<compile_context>
chip_gen: v7x
topology: tpu7x:2x2x1
jax: 0.10.0
libtpu: 0.0.40
codegen_flags: <defaults>
</compile_context>

<pallas_src>
import jax
import jax.numpy as jnp
from jax.experimental import pallas as pl
from jax.experimental.pallas import tpu as pltpu

NLAYERS = 2
NHEAD = 4
EPS = 1e-5
NUM_CLASSES = 2
OUT_PAD = 128          # lane-dense padded width for the 2-class head output


def _layernorm(x, w, b):
    # x: (N, D) f32, w/b: (1, D) f32; LayerNorm over last dim, biased var, eps=1e-5
    mu = jnp.mean(x, axis=-1, keepdims=True)
    var = jnp.mean((x - mu) ** 2, axis=-1, keepdims=True)
    return (x - mu) * jax.lax.rsqrt(var + EPS) * w + b


def transformer_kernel(x_ref, wqkv_ref, bqkv_ref, wo_ref, bo_ref,
                       w1_ref, b1_ref, w2_ref, b2_ref,
                       ln1w_ref, ln1b_ref, ln2w_ref, ln2b_ref,
                       wfc1_ref, bfc1_ref, wfc2_ref, bfc2_ref,
                       out_ref):
    # x_ref block is (TB, S, D): TB batch elements per grid step.
    TB, S, D = x_ref.shape
    Dh = D // NHEAD
    M = TB * S

    # (TB, S, D) -> (TB*S, D) slab: S == 8 sublane tile, so this is layout-free.
    x2 = x_ref[...].reshape(M, D).astype(jnp.float32)

    for l in range(NLAYERS):                                # static unroll
        # ---- multi-head self-attention (dropout = identity in eval mode) ----
        # Fused QKV projection on the whole slab; 1/sqrt(Dh) already folded
        # into the Q weight columns at prep time.
        qkv = jnp.dot(x2.astype(jnp.bfloat16), wqkv_ref[l],
                      preferred_element_type=jnp.float32) + bqkv_ref[l]  # (M, 3D) f32
        wo_l = wo_ref[l]                                    # (D, D) bf16
        attn = bo_ref[l]                                    # (1, D) f32, broadcasts
        # Static head unroll: simple lane slices + TB-batched small matmuls,
        # no (S, NHEAD, Dh) reshape / einsum-internal transposes.
        for h in range(NHEAD):
            qh = qkv[:, h * Dh:(h + 1) * Dh].reshape(TB, S, Dh)
            kh = qkv[:, D + h * Dh:D + (h + 1) * Dh].reshape(TB, S, Dh)
            vh = qkv[:, 2 * D + h * Dh:2 * D + (h + 1) * Dh].reshape(TB, S, Dh)
            s = jnp.einsum('bqd,bkd->bqk',
                           qh.astype(jnp.bfloat16), kh.astype(jnp.bfloat16),
                           preferred_element_type=jnp.float32)        # (TB,S,S)
            # softmax statistics stay f32; reciprocal on the EUP slot
            s = s - jnp.max(s, axis=-1, keepdims=True)
            p = jnp.exp(s)
            p = p * pl.reciprocal(jnp.sum(p, axis=-1, keepdims=True), approx=True)
            ctx = jnp.einsum('bqk,bkd->bqd',
                             p.astype(jnp.bfloat16), vh.astype(jnp.bfloat16),
                             preferred_element_type=jnp.float32)      # (TB,S,Dh)
            # Fold this head's context directly into the output projection
            # (K = Dh partial matmul) -> no lane-dim concat of head outputs.
            attn = attn + jnp.dot(ctx.reshape(M, Dh).astype(jnp.bfloat16),
                                  wo_l[h * Dh:(h + 1) * Dh, :],
                                  preferred_element_type=jnp.float32)
        x2 = _layernorm(x2 + attn, ln1w_ref[l], ln1b_ref[l])
        # ---- feed-forward (ReLU) ----
        hff = jnp.maximum(
            jnp.dot(x2.astype(jnp.bfloat16), w1_ref[l],
                    preferred_element_type=jnp.float32) + b1_ref[l], 0.0)
        ff = jnp.dot(hff.astype(jnp.bfloat16), w2_ref[l],
                     preferred_element_type=jnp.float32) + b2_ref[l]
        x2 = _layernorm(x2 + ff, ln2w_ref[l], ln2b_ref[l])

    # PyTorch h[-1] (seq-first) == last sequence position of each batch element.
    h_last = x2.reshape(TB, S, D)[:, S - 1, :]               # (TB, D)
    y = jnp.maximum(
        jnp.dot(h_last.astype(jnp.bfloat16), wfc1_ref[...],
                preferred_element_type=jnp.float32) + bfc1_ref[...], 0.0)
    out = jnp.dot(y.astype(jnp.bfloat16), wfc2_ref[...],
                  preferred_element_type=jnp.float32) + bfc2_ref[...]  # (TB, OUT_PAD)
    out_ref[...] = out.reshape(1, TB, OUT_PAD).astype(out_ref.dtype)


def _prep_params(params):
    """Trace-time parameter transform (runs once in XLA):
       - transpose weights to (Din, Dout),
       - fold 1/sqrt(Dh) into the Q columns of wqkv/bqkv,
       - cast matmul weights to bf16 (biases / LN params stay f32),
       - pad the 2-class head output to OUT_PAD lanes."""
    (wqkv, bqkv, wo, bo, w1, b1, w2, b2,
     ln1w, ln1b, ln2w, ln2b, wfc1, bfc1, wfc2, bfc2) = params
    D = wqkv.shape[2]
    scale = 1.0 / float(D // NHEAD) ** 0.5
    wqkv_t = jnp.swapaxes(wqkv, 1, 2)                        # (L, D, 3D)
    wqkv_t = wqkv_t.at[:, :, :D].multiply(scale)             # fold Q scale
    bqkv_s = bqkv.at[:, :, :D].multiply(scale)
    wo_t = jnp.swapaxes(wo, 1, 2)                            # (L, D, D)
    w1_t = jnp.swapaxes(w1, 1, 2)                            # (L, D, nhid)
    w2_t = jnp.swapaxes(w2, 1, 2)                            # (L, nhid, D)
    wfc1_t = wfc1.T                                          # (D, 32)
    wfc2_p = jnp.zeros((wfc2.shape[1], OUT_PAD),
                       jnp.float32).at[:, :NUM_CLASSES].set(wfc2.T)
    bfc2_p = jnp.zeros((1, OUT_PAD),
                       jnp.float32).at[:, :NUM_CLASSES].set(bfc2)
    bf = jnp.bfloat16
    return (wqkv_t.astype(bf), bqkv_s, wo_t.astype(bf), bo,
            w1_t.astype(bf), b1, w2_t.astype(bf), b2,
            ln1w, ln1b, ln2w, ln2b,
            wfc1_t.astype(bf), bfc1, wfc2_p.astype(bf), bfc2_p)


def _const_spec(shape):
    # Full-array block, same block every grid step (stays VMEM-resident).
    # NOTE: at larger model sizes, pipeline_mode=pl.Buffered(1) would avoid
    # double-buffering these constant blocks; irrelevant at this size.
    if len(shape) == 2:
        return pl.BlockSpec(shape, lambda i: (0, 0))
    return pl.BlockSpec(shape, lambda i: (0, 0, 0))


def _choose_tb(B, S, target_rows=128):
    """Batch elements per grid step: aim for ~128-row matmul slabs, keep >=2
    grid steps (v7x megacore), and require TB to divide B."""
    cap = max(1, target_rows // max(S, 1))
    cap = min(cap, max(1, B // 2))
    tb = 1
    for d in range(1, min(cap, B) + 1):
        if B % d == 0:
            tb = d
    return tb


def transformer_net(x, params):
    """x: (B, S, D) float32 (batch-first) -> (B, 2) float32 logits."""
    B, S, D = x.shape
    TB = _choose_tb(B, S)
    G = B // TB
    p = _prep_params(params)

    in_specs = [pl.BlockSpec((TB, S, D), lambda i: (i, 0, 0))]
    in_specs += [_const_spec(a.shape) for a in p]
    out_spec = pl.BlockSpec((1, TB, OUT_PAD), lambda i: (i, 0, 0))

    nhid = p[4].shape[2]
    dh = D // NHEAD
    flops_per_b = NLAYERS * (2 * S * D * 3 * D               # fused qkv
                             + 4 * NHEAD * S * S * dh        # scores + ctx
                             + 2 * S * D * D                 # out proj
                             + 4 * S * D * nhid)             # ffn
    flops_per_b += 2 * D * 32 + 2 * 32 * OUT_PAD             # head
    bytes_params = sum(int(a.size) * a.dtype.itemsize for a in p)
    cost = pl.CostEstimate(
        flops=int(B * flops_per_b),
        transcendentals=int(B * NLAYERS * NHEAD * S * S),
        bytes_accessed=int(x.size) * 4 + bytes_params + B * OUT_PAD * 4)

    out = pl.pallas_call(
        transformer_kernel,
        out_shape=jax.ShapeDtypeStruct((G, TB, OUT_PAD), jnp.float32),
        grid_spec=pltpu.PrefetchScalarGridSpec(
            num_scalar_prefetch=0,
            grid=(G,),
            in_specs=in_specs,
            out_specs=out_spec),
        compiler_params=pltpu.CompilerParams(
            dimension_semantics=("parallel",)),
        cost_estimate=cost,
    )(x, *p)
    return out.reshape(B, OUT_PAD)[:, :NUM_CLASSES]


def init_params(key, pkt_dim, nhid=64, nlayers=NLAYERS):
    """Parameters in PyTorch layout (Dout, Din); _prep_params transforms once."""
    D, L = pkt_dim, nlayers
    ks = jax.random.split(key, 8)
    s = 0.1
    wqkv = s * jax.random.normal(ks[0], (L, 3 * D, D), jnp.float32)
    bqkv = s * jax.random.normal(ks[1], (L, 1, 3 * D), jnp.float32)
    wo   = s * jax.random.normal(ks[2], (L, D, D), jnp.float32)
    bo   = s * jax.random.normal(ks[3], (L, 1, D), jnp.float32)
    w1   = s * jax.random.normal(ks[4], (L, nhid, D), jnp.float32)
    b1   = jnp.zeros((L, 1, nhid), jnp.float32)
    w2   = s * jax.random.normal(ks[5], (L, D, nhid), jnp.float32)
    b2   = jnp.zeros((L, 1, D), jnp.float32)
    ln1w = jnp.ones((L, 1, D), jnp.float32)
    ln1b = jnp.zeros((L, 1, D), jnp.float32)
    ln2w = jnp.ones((L, 1, D), jnp.float32)
    ln2b = jnp.zeros((L, 1, D), jnp.float32)
    wfc1 = s * jax.random.normal(ks[6], (32, D), jnp.float32)
    bfc1 = jnp.zeros((1, 32), jnp.float32)
    wfc2 = s * jax.random.normal(ks[7], (2, 32), jnp.float32)
    bfc2 = jnp.zeros((1, 2), jnp.float32)
    return (wqkv, bqkv, wo, bo, w1, b1, w2, b2,
            ln1w, ln1b, ln2w, ln2b, wfc1, bfc1, wfc2, bfc2)


def transformer_ref(x, params):
    """Pure-JAX f32 reference mirroring PyTorch semantics (correctness check)."""
    (wqkv, bqkv, wo, bo, w1, b1, w2, b2,
     ln1w, ln1b, ln2w, ln2b, wfc1, bfc1, wfc2, bfc2) = params
    B, S, D = x.shape
    Dh = D // NHEAD
    h = x.reshape(B * S, D)
    for l in range(NLAYERS):
        q = (h @ wqkv[l, :D].T + bqkv[l, :, :D]).reshape(B, S, NHEAD, Dh) / (Dh ** 0.5)
        k = (h @ wqkv[l, D:2 * D].T + bqkv[l, :, D:2 * D]).reshape(B, S, NHEAD, Dh)
        v = (h @ wqkv[l, 2 * D:].T + bqkv[l, :, 2 * D:]).reshape(B, S, NHEAD, Dh)
        s = jnp.einsum('bqhd,bkhd->bhqk', q, k)
        p = jax.nn.softmax(s, axis=-1)
        ctx = jnp.einsum('bhqk,bkhd->bqhd', p, v).reshape(B * S, D)
        h = _layernorm(h + ctx @ wo[l].T + bo[l], ln1w[l], ln1b[l])
        ffh = jnp.maximum(h @ w1[l].T + b1[l], 0.0)
        h = _layernorm(h + ffh @ w2[l].T + b2[l], ln2w[l], ln2b[l])
    h_last = h.reshape(B, S, D)[:, -1, :]
    y = jnp.maximum(h_last @ wfc1.T + bfc1, 0.0)
    return y @ wfc2.T + bfc2


if __name__ == "__main__":
    B, S, PKT_DIM, NHID = 8, 8, 32, 64      # pkt_dim divisible by nhead=4
    key = jax.random.PRNGKey(0)
    kx, kp = jax.random.split(key)
    x = jax.random.normal(kx, (B, S, PKT_DIM), jnp.float32)
    params = init_params(kp, PKT_DIM, NHID)

    out = jax.jit(transformer_net)(x, params)
    out = jax.block_until_ready(out)

    assert out.shape == (B, NUM_CLASSES) and out.dtype == jnp.float32
    assert bool(jnp.all(jnp.isfinite(out)))
    ref = transformer_ref(x, params)
    # bf16 matmul inputs (f32 accumulation) + approx EUP reciprocal in softmax
    # -> compare against the pure-f32 reference with a slightly looser bound.
    assert float(jnp.max(jnp.abs(out - ref))) < 2e-2, "mismatch vs pure-JAX reference"
    print("KERNEL_OK")
</pallas_src>

<mosaic_0001>
module attributes {stable_mosaic.version = 11 : i64} {
  func.func @transformer_kernel(%arg0: i32, %arg1: memref<4x8x32xf32, #tpu.memory_space<vmem>>, %arg2: memref<2x32x96xbf16, #tpu.memory_space<vmem>>, %arg3: memref<2x1x96xf32, #tpu.memory_space<vmem>>, %arg4: memref<2x32x32xbf16, #tpu.memory_space<vmem>>, %arg5: memref<2x1x32xf32, #tpu.memory_space<vmem>>, %arg6: memref<2x32x64xbf16, #tpu.memory_space<vmem>>, %arg7: memref<2x1x64xf32, #tpu.memory_space<vmem>>, %arg8: memref<2x64x32xbf16, #tpu.memory_space<vmem>>, %arg9: memref<2x1x32xf32, #tpu.memory_space<vmem>>, %arg10: memref<2x1x32xf32, #tpu.memory_space<vmem>>, %arg11: memref<2x1x32xf32, #tpu.memory_space<vmem>>, %arg12: memref<2x1x32xf32, #tpu.memory_space<vmem>>, %arg13: memref<2x1x32xf32, #tpu.memory_space<vmem>>, %arg14: memref<32x32xbf16, #tpu.memory_space<vmem>>, %arg15: memref<1x32xf32, #tpu.memory_space<vmem>>, %arg16: memref<32x128xbf16, #tpu.memory_space<vmem>>, %arg17: memref<1x128xf32, #tpu.memory_space<vmem>>, %arg18: memref<1x4x128xf32, #tpu.memory_space<vmem>>) attributes {dimension_semantics = [#tpu.dimension_semantics<parallel>], iteration_bounds = array<i64: 2>, scalar_prefetch = 0 : i64, scratch_operands = 0 : i64, tpu.core_type = #tpu.core_type<tc>, window_params = [{transform_indices = @transform_0, window_bounds = array<i64: 4, 8, 32>}, {pipeline_mode = #tpu.pipeline_mode<synchronous>, transform_indices = @transform_1, window_bounds = array<i64: 2, 32, 96>}, {pipeline_mode = #tpu.pipeline_mode<synchronous>, transform_indices = @transform_2, window_bounds = array<i64: 2, 1, 96>}, {pipeline_mode = #tpu.pipeline_mode<synchronous>, transform_indices = @transform_3, window_bounds = array<i64: 2, 32, 32>}, {pipeline_mode = #tpu.pipeline_mode<synchronous>, transform_indices = @transform_4, window_bounds = array<i64: 2, 1, 32>}, {pipeline_mode = #tpu.pipeline_mode<synchronous>, transform_indices = @transform_5, window_bounds = array<i64: 2, 32, 64>}, {pipeline_mode = #tpu.pipeline_mode<synchronous>, transform_indices = @transform_6, window_bounds = array<i64: 2, 1, 64>}, {pipeline_mode = #tpu.pipeline_mode<synchronous>, transform_indices = @transform_7, window_bounds = array<i64: 2, 64, 32>}, {pipeline_mode = #tpu.pipeline_mode<synchronous>, transform_indices = @transform_8, window_bounds = array<i64: 2, 1, 32>}, {pipeline_mode = #tpu.pipeline_mode<synchronous>, transform_indices = @transform_9, window_bounds = array<i64: 2, 1, 32>}, {pipeline_mode = #tpu.pipeline_mode<synchronous>, transform_indices = @transform_10, window_bounds = array<i64: 2, 1, 32>}, {pipeline_mode = #tpu.pipeline_mode<synchronous>, transform_indices = @transform_11, window_bounds = array<i64: 2, 1, 32>}, {pipeline_mode = #tpu.pipeline_mode<synchronous>, transform_indices = @transform_12, window_bounds = array<i64: 2, 1, 32>}, {pipeline_mode = #tpu.pipeline_mode<synchronous>, transform_indices = @transform_13, window_bounds = array<i64: 32, 32>}, {pipeline_mode = #tpu.pipeline_mode<synchronous>, transform_indices = @transform_14, window_bounds = array<i64: 1, 32>}, {pipeline_mode = #tpu.pipeline_mode<synchronous>, transform_indices = @transform_15, window_bounds = array<i64: 32, 128>}, {pipeline_mode = #tpu.pipeline_mode<synchronous>, transform_indices = @transform_16, window_bounds = array<i64: 1, 128>}, {transform_indices = @transform_17, window_bounds = array<i64: 1, 4, 128>}]} {
    %c0 = arith.constant 0 : index
    %c0_0 = arith.constant 0 : index
    %c0_1 = arith.constant 0 : index
    %0 = vector.load %arg1[%c0, %c0_0, %c0_1] : memref<4x8x32xf32, #tpu.memory_space<vmem>>, vector<4x8x32xf32>
    %1 = vector.shape_cast %0 : vector<4x8x32xf32> to vector<32x32xf32>
    %2 = arith.truncf %1 : vector<32x32xf32> to vector<32x32xbf16>
    %c0_2 = arith.constant 0 : index
    %c0_3 = arith.constant 0 : index
    %c0_4 = arith.constant 0 : index
    %3 = vector.load %arg2[%c0_2, %c0_3, %c0_4] : memref<2x32x96xbf16, #tpu.memory_space<vmem>>, vector<1x32x96xbf16>
    %4 = vector.shape_cast %3 : vector<1x32x96xbf16> to vector<32x96xbf16>
    %cst = arith.constant dense<0.000000e+00> : vector<32x96xf32>
    %5 = tpu.matmul %2, %4, %cst {dimension_numbers = #tpu.dot_dimension_numbers<[1], [0], [0], [1], [0, 0, 1, 1], [], []>} : vector<32x32xbf16>, vector<32x96xbf16>, vector<32x96xf32> -> vector<32x96xf32>
    %c0_5 = arith.constant 0 : index
    %c0_6 = arith.constant 0 : index
    %c0_7 = arith.constant 0 : index
    %6 = vector.load %arg3[%c0_5, %c0_6, %c0_7] : memref<2x1x96xf32, #tpu.memory_space<vmem>>, vector<1x1x96xf32>
    %7 = vector.shape_cast %6 : vector<1x1x96xf32> to vector<1x96xf32>
    %8 = vector.broadcast %7 : vector<1x96xf32> to vector<32x96xf32>
    %9 = arith.addf %5, %8 : vector<32x96xf32>
    %c0_8 = arith.constant 0 : index
    %c0_9 = arith.constant 0 : index
    %c0_10 = arith.constant 0 : index
    %10 = vector.load %arg4[%c0_8, %c0_9, %c0_10] : memref<2x32x32xbf16, #tpu.memory_space<vmem>>, vector<1x32x32xbf16>
    %11 = vector.shape_cast %10 : vector<1x32x32xbf16> to vector<32x32xbf16>
    %c0_11 = arith.constant 0 : index
    %c0_12 = arith.constant 0 : index
    %c0_13 = arith.constant 0 : index
    %12 = vector.load %arg5[%c0_11, %c0_12, %c0_13] : memref<2x1x32xf32, #tpu.memory_space<vmem>>, vector<1x1x32xf32>
    %13 = vector.shape_cast %12 : vector<1x1x32xf32> to vector<1x32xf32>
    %14 = vector.extract_strided_slice %9 {offsets = [0, 0], sizes = [32, 8], strides = [1, 1]} : vector<32x96xf32> to vector<32x8xf32>
    %15 = vector.shape_cast %14 : vector<32x8xf32> to vector<4x8x8xf32>
    %16 = vector.extract_strided_slice %9 {offsets = [0, 32], sizes = [32, 8], strides = [1, 1]} : vector<32x96xf32> to vector<32x8xf32>
    %17 = vector.shape_cast %16 : vector<32x8xf32> to vector<4x8x8xf32>
    %18 = vector.extract_strided_slice %9 {offsets = [0, 64], sizes = [32, 8], strides = [1, 1]} : vector<32x96xf32> to vector<32x8xf32>
    %19 = vector.shape_cast %18 : vector<32x8xf32> to vector<4x8x8xf32>
    %20 = arith.truncf %15 : vector<4x8x8xf32> to vector<4x8x8xbf16>
    %21 = arith.truncf %17 : vector<4x8x8xf32> to vector<4x8x8xbf16>
    "tpu.trace_start"() <{level = 10 : i32, message = "bqd,bkd->bqk"}> : () -> ()
    %cst_14 = arith.constant dense<0.000000e+00> : vector<4x8x8xf32>
    %22 = tpu.matmul %20, %21, %cst_14 {dimension_numbers = #tpu.dot_dimension_numbers<[2], [2], [1], [1], [0, 0, 0, 1, 1, 1], [0], [0]>} : vector<4x8x8xbf16>, vector<4x8x8xbf16>, vector<4x8x8xf32> -> vector<4x8x8xf32>
    "tpu.trace_stop"() : () -> ()
    %cst_15 = arith.constant dense<0xFF800000> : vector<4x8xf32>
    %23 = vector.multi_reduction <maximumf>, %22, %cst_15 [2] : vector<4x8x8xf32> to vector<4x8xf32>
    %24 = vector.shape_cast %23 : vector<4x8xf32> to vector<4x8x1xf32>
    %25 = vector.broadcast %24 : vector<4x8x1xf32> to vector<4x8x8xf32>
    %26 = arith.subf %22, %25 : vector<4x8x8xf32>
    %27 = math.exp %26 : vector<4x8x8xf32>
    %cst_16 = arith.constant dense<0.000000e+00> : vector<4x8xf32>
    %28 = vector.multi_reduction <add>, %27, %cst_16 [2] : vector<4x8x8xf32> to vector<4x8xf32>
    %29 = vector.shape_cast %28 : vector<4x8xf32> to vector<4x8x1xf32>
    %30 = tpu.reciprocal %29 {approx = true} : vector<4x8x1xf32> -> vector<4x8x1xf32>
    %31 = vector.broadcast %30 : vector<4x8x1xf32> to vector<4x8x8xf32>
    %32 = arith.mulf %27, %31 : vector<4x8x8xf32>
    %33 = arith.truncf %32 : vector<4x8x8xf32> to vector<4x8x8xbf16>
    %34 = arith.truncf %19 : vector<4x8x8xf32> to vector<4x8x8xbf16>
    "tpu.trace_start"() <{level = 10 : i32, message = "bqk,bkd->bqd"}> : () -> ()
    %cst_17 = arith.constant dense<0.000000e+00> : vector<4x8x8xf32>
    %35 = tpu.matmul %33, %34, %cst_17 {dimension_numbers = #tpu.dot_dimension_numbers<[2], [1], [1], [2], [0, 0, 0, 1, 1, 2], [0], [0]>} : vector<4x8x8xbf16>, vector<4x8x8xbf16>, vector<4x8x8xf32> -> vector<4x8x8xf32>
    "tpu.trace_stop"() : () -> ()
    %36 = vector.shape_cast %35 : vector<4x8x8xf32> to vector<32x8xf32>
    %37 = arith.truncf %36 : vector<32x8xf32> to vector<32x8xbf16>
    %38 = vector.extract_strided_slice %11 {offsets = [0, 0], sizes = [8, 32], strides = [1, 1]} : vector<32x32xbf16> to vector<8x32xbf16>
    %cst_18 = arith.constant dense<0.000000e+00> : vector<32x32xf32>
    %39 = tpu.matmul %37, %38, %cst_18 {dimension_numbers = #tpu.dot_dimension_numbers<[1], [0], [0], [1], [0, 0, 1, 1], [], []>} : vector<32x8xbf16>, vector<8x32xbf16>, vector<32x32xf32> -> vector<32x32xf32>
    %40 = vector.broadcast %13 : vector<1x32xf32> to vector<32x32xf32>
    %41 = arith.addf %40, %39 : vector<32x32xf32>
    %42 = vector.extract_strided_slice %9 {offsets = [0, 8], sizes = [32, 8], strides = [1, 1]} : vector<32x96xf32> to vector<32x8xf32>
    %43 = vector.shape_cast %42 : vector<32x8xf32> to vector<4x8x8xf32>
    %44 = vector.extract_strided_slice %9 {offsets = [0, 40], sizes = [32, 8], strides = [1, 1]} : vector<32x96xf32> to vector<32x8xf32>
    %45 = vector.shape_cast %44 : vector<32x8xf32> to vector<4x8x8xf32>
    %46 = vector.extract_strided_slice %9 {offsets = [0, 72], sizes = [32, 8], strides = [1, 1]} : vector<32x96xf32> to vector<32x8xf32>
    %47 = vector.shape_cast %46 : vector<32x8xf32> to vector<4x8x8xf32>
    %48 = arith.truncf %43 : vector<4x8x8xf32> to vector<4x8x8xbf16>
    %49 = arith.truncf %45 : vector<4x8x8xf32> to vector<4x8x8xbf16>
    "tpu.trace_start"() <{level = 10 : i32, message = "bqd,bkd->bqk"}> : () -> ()
    %cst_19 = arith.constant dense<0.000000e+00> : vector<4x8x8xf32>
    %50 = tpu.matmul %48, %49, %cst_19 {dimension_numbers = #tpu.dot_dimension_numbers<[2], [2], [1], [1], [0, 0, 0, 1, 1, 1], [0], [0]>} : vector<4x8x8xbf16>, vector<4x8x8xbf16>, vector<4x8x8xf32> -> vector<4x8x8xf32>
    "tpu.trace_stop"() : () -> ()
    %cst_20 = arith.constant dense<0xFF800000> : vector<4x8xf32>
    %51 = vector.multi_reduction <maximumf>, %50, %cst_20 [2] : vector<4x8x8xf32> to vector<4x8xf32>
    %52 = vector.shape_cast %51 : vector<4x8xf32> to vector<4x8x1xf32>
    %53 = vector.broadcast %52 : vector<4x8x1xf32> to vector<4x8x8xf32>
    %54 = arith.subf %50, %53 : vector<4x8x8xf32>
    %55 = math.exp %54 : vector<4x8x8xf32>
    %cst_21 = arith.constant dense<0.000000e+00> : vector<4x8xf32>
    %56 = vector.multi_reduction <add>, %55, %cst_21 [2] : vector<4x8x8xf32> to vector<4x8xf32>
    %57 = vector.shape_cast %56 : vector<4x8xf32> to vector<4x8x1xf32>
    %58 = tpu.reciprocal %57 {approx = true} : vector<4x8x1xf32> -> vector<4x8x1xf32>
    %59 = vector.broadcast %58 : vector<4x8x1xf32> to vector<4x8x8xf32>
    %60 = arith.mulf %55, %59 : vector<4x8x8xf32>
    %61 = arith.truncf %60 : vector<4x8x8xf32> to vector<4x8x8xbf16>
    %62 = arith.truncf %47 : vector<4x8x8xf32> to vector<4x8x8xbf16>
    "tpu.trace_start"() <{level = 10 : i32, message = "bqk,bkd->bqd"}> : () -> ()
    %cst_22 = arith.constant dense<0.000000e+00> : vector<4x8x8xf32>
    %63 = tpu.matmul %61, %62, %cst_22 {dimension_numbers = #tpu.dot_dimension_numbers<[2], [1], [1], [2], [0, 0, 0, 1, 1, 2], [0], [0]>} : vector<4x8x8xbf16>, vector<4x8x8xbf16>, vector<4x8x8xf32> -> vector<4x8x8xf32>
    "tpu.trace_stop"() : () -> ()
    %64 = vector.shape_cast %63 : vector<4x8x8xf32> to vector<32x8xf32>
    %65 = arith.truncf %64 : vector<32x8xf32> to vector<32x8xbf16>
    %66 = vector.extract_strided_slice %11 {offsets = [8, 0], sizes = [8, 32], strides = [1, 1]} : vector<32x32xbf16> to vector<8x32xbf16>
    %cst_23 = arith.constant dense<0.000000e+00> : vector<32x32xf32>
    %67 = tpu.matmul %65, %66, %cst_23 {dimension_numbers = #tpu.dot_dimension_numbers<[1], [0], [0], [1], [0, 0, 1, 1], [], []>} : vector<32x8xbf16>, vector<8x32xbf16>, vector<32x32xf32> -> vector<32x32xf32>
    %68 = arith.addf %41, %67 : vector<32x32xf32>
    %69 = vector.extract_strided_slice %9 {offsets = [0, 16], sizes = [32, 8], strides = [1, 1]} : vector<32x96xf32> to vector<32x8xf32>
    %70 = vector.shape_cast %69 : vector<32x8xf32> to vector<4x8x8xf32>
    %71 = vector.extract_strided_slice %9 {offsets = [0, 48], sizes = [32, 8], strides = [1, 1]} : vector<32x96xf32> to vector<32x8xf32>
    %72 = vector.shape_cast %71 : vector<32x8xf32> to vector<4x8x8xf32>
    %73 = vector.extract_strided_slice %9 {offsets = [0, 80], sizes = [32, 8], strides = [1, 1]} : vector<32x96xf32> to vector<32x8xf32>
    %74 = vector.shape_cast %73 : vector<32x8xf32> to vector<4x8x8xf32>
    %75 = arith.truncf %70 : vector<4x8x8xf32> to vector<4x8x8xbf16>
    %76 = arith.truncf %72 : vector<4x8x8xf32> to vector<4x8x8xbf16>
    "tpu.trace_start"() <{level = 10 : i32, message = "bqd,bkd->bqk"}> : () -> ()
    %cst_24 = arith.constant dense<0.000000e+00> : vector<4x8x8xf32>
    %77 = tpu.matmul %75, %76, %cst_24 {dimension_numbers = #tpu.dot_dimension_numbers<[2], [2], [1], [1], [0, 0, 0, 1, 1, 1], [0], [0]>} : vector<4x8x8xbf16>, vector<4x8x8xbf16>, vector<4x8x8xf32> -> vector<4x8x8xf32>
    "tpu.trace_stop"() : () -> ()
    %cst_25 = arith.constant dense<0xFF800000> : vector<4x8xf32>
    %78 = vector.multi_reduction <maximumf>, %77, %cst_25 [2] : vector<4x8x8xf32> to vector<4x8xf32>
    %79 = vector.shape_cast %78 : vector<4x8xf32> to vector<4x8x1xf32>
    %80 = vector.broadcast %79 : vector<4x8x1xf32> to vector<4x8x8xf32>
    %81 = arith.subf %77, %80 : vector<4x8x8xf32>
    %82 = math.exp %81 : vector<4x8x8xf32>
    %cst_26 = arith.constant dense<0.000000e+00> : vector<4x8xf32>
    %83 = vector.multi_reduction <add>, %82, %cst_26 [2] : vector<4x8x8xf32> to vector<4x8xf32>
    %84 = vector.shape_cast %83 : vector<4x8xf32> to vector<4x8x1xf32>
    %85 = tpu.reciprocal %84 {approx = true} : vector<4x8x1xf32> -> vector<4x8x1xf32>
    %86 = vector.broadcast %85 : vector<4x8x1xf32> to vector<4x8x8xf32>
    %87 = arith.mulf %82, %86 : vector<4x8x8xf32>
    %88 = arith.truncf %87 : vector<4x8x8xf32> to vector<4x8x8xbf16>
    %89 = arith.truncf %74 : vector<4x8x8xf32> to vector<4x8x8xbf16>
    "tpu.trace_start"() <{level = 10 : i32, message = "bqk,bkd->bqd"}> : () -> ()
    %cst_27 = arith.constant dense<0.000000e+00> : vector<4x8x8xf32>
    %90 = tpu.matmul %88, %89, %cst_27 {dimension_numbers = #tpu.dot_dimension_numbers<[2], [1], [1], [2], [0, 0, 0, 1, 1, 2], [0], [0]>} : vector<4x8x8xbf16>, vector<4x8x8xbf16>, vector<4x8x8xf32> -> vector<4x8x8xf32>
    "tpu.trace_stop"() : () -> ()
    %91 = vector.shape_cast %90 : vector<4x8x8xf32> to vector<32x8xf32>
    %92 = arith.truncf %91 : vector<32x8xf32> to vector<32x8xbf16>
    %93 = vector.extract_strided_slice %11 {offsets = [16, 0], sizes = [8, 32], strides = [1, 1]} : vector<32x32xbf16> to vector<8x32xbf16>
    %cst_28 = arith.constant dense<0.000000e+00> : vector<32x32xf32>
    %94 = tpu.matmul %92, %93, %cst_28 {dimension_numbers = #tpu.dot_dimension_numbers<[1], [0], [0], [1], [0, 0, 1, 1], [], []>} : vector<32x8xbf16>, vector<8x32xbf16>, vector<32x32xf32> -> vector<32x32xf32>
    %95 = arith.addf %68, %94 : vector<32x32xf32>
    %96 = vector.extract_strided_slice %9 {offsets = [0, 24], sizes = [32, 8], strides = [1, 1]} : vector<32x96xf32> to vector<32x8xf32>
    %97 = vector.shape_cast %96 : vector<32x8xf32> to vector<4x8x8xf32>
    %98 = vector.extract_strided_slice %9 {offsets = [0, 56], sizes = [32, 8], strides = [1, 1]} : vector<32x96xf32> to vector<32x8xf32>
    %99 = vector.shape_cast %98 : vector<32x8xf32> to vector<4x8x8xf32>
    %100 = vector.extract_strided_slice %9 {offsets = [0, 88], sizes = [32, 8], strides = [1, 1]} : vector<32x96xf32> to vector<32x8xf32>
    %101 = vector.shape_cast %100 : vector<32x8xf32> to vector<4x8x8xf32>
    %102 = arith.truncf %97 : vector<4x8x8xf32> to vector<4x8x8xbf16>
    %103 = arith.truncf %99 : vector<4x8x8xf32> to vector<4x8x8xbf16>
    "tpu.trace_start"() <{level = 10 : i32, message = "bqd,bkd->bqk"}> : () -> ()
    %cst_29 = arith.constant dense<0.000000e+00> : vector<4x8x8xf32>
    %104 = tpu.matmul %102, %103, %cst_29 {dimension_numbers = #tpu.dot_dimension_numbers<[2], [2], [1], [1], [0, 0, 0, 1, 1, 1], [0], [0]>} : vector<4x8x8xbf16>, vector<4x8x8xbf16>, vector<4x8x8xf32> -> vector<4x8x8xf32>
    "tpu.trace_stop"() : () -> ()
    %cst_30 = arith.constant dense<0xFF800000> : vector<4x8xf32>
    %105 = vector.multi_reduction <maximumf>, %104, %cst_30 [2] : vector<4x8x8xf32> to vector<4x8xf32>
    %106 = vector.shape_cast %105 : vector<4x8xf32> to vector<4x8x1xf32>
    %107 = vector.broadcast %106 : vector<4x8x1xf32> to vector<4x8x8xf32>
    %108 = arith.subf %104, %107 : vector<4x8x8xf32>
    %109 = math.exp %108 : vector<4x8x8xf32>
    %cst_31 = arith.constant dense<0.000000e+00> : vector<4x8xf32>
    %110 = vector.multi_reduction <add>, %109, %cst_31 [2] : vector<4x8x8xf32> to vector<4x8xf32>
    %111 = vector.shape_cast %110 : vector<4x8xf32> to vector<4x8x1xf32>
    %112 = tpu.reciprocal %111 {approx = true} : vector<4x8x1xf32> -> vector<4x8x1xf32>
    %113 = vector.broadcast %112 : vector<4x8x1xf32> to vector<4x8x8xf32>
    %114 = arith.mulf %109, %113 : vector<4x8x8xf32>
    %115 = arith.truncf %114 : vector<4x8x8xf32> to vector<4x8x8xbf16>
    %116 = arith.truncf %101 : vector<4x8x8xf32> to vector<4x8x8xbf16>
    "tpu.trace_start"() <{level = 10 : i32, message = "bqk,bkd->bqd"}> : () -> ()
    %cst_32 = arith.constant dense<0.000000e+00> : vector<4x8x8xf32>
    %117 = tpu.matmul %115, %116, %cst_32 {dimension_numbers = #tpu.dot_dimension_numbers<[2], [1], [1], [2], [0, 0, 0, 1, 1, 2], [0], [0]>} : vector<4x8x8xbf16>, vector<4x8x8xbf16>, vector<4x8x8xf32> -> vector<4x8x8xf32>
    "tpu.trace_stop"() : () -> ()
    %118 = vector.shape_cast %117 : vector<4x8x8xf32> to vector<32x8xf32>
    %119 = arith.truncf %118 : vector<32x8xf32> to vector<32x8xbf16>
    %120 = vector.extract_strided_slice %11 {offsets = [24, 0], sizes = [8, 32], strides = [1, 1]} : vector<32x32xbf16> to vector<8x32xbf16>
    %cst_33 = arith.constant dense<0.000000e+00> : vector<32x32xf32>
    %121 = tpu.matmul %119, %120, %cst_33 {dimension_numbers = #tpu.dot_dimension_numbers<[1], [0], [0], [1], [0, 0, 1, 1], [], []>} : vector<32x8xbf16>, vector<8x32xbf16>, vector<32x32xf32> -> vector<32x32xf32>
    %122 = arith.addf %95, %121 : vector<32x32xf32>
    %123 = arith.addf %1, %122 : vector<32x32xf32>
    %c0_34 = arith.constant 0 : index
    %c0_35 = arith.constant 0 : index
    %c0_36 = arith.constant 0 : index
    %124 = vector.load %arg10[%c0_34, %c0_35, %c0_36] : memref<2x1x32xf32, #tpu.memory_space<vmem>>, vector<1x1x32xf32>
    %125 = vector.shape_cast %124 : vector<1x1x32xf32> to vector<1x32xf32>
    %c0_37 = arith.constant 0 : index
    %c0_38 = arith.constant 0 : index
    %c0_39 = arith.constant 0 : index
    %126 = vector.load %arg11[%c0_37, %c0_38, %c0_39] : memref<2x1x32xf32, #tpu.memory_space<vmem>>, vector<1x1x32xf32>
    %127 = vector.shape_cast %126 : vector<1x1x32xf32> to vector<1x32xf32>
    %cst_40 = arith.constant dense<0.000000e+00> : vector<32xf32>
    %128 = vector.multi_reduction <add>, %123, %cst_40 [1] : vector<32x32xf32> to vector<32xf32>
    %129 = vector.shape_cast %128 : vector<32xf32> to vector<32x1xf32>
    %cst_41 = arith.constant 3.200000e+01 : f32
    %130 = vector.broadcast %cst_41 : f32 to vector<32x1xf32>
    %131 = arith.divf %129, %130 : vector<32x1xf32>
    %132 = vector.broadcast %131 : vector<32x1xf32> to vector<32x32xf32>
    %133 = arith.subf %123, %132 : vector<32x32xf32>
    %134 = arith.mulf %133, %133 : vector<32x32xf32>
    %cst_42 = arith.constant dense<0.000000e+00> : vector<32xf32>
    %135 = vector.multi_reduction <add>, %134, %cst_42 [1] : vector<32x32xf32> to vector<32xf32>
    %136 = vector.shape_cast %135 : vector<32xf32> to vector<32x1xf32>
    %cst_43 = arith.constant 3.200000e+01 : f32
    %137 = vector.broadcast %cst_43 : f32 to vector<32x1xf32>
    %138 = arith.divf %136, %137 : vector<32x1xf32>
    %139 = vector.broadcast %131 : vector<32x1xf32> to vector<32x32xf32>
    %140 = arith.subf %123, %139 : vector<32x32xf32>
    %cst_44 = arith.constant 9.99999974E-6 : f32
    %141 = vector.broadcast %cst_44 : f32 to vector<32x1xf32>
    %142 = arith.addf %138, %141 : vector<32x1xf32>
    %143 = math.rsqrt %142 : vector<32x1xf32>
    %144 = vector.broadcast %143 : vector<32x1xf32> to vector<32x32xf32>
    %145 = arith.mulf %140, %144 : vector<32x32xf32>
    %146 = vector.broadcast %125 : vector<1x32xf32> to vector<32x32xf32>
    %147 = arith.mulf %145, %146 : vector<32x32xf32>
    %148 = vector.broadcast %127 : vector<1x32xf32> to vector<32x32xf32>
    %149 = arith.addf %147, %148 : vector<32x32xf32>
    %150 = arith.truncf %149 : vector<32x32xf32> to vector<32x32xbf16>
    %c0_45 = arith.constant 0 : index
    %c0_46 = arith.constant 0 : index
    %c0_47 = arith.constant 0 : index
    %151 = vector.load %arg6[%c0_45, %c0_46, %c0_47] : memref<2x32x64xbf16, #tpu.memory_space<vmem>>, vector<1x32x64xbf16>
    %152 = vector.shape_cast %151 : vector<1x32x64xbf16> to vector<32x64xbf16>
    %cst_48 = arith.constant dense<0.000000e+00> : vector<32x64xf32>
    %153 = tpu.matmul %150, %152, %cst_48 {dimension_numbers = #tpu.dot_dimension_numbers<[1], [0], [0], [1], [0, 0, 1, 1], [], []>} : vector<32x32xbf16>, vector<32x64xbf16>, vector<32x64xf32> -> vector<32x64xf32>
    %c0_49 = arith.constant 0 : index
    %c0_50 = arith.constant 0 : index
    %c0_51 = arith.constant 0 : index
    %154 = vector.load %arg7[%c0_49, %c0_50, %c0_51] : memref<2x1x64xf32, #tpu.memory_space<vmem>>, vector<1x1x64xf32>
    %155 = vector.shape_cast %154 : vector<1x1x64xf32> to vector<1x64xf32>
    %156 = vector.broadcast %155 : vector<1x64xf32> to vector<32x64xf32>
    %157 = arith.addf %153, %156 : vector<32x64xf32>
    %cst_52 = arith.constant 0.000000e+00 : f32
    %158 = vector.broadcast %cst_52 : f32 to vector<32x64xf32>
    %159 = arith.maximumf %157, %158 : vector<32x64xf32>
    %160 = arith.truncf %159 : vector<32x64xf32> to vector<32x64xbf16>
    %c0_53 = arith.constant 0 : index
    %c0_54 = arith.constant 0 : index
    %c0_55 = arith.constant 0 : index
    %161 = vector.load %arg8[%c0_53, %c0_54, %c0_55] : memref<2x64x32xbf16, #tpu.memory_space<vmem>>, vector<1x64x32xbf16>
    %162 = vector.shape_cast %161 : vector<1x64x32xbf16> to vector<64x32xbf16>
    %cst_56 = arith.constant dense<0.000000e+00> : vector<32x32xf32>
    %163 = tpu.matmul %160, %162, %cst_56 {dimension_numbers = #tpu.dot_dimension_numbers<[1], [0], [0], [1], [0, 0, 1, 1], [], []>} : vector<32x64xbf16>, vector<64x32xbf16>, vector<32x32xf32> -> vector<32x32xf32>
    %c0_57 = arith.constant 0 : index
    %c0_58 = arith.constant 0 : index
    %c0_59 = arith.constant 0 : index
    %164 = vector.load %arg9[%c0_57, %c0_58, %c0_59] : memref<2x1x32xf32, #tpu.memory_space<vmem>>, vector<1x1x32xf32>
    %165 = vector.shape_cast %164 : vector<1x1x32xf32> to vector<1x32xf32>
    %166 = vector.broadcast %165 : vector<1x32xf32> to vector<32x32xf32>
    %167 = arith.addf %163, %166 : vector<32x32xf32>
    %168 = arith.addf %149, %167 : vector<32x32xf32>
    %c0_60 = arith.constant 0 : index
    %c0_61 = arith.constant 0 : index
    %c0_62 = arith.constant 0 : index
    %169 = vector.load %arg12[%c0_60, %c0_61, %c0_62] : memref<2x1x32xf32, #tpu.memory_space<vmem>>, vector<1x1x32xf32>
    %170 = vector.shape_cast %169 : vector<1x1x32xf32> to vector<1x32xf32>
    %c0_63 = arith.constant 0 : index
    %c0_64 = arith.constant 0 : index
    %c0_65 = arith.constant 0 : index
    %171 = vector.load %arg13[%c0_63, %c0_64, %c0_65] : memref<2x1x32xf32, #tpu.memory_space<vmem>>, vector<1x1x32xf32>
    %172 = vector.shape_cast %171 : vector<1x1x32xf32> to vector<1x32xf32>
    %cst_66 = arith.constant dense<0.000000e+00> : vector<32xf32>
    %173 = vector.multi_reduction <add>, %168, %cst_66 [1] : vector<32x32xf32> to vector<32xf32>
    %174 = vector.shape_cast %173 : vector<32xf32> to vector<32x1xf32>
    %cst_67 = arith.constant 3.200000e+01 : f32
    %175 = vector.broadcast %cst_67 : f32 to vector<32x1xf32>
    %176 = arith.divf %174, %175 : vector<32x1xf32>
    %177 = vector.broadcast %176 : vector<32x1xf32> to vector<32x32xf32>
    %178 = arith.subf %168, %177 : vector<32x32xf32>
    %179 = arith.mulf %178, %178 : vector<32x32xf32>
    %cst_68 = arith.constant dense<0.000000e+00> : vector<32xf32>
    %180 = vector.multi_reduction <add>, %179, %cst_68 [1] : vector<32x32xf32> to vector<32xf32>
    %181 = vector.shape_cast %180 : vector<32xf32> to vector<32x1xf32>
    %cst_69 = arith.constant 3.200000e+01 : f32
    %182 = vector.broadcast %cst_69 : f32 to vector<32x1xf32>
    %183 = arith.divf %181, %182 : vector<32x1xf32>
    %184 = vector.broadcast %176 : vector<32x1xf32> to vector<32x32xf32>
    %185 = arith.subf %168, %184 : vector<32x32xf32>
    %cst_70 = arith.constant 9.99999974E-6 : f32
    %186 = vector.broadcast %cst_70 : f32 to vector<32x1xf32>
    %187 = arith.addf %183, %186 : vector<32x1xf32>
    %188 = math.rsqrt %187 : vector<32x1xf32>
    %189 = vector.broadcast %188 : vector<32x1xf32> to vector<32x32xf32>
    %190 = arith.mulf %185, %189 : vector<32x32xf32>
    %191 = vector.broadcast %170 : vector<1x32xf32> to vector<32x32xf32>
    %192 = arith.mulf %190, %191 : vector<32x32xf32>
    %193 = vector.broadcast %172 : vector<1x32xf32> to vector<32x32xf32>
    %194 = arith.addf %192, %193 : vector<32x32xf32>
    %195 = arith.truncf %194 : vector<32x32xf32> to vector<32x32xbf16>
    %c1 = arith.constant 1 : index
    %c0_71 = arith.constant 0 : index
    %c0_72 = arith.constant 0 : index
    %196 = vector.load %arg2[%c1, %c0_71, %c0_72] : memref<2x32x96xbf16, #tpu.memory_space<vmem>>, vector<1x32x96xbf16>
    %197 = vector.shape_cast %196 : vector<1x32x96xbf16> to vector<32x96xbf16>
    %cst_73 = arith.constant dense<0.000000e+00> : vector<32x96xf32>
    %198 = tpu.matmul %195, %197, %cst_73 {dimension_numbers = #tpu.dot_dimension_numbers<[1], [0], [0], [1], [0, 0, 1, 1], [], []>} : vector<32x32xbf16>, vector<32x96xbf16>, vector<32x96xf32> -> vector<32x96xf32>
    %c1_74 = arith.constant 1 : index
    %c0_75 = arith.constant 0 : index
    %c0_76 = arith.constant 0 : index
    %199 = vector.load %arg3[%c1_74, %c0_75, %c0_76] : memref<2x1x96xf32, #tpu.memory_space<vmem>>, vector<1x1x96xf32>
    %200 = vector.shape_cast %199 : vector<1x1x96xf32> to vector<1x96xf32>
    %201 = vector.broadcast %200 : vector<1x96xf32> to vector<32x96xf32>
    %202 = arith.addf %198, %201 : vector<32x96xf32>
    %c1_77 = arith.constant 1 : index
    %c0_78 = arith.constant 0 : index
    %c0_79 = arith.constant 0 : index
    %203 = vector.load %arg4[%c1_77, %c0_78, %c0_79] : memref<2x32x32xbf16, #tpu.memory_space<vmem>>, vector<1x32x32xbf16>
    %204 = vector.shape_cast %203 : vector<1x32x32xbf16> to vector<32x32xbf16>
    %c1_80 = arith.constant 1 : index
    %c0_81 = arith.constant 0 : index
    %c0_82 = arith.constant 0 : index
    %205 = vector.load %arg5[%c1_80, %c0_81, %c0_82] : memref<2x1x32xf32, #tpu.memory_space<vmem>>, vector<1x1x32xf32>
    %206 = vector.shape_cast %205 : vector<1x1x32xf32> to vector<1x32xf32>
    %207 = vector.extract_strided_slice %202 {offsets = [0, 0], sizes = [32, 8], strides = [1, 1]} : vector<32x96xf32> to vector<32x8xf32>
    %208 = vector.shape_cast %207 : vector<32x8xf32> to vector<4x8x8xf32>
    %209 = vector.extract_strided_slice %202 {offsets = [0, 32], sizes = [32, 8], strides = [1, 1]} : vector<32x96xf32> to vector<32x8xf32>
    %210 = vector.shape_cast %209 : vector<32x8xf32> to vector<4x8x8xf32>
    %211 = vector.extract_strided_slice %202 {offsets = [0, 64], sizes = [32, 8], strides = [1, 1]} : vector<32x96xf32> to vector<32x8xf32>
    %212 = vector.shape_cast %211 : vector<32x8xf32> to vector<4x8x8xf32>
    %213 = arith.truncf %208 : vector<4x8x8xf32> to vector<4x8x8xbf16>
    %214 = arith.truncf %210 : vector<4x8x8xf32> to vector<4x8x8xbf16>
    "tpu.trace_start"() <{level = 10 : i32, message = "bqd,bkd->bqk"}> : () -> ()
    %cst_83 = arith.constant dense<0.000000e+00> : vector<4x8x8xf32>
    %215 = tpu.matmul %213, %214, %cst_83 {dimension_numbers = #tpu.dot_dimension_numbers<[2], [2], [1], [1], [0, 0, 0, 1, 1, 1], [0], [0]>} : vector<4x8x8xbf16>, vector<4x8x8xbf16>, vector<4x8x8xf32> -> vector<4x8x8xf32>
    "tpu.trace_stop"() : () -> ()
    %cst_84 = arith.constant dense<0xFF800000> : vector<4x8xf32>
    %216 = vector.multi_reduction <maximumf>, %215, %cst_84 [2] : vector<4x8x8xf32> to vector<4x8xf32>
    %217 = vector.shape_cast %216 : vector<4x8xf32> to vector<4x8x1xf32>
    %218 = vector.broadcast %217 : vector<4x8x1xf32> to vector<4x8x8xf32>
    %219 = arith.subf %215, %218 : vector<4x8x8xf32>
    %220 = math.exp %219 : vector<4x8x8xf32>
    %cst_85 = arith.constant dense<0.000000e+00> : vector<4x8xf32>
    %221 = vector.multi_reduction <add>, %220, %cst_85 [2] : vector<4x8x8xf32> to vector<4x8xf32>
    %222 = vector.shape_cast %221 : vector<4x8xf32> to vector<4x8x1xf32>
    %223 = tpu.reciprocal %222 {approx = true} : vector<4x8x1xf32> -> vector<4x8x1xf32>
    %224 = vector.broadcast %223 : vector<4x8x1xf32> to vector<4x8x8xf32>
    %225 = arith.mulf %220, %224 : vector<4x8x8xf32>
    %226 = arith.truncf %225 : vector<4x8x8xf32> to vector<4x8x8xbf16>
    %227 = arith.truncf %212 : vector<4x8x8xf32> to vector<4x8x8xbf16>
    "tpu.trace_start"() <{level = 10 : i32, message = "bqk,bkd->bqd"}> : () -> ()
    %cst_86 = arith.constant dense<0.000000e+00> : vector<4x8x8xf32>
    %228 = tpu.matmul %226, %227, %cst_86 {dimension_numbers = #tpu.dot_dimension_numbers<[2], [1], [1], [2], [0, 0, 0, 1, 1, 2], [0], [0]>} : vector<4x8x8xbf16>, vector<4x8x8xbf16>, vector<4x8x8xf32> -> vector<4x8x8xf32>
    "tpu.trace_stop"() : () -> ()
    %229 = vector.shape_cast %228 : vector<4x8x8xf32> to vector<32x8xf32>
    %230 = arith.truncf %229 : vector<32x8xf32> to vector<32x8xbf16>
    %231 = vector.extract_strided_slice %204 {offsets = [0, 0], sizes = [8, 32], strides = [1, 1]} : vector<32x32xbf16> to vector<8x32xbf16>
    %cst_87 = arith.constant dense<0.000000e+00> : vector<32x32xf32>
    %232 = tpu.matmul %230, %231, %cst_87 {dimension_numbers = #tpu.dot_dimension_numbers<[1], [0], [0], [1], [0, 0, 1, 1], [], []>} : vector<32x8xbf16>, vector<8x32xbf16>, vector<32x32xf32> -> vector<32x32xf32>
    %233 = vector.broadcast %206 : vector<1x32xf32> to vector<32x32xf32>
    %234 = arith.addf %233, %232 : vector<32x32xf32>
    %235 = vector.extract_strided_slice %202 {offsets = [0, 8], sizes = [32, 8], strides = [1, 1]} : vector<32x96xf32> to vector<32x8xf32>
    %236 = vector.shape_cast %235 : vector<32x8xf32> to vector<4x8x8xf32>
    %237 = vector.extract_strided_slice %202 {offsets = [0, 40], sizes = [32, 8], strides = [1, 1]} : vector<32x96xf32> to vector<32x8xf32>
    %238 = vector.shape_cast %237 : vector<32x8xf32> to vector<4x8x8xf32>
    %239 = vector.extract_strided_slice %202 {offsets = [0, 72], sizes = [32, 8], strides = [1, 1]} : vector<32x96xf32> to vector<32x8xf32>
    %240 = vector.shape_cast %239 : vector<32x8xf32> to vector<4x8x8xf32>
    %241 = arith.truncf %236 : vector<4x8x8xf32> to vector<4x8x8xbf16>
    %242 = arith.truncf %238 : vector<4x8x8xf32> to vector<4x8x8xbf16>
    "tpu.trace_start"() <{level = 10 : i32, message = "bqd,bkd->bqk"}> : () -> ()
    %cst_88 = arith.constant dense<0.000000e+00> : vector<4x8x8xf32>
    %243 = tpu.matmul %241, %242, %cst_88 {dimension_numbers = #tpu.dot_dimension_numbers<[2], [2], [1], [1], [0, 0, 0, 1, 1, 1], [0], [0]>} : vector<4x8x8xbf16>, vector<4x8x8xbf16>, vector<4x8x8xf32> -> vector<4x8x8xf32>
    "tpu.trace_stop"() : () -> ()
    %cst_89 = arith.constant dense<0xFF800000> : vector<4x8xf32>
    %244 = vector.multi_reduction <maximumf>, %243, %cst_89 [2] : vector<4x8x8xf32> to vector<4x8xf32>
    %245 = vector.shape_cast %244 : vector<4x8xf32> to vector<4x8x1xf32>
    %246 = vector.broadcast %245 : vector<4x8x1xf32> to vector<4x8x8xf32>
    %247 = arith.subf %243, %246 : vector<4x8x8xf32>
    %248 = math.exp %247 : vector<4x8x8xf32>
    %cst_90 = arith.constant dense<0.000000e+00> : vector<4x8xf32>
    %249 = vector.multi_reduction <add>, %248, %cst_90 [2] : vector<4x8x8xf32> to vector<4x8xf32>
    %250 = vector.shape_cast %249 : vector<4x8xf32> to vector<4x8x1xf32>
    %251 = tpu.reciprocal %250 {approx = true} : vector<4x8x1xf32> -> vector<4x8x1xf32>
    %252 = vector.broadcast %251 : vector<4x8x1xf32> to vector<4x8x8xf32>
    %253 = arith.mulf %248, %252 : vector<4x8x8xf32>
    %254 = arith.truncf %253 : vector<4x8x8xf32> to vector<4x8x8xbf16>
    %255 = arith.truncf %240 : vector<4x8x8xf32> to vector<4x8x8xbf16>
    "tpu.trace_start"() <{level = 10 : i32, message = "bqk,bkd->bqd"}> : () -> ()
    %cst_91 = arith.constant dense<0.000000e+00> : vector<4x8x8xf32>
    %256 = tpu.matmul %254, %255, %cst_91 {dimension_numbers = #tpu.dot_dimension_numbers<[2], [1], [1], [2], [0, 0, 0, 1, 1, 2], [0], [0]>} : vector<4x8x8xbf16>, vector<4x8x8xbf16>, vector<4x8x8xf32> -> vector<4x8x8xf32>
    "tpu.trace_stop"() : () -> ()
    %257 = vector.shape_cast %256 : vector<4x8x8xf32> to vector<32x8xf32>
    %258 = arith.truncf %257 : vector<32x8xf32> to vector<32x8xbf16>
    %259 = vector.extract_strided_slice %204 {offsets = [8, 0], sizes = [8, 32], strides = [1, 1]} : vector<32x32xbf16> to vector<8x32xbf16>
    %cst_92 = arith.constant dense<0.000000e+00> : vector<32x32xf32>
    %260 = tpu.matmul %258, %259, %cst_92 {dimension_numbers = #tpu.dot_dimension_numbers<[1], [0], [0], [1], [0, 0, 1, 1], [], []>} : vector<32x8xbf16>, vector<8x32xbf16>, vector<32x32xf32> -> vector<32x32xf32>
    %261 = arith.addf %234, %260 : vector<32x32xf32>
    %262 = vector.extract_strided_slice %202 {offsets = [0, 16], sizes = [32, 8], strides = [1, 1]} : vector<32x96xf32> to vector<32x8xf32>
    %263 = vector.shape_cast %262 : vector<32x8xf32> to vector<4x8x8xf32>
    %264 = vector.extract_strided_slice %202 {offsets = [0, 48], sizes = [32, 8], strides = [1, 1]} : vector<32x96xf32> to vector<32x8xf32>
    %265 = vector.shape_cast %264 : vector<32x8xf32> to vector<4x8x8xf32>
    %266 = vector.extract_strided_slice %202 {offsets = [0, 80], sizes = [32, 8], strides = [1, 1]} : vector<32x96xf32> to vector<32x8xf32>
    %267 = vector.shape_cast %266 : vector<32x8xf32> to vector<4x8x8xf32>
    %268 = arith.truncf %263 : vector<4x8x8xf32> to vector<4x8x8xbf16>
    %269 = arith.truncf %265 : vector<4x8x8xf32> to vector<4x8x8xbf16>
    "tpu.trace_start"() <{level = 10 : i32, message = "bqd,bkd->bqk"}> : () -> ()
    %cst_93 = arith.constant dense<0.000000e+00> : vector<4x8x8xf32>
    %270 = tpu.matmul %268, %269, %cst_93 {dimension_numbers = #tpu.dot_dimension_numbers<[2], [2], [1], [1], [0, 0, 0, 1, 1, 1], [0], [0]>} : vector<4x8x8xbf16>, vector<4x8x8xbf16>, vector<4x8x8xf32> -> vector<4x8x8xf32>
    "tpu.trace_stop"() : () -> ()
    %cst_94 = arith.constant dense<0xFF800000> : vector<4x8xf32>
    %271 = vector.multi_reduction <maximumf>, %270, %cst_94 [2] : vector<4x8x8xf32> to vector<4x8xf32>
    %272 = vector.shape_cast %271 : vector<4x8xf32> to vector<4x8x1xf32>
    %273 = vector.broadcast %272 : vector<4x8x1xf32> to vector<4x8x8xf32>
    %274 = arith.subf %270, %273 : vector<4x8x8xf32>
    %275 = math.exp %274 : vector<4x8x8xf32>
    %cst_95 = arith.constant dense<0.000000e+00> : vector<4x8xf32>
    %276 = vector.multi_reduction <add>, %275, %cst_95 [2] : vector<4x8x8xf32> to vector<4x8xf32>
    %277 = vector.shape_cast %276 : vector<4x8xf32> to vector<4x8x1xf32>
    %278 = tpu.reciprocal %277 {approx = true} : vector<4x8x1xf32> -> vector<4x8x1xf32>
    %279 = vector.broadcast %278 : vector<4x8x1xf32> to vector<4x8x8xf32>
    %280 = arith.mulf %275, %279 : vector<4x8x8xf32>
    %281 = arith.truncf %280 : vector<4x8x8xf32> to vector<4x8x8xbf16>
    %282 = arith.truncf %267 : vector<4x8x8xf32> to vector<4x8x8xbf16>
    "tpu.trace_start"() <{level = 10 : i32, message = "bqk,bkd->bqd"}> : () -> ()
    %cst_96 = arith.constant dense<0.000000e+00> : vector<4x8x8xf32>
    %283 = tpu.matmul %281, %282, %cst_96 {dimension_numbers = #tpu.dot_dimension_numbers<[2], [1], [1], [2], [0, 0, 0, 1, 1, 2], [0], [0]>} : vector<4x8x8xbf16>, vector<4x8x8xbf16>, vector<4x8x8xf32> -> vector<4x8x8xf32>
    "tpu.trace_stop"() : () -> ()
    %284 = vector.shape_cast %283 : vector<4x8x8xf32> to vector<32x8xf32>
    %285 = arith.truncf %284 : vector<32x8xf32> to vector<32x8xbf16>
    %286 = vector.extract_strided_slice %204 {offsets = [16, 0], sizes = [8, 32], strides = [1, 1]} : vector<32x32xbf16> to vector<8x32xbf16>
    %cst_97 = arith.constant dense<0.000000e+00> : vector<32x32xf32>
    %287 = tpu.matmul %285, %286, %cst_97 {dimension_numbers = #tpu.dot_dimension_numbers<[1], [0], [0], [1], [0, 0, 1, 1], [], []>} : vector<32x8xbf16>, vector<8x32xbf16>, vector<32x32xf32> -> vector<32x32xf32>
    %288 = arith.addf %261, %287 : vector<32x32xf32>
    %289 = vector.extract_strided_slice %202 {offsets = [0, 24], sizes = [32, 8], strides = [1, 1]} : vector<32x96xf32> to vector<32x8xf32>
    %290 = vector.shape_cast %289 : vector<32x8xf32> to vector<4x8x8xf32>
    %291 = vector.extract_strided_slice %202 {offsets = [0, 56], sizes = [32, 8], strides = [1, 1]} : vector<32x96xf32> to vector<32x8xf32>
    %292 = vector.shape_cast %291 : vector<32x8xf32> to vector<4x8x8xf32>
    %293 = vector.extract_strided_slice %202 {offsets = [0, 88], sizes = [32, 8], strides = [1, 1]} : vector<32x96xf32> to vector<32x8xf32>
    %294 = vector.shape_cast %293 : vector<32x8xf32> to vector<4x8x8xf32>
    %295 = arith.truncf %290 : vector<4x8x8xf32> to vector<4x8x8xbf16>
    %296 = arith.truncf %292 : vector<4x8x8xf32> to vector<4x8x8xbf16>
    "tpu.trace_start"() <{level = 10 : i32, message = "bqd,bkd->bqk"}> : () -> ()
    %cst_98 = arith.constant dense<0.000000e+00> : vector<4x8x8xf32>
    %297 = tpu.matmul %295, %296, %cst_98 {dimension_numbers = #tpu.dot_dimension_numbers<[2], [2], [1], [1], [0, 0, 0, 1, 1, 1], [0], [0]>} : vector<4x8x8xbf16>, vector<4x8x8xbf16>, vector<4x8x8xf32> -> vector<4x8x8xf32>
    "tpu.trace_stop"() : () -> ()
    %cst_99 = arith.constant dense<0xFF800000> : vector<4x8xf32>
    %298 = vector.multi_reduction <maximumf>, %297, %cst_99 [2] : vector<4x8x8xf32> to vector<4x8xf32>
    %299 = vector.shape_cast %298 : vector<4x8xf32> to vector<4x8x1xf32>
    %300 = vector.broadcast %299 : vector<4x8x1xf32> to vector<4x8x8xf32>
    %301 = arith.subf %297, %300 : vector<4x8x8xf32>
    %302 = math.exp %301 : vector<4x8x8xf32>
    %cst_100 = arith.constant dense<0.000000e+00> : vector<4x8xf32>
    %303 = vector.multi_reduction <add>, %302, %cst_100 [2] : vector<4x8x8xf32> to vector<4x8xf32>
    %304 = vector.shape_cast %303 : vector<4x8xf32> to vector<4x8x1xf32>
    %305 = tpu.reciprocal %304 {approx = true} : vector<4x8x1xf32> -> vector<4x8x1xf32>
    %306 = vector.broadcast %305 : vector<4x8x1xf32> to vector<4x8x8xf32>
    %307 = arith.mulf %302, %306 : vector<4x8x8xf32>
    %308 = arith.truncf %307 : vector<4x8x8xf32> to vector<4x8x8xbf16>
    %309 = arith.truncf %294 : vector<4x8x8xf32> to vector<4x8x8xbf16>
    "tpu.trace_start"() <{level = 10 : i32, message = "bqk,bkd->bqd"}> : () -> ()
    %cst_101 = arith.constant dense<0.000000e+00> : vector<4x8x8xf32>
    %310 = tpu.matmul %308, %309, %cst_101 {dimension_numbers = #tpu.dot_dimension_numbers<[2], [1], [1], [2], [0, 0, 0, 1, 1, 2], [0], [0]>} : vector<4x8x8xbf16>, vector<4x8x8xbf16>, vector<4x8x8xf32> -> vector<4x8x8xf32>
    "tpu.trace_stop"() : () -> ()
    %311 = vector.shape_cast %310 : vector<4x8x8xf32> to vector<32x8xf32>
    %312 = arith.truncf %311 : vector<32x8xf32> to vector<32x8xbf16>
    %313 = vector.extract_strided_slice %204 {offsets = [24, 0], sizes = [8, 32], strides = [1, 1]} : vector<32x32xbf16> to vector<8x32xbf16>
    %cst_102 = arith.constant dense<0.000000e+00> : vector<32x32xf32>
    %314 = tpu.matmul %312, %313, %cst_102 {dimension_numbers = #tpu.dot_dimension_numbers<[1], [0], [0], [1], [0, 0, 1, 1], [], []>} : vector<32x8xbf16>, vector<8x32xbf16>, vector<32x32xf32> -> vector<32x32xf32>
    %315 = arith.addf %288, %314 : vector<32x32xf32>
    %316 = arith.addf %194, %315 : vector<32x32xf32>
    %c1_103 = arith.constant 1 : index
    %c0_104 = arith.constant 0 : index
    %c0_105 = arith.constant 0 : index
    %317 = vector.load %arg10[%c1_103, %c0_104, %c0_105] : memref<2x1x32xf32, #tpu.memory_space<vmem>>, vector<1x1x32xf32>
    %318 = vector.shape_cast %317 : vector<1x1x32xf32> to vector<1x32xf32>
    %c1_106 = arith.constant 1 : index
    %c0_107 = arith.constant 0 : index
    %c0_108 = arith.constant 0 : index
    %319 = vector.load %arg11[%c1_106, %c0_107, %c0_108] : memref<2x1x32xf32, #tpu.memory_space<vmem>>, vector<1x1x32xf32>
    %320 = vector.shape_cast %319 : vector<1x1x32xf32> to vector<1x32xf32>
    %cst_109 = arith.constant dense<0.000000e+00> : vector<32xf32>
    %321 = vector.multi_reduction <add>, %316, %cst_109 [1] : vector<32x32xf32> to vector<32xf32>
    %322 = vector.shape_cast %321 : vector<32xf32> to vector<32x1xf32>
    %cst_110 = arith.constant 3.200000e+01 : f32
    %323 = vector.broadcast %cst_110 : f32 to vector<32x1xf32>
    %324 = arith.divf %322, %323 : vector<32x1xf32>
    %325 = vector.broadcast %324 : vector<32x1xf32> to vector<32x32xf32>
    %326 = arith.subf %316, %325 : vector<32x32xf32>
    %327 = arith.mulf %326, %326 : vector<32x32xf32>
    %cst_111 = arith.constant dense<0.000000e+00> : vector<32xf32>
    %328 = vector.multi_reduction <add>, %327, %cst_111 [1] : vector<32x32xf32> to vector<32xf32>
    %329 = vector.shape_cast %328 : vector<32xf32> to vector<32x1xf32>
    %cst_112 = arith.constant 3.200000e+01 : f32
    %330 = vector.broadcast %cst_112 : f32 to vector<32x1xf32>
    %331 = arith.divf %329, %330 : vector<32x1xf32>
    %332 = vector.broadcast %324 : vector<32x1xf32> to vector<32x32xf32>
    %333 = arith.subf %316, %332 : vector<32x32xf32>
    %cst_113 = arith.constant 9.99999974E-6 : f32
    %334 = vector.broadcast %cst_113 : f32 to vector<32x1xf32>
    %335 = arith.addf %331, %334 : vector<32x1xf32>
    %336 = math.rsqrt %335 : vector<32x1xf32>
    %337 = vector.broadcast %336 : vector<32x1xf32> to vector<32x32xf32>
    %338 = arith.mulf %333, %337 : vector<32x32xf32>
    %339 = vector.broadcast %318 : vector<1x32xf32> to vector<32x32xf32>
    %340 = arith.mulf %338, %339 : vector<32x32xf32>
    %341 = vector.broadcast %320 : vector<1x32xf32> to vector<32x32xf32>
    %342 = arith.addf %340, %341 : vector<32x32xf32>
    %343 = arith.truncf %342 : vector<32x32xf32> to vector<32x32xbf16>
    %c1_114 = arith.constant 1 : index
    %c0_115 = arith.constant 0 : index
    %c0_116 = arith.constant 0 : index
    %344 = vector.load %arg6[%c1_114, %c0_115, %c0_116] : memref<2x32x64xbf16, #tpu.memory_space<vmem>>, vector<1x32x64xbf16>
    %345 = vector.shape_cast %344 : vector<1x32x64xbf16> to vector<32x64xbf16>
    %cst_117 = arith.constant dense<0.000000e+00> : vector<32x64xf32>
    %346 = tpu.matmul %343, %345, %cst_117 {dimension_numbers = #tpu.dot_dimension_numbers<[1], [0], [0], [1], [0, 0, 1, 1], [], []>} : vector<32x32xbf16>, vector<32x64xbf16>, vector<32x64xf32> -> vector<32x64xf32>
    %c1_118 = arith.constant 1 : index
    %c0_119 = arith.constant 0 : index
    %c0_120 = arith.constant 0 : index
    %347 = vector.load %arg7[%c1_118, %c0_119, %c0_120] : memref<2x1x64xf32, #tpu.memory_space<vmem>>, vector<1x1x64xf32>
    %348 = vector.shape_cast %347 : vector<1x1x64xf32> to vector<1x64xf32>
    %349 = vector.broadcast %348 : vector<1x64xf32> to vector<32x64xf32>
    %350 = arith.addf %346, %349 : vector<32x64xf32>
    %cst_121 = arith.constant 0.000000e+00 : f32
    %351 = vector.broadcast %cst_121 : f32 to vector<32x64xf32>
    %352 = arith.maximumf %350, %351 : vector<32x64xf32>
    %353 = arith.truncf %352 : vector<32x64xf32> to vector<32x64xbf16>
    %c1_122 = arith.constant 1 : index
    %c0_123 = arith.constant 0 : index
    %c0_124 = arith.constant 0 : index
    %354 = vector.load %arg8[%c1_122, %c0_123, %c0_124] : memref<2x64x32xbf16, #tpu.memory_space<vmem>>, vector<1x64x32xbf16>
    %355 = vector.shape_cast %354 : vector<1x64x32xbf16> to vector<64x32xbf16>
    %cst_125 = arith.constant dense<0.000000e+00> : vector<32x32xf32>
    %356 = tpu.matmul %353, %355, %cst_125 {dimension_numbers = #tpu.dot_dimension_numbers<[1], [0], [0], [1], [0, 0, 1, 1], [], []>} : vector<32x64xbf16>, vector<64x32xbf16>, vector<32x32xf32> -> vector<32x32xf32>
    %c1_126 = arith.constant 1 : index
    %c0_127 = arith.constant 0 : index
    %c0_128 = arith.constant 0 : index
    %357 = vector.load %arg9[%c1_126, %c0_127, %c0_128] : memref<2x1x32xf32, #tpu.memory_space<vmem>>, vector<1x1x32xf32>
    %358 = vector.shape_cast %357 : vector<1x1x32xf32> to vector<1x32xf32>
    %359 = vector.broadcast %358 : vector<1x32xf32> to vector<32x32xf32>
    %360 = arith.addf %356, %359 : vector<32x32xf32>
    %361 = arith.addf %342, %360 : vector<32x32xf32>
    %c1_129 = arith.constant 1 : index
    %c0_130 = arith.constant 0 : index
    %c0_131 = arith.constant 0 : index
    %362 = vector.load %arg12[%c1_129, %c0_130, %c0_131] : memref<2x1x32xf32, #tpu.memory_space<vmem>>, vector<1x1x32xf32>
    %363 = vector.shape_cast %362 : vector<1x1x32xf32> to vector<1x32xf32>
    %c1_132 = arith.constant 1 : index
    %c0_133 = arith.constant 0 : index
    %c0_134 = arith.constant 0 : index
    %364 = vector.load %arg13[%c1_132, %c0_133, %c0_134] : memref<2x1x32xf32, #tpu.memory_space<vmem>>, vector<1x1x32xf32>
    %365 = vector.shape_cast %364 : vector<1x1x32xf32> to vector<1x32xf32>
    %cst_135 = arith.constant dense<0.000000e+00> : vector<32xf32>
    %366 = vector.multi_reduction <add>, %361, %cst_135 [1] : vector<32x32xf32> to vector<32xf32>
    %367 = vector.shape_cast %366 : vector<32xf32> to vector<32x1xf32>
    %cst_136 = arith.constant 3.200000e+01 : f32
    %368 = vector.broadcast %cst_136 : f32 to vector<32x1xf32>
    %369 = arith.divf %367, %368 : vector<32x1xf32>
    %370 = vector.broadcast %369 : vector<32x1xf32> to vector<32x32xf32>
    %371 = arith.subf %361, %370 : vector<32x32xf32>
    %372 = arith.mulf %371, %371 : vector<32x32xf32>
    %cst_137 = arith.constant dense<0.000000e+00> : vector<32xf32>
    %373 = vector.multi_reduction <add>, %372, %cst_137 [1] : vector<32x32xf32> to vector<32xf32>
    %374 = vector.shape_cast %373 : vector<32xf32> to vector<32x1xf32>
    %cst_138 = arith.constant 3.200000e+01 : f32
    %375 = vector.broadcast %cst_138 : f32 to vector<32x1xf32>
    %376 = arith.divf %374, %375 : vector<32x1xf32>
    %377 = vector.broadcast %369 : vector<32x1xf32> to vector<32x32xf32>
    %378 = arith.subf %361, %377 : vector<32x32xf32>
    %cst_139 = arith.constant 9.99999974E-6 : f32
    %379 = vector.broadcast %cst_139 : f32 to vector<32x1xf32>
    %380 = arith.addf %376, %379 : vector<32x1xf32>
    %381 = math.rsqrt %380 : vector<32x1xf32>
    %382 = vector.broadcast %381 : vector<32x1xf32> to vector<32x32xf32>
    %383 = arith.mulf %378, %382 : vector<32x32xf32>
    %384 = vector.broadcast %363 : vector<1x32xf32> to vector<32x32xf32>
    %385 = arith.mulf %383, %384 : vector<32x32xf32>
    %386 = vector.broadcast %365 : vector<1x32xf32> to vector<32x32xf32>
    %387 = arith.addf %385, %386 : vector<32x32xf32>
    %388 = vector.shape_cast %387 : vector<32x32xf32> to vector<4x8x32xf32>
    %389 = vector.extract_strided_slice %388 {offsets = [0, 7, 0], sizes = [4, 1, 32], strides = [1, 1, 1]} : vector<4x8x32xf32> to vector<4x1x32xf32>
    %390 = vector.shape_cast %389 : vector<4x1x32xf32> to vector<4x32xf32>
    %391 = arith.truncf %390 : vector<4x32xf32> to vector<4x32xbf16>
    %c0_140 = arith.constant 0 : index
    %c0_141 = arith.constant 0 : index
    %392 = vector.load %arg14[%c0_140, %c0_141] : memref<32x32xbf16, #tpu.memory_space<vmem>>, vector<32x32xbf16>
    %cst_142 = arith.constant dense<0.000000e+00> : vector<4x32xf32>
    %393 = tpu.matmul %391, %392, %cst_142 {dimension_numbers = #tpu.dot_dimension_numbers<[1], [0], [0], [1], [0, 0, 1, 1], [], []>} : vector<4x32xbf16>, vector<32x32xbf16>, vector<4x32xf32> -> vector<4x32xf32>
    %c0_143 = arith.constant 0 : index
    %c0_144 = arith.constant 0 : index
    %394 = vector.load %arg15[%c0_143, %c0_144] : memref<1x32xf32, #tpu.memory_space<vmem>>, vector<1x32xf32>
    %395 = vector.broadcast %394 : vector<1x32xf32> to vector<4x32xf32>
    %396 = arith.addf %393, %395 : vector<4x32xf32>
    %cst_145 = arith.constant 0.000000e+00 : f32
    %397 = vector.broadcast %cst_145 : f32 to vector<4x32xf32>
    %398 = arith.maximumf %396, %397 : vector<4x32xf32>
    %399 = arith.truncf %398 : vector<4x32xf32> to vector<4x32xbf16>
    %c0_146 = arith.constant 0 : index
    %c0_147 = arith.constant 0 : index
    %400 = vector.load %arg16[%c0_146, %c0_147] : memref<32x128xbf16, #tpu.memory_space<vmem>>, vector<32x128xbf16>
    %cst_148 = arith.constant dense<0.000000e+00> : vector<4x128xf32>
    %401 = tpu.matmul %399, %400, %cst_148 {dimension_numbers = #tpu.dot_dimension_numbers<[1], [0], [0], [1], [0, 0, 1, 1], [], []>} : vector<4x32xbf16>, vector<32x128xbf16>, vector<4x128xf32> -> vector<4x128xf32>
    %c0_149 = arith.constant 0 : index
    %c0_150 = arith.constant 0 : index
    %402 = vector.load %arg17[%c0_149, %c0_150] : memref<1x128xf32, #tpu.memory_space<vmem>>, vector<1x128xf32>
    %403 = vector.broadcast %402 : vector<1x128xf32> to vector<4x128xf32>
    %404 = arith.addf %401, %403 : vector<4x128xf32>
    %405 = vector.shape_cast %404 : vector<4x128xf32> to vector<1x4x128xf32>
    %c0_151 = arith.constant 0 : index
    %c0_152 = arith.constant 0 : index
    %c0_153 = arith.constant 0 : index
    %406 = vector.load %arg18[%c0_151, %c0_152, %c0_153] : memref<1x4x128xf32, #tpu.memory_space<vmem>>, vector<1x4x128xf32>
    tpu.vector_store %arg18[%c0_151, %c0_152, %c0_153], %405 {strides = array<i32>} : memref<1x4x128xf32, #tpu.memory_space<vmem>>, vector<1x4x128xf32>,
    return
  }
  func.func @transform_0(%arg0: i32) -> (i32, i32, i32) {
    %c0_i32 = arith.constant 0 : i32
    %c0_i32_0 = arith.constant 0 : i32
    %c0_i32_1 = arith.constant 0 : i32
    return %arg0, %c0_i32, %c0_i32_0 : i32, i32, i32
  }
  func.func @transform_1(%arg0: i32) -> (i32, i32, i32) {
    %c0_i32 = arith.constant 0 : i32
    %c0_i32_0 = arith.constant 0 : i32
    %c0_i32_1 = arith.constant 0 : i32
    %c0_i32_2 = arith.constant 0 : i32
    return %c0_i32, %c0_i32_0, %c0_i32_1 : i32, i32, i32
  }
  func.func @transform_2(%arg0: i32) -> (i32, i32, i32) {
    %c0_i32 = arith.constant 0 : i32
    %c0_i32_0 = arith.constant 0 : i32
    %c0_i32_1 = arith.constant 0 : i32
    %c0_i32_2 = arith.constant 0 : i32
    return %c0_i32, %c0_i32_0, %c0_i32_1 : i32, i32, i32
  }
  func.func @transform_3(%arg0: i32) -> (i32, i32, i32) {
    %c0_i32 = arith.constant 0 : i32
    %c0_i32_0 = arith.constant 0 : i32
    %c0_i32_1 = arith.constant 0 : i32
    %c0_i32_2 = arith.constant 0 : i32
    return %c0_i32, %c0_i32_0, %c0_i32_1 : i32, i32, i32
  }
  func.func @transform_4(%arg0: i32) -> (i32, i32, i32) {
    %c0_i32 = arith.constant 0 : i32
    %c0_i32_0 = arith.constant 0 : i32
    %c0_i32_1 = arith.constant 0 : i32
    %c0_i32_2 = arith.constant 0 : i32
    return %c0_i32, %c0_i32_0, %c0_i32_1 : i32, i32, i32
  }
  func.func @transform_5(%arg0: i32) -> (i32, i32, i32) {
    %c0_i32 = arith.constant 0 : i32
    %c0_i32_0 = arith.constant 0 : i32
    %c0_i32_1 = arith.constant 0 : i32
    %c0_i32_2 = arith.constant 0 : i32
    return %c0_i32, %c0_i32_0, %c0_i32_1 : i32, i32, i32
  }
  func.func @transform_6(%arg0: i32) -> (i32, i32, i32) {
    %c0_i32 = arith.constant 0 : i32
    %c0_i32_0 = arith.constant 0 : i32
    %c0_i32_1 = arith.constant 0 : i32
    %c0_i32_2 = arith.constant 0 : i32
    return %c0_i32, %c0_i32_0, %c0_i32_1 : i32, i32, i32
  }
  func.func @transform_7(%arg0: i32) -> (i32, i32, i32) {
    %c0_i32 = arith.constant 0 : i32
    %c0_i32_0 = arith.constant 0 : i32
    %c0_i32_1 = arith.constant 0 : i32
    %c0_i32_2 = arith.constant 0 : i32
    return %c0_i32, %c0_i32_0, %c0_i32_1 : i32, i32, i32
  }
  func.func @transform_8(%arg0: i32) -> (i32, i32, i32) {
    %c0_i32 = arith.constant 0 : i32
    %c0_i32_0 = arith.constant 0 : i32
    %c0_i32_1 = arith.constant 0 : i32
    %c0_i32_2 = arith.constant 0 : i32
    return %c0_i32, %c0_i32_0, %c0_i32_1 : i32, i32, i32
  }
  func.func @transform_9(%arg0: i32) -> (i32, i32, i32) {
    %c0_i32 = arith.constant 0 : i32
    %c0_i32_0 = arith.constant 0 : i32
    %c0_i32_1 = arith.constant 0 : i32
    %c0_i32_2 = arith.constant 0 : i32
    return %c0_i32, %c0_i32_0, %c0_i32_1 : i32, i32, i32
  }
  func.func @transform_10(%arg0: i32) -> (i32, i32, i32) {
    %c0_i32 = arith.constant 0 : i32
    %c0_i32_0 = arith.constant 0 : i32
    %c0_i32_1 = arith.constant 0 : i32
    %c0_i32_2 = arith.constant 0 : i32
    return %c0_i32, %c0_i32_0, %c0_i32_1 : i32, i32, i32
  }
  func.func @transform_11(%arg0: i32) -> (i32, i32, i32) {
    %c0_i32 = arith.constant 0 : i32
    %c0_i32_0 = arith.constant 0 : i32
    %c0_i32_1 = arith.constant 0 : i32
    %c0_i32_2 = arith.constant 0 : i32
    return %c0_i32, %c0_i32_0, %c0_i32_1 : i32, i32, i32
  }
  func.func @transform_12(%arg0: i32) -> (i32, i32, i32) {
    %c0_i32 = arith.constant 0 : i32
    %c0_i32_0 = arith.constant 0 : i32
    %c0_i32_1 = arith.constant 0 : i32
    %c0_i32_2 = arith.constant 0 : i32
    return %c0_i32, %c0_i32_0, %c0_i32_1 : i32, i32, i32
  }
  func.func @transform_13(%arg0: i32) -> (i32, i32) {
    %c0_i32 = arith.constant 0 : i32
    %c0_i32_0 = arith.constant 0 : i32
    %c0_i32_1 = arith.constant 0 : i32
    return %c0_i32, %c0_i32_0 : i32, i32
  }
  func.func @transform_14(%arg0: i32) -> (i32, i32) {
    %c0_i32 = arith.constant 0 : i32
    %c0_i32_0 = arith.constant 0 : i32
    %c0_i32_1 = arith.constant 0 : i32
    return %c0_i32, %c0_i32_0 : i32, i32
  }
  func.func @transform_15(%arg0: i32) -> (i32, i32) {
    %c0_i32 = arith.constant 0 : i32
    %c0_i32_0 = arith.constant 0 : i32
    %c0_i32_1 = arith.constant 0 : i32
    return %c0_i32, %c0_i32_0 : i32, i32
  }
  func.func @transform_16(%arg0: i32) -> (i32, i32) {
    %c0_i32 = arith.constant 0 : i32
    %c0_i32_0 = arith.constant 0 : i32
    %c0_i32_1 = arith.constant 0 : i32
    return %c0_i32, %c0_i32_0 : i32, i32
  }
  func.func @transform_17(%arg0: i32) -> (i32, i32, i32) {
    %c0_i32 = arith.constant 0 : i32
    %c0_i32_0 = arith.constant 0 : i32
    %c0_i32_1 = arith.constant 0 : i32
    return %arg0, %c0_i32, %c0_i32_0 : i32, i32, i32
  }
}

</mosaic_0001>

<llo_original>
// kernel: transformer_net.1
$region0: #{transformer_net.1}
  #allocation0 [shape = 'u32[]', space=smem, size = 0x4, offset = 0x4, fixed_abs, tag = 'smem constant byte address 0x4 - core index']
  #allocation1 [shape = 'u32[144,128]{1,0:T(1,128)}', space=vmem, size = 0x12000, scoped, tag = 'internal scratch']
  %s0 = inlined_call_operand.vmem [shape: f32[8,8,32], index: 0, kind: input, shape index: {}]
  %s1 = inlined_call_operand.vmem [shape: bf16[2,32,96], index: 1, kind: input, shape index: {}]
  %s2 = inlined_call_operand.vmem [shape: f32[2,1,96], index: 2, kind: input, shape index: {}]
  %s3 = inlined_call_operand.vmem [shape: bf16[2,32,32], index: 3, kind: input, shape index: {}]
  %s4 = inlined_call_operand.vmem [shape: f32[2,1,32], index: 4, kind: input, shape index: {}]
  %s5 = inlined_call_operand.vmem [shape: bf16[2,32,64], index: 5, kind: input, shape index: {}]
  %s6 = inlined_call_operand.vmem [shape: f32[2,1,64], index: 6, kind: input, shape index: {}]
  %s7 = inlined_call_operand.vmem [shape: bf16[2,64,32], index: 7, kind: input, shape index: {}]
  %s8 = inlined_call_operand.vmem [shape: f32[2,1,32], index: 8, kind: input, shape index: {}]
  %s9 = inlined_call_operand.vmem [shape: f32[2,1,32], index: 9, kind: input, shape index: {}]
  %s10 = inlined_call_operand.vmem [shape: f32[2,1,32], index: 10, kind: input, shape index: {}]
  %s11 = inlined_call_operand.vmem [shape: f32[2,1,32], index: 11, kind: input, shape index: {}]
  %s12 = inlined_call_operand.vmem [shape: f32[2,1,32], index: 12, kind: input, shape index: {}]
  %s13 = inlined_call_operand.vmem [shape: bf16[32,32], index: 13, kind: input, shape index: {}]
  %s14 = inlined_call_operand.vmem [shape: f32[1,32], index: 14, kind: input, shape index: {}]
  %s15 = inlined_call_operand.vmem [shape: bf16[32,128], index: 15, kind: input, shape index: {}]
  %s16 = inlined_call_operand.vmem [shape: f32[1,128], index: 16, kind: input, shape index: {}]
  %s17 = inlined_call_operand.vmem [shape: f32[2,4,128], index: 17, kind: output, shape index: {}]
  %s18 = sld [smem:[#allocation0]]
  $region101: #{transformer_net.1} parent=0
    _
  %s20 = ssub.s32 1, %s18
  %s21 = scalar_select 0, %s20, %s18
  loop: start=0, step=1, limit=4
  $region2: #{transformer_net.1} parent=0 // loop_pre_header
    _
  $region3: #{transformer_net.1} parent=0 // loop_header
    %s23 = sphi 0, %s27
    %p24 = scmp.ge.s32.totalorder %s23, 4
    %s33 = sphi 0, %s35
    %s36 = sphi 0, %s33
    %s37 = sphi 0, %s36
    %s53 = sphi 0, %s37
    %s57 = sphi 0, %s57
    %s59 = sphi 0, %s57
    %s60 = sphi 0, %s59
    %s74 = sphi 0, %s60
    %s78 = sphi 0, %s78
    %s80 = sphi 0, %s78
    %s81 = sphi 0, %s80
    %s95 = sphi 0, %s81
    %s99 = sphi 0, %s99
    %s101 = sphi 0, %s99
    %s102 = sphi 0, %s101
    %s116 = sphi 0, %s102
    %s120 = sphi 0, %s120
    %s122 = sphi 0, %s120
    %s123 = sphi 0, %s122
    %s137 = sphi 0, %s123
    %s141 = sphi 0, %s141
    %s143 = sphi 0, %s141
    %s144 = sphi 0, %s143
    %s158 = sphi 0, %s144
    %s162 = sphi 0, %s162
    %s164 = sphi 0, %s162
    %s165 = sphi 0, %s164
    %s179 = sphi 0, %s165
    %s183 = sphi 0, %s183
    %s185 = sphi 0, %s183
    %s186 = sphi 0, %s185
    %s200 = sphi 0, %s186
    %s204 = sphi 0, %s204
    %s206 = sphi 0, %s204
    %s207 = sphi 0, %s206
    %s221 = sphi 0, %s207
    %s225 = sphi 0, %s225
    %s227 = sphi 0, %s225
    %s228 = sphi 0, %s227
    %s242 = sphi 0, %s228
    %s246 = sphi 0, %s246
    %s248 = sphi 0, %s246
    %s249 = sphi 0, %s248
    %s263 = sphi 0, %s249
    %s267 = sphi 0, %s267
    %s269 = sphi 0, %s267
    %s270 = sphi 0, %s269
    %s284 = sphi 0, %s270
    %s288 = sphi 0, %s288
    %s290 = sphi 0, %s288
    %s291 = sphi 0, %s290
    %s305 = sphi 0, %s291
    %s309 = sphi 0, %s309
    %s311 = sphi 0, %s309
    %s312 = sphi 0, %s311
    %s326 = sphi 0, %s312
    %s330 = sphi 0, %s330
    %s332 = sphi 0, %s330
    %s333 = sphi 0, %s332
    %s347 = sphi 0, %s333
    %s351 = sphi 0, %s351
    %s353 = sphi 0, %s351
    %s354 = sphi 0, %s353
    %s368 = sphi 0, %s354
    %s372 = sphi 0, %s372
    %s374 = sphi 0, %s372
    %s375 = sphi 0, %s374
    %s389 = sphi 0, %s375
    %s395 = sphi 0, %s397
    %s398 = sphi 0, %s395
    %s399 = sphi 0, %s398
    %s415 = sphi 0, %s399
  $region4: #{transformer_net.1} parent=0 // loop_header_branch
    %26 = sbr.rel (%p24) target = $region8
  $region5: #{transformer_net.1} parent=0 // loop_body
    %s28 = ssub.s32 %s23, 1
    %s29 = ssub.s32 %s23, 2
    %s30 = sadd.s32 %s23, 1
    %s31 = ssub.s32 %s23, %s30
    %p32 = scmp.eq.s32.totalorder %s31, 0
    %s34 = sadd.s32 %s33, 1
    %s35 = scalar_select %p32, %s33, %s34
    %p38 = pneg %p32
    %p39 = scmp.eq.s32.totalorder %s23, 1
    %p40 = por %p38, %p39
    %p41 = scmp.ne.s32.totalorder %s33, %s36
    %p42 = scmp.eq.s32.totalorder %s23, 0
    %p43 = por %p41, %p42
    %p44 = scmp.ne.s32.totalorder %s33, %s36
    %p45 = scmp.eq.s32.totalorder %s28, 1
    %p46 = por %p44, %p45
    %p47 = scmp.ne.s32.totalorder %s36, %s37
    %p48 = scmp.eq.s32.totalorder %s28, 0
    %p49 = por %p47, %p48
    %p50 = scmp.ne.s32.totalorder %s36, %s37
    %p51 = scmp.eq.s32.totalorder %s29, 1
    %p52 = por %p50, %p51
    %p54 = scmp.ne.s32.totalorder %s37, %s53
    %p55 = scmp.eq.s32.totalorder %s29, 0
    %p56 = por %p54, %p55
    %s58 = sadd.s32 %s57, 1
    %p61 = scmp.eq.s32.totalorder %s23, 1
    %p62 = scmp.ne.s32.totalorder %s57, %s59
    %p63 = scmp.eq.s32.totalorder %s23, 0
    %p64 = por %p62, %p63
    %p65 = scmp.ne.s32.totalorder %s57, %s59
    %p66 = scmp.eq.s32.totalorder %s28, 1
    %p67 = por %p65, %p66
    %p68 = scmp.ne.s32.totalorder %s59, %s60
    %p69 = scmp.eq.s32.totalorder %s28, 0
    %p70 = por %p68, %p69
    %p71 = scmp.ne.s32.totalorder %s59, %s60
    %p72 = scmp.eq.s32.totalorder %s29, 1
    %p73 = por %p71, %p72
    %p75 = scmp.ne.s32.totalorder %s60, %s74
    %p76 = scmp.eq.s32.totalorder %s29, 0
    %p77 = por %p75, %p76
    %s79 = sadd.s32 %s78, 1
    %p82 = scmp.eq.s32.totalorder %s23, 1
    %p83 = scmp.ne.s32.totalorder %s78, %s80
    %p84 = scmp.eq.s32.totalorder %s23, 0
    %p85 = por %p83, %p84
    %p86 = scmp.ne.s32.totalorder %s78, %s80
    %p87 = scmp.eq.s32.totalorder %s28, 1
    %p88 = por %p86, %p87
    %p89 = scmp.ne.s32.totalorder %s80, %s81
    %p90 = scmp.eq.s32.totalorder %s28, 0
    %p91 = por %p89, %p90
    %p92 = scmp.ne.s32.totalorder %s80, %s81
    %p93 = scmp.eq.s32.totalorder %s29, 1
    %p94 = por %p92, %p93
    %p96 = scmp.ne.s32.totalorder %s81, %s95
    %p97 = scmp.eq.s32.totalorder %s29, 0
    %p98 = por %p96, %p97
    %s100 = sadd.s32 %s99, 1
    %p103 = scmp.eq.s32.totalorder %s23, 1
    %p104 = scmp.ne.s32.totalorder %s99, %s101
    %p105 = scmp.eq.s32.totalorder %s23, 0
    %p106 = por %p104, %p105
    %p107 = scmp.ne.s32.totalorder %s99, %s101
    %p108 = scmp.eq.s32.totalorder %s28, 1
    %p109 = por %p107, %p108
    %p110 = scmp.ne.s32.totalorder %s101, %s102
    %p111 = scmp.eq.s32.totalorder %s28, 0
    %p112 = por %p110, %p111
    %p113 = scmp.ne.s32.totalorder %s101, %s102
    %p114 = scmp.eq.s32.totalorder %s29, 1
    %p115 = por %p113, %p114
    %p117 = scmp.ne.s32.totalorder %s102, %s116
    %p118 = scmp.eq.s32.totalorder %s29, 0
    %p119 = por %p117, %p118
    %s121 = sadd.s32 %s120, 1
    %p124 = scmp.eq.s32.totalorder %s23, 1
    %p125 = scmp.ne.s32.totalorder %s120, %s122
    %p126 = scmp.eq.s32.totalorder %s23, 0
    %p127 = por %p125, %p126
    %p128 = scmp.ne.s32.totalorder %s120, %s122
    %p129 = scmp.eq.s32.totalorder %s28, 1
    %p130 = por %p128, %p129
    %p131 = scmp.ne.s32.totalorder %s122, %s123
    %p132 = scmp.eq.s32.totalorder %s28, 0
    %p133 = por %p131, %p132
    %p134 = scmp.ne.s32.totalorder %s122, %s123
    %p135 = scmp.eq.s32.totalorder %s29, 1
    %p136 = por %p134, %p135
    %p138 = scmp.ne.s32.totalorder %s123, %s137
    %p139 = scmp.eq.s32.totalorder %s29, 0
    %p140 = por %p138, %p139
    %s142 = sadd.s32 %s141, 1
    %p145 = scmp.eq.s32.totalorder %s23, 1
    %p146 = scmp.ne.s32.totalorder %s141, %s143
    %p147 = scmp.eq.s32.totalorder %s23, 0
    %p148 = por %p146, %p147
    %p149 = scmp.ne.s32.totalorder %s141, %s143
    %p150 = scmp.eq.s32.totalorder %s28, 1
    %p151 = por %p149, %p150
    %p152 = scmp.ne.s32.totalorder %s143, %s144
    %p153 = scmp.eq.s32.totalorder %s28, 0
    %p154 = por %p152, %p153
    %p155 = scmp.ne.s32.totalorder %s143, %s144
    %p156 = scmp.eq.s32.totalorder %s29, 1
    %p157 = por %p155, %p156
    %p159 = scmp.ne.s32.totalorder %s144, %s158
    %p160 = scmp.eq.s32.totalorder %s29, 0
    %p161 = por %p159, %p160
    %s163 = sadd.s32 %s162, 1
    %p166 = scmp.eq.s32.totalorder %s23, 1
    %p167 = scmp.ne.s32.totalorder %s162, %s164
    %p168 = scmp.eq.s32.totalorder %s23, 0
    %p169 = por %p167, %p168
    %p170 = scmp.ne.s32.totalorder %s162, %s164
    %p171 = scmp.eq.s32.totalorder %s28, 1
    %p172 = por %p170, %p171
    %p173 = scmp.ne.s32.totalorder %s164, %s165
    %p174 = scmp.eq.s32.totalorder %s28, 0
    %p175 = por %p173, %p174
    %p176 = scmp.ne.s32.totalorder %s164, %s165
    %p177 = scmp.eq.s32.totalorder %s29, 1
    %p178 = por %p176, %p177
    %p180 = scmp.ne.s32.totalorder %s165, %s179
    %p181 = scmp.eq.s32.totalorder %s29, 0
    %p182 = por %p180, %p181
    %s184 = sadd.s32 %s183, 1
    %p187 = scmp.eq.s32.totalorder %s23, 1
    %p188 = scmp.ne.s32.totalorder %s183, %s185
    %p189 = scmp.eq.s32.totalorder %s23, 0
    %p190 = por %p188, %p189
    %p191 = scmp.ne.s32.totalorder %s183, %s185
    %p192 = scmp.eq.s32.totalorder %s28, 1
    %p193 = por %p191, %p192
    %p194 = scmp.ne.s32.totalorder %s185, %s186
    %p195 = scmp.eq.s32.totalorder %s28, 0
    %p196 = por %p194, %p195
    %p197 = scmp.ne.s32.totalorder %s185, %s186
    %p198 = scmp.eq.s32.totalorder %s29, 1
    %p199 = por %p197, %p198
    %p201 = scmp.ne.s32.totalorder %s186, %s200
    %p202 = scmp.eq.s32.totalorder %s29, 0
    %p203 = por %p201, %p202
    %s205 = sadd.s32 %s204, 1
    %p208 = scmp.eq.s32.totalorder %s23, 1
    %p209 = scmp.ne.s32.totalorder %s204, %s206
    %p210 = scmp.eq.s32.totalorder %s23, 0
    %p211 = por %p209, %p210
    %p212 = scmp.ne.s32.totalorder %s204, %s206
    %p213 = scmp.eq.s32.totalorder %s28, 1
    %p214 = por %p212, %p213
    %p215 = scmp.ne.s32.totalorder %s206, %s207
    %p216 = scmp.eq.s32.totalorder %s28, 0
    %p217 = por %p215, %p216
    %p218 = scmp.ne.s32.totalorder %s206, %s207
    %p219 = scmp.eq.s32.totalorder %s29, 1
    %p220 = por %p218, %p219
    %p222 = scmp.ne.s32.totalorder %s207, %s221
    %p223 = scmp.eq.s32.totalorder %s29, 0
    %p224 = por %p222, %p223
    %s226 = sadd.s32 %s225, 1
    %p229 = scmp.eq.s32.totalorder %s23, 1
    %p230 = scmp.ne.s32.totalorder %s225, %s227
    %p231 = scmp.eq.s32.totalorder %s23, 0
    %p232 = por %p230, %p231
    %p233 = scmp.ne.s32.totalorder %s225, %s227
    %p234 = scmp.eq.s32.totalorder %s28, 1
    %p235 = por %p233, %p234
    %p236 = scmp.ne.s32.totalorder %s227, %s228
    %p237 = scmp.eq.s32.totalorder %s28, 0
    %p238 = por %p236, %p237
    %p239 = scmp.ne.s32.totalorder %s227, %s228
    %p240 = scmp.eq.s32.totalorder %s29, 1
    %p241 = por %p239, %p240
    %p243 = scmp.ne.s32.totalorder %s228, %s242
    %p244 = scmp.eq.s32.totalorder %s29, 0
    %p245 = por %p243, %p244
    %s247 = sadd.s32 %s246, 1
    %p250 = scmp.eq.s32.totalorder %s23, 1
    %p251 = scmp.ne.s32.totalorder %s246, %s248
    %p252 = scmp.eq.s32.totalorder %s23, 0
    %p253 = por %p251, %p252
    %p254 = scmp.ne.s32.totalorder %s246, %s248
    %p255 = scmp.eq.s32.totalorder %s28, 1
    %p256 = por %p254, %p255
    %p257 = scmp.ne.s32.totalorder %s248, %s249
    %p258 = scmp.eq.s32.totalorder %s28, 0
    %p259 = por %p257, %p258
    %p260 = scmp.ne.s32.totalorder %s248, %s249
    %p261 = scmp.eq.s32.totalorder %s29, 1
    %p262 = por %p260, %p261
    %p264 = scmp.ne.s32.totalorder %s249, %s263
    %p265 = scmp.eq.s32.totalorder %s29, 0
    %p266 = por %p264, %p265
    %s268 = sadd.s32 %s267, 1
    %p271 = scmp.eq.s32.totalorder %s23, 1
    %p272 = scmp.ne.s32.totalorder %s267, %s269
    %p273 = scmp.eq.s32.totalorder %s23, 0
    %p274 = por %p272, %p273
    %p275 = scmp.ne.s32.totalorder %s267, %s269
    %p276 = scmp.eq.s32.totalorder %s28, 1
    %p277 = por %p275, %p276
    %p278 = scmp.ne.s32.totalorder %s269, %s270
    %p279 = scmp.eq.s32.totalorder %s28, 0
    %p280 = por %p278, %p279
    %p281 = scmp.ne.s32.totalorder %s269, %s270
    %p282 = scmp.eq.s32.totalorder %s29, 1
    %p283 = por %p281, %p282
    %p285 = scmp.ne.s32.totalorder %s270, %s284
    %p286 = scmp.eq.s32.totalorder %s29, 0
    %p287 = por %p285, %p286
    %s289 = sadd.s32 %s288, 1
    %p292 = scmp.eq.s32.totalorder %s23, 1
    %p293 = scmp.ne.s32.totalorder %s288, %s290
    %p294 = scmp.eq.s32.totalorder %s23, 0
    %p295 = por %p293, %p294
    %p296 = scmp.ne.s32.totalorder %s288, %s290
    %p297 = scmp.eq.s32.totalorder %s28, 1
    %p298 = por %p296, %p297
    %p299 = scmp.ne.s32.totalorder %s290, %s291
    %p300 = scmp.eq.s32.totalorder %s28, 0
    %p301 = por %p299, %p300
    %p302 = scmp.ne.s32.totalorder %s290, %s291
    %p303 = scmp.eq.s32.totalorder %s29, 1
    %p304 = por %p302, %p303
    %p306 = scmp.ne.s32.totalorder %s291, %s305
    %p307 = scmp.eq.s32.totalorder %s29, 0
    %p308 = por %p306, %p307
    %s310 = sadd.s32 %s309, 1
    %p313 = scmp.eq.s32.totalorder %s23, 1
    %p314 = scmp.ne.s32.totalorder %s309, %s311
    %p315 = scmp.eq.s32.totalorder %s23, 0
    %p316 = por %p314, %p315
    %p317 = scmp.ne.s32.totalorder %s309, %s311
    %p318 = scmp.eq.s32.totalorder %s28, 1
    %p319 = por %p317, %p318
    %p320 = scmp.ne.s32.totalorder %s311, %s312
    %p321 = scmp.eq.s32.totalorder %s28, 0
    %p322 = por %p320, %p321
    %p323 = scmp.ne.s32.totalorder %s311, %s312
    %p324 = scmp.eq.s32.totalorder %s29, 1
    %p325 = por %p323, %p324
    %p327 = scmp.ne.s32.totalorder %s312, %s326
    %p328 = scmp.eq.s32.totalorder %s29, 0
    %p329 = por %p327, %p328
    %s331 = sadd.s32 %s330, 1
    %p334 = scmp.eq.s32.totalorder %s23, 1
    %p335 = scmp.ne.s32.totalorder %s330, %s332
    %p336 = scmp.eq.s32.totalorder %s23, 0
    %p337 = por %p335, %p336
    %p338 = scmp.ne.s32.totalorder %s330, %s332
    %p339 = scmp.eq.s32.totalorder %s28, 1
    %p340 = por %p338, %p339
    %p341 = scmp.ne.s32.totalorder %s332, %s333
    %p342 = scmp.eq.s32.totalorder %s28, 0
    %p343 = por %p341, %p342
    %p344 = scmp.ne.s32.totalorder %s332, %s333
    %p345 = scmp.eq.s32.totalorder %s29, 1
    %p346 = por %p344, %p345
    %p348 = scmp.ne.s32.totalorder %s333, %s347
    %p349 = scmp.eq.s32.totalorder %s29, 0
    %p350 = por %p348, %p349
    %s352 = sadd.s32 %s351, 1
    %p355 = scmp.eq.s32.totalorder %s23, 1
    %p356 = scmp.ne.s32.totalorder %s351, %s353
    %p357 = scmp.eq.s32.totalorder %s23, 0
    %p358 = por %p356, %p357
    %p359 = scmp.ne.s32.totalorder %s351, %s353
    %p360 = scmp.eq.s32.totalorder %s28, 1
    %p361 = por %p359, %p360
    %p362 = scmp.ne.s32.totalorder %s353, %s354
    %p363 = scmp.eq.s32.totalorder %s28, 0
    %p364 = por %p362, %p363
    %p365 = scmp.ne.s32.totalorder %s353, %s354
    %p366 = scmp.eq.s32.totalorder %s29, 1
    %p367 = por %p365, %p366
    %p369 = scmp.ne.s32.totalorder %s354, %s368
    %p370 = scmp.eq.s32.totalorder %s29, 0
    %p371 = por %p369, %p370
    %s373 = sadd.s32 %s372, 1
    %p376 = scmp.eq.s32.totalorder %s23, 1
    %p377 = scmp.ne.s32.totalorder %s372, %s374
    %p378 = scmp.eq.s32.totalorder %s23, 0
    %p379 = por %p377, %p378
    %p380 = scmp.ne.s32.totalorder %s372, %s374
    %p381 = scmp.eq.s32.totalorder %s28, 1
    %p382 = por %p380, %p381
    %p383 = scmp.ne.s32.totalorder %s374, %s375
    %p384 = scmp.eq.s32.totalorder %s28, 0
    %p385 = por %p383, %p384
    %p386 = scmp.ne.s32.totalorder %s374, %s375
    %p387 = scmp.eq.s32.totalorder %s29, 1
    %p388 = por %p386, %p387
    %p390 = scmp.ne.s32.totalorder %s375, %s389
    %p391 = scmp.eq.s32.totalorder %s29, 0
    %p392 = por %p390, %p391
    %s393 = ssub.s32 %s23, %s30
    %p394 = scmp.eq.s32.totalorder %s393, 0
    %s396 = sadd.s32 %s395, 1
    %s397 = scalar_select %p394, %s395, %s396
    %p400 = pneg %p394
    %p401 = scmp.eq.s32.totalorder %s23, 1
    %p402 = por %p400, %p401
    %p403 = scmp.ne.s32.totalorder %s395, %s398
    %p404 = scmp.eq.s32.totalorder %s23, 0
    %p405 = por %p403, %p404
    %p406 = scmp.ne.s32.totalorder %s395, %s398
    %p407 = scmp.eq.s32.totalorder %s28, 1
    %p408 = por %p406, %p407
    %p409 = scmp.ne.s32.totalorder %s398, %s399
    %p410 = scmp.eq.s32.totalorder %s28, 0
    %p411 = por %p409, %p410
    %p412 = scmp.ne.s32.totalorder %s398, %s399
    %p413 = scmp.eq.s32.totalorder %s29, 1
    %p414 = por %p412, %p413
    %p416 = scmp.ne.s32.totalorder %s399, %s415
    %p417 = scmp.eq.s32.totalorder %s29, 0
    %p418 = por %p416, %p417
    %p419 = scmp.le.s32.totalorder 1, %s23
    %p420 = scmp.lt.s32.totalorder %s23, 3
    %p421 = pnand %p419, %p420
    %p422 = pneg %p421
    // Predicated region
    $region9: #{transformer_net.1} parent=5 // pred_check
      _
    $region10: #{transformer_net.1} parent=5 // pred_check_branch
      %424 = sbr.rel (%p421) target = $region12
    $region11: #{transformer_net.1} parent=5 // pred_region
      %s425 = ssub.s32 %s23, 1
      // Predicated region
      $region13: #{transformer_net.1} parent=11 // pred_check
        %p426 = pneg %p70
      $region14: #{transformer_net.1} parent=11 // pred_check_branch
        %428 = sbr.rel (%p426) target = $region16
      $region15: #{transformer_net.1} parent=11 // pred_region
        _
      $region16: #{transformer_net.1} parent=11 // pred_fallthru
        _
      // Predicated region
      $region17: #{transformer_net.1} parent=11 // pred_check
        %p429 = pneg %p91
      $region18: #{transformer_net.1} parent=11 // pred_check_branch
        %431 = sbr.rel (%p429) target = $region20
      $region19: #{transformer_net.1} parent=11 // pred_region
        _
      $region20: #{transformer_net.1} parent=11 // pred_fallthru
        _
      // Predicated region
      $region21: #{transformer_net.1} parent=11 // pred_check
        %p432 = pneg %p112
      $region22: #{transformer_net.1} parent=11 // pred_check_branch
        %434 = sbr.rel (%p432) target = $region24
      $region23: #{transformer_net.1} parent=11 // pred_region
        _
      $region24: #{transformer_net.1} parent=11 // pred_fallthru
        _
      // Predicated region
      $region25: #{transformer_net.1} parent=11 // pred_check
        %p435 = pneg %p133
      $region26: #{transformer_net.1} parent=11 // pred_check_branch
        %437 = sbr.rel (%p435) target = $region28
      $region27: #{transformer_net.1} parent=11 // pred_region
        _
      $region28: #{transformer_net.1} parent=11 // pred_fallthru
        _
      // Predicated region
      $region29: #{transformer_net.1} parent=11 // pred_check
        %p438 = pneg %p154
      $region30: #{transformer_net.1} parent=11 // pred_check_branch
        %440 = sbr.rel (%p438) target = $region32
      $region31: #{transformer_net.1} parent=11 // pred_region
        _
      $region32: #{transformer_net.1} parent=11 // pred_fallthru
        _
      // Predicated region
      $region33: #{transformer_net.1} parent=11 // pred_check
        %p441 = pneg %p175
      $region34: #{transformer_net.1} parent=11 // pred_check_branch
        %443 = sbr.rel (%p441) target = $region36
      $region35: #{transformer_net.1} parent=11 // pred_region
        _
      $region36: #{transformer_net.1} parent=11 // pred_fallthru
        _
      // Predicated region
      $region37: #{transformer_net.1} parent=11 // pred_check
        %p444 = pneg %p196
      $region38: #{transformer_net.1} parent=11 // pred_check_branch
        %446 = sbr.rel (%p444) target = $region40
      $region39: #{transformer_net.1} parent=11 // pred_region
        _
      $region40: #{transformer_net.1} parent=11 // pred_fallthru
        _
      // Predicated region
      $region41: #{transformer_net.1} parent=11 // pred_check
        %p447 = pneg %p217
      $region42: #{transformer_net.1} parent=11 // pred_check_branch
        %449 = sbr.rel (%p447) target = $region44
      $region43: #{transformer_net.1} parent=11 // pred_region
        _
      $region44: #{transformer_net.1} parent=11 // pred_fallthru
        _
      // Predicated region
      $region45: #{transformer_net.1} parent=11 // pred_check
        %p450 = pneg %p238
      $region46: #{transformer_net.1} parent=11 // pred_check_branch
        %452 = sbr.rel (%p450) target = $region48
      $region47: #{transformer_net.1} parent=11 // pred_region
        _
      $region48: #{transformer_net.1} parent=11 // pred_fallthru
        _
      // Predicated region
      $region49: #{transformer_net.1} parent=11 // pred_check
        %p453 = pneg %p259
      $region50: #{transformer_net.1} parent=11 // pred_check_branch
        %455 = sbr.rel (%p453) target = $region52
      $region51: #{transformer_net.1} parent=11 // pred_region
        _
      $region52: #{transformer_net.1} parent=11 // pred_fallthru
        _
      // Predicated region
      $region53: #{transformer_net.1} parent=11 // pred_check
        %p456 = pneg %p280
      $region54: #{transformer_net.1} parent=11 // pred_check_branch
        %458 = sbr.rel (%p456) target = $region56
      $region55: #{transformer_net.1} parent=11 // pred_region
        _
      $region56: #{transformer_net.1} parent=11 // pred_fallthru
        _
      // Predicated region
      $region57: #{transformer_net.1} parent=11 // pred_check
        %p459 = pneg %p301
      $region58: #{transformer_net.1} parent=11 // pred_check_branch
        %461 = sbr.rel (%p459) target = $region60
      $region59: #{transformer_net.1} parent=11 // pred_region
        _
      $region60: #{transformer_net.1} parent=11 // pred_fallthru
        _
      // Predicated region
      $region61: #{transformer_net.1} parent=11 // pred_check
        %p462 = pneg %p322
      $region62: #{transformer_net.1} parent=11 // pred_check_branch
        %464 = sbr.rel (%p462) target = $region64
      $region63: #{transformer_net.1} parent=11 // pred_region
        _
      $region64: #{transformer_net.1} parent=11 // pred_fallthru
        _
      // Predicated region
      $region65: #{transformer_net.1} parent=11 // pred_check
        %p465 = pneg %p343
      $region66: #{transformer_net.1} parent=11 // pred_check_branch
        %467 = sbr.rel (%p465) target = $region68
      $region67: #{transformer_net.1} parent=11 // pred_region
        _
      $region68: #{transformer_net.1} parent=11 // pred_fallthru
        _
      // Predicated region
      $region69: #{transformer_net.1} parent=11 // pred_check
        %p468 = pneg %p364
      $region70: #{transformer_net.1} parent=11 // pred_check_branch
        %470 = sbr.rel (%p468) target = $region72
      $region71: #{transformer_net.1} parent=11 // pred_region
        _
      $region72: #{transformer_net.1} parent=11 // pred_fallthru
        _
      // Predicated region
      $region73: #{transformer_net.1} parent=11 // pred_check
        %p471 = pneg %p385
      $region74: #{transformer_net.1} parent=11 // pred_check_branch
        %473 = sbr.rel (%p471) target = $region76
      $region75: #{transformer_net.1} parent=11 // pred_region
        _
      $region76: #{transformer_net.1} parent=11 // pred_fallthru
        _
    $region12: #{transformer_net.1} parent=5 // pred_fallthru
      _
    %p474 = scmp.lt.s32.totalorder %s23, 2
    // Predicated region
    $region77: #{transformer_net.1} parent=5 // pred_check
      %p475 = pneg %p474
    $region78: #{transformer_net.1} parent=5 // pred_check_branch
      %477 = sbr.rel (%p475) target = $region80
    $region79: #{transformer_net.1} parent=5 // pred_region
      // Predicated region
      $region81: #{transformer_net.1} parent=79 // pred_check
        %p478 = pneg %p43
      $region82: #{transformer_net.1} parent=79 // pred_check_branch
        %480 = sbr.rel (%p478) target = $region84
      $region83: #{transformer_net.1} parent=79 // pred_region
        %s481 = smul.u32 4, %s23
        %p482 = scmp.lt.s32.totalorder %s481, 7
        %s483 = scalar_select %p482, %s481, 7
        %s484 = smul.addr %s483, 8
        %s485 = scalar_lea.vmem %s0, %s484
        %s486 = smul.u32 4, %s23
      $region84: #{transformer_net.1} parent=79 // pred_fallthru
        _
    $region80: #{transformer_net.1} parent=5 // pred_fallthru
      _
    %p487 = scmp.le.s32.totalorder 1, %s23
    %p488 = scmp.lt.s32.totalorder %s23, 3
    %p489 = pnand %p487, %p488
    %p490 = pneg %p489
    // Predicated region
    $region85: #{transformer_net.1} parent=5 // pred_check
      _
    $region86: #{transformer_net.1} parent=5 // pred_check_branch
      %492 = sbr.rel (%p489) target = $region88
    $region87: #{transformer_net.1} parent=5 // pred_region
      %s493 = ssub.s32 %s23, 1
      %s494 = smul.u32 4, %s28
      %p495 = scmp.lt.s32.totalorder %s494, 7
      %s496 = scalar_select %p495, %s494, 7
      %s497 = smul.addr %s496, 8
      %s498 = scalar_lea.vmem %s0, %s497
      %p499 = pneg %p49
      %p500 = pneg %p46
      %p501 = pneg %p70
      %p502 = pneg %p67
      %p503 = pneg %p91
      %p504 = pneg %p88
      %p505 = pneg %p112
      %p506 = pneg %p109
      %p507 = pneg %p133
      %p508 = pneg %p130
      %p509 = pneg %p154
      %p510 = pneg %p151
      %p511 = pneg %p175
      %p512 = pneg %p172
      %p513 = pneg %p196
      %p514 = pneg %p193
      %p515 = pneg %p217
      %p516 = pneg %p214
      %p517 = pneg %p238
      %p518 = pneg %p235
      %p519 = pneg %p259
      %p520 = pneg %p256
      %p521 = pneg %p280
      %p522 = pneg %p277
      %p523 = pneg %p301
      %p524 = pneg %p298
      %p525 = pneg %p322
      %p526 = pneg %p319
      %p527 = pneg %p343
      %p528 = pneg %p340
      %p529 = pneg %p364
      %p530 = pneg %p361
      %p531 = pneg %p385
      %p532 = pneg %p382
      %p533 = pneg %p411
      %p534 = pneg %p408
      %p535 = scmp.lt.s32.totalorder %s28, 1
      %s536 = scalar_select %p535, %s28, 1
      %s537 = smul.addr %s536, 4
      %s538 = scalar_lea.vmem %s17, %s537
      %s539 = smul.u32 4, %s28
      %p540 = scmp.lt.s32.totalorder %s539, 7
      %s541 = scalar_select %p540, %s539, 7
      %s542 = smul.addr %s541, 8
      %s543 = scalar_lea.vmem %s0, %s542
      %s544 = smul.u32 4, %s28
      %p545 = scmp.lt.s32.totalorder %s28, 1
      %s546 = scalar_select %p545, %s28, 1
      %s547 = smul.addr %s546, 4
      %s548 = scalar_lea.vmem %s17, %s547
      %v550 = vld [vmem:[%s543] sm:$0xff]
      %v551 = vld [vmem:[%s543 + $0x8] sm:$0xff]
      %v552 = vld [vmem:[%s543 + $0x10] sm:$0xff]
      %v553 = vld [vmem:[%s543 + $0x18] sm:$0xff]
      %v554 = vpack.c.bf16 %v551, %v550
      %v555 = vpack.c.bf16 %v553, %v552
      %v556 = vld [vmem:[%s1] sm:$0xf]
      %v557 = vld [vmem:[%s1 + $0x4] sm:$0xf]
      %v558 = vld [vmem:[%s1 + $0x8] sm:$0xf]
      %v559 = vld [vmem:[%s1 + $0xc] sm:$0xf]
      %v560 = vld [vmem:[%s2] sm:$0x1]
      %v562 = vlaneseq
      %v563 = vshrl.u32 %v562, 7
      %v564 = vsub.s32 0, %v563
      %v565 = vrot.slane %v560, %v564
      %v571 = vunpack.c.l.b16 %v556
      %v572 = vunpack.c.l.b16 %v557
      %v573 = vunpack.c.l.b16 %v558
      %v574 = vunpack.c.l.b16 %v559
      %v575 = vpack.c.b16 %v572, %v571
      %v576 = vpack.c.b16 %v574, %v573
      %vm579 = vcmask 261120
      %v581 = vsel %vm579, %v554, 0
      %v584 = vsel %vm579, %v555, 0
      %586 = vmatprep.subr.bf16.mxu0 0
      %587 = vmatpush1.bf16.msra.mxu0 %v575
      %588 = vmatprep.subr.bf16.mxu0 0
      %589 = vmatpush1.bf16.msra.mxu0 %v576
      %590 = vmatprep.subr.bf16.mxu0 0
      %591 = vmatpush1.bf16.msra.mxu0 0
      %592 = vmatprep.subr.bf16.mxu0 0
      %593 = vmatpush1.bf16.msra.mxu0 0
      %594 = vmatprep.subr.bf16.mxu0 0
      %595 = vmatpush1.bf16.msra.mxu0 0
      %596 = vmatprep.subr.bf16.mxu0 0
      %597 = vmatpush1.bf16.msra.mxu0 0
      %598 = vmatprep.subr.bf16.mxu0 0
      %599 = vmatpush1.bf16.msra.mxu0 0
      %600 = vmatprep.subr.bf16.mxu0 0
      %601 = vmatpush1.bf16.msra.mxu0 0
      %602 = vmatprep.subr.bf16.mxu0 0
      %603 = vmatpush1.bf16.msra.mxu0 0
      %604 = vmatprep.subr.bf16.mxu0 0
      %605 = vmatpush1.bf16.msra.mxu0 0
      %606 = vmatprep.subr.bf16.mxu0 0
      %607 = vmatpush1.bf16.msra.mxu0 0
      %608 = vmatprep.subr.bf16.mxu0 0
      %609 = vmatpush1.bf16.msra.mxu0 0
      %610 = vmatprep.subr.bf16.mxu0 0
      %611 = vmatpush1.bf16.msra.mxu0 0
      %612 = vmatprep.subr.bf16.mxu0 0
      %613 = vmatpush1.bf16.msra.mxu0 0
      %614 = vmatprep.subr.bf16.mxu0 0
      %615 = vmatpush1.bf16.msra.mxu0 0
      %616 = vmatprep.subr.bf16.mxu0 0
      %617 = vmatpush1.bf16.msra.mxu0 0
      %618 = vmatprep.mubr.bf16.mxu0 0
      %619 = vmatmul.mubr.bf16.gmra.mrb[0].mxu0 %v581
      %v620 = vpop.f32.mrb[0].mxu0
      %v621 = vadd.f32 %v565, %v620
      %v622 = vpop.f32.mrb[0].mxu0
      %v623 = vpop.f32.mrb[0].mxu0
      %v624 = vadd.f32 %v565, %v623
      %v625 = vpop.f32.mrb[0].mxu0
      %626 = vmatprep.mubr.bf16.mxu0 0
      %627 = vmatmul.mubr.bf16.gmra.mrb[0].mxu0 %v584
      %v628 = vpop.f32.mrb[0].mxu0
      %v629 = vadd.f32 %v565, %v628
      %v630 = vpop.f32.mrb[0].mxu0
      %v631 = vpop.f32.mrb[0].mxu0
      %v632 = vadd.f32 %v565, %v631
      %v633 = vpop.f32.mrb[0].mxu0
      %634 = vdwg.mxu0
      %v635 = vld [vmem:[%s3] sm:$0xf]
      %v636 = vld [vmem:[%s3 + $0x4] sm:$0xf]
      %v637 = vld [vmem:[%s3 + $0x8] sm:$0xf]
      %v638 = vld [vmem:[%s3 + $0xc] sm:$0xf]
      %v639 = vld [vmem:[%s4] sm:$0x1]
      %v640 = vpack.c.bf16 %v621, %v621
      %v641 = vpack.c.bf16 %v624, %v624
      %v642 = vpack.c.bf16 %v629, %v629
      %v643 = vpack.c.bf16 %v632, %v632
      %645 = vrot.lane.b32.xlu0 %v640, 96
      %v646 = vpop.permute.xlu0 %645
      %vm647 = vcmask 64512
      %v649 = vsel %vm647, %v640, 0
      %v652 = vsel %vm647, %v646, 0
      %654 = vmatprep.subr.bf16.mxu0 0
      %655 = vmatpush1.bf16.xpose.msra.mxu0 %v652
      %656 = vmatprep.subr.bf16.mxu0 0
      %657 = vmatpush1.bf16.xpose.msra.mxu0 0
      %658 = vmatprep.subr.bf16.mxu0 0
      %659 = vmatpush1.bf16.xpose.msra.mxu0 0
      %660 = vmatprep.subr.bf16.mxu0 0
      %661 = vmatpush1.bf16.xpose.msra.mxu0 0
      %662 = vmatprep.subr.bf16.mxu0 0
      %663 = vmatpush1.bf16.xpose.msra.mxu0 0
      %664 = vmatprep.subr.bf16.mxu0 0
      %665 = vmatpush1.bf16.xpose.msra.mxu0 0
      %666 = vmatprep.subr.bf16.mxu0 0
      %667 = vmatpush1.bf16.xpose.msra.mxu0 0
      %668 = vmatprep.subr.bf16.mxu0 0
      %669 = vmatpush1.bf16.xpose.msra.mxu0 0
      %670 = vmatprep.subr.bf16.mxu0 0
      %671 = vmatpush1.bf16.xpose.msra.mxu0 0
      %672 = vmatprep.subr.bf16.mxu0 0
      %673 = vmatpush1.bf16.xpose.msra.mxu0 0
      %674 = vmatprep.subr.bf16.mxu0 0
      %675 = vmatpush1.bf16.xpose.msra.mxu0 0
      %676 = vmatprep.subr.bf16.mxu0 0
      %677 = vmatpush1.bf16.xpose.msra.mxu0 0
      %678 = vmatprep.subr.bf16.mxu0 0
      %679 = vmatpush1.bf16.xpose.msra.mxu0 0
      %680 = vmatprep.subr.bf16.mxu0 0
      %681 = vmatpush1.bf16.xpose.msra.mxu0 0
      %682 = vmatprep.subr.bf16.mxu0 0
      %683 = vmatpush1.bf16.xpose.msra.mxu0 0
      %684 = vmatprep.subr.bf16.mxu0 0
      %685 = vmatpush1.bf16.xpose.msra.mxu0 0
      %686 = vmatprep.mubr.bf16.mxu0 0
      %687 = vmatmul.mubr.bf16.gmra.mrb[0].mxu0 %v649
      %v688 = vpop.f32.mrb[0].mxu0
      %v689 = vadd.f32 0.0, %v688
      %v690 = vpop.f32.mrb[0].mxu0
      %v691 = vpop.f32.mrb[0].mxu0
      %v692 = vpop.f32.mrb[0].mxu0
      %693 = vdwg.mxu0
      %695 = vrot.lane.b32.xlu0 %v641, 96
      %v696 = vpop.permute.xlu0 %695
      %v698 = vsel %vm647, %v641, 0
      %v701 = vsel %vm647, %v696, 0
      %703 = vmatprep.subr.bf16.mxu0 0
      %704 = vmatpush1.bf16.xpose.msra.mxu0 %v701
      %705 = vmatprep.subr.bf16.mxu0 0
      %706 = vmatpush1.bf16.xpose.msra.mxu0 0
      %707 = vmatprep.subr.bf16.mxu0 0
      %708 = vmatpush1.bf16.xpose.msra.mxu0 0
      %709 = vmatprep.subr.bf16.mxu0 0
      %710 = vmatpush1.bf16.xpose.msra.mxu0 0
      %711 = vmatprep.subr.bf16.mxu0 0
      %712 = vmatpush1.bf16.xpose.msra.mxu0 0
      %713 = vmatprep.subr.bf16.mxu0 0
      %714 = vmatpush1.bf16.xpose.msra.mxu0 0
      %715 = vmatprep.subr.bf16.mxu0 0
      %716 = vmatpush1.bf16.xpose.msra.mxu0 0
      %717 = vmatprep.subr.bf16.mxu0 0
      %718 = vmatpush1.bf16.xpose.msra.mxu0 0
      %719 = vmatprep.subr.bf16.mxu0 0
      %720 = vmatpush1.bf16.xpose.msra.mxu0 0
      %721 = vmatprep.subr.bf16.mxu0 0
      %722 = vmatpush1.bf16.xpose.msra.mxu0 0
      %723 = vmatprep.subr.bf16.mxu0 0
      %724 = vmatpush1.bf16.xpose.msra.mxu0 0
      %725 = vmatprep.subr.bf16.mxu0 0
      %726 = vmatpush1.bf16.xpose.msra.mxu0 0
      %727 = vmatprep.subr.bf16.mxu0 0
      %728 = vmatpush1.bf16.xpose.msra.mxu0 0
      %729 = vmatprep.subr.bf16.mxu0 0
      %730 = vmatpush1.bf16.xpose.msra.mxu0 0
      %731 = vmatprep.subr.bf16.mxu0 0
      %732 = vmatpush1.bf16.xpose.msra.mxu0 0
      %733 = vmatprep.subr.bf16.mxu0 0
      %734 = vmatpush1.bf16.xpose.msra.mxu0 0
      %735 = vmatprep.mubr.bf16.mxu0 0
      %736 = vmatmul.mubr.bf16.gmra.mrb[0].mxu0 %v698
      %v737 = vpop.f32.mrb[0].mxu0
      %v738 = vadd.f32 0.0, %v737
      %v739 = vpop.f32.mrb[0].mxu0
      %v740 = vpop.f32.mrb[0].mxu0
      %v741 = vpop.f32.mrb[0].mxu0
      %742 = vdwg.mxu0
      %744 = vrot.lane.b32.xlu0 %v642, 96
      %v745 = vpop.permute.xlu0 %744
      %v747 = vsel %vm647, %v642, 0
      %v750 = vsel %vm647, %v745, 0
      %752 = vmatprep.subr.bf16.mxu0 0
      %753 = vmatpush1.bf16.xpose.msra.mxu0 %v750
      %754 = vmatprep.subr.bf16.mxu0 0
      %755 = vmatpush1.bf16.xpose.msra.mxu0 0
      %756 = vmatprep.subr.bf16.mxu0 0
      %757 = vmatpush1.bf16.xpose.msra.mxu0 0
      %758 = vmatprep.subr.bf16.mxu0 0
      %759 = vmatpush1.bf16.xpose.msra.mxu0 0
      %760 = vmatprep.subr.bf16.mxu0 0
      %761 = vmatpush1.bf16.xpose.msra.mxu0 0
      %762 = vmatprep.subr.bf16.mxu0 0
      %763 = vmatpush1.bf16.xpose.msra.mxu0 0
      %764 = vmatprep.subr.bf16.mxu0 0
      %765 = vmatpush1.bf16.xpose.msra.mxu0 0
      %766 = vmatprep.subr.bf16.mxu0 0
      %767 = vmatpush1.bf16.xpose.msra.mxu0 0
      %768 = vmatprep.subr.bf16.mxu0 0
      %769 = vmatpush1.bf16.xpose.msra.mxu0 0
      %770 = vmatprep.subr.bf16.mxu0 0
      %771 = vmatpush1.bf16.xpose.msra.mxu0 0
      %772 = vmatprep.subr.bf16.mxu0 0
      %773 = vmatpush1.bf16.xpose.msra.mxu0 0
      %774 = vmatprep.subr.bf16.mxu0 0
      %775 = vmatpush1.bf16.xpose.msra.mxu0 0
      %776 = vmatprep.subr.bf16.mxu0 0
      %777 = vmatpush1.bf16.xpose.msra.mxu0 0
      %778 = vmatprep.subr.bf16.mxu0 0
      %779 = vmatpush1.bf16.xpose.msra.mxu0 0
      %780 = vmatprep.subr.bf16.mxu0 0
      %781 = vmatpush1.bf16.xpose.msra.mxu0 0
      %782 = vmatprep.subr.bf16.mxu0 0
      %783 = vmatpush1.bf16.xpose.msra.mxu0 0
      %784 = vmatprep.mubr.bf16.mxu0 0
      %785 = vmatmul.mubr.bf16.gmra.mrb[0].mxu0 %v747
      %v786 = vpop.f32.mrb[0].mxu0
      %v787 = vadd.f32 0.0, %v786
      %v788 = vpop.f32.mrb[0].mxu0
      %v789 = vpop.f32.mrb[0].mxu0
      %v790 = vpop.f32.mrb[0].mxu0
      %791 = vdwg.mxu0
      %793 = vrot.lane.b32.xlu0 %v643, 96
      %v794 = vpop.permute.xlu0 %793
      %v796 = vsel %vm647, %v643, 0
      %v799 = vsel %vm647, %v794, 0
      %801 = vmatprep.subr.bf16.mxu0 0
      %802 = vmatpush1.bf16.xpose.msra.mxu0 %v799
      %803 = vmatprep.subr.bf16.mxu0 0
      %804 = vmatpush1.bf16.xpose.msra.mxu0 0
      %805 = vmatprep.subr.bf16.mxu0 0
      %806 = vmatpush1.bf16.xpose.msra.mxu0 0
      %807 = vmatprep.subr.bf16.mxu0 0
      %808 = vmatpush1.bf16.xpose.msra.mxu0 0
      %809 = vmatprep.subr.bf16.mxu0 0
      %810 = vmatpush1.bf16.xpose.msra.mxu0 0
      %811 = vmatprep.subr.bf16.mxu0 0
      %812 = vmatpush1.bf16.xpose.msra.mxu0 0
      %813 = vmatprep.subr.bf16.mxu0 0
      %814 = vmatpush1.bf16.xpose.msra.mxu0 0
      %815 = vmatprep.subr.bf16.mxu0 0
      %816 = vmatpush1.bf16.xpose.msra.mxu0 0
      %817 = vmatprep.subr.bf16.mxu0 0
      %818 = vmatpush1.bf16.xpose.msra.mxu0 0
      %819 = vmatprep.subr.bf16.mxu0 0
      %820 = vmatpush1.bf16.xpose.msra.mxu0 0
      %821 = vmatprep.subr.bf16.mxu0 0
      %822 = vmatpush1.bf16.xpose.msra.mxu0 0
      %823 = vmatprep.subr.bf16.mxu0 0
      %824 = vmatpush1.bf16.xpose.msra.mxu0 0
      %825 = vmatprep.subr.bf16.mxu0 0
      %826 = vmatpush1.bf16.xpose.msra.mxu0 0
      %827 = vmatprep.subr.bf16.mxu0 0
      %828 = vmatpush1.bf16.xpose.msra.mxu0 0
      %829 = vmatprep.subr.bf16.mxu0 0
      %830 = vmatpush1.bf16.xpose.msra.mxu0 0
      %831 = vmatprep.subr.bf16.mxu0 0
      %832 = vmatpush1.bf16.xpose.msra.mxu0 0
      %833 = vmatprep.mubr.bf16.mxu0 0
      %834 = vmatmul.mubr.bf16.gmra.mrb[0].mxu0 %v796
      %v835 = vpop.f32.mrb[0].mxu0
      %v836 = vadd.f32 0.0, %v835
      %v837 = vpop.f32.mrb[0].mxu0
      %v838 = vpop.f32.mrb[0].mxu0
      %v839 = vpop.f32.mrb[0].mxu0
      %840 = vdwg.mxu0
      %v841 = vsel %vm647, %v689, -inf
      %842 = vmax.xlane.f32.xlu0 %v841
      %v843 = vpop.xlane.xlu0 %842
      %v844 = vsel %vm647, %v738, -inf
      %845 = vmax.xlane.f32.xlu0 %v844
      %v846 = vpop.xlane.xlu0 %845
      %v847 = vsel %vm647, %v787, -inf
      %848 = vmax.xlane.f32.xlu0 %v847
      %v849 = vpop.xlane.xlu0 %848
      %v850 = vsel %vm647, %v836, -inf
      %851 = vmax.xlane.f32.xlu0 %v850
      %v852 = vpop.xlane.xlu0 %851
      %v853 = vsub.f32 %v689, %v843
      %v854 = vsub.f32 %v738, %v846
      %v855 = vsub.f32 %v787, %v849
      %v856 = vsub.f32 %v836, %v852
      %v857 = vmul.f32 %v853, 1.442695
      %v858 = vpow.pop %v857
      %v859 = vmul.f32 %v854, 1.442695
      %v860 = vpow.pop %v859
      %v861 = vmul.f32 %v855, 1.442695
      %v862 = vpow.pop %v861
      %v863 = vmul.f32 %v856, 1.442695
      %v864 = vpow.pop %v863
      %v865 = vsel %vm647, %v858, 0.0
      %866 = vadd.xlane.f32.xlu0 %v865
      %v867 = vpop.xlane.xlu0 %866
      %v868 = vsel %vm647, %v860, 0.0
      %869 = vadd.xlane.f32.xlu0 %v868
      %v870 = vpop.xlane.xlu0 %869
      %v871 = vsel %vm647, %v862, 0.0
      %872 = vadd.xlane.f32.xlu0 %v871
      %v873 = vpop.xlane.xlu0 %872
      %v874 = vsel %vm647, %v864, 0.0
      %875 = vadd.xlane.f32.xlu0 %v874
      %v876 = vpop.xlane.xlu0 %875
      %v877 = vrcp.pop %v867
      %v878 = vrcp.pop %v870
      %v879 = vrcp.pop %v873
      %v880 = vrcp.pop %v876
      %v881 = vmul.f32 %v858, %v877
      %v882 = vmul.f32 %v860, %v878
      %v883 = vmul.f32 %v862, %v879
      %v884 = vmul.f32 %v864, %v880
      %v885 = vpack.c.bf16 %v881, %v881
      %v886 = vpack.c.bf16 %v882, %v882
      %v887 = vpack.c.bf16 %v883, %v883
      %v888 = vpack.c.bf16 %v884, %v884
      %889 = vrot.lane.b32.xlu0 %v640, 64
      %v890 = vpop.permute.xlu0 %889
      %v892 = vsel %vm647, %v885, 0
      %vm894 = vcmask 1043456
      %v896 = vsel %vm894, %v890, 0
      %898 = vmatprep.subr.bf16.mxu0 0
      %899 = vmatpush1.bf16.msra.mxu0 %v896
      %900 = vmatprep.subr.bf16.mxu0 0
      %901 = vmatpush1.bf16.msra.mxu0 0
      %902 = vmatprep.subr.bf16.mxu0 0
      %903 = vmatpush1.bf16.msra.mxu0 0
      %904 = vmatprep.subr.bf16.mxu0 0
      %905 = vmatpush1.bf16.msra.mxu0 0
      %906 = vmatprep.subr.bf16.mxu0 0
      %907 = vmatpush1.bf16.msra.mxu0 0
      %908 = vmatprep.subr.bf16.mxu0 0
      %909 = vmatpush1.bf16.msra.mxu0 0
      %910 = vmatprep.subr.bf16.mxu0 0
      %911 = vmatpush1.bf16.msra.mxu0 0
      %912 = vmatprep.subr.bf16.mxu0 0
      %913 = vmatpush1.bf16.msra.mxu0 0
      %914 = vmatprep.subr.bf16.mxu0 0
      %915 = vmatpush1.bf16.msra.mxu0 0
      %916 = vmatprep.subr.bf16.mxu0 0
      %917 = vmatpush1.bf16.msra.mxu0 0
      %918 = vmatprep.subr.bf16.mxu0 0
      %919 = vmatpush1.bf16.msra.mxu0 0
      %920 = vmatprep.subr.bf16.mxu0 0
      %921 = vmatpush1.bf16.msra.mxu0 0
      %922 = vmatprep.subr.bf16.mxu0 0
      %923 = vmatpush1.bf16.msra.mxu0 0
      %924 = vmatprep.subr.bf16.mxu0 0
      %925 = vmatpush1.bf16.msra.mxu0 0
      %926 = vmatprep.subr.bf16.mxu0 0
      %927 = vmatpush1.bf16.msra.mxu0 0
      %928 = vmatprep.subr.bf16.mxu0 0
      %929 = vmatpush1.bf16.msra.mxu0 0
      %930 = vmatprep.mubr.bf16.mxu0 0
      %931 = vmatmul.mubr.bf16.gmra.mrb[0].mxu0 %v892
      %v932 = vpop.f32.mrb[0].mxu0
      %v933 = vadd.f32 0.0, %v932
      %v934 = vpop.f32.mrb[0].mxu0
      %v935 = vpop.f32.mrb[0].mxu0
      %v936 = vpop.f32.mrb[0].mxu0
      %937 = vdwg.mxu0
      %938 = vrot.lane.b32.xlu0 %v641, 64
      %v939 = vpop.permute.xlu0 %938
      %v941 = vsel %vm647, %v886, 0
      %v944 = vsel %vm894, %v939, 0
      %946 = vmatprep.subr.bf16.mxu0 0
      %947 = vmatpush1.bf16.msra.mxu0 %v944
      %948 = vmatprep.subr.bf16.mxu0 0
      %949 = vmatpush1.bf16.msra.mxu0 0
      %950 = vmatprep.subr.bf16.mxu0 0
      %951 = vmatpush1.bf16.msra.mxu0 0
      %952 = vmatprep.subr.bf16.mxu0 0
      %953 = vmatpush1.bf16.msra.mxu0 0
      %954 = vmatprep.subr.bf16.mxu0 0
      %955 = vmatpush1.bf16.msra.mxu0 0
      %956 = vmatprep.subr.bf16.mxu0 0
      %957 = vmatpush1.bf16.msra.mxu0 0
      %958 = vmatprep.subr.bf16.mxu0 0
      %959 = vmatpush1.bf16.msra.mxu0 0
      %960 = vmatprep.subr.bf16.mxu0 0
      %961 = vmatpush1.bf16.msra.mxu0 0
      %962 = vmatprep.subr.bf16.mxu0 0
      %963 = vmatpush1.bf16.msra.mxu0 0
      %964 = vmatprep.subr.bf16.mxu0 0
      %965 = vmatpush1.bf16.msra.mxu0 0
      %966 = vmatprep.subr.bf16.mxu0 0
      %967 = vmatpush1.bf16.msra.mxu0 0
      %968 = vmatprep.subr.bf16.mxu0 0
      %969 = vmatpush1.bf16.msra.mxu0 0
      %970 = vmatprep.subr.bf16.mxu0 0
      %971 = vmatpush1.bf16.msra.mxu0 0
      %972 = vmatprep.subr.bf16.mxu0 0
      %973 = vmatpush1.bf16.msra.mxu0 0
      %974 = vmatprep.subr.bf16.mxu0 0
      %975 = vmatpush1.bf16.msra.mxu0 0
      %976 = vmatprep.subr.bf16.mxu0 0
      %977 = vmatpush1.bf16.msra.mxu0 0
      %978 = vmatprep.mubr.bf16.mxu0 0
      %979 = vmatmul.mubr.bf16.gmra.mrb[0].mxu0 %v941
      %v980 = vpop.f32.mrb[0].mxu0
      %v981 = vadd.f32 0.0, %v980
      %v982 = vpop.f32.mrb[0].mxu0
      %v983 = vpop.f32.mrb[0].mxu0
      %v984 = vpop.f32.mrb[0].mxu0
      %985 = vdwg.mxu0
      %986 = vrot.lane.b32.xlu0 %v642, 64
      %v987 = vpop.permute.xlu0 %986
      %v989 = vsel %vm647, %v887, 0
      %v992 = vsel %vm894, %v987, 0
      %994 = vmatprep.subr.bf16.mxu0 0
      %995 = vmatpush1.bf16.msra.mxu0 %v992
      %996 = vmatprep.subr.bf16.mxu0 0
      %997 = vmatpush1.bf16.msra.mxu0 0
      %998 = vmatprep.subr.bf16.mxu0 0
      %999 = vmatpush1.bf16.msra.mxu0 0
      %1000 = vmatprep.subr.bf16.mxu0 0
      %1001 = vmatpush1.bf16.msra.mxu0 0
      %1002 = vmatprep.subr.bf16.mxu0 0
      %1003 = vmatpush1.bf16.msra.mxu0 0
      %1004 = vmatprep.subr.bf16.mxu0 0
      %1005 = vmatpush1.bf16.msra.mxu0 0
      %1006 = vmatprep.subr.bf16.mxu0 0
      %1007 = vmatpush1.bf16.msra.mxu0 0
      %1008 = vmatprep.subr.bf16.mxu0 0
      %1009 = vmatpush1.bf16.msra.mxu0 0
      %1010 = vmatprep.subr.bf16.mxu0 0
      %1011 = vmatpush1.bf16.msra.mxu0 0
      %1012 = vmatprep.subr.bf16.mxu0 0
      %1013 = vmatpush1.bf16.msra.mxu0 0
      %1014 = vmatprep.subr.bf16.mxu0 0
      %1015 = vmatpush1.bf16.msra.mxu0 0
      %1016 = vmatprep.subr.bf16.mxu0 0
      %1017 = vmatpush1.bf16.msra.mxu0 0
      %1018 = vmatprep.subr.bf16.mxu0 0
      %1019 = vmatpush1.bf16.msra.mxu0 0
      %1020 = vmatprep.subr.bf16.mxu0 0
      %1021 = vmatpush1.bf16.msra.mxu0 0
      %1022 = vmatprep.subr.bf16.mxu0 0
      %1023 = vmatpush1.bf16.msra.mxu0 0
      %1024 = vmatprep.subr.bf16.mxu0 0
      %1025 = vmatpush1.bf16.msra.mxu0 0
      %1026 = vmatprep.mubr.bf16.mxu0 0
      %1027 = vmatmul.mubr.bf16.gmra.mrb[0].mxu0 %v989
      %v1028 = vpop.f32.mrb[0].mxu0
      %v1029 = vadd.f32 0.0, %v1028
      %v1030 = vpop.f32.mrb[0].mxu0
      %v1031 = vpop.f32.mrb[0].mxu0
      %v1032 = vpop.f32.mrb[0].mxu0
      %1033 = vdwg.mxu0
      %1034 = vrot.lane.b32.xlu0 %v643, 64
      %v1035 = vpop.permute.xlu0 %1034
      %v1037 = vsel %vm647, %v888, 0
      %v1040 = vsel %vm894, %v1035, 0
      %1042 = vmatprep.subr.bf16.mxu0 0
      %1043 = vmatpush1.bf16.msra.mxu0 %v1040
      %1044 = vmatprep.subr.bf16.mxu0 0
      %1045 = vmatpush1.bf16.msra.mxu0 0
      %1046 = vmatprep.subr.bf16.mxu0 0
      %1047 = vmatpush1.bf16.msra.mxu0 0
      %1048 = vmatprep.subr.bf16.mxu0 0
      %1049 = vmatpush1.bf16.msra.mxu0 0
      %1050 = vmatprep.subr.bf16.mxu0 0
      %1051 = vmatpush1.bf16.msra.mxu0 0
      %1052 = vmatprep.subr.bf16.mxu0 0
      %1053 = vmatpush1.bf16.msra.mxu0 0
      %1054 = vmatprep.subr.bf16.mxu0 0
      %1055 = vmatpush1.bf16.msra.mxu0 0
      %1056 = vmatprep.subr.bf16.mxu0 0
      %1057 = vmatpush1.bf16.msra.mxu0 0
      %1058 = vmatprep.subr.bf16.mxu0 0
      %1059 = vmatpush1.bf16.msra.mxu0 0
      %1060 = vmatprep.subr.bf16.mxu0 0
      %1061 = vmatpush1.bf16.msra.mxu0 0
      %1062 = vmatprep.subr.bf16.mxu0 0
      %1063 = vmatpush1.bf16.msra.mxu0 0
      %1064 = vmatprep.subr.bf16.mxu0 0
      %1065 = vmatpush1.bf16.msra.mxu0 0
      %1066 = vmatprep.subr.bf16.mxu0 0
      %1067 = vmatpush1.bf16.msra.mxu0 0
      %1068 = vmatprep.subr.bf16.mxu0 0
      %1069 = vmatpush1.bf16.msra.mxu0 0
      %1070 = vmatprep.subr.bf16.mxu0 0
      %1071 = vmatpush1.bf16.msra.mxu0 0
      %1072 = vmatprep.subr.bf16.mxu0 0
      %1073 = vmatpush1.bf16.msra.mxu0 0
      %1074 = vmatprep.mubr.bf16.mxu0 0
      %1075 = vmatmul.mubr.bf16.gmra.mrb[0].mxu0 %v1037
      %v1076 = vpop.f32.mrb[0].mxu0
      %v1077 = vadd.f32 0.0, %v1076
      %v1078 = vpop.f32.mrb[0].mxu0
      %v1079 = vpop.f32.mrb[0].mxu0
      %v1080 = vpop.f32.mrb[0].mxu0
      %1081 = vdwg.mxu0
      %v1082 = vpack.c.bf16 %v981, %v933
      %v1083 = vpack.c.bf16 %v1077, %v1029
      %v1085 = vsel %vm647, %v1082, 0
      %v1088 = vsel %vm647, %v1083, 0
      %v1091 = vsel %vm894, %v635, 0
      %1093 = vmatprep.subr.bf16.mxu0 0
      %1094 = vmatpush1.bf16.msra.mxu0 %v1091
      %1095 = vmatprep.subr.bf16.mxu0 0
      %1096 = vmatpush1.bf16.msra.mxu0 0
      %1097 = vmatprep.subr.bf16.mxu0 0
      %1098 = vmatpush1.bf16.msra.mxu0 0
      %1099 = vmatprep.subr.bf16.mxu0 0
      %1100 = vmatpush1.bf16.msra.mxu0 0
      %1101 = vmatprep.subr.bf16.mxu0 0
      %1102 = vmatpush1.bf16.msra.mxu0 0
      %1103 = vmatprep.subr.bf16.mxu0 0
      %1104 = vmatpush1.bf16.msra.mxu0 0
      %1105 = vmatprep.subr.bf16.mxu0 0
      %1106 = vmatpush1.bf16.msra.mxu0 0
      %1107 = vmatprep.subr.bf16.mxu0 0
      %1108 = vmatpush1.bf16.msra.mxu0 0
      %1109 = vmatprep.subr.bf16.mxu0 0
      %1110 = vmatpush1.bf16.msra.mxu0 0
      %1111 = vmatprep.subr.bf16.mxu0 0
      %1112 = vmatpush1.bf16.msra.mxu0 0
      %1113 = vmatprep.subr.bf16.mxu0 0
      %1114 = vmatpush1.bf16.msra.mxu0 0
      %1115 = vmatprep.subr.bf16.mxu0 0
      %1116 = vmatpush1.bf16.msra.mxu0 0
      %1117 = vmatprep.subr.bf16.mxu0 0
      %1118 = vmatpush1.bf16.msra.mxu0 0
      %1119 = vmatprep.subr.bf16.mxu0 0
      %1120 = vmatpush1.bf16.msra.mxu0 0
      %1121 = vmatprep.subr.bf16.mxu0 0
      %1122 = vmatpush1.bf16.msra.mxu0 0
      %1123 = vmatprep.subr.bf16.mxu0 0
      %1124 = vmatpush1.bf16.msra.mxu0 0
      %1125 = vmatprep.mubr.bf16.mxu0 0
      %1126 = vmatmul.mubr.bf16.gmra.mrb[0].mxu0 %v1085
      %v1127 = vpop.f32.mrb[0].mxu0
      %v1128 = vadd.f32 0.0, %v1127
      %v1129 = vpop.f32.mrb[0].mxu0
      %v1130 = vpop.f32.mrb[0].mxu0
      %v1131 = vadd.f32 0.0, %v1130
      %v1132 = vpop.f32.mrb[0].mxu0
      %1133 = vmatprep.mubr.bf16.mxu0 0
      %1134 = vmatmul.mubr.bf16.gmra.mrb[0].mxu0 %v1088
      %v1135 = vpop.f32.mrb[0].mxu0
      %v1136 = vadd.f32 0.0, %v1135
      %v1137 = vpop.f32.mrb[0].mxu0
      %v1138 = vpop.f32.mrb[0].mxu0
      %v1139 = vadd.f32 0.0, %v1138
      %v1140 = vpop.f32.mrb[0].mxu0
      %1141 = vdwg.mxu0
      %v1143 = vlaneseq
      %v1144 = vshrl.u32 %v1143, 7
      %v1145 = vsub.s32 0, %v1144
      %v1146 = vrot.slane %v639, %v1145
      %v1148 = vadd.f32 %v1146, %v1128
      %v1149 = vadd.f32 %v1146, %v1131
      %v1150 = vadd.f32 %v1146, %v1136
      %v1151 = vadd.f32 %v1146, %v1139
      %1152 = vrot.lane.b32.xlu0 %v640, 120
      %v1153 = vpop.permute.xlu0 %1152
      %1154 = vrot.lane.b32.xlu0 %v640, 88
      %v1155 = vpop.permute.xlu0 %1154
      %v1157 = vsel %vm647, %v1153, 0
      %v1160 = vsel %vm647, %v1155, 0
      %1162 = vmatprep.subr.bf16.mxu0 0
      %1163 = vmatpush1.bf16.xpose.msra.mxu0 %v1160
      %1164 = vmatprep.subr.bf16.mxu0 0
      %1165 = vmatpush1.bf16.xpose.msra.mxu0 0
      %1166 = vmatprep.subr.bf16.mxu0 0
      %1167 = vmatpush1.bf16.xpose.msra.mxu0 0
      %1168 = vmatprep.subr.bf16.mxu0 0
      %1169 = vmatpush1.bf16.xpose.msra.mxu0 0
      %1170 = vmatprep.subr.bf16.mxu0 0
      %1171 = vmatpush1.bf16.xpose.msra.mxu0 0
      %1172 = vmatprep.subr.bf16.mxu0 0
      %1173 = vmatpush1.bf16.xpose.msra.mxu0 0
      %1174 = vmatprep.subr.bf16.mxu0 0
      %1175 = vmatpush1.bf16.xpose.msra.mxu0 0
      %1176 = vmatprep.subr.bf16.mxu0 0
      %1177 = vmatpush1.bf16.xpose.msra.mxu0 0
      %1178 = vmatprep.subr.bf16.mxu0 0
      %1179 = vmatpush1.bf16.xpose.msra.mxu0 0
      %1180 = vmatprep.subr.bf16.mxu0 0
      %1181 = vmatpush1.bf16.xpose.msra.mxu0 0
      %1182 = vmatprep.subr.bf16.mxu0 0
      %1183 = vmatpush1.bf16.xpose.msra.mxu0 0
      %1184 = vmatprep.subr.bf16.mxu0 0
      %1185 = vmatpush1.bf16.xpose.msra.mxu0 0
      %1186 = vmatprep.subr.bf16.mxu0 0
      %1187 = vmatpush1.bf16.xpose.msra.mxu0 0
      %1188 = vmatprep.subr.bf16.mxu0 0
      %1189 = vmatpush1.bf16.xpose.msra.mxu0 0
      %1190 = vmatprep.subr.bf16.mxu0 0
      %1191 = vmatpush1.bf16.xpose.msra.mxu0 0
      %1192 = vmatprep.subr.bf16.mxu0 0
      %1193 = vmatpush1.bf16.xpose.msra.mxu0 0
      %1194 = vmatprep.mubr.bf16.mxu0 0
      %1195 = vmatmul.mubr.bf16.gmra.mrb[0].mxu0 %v1157
      %v1196 = vpop.f32.mrb[0].mxu0
      %v1197 = vadd.f32 0.0, %v1196
      %v1198 = vpop.f32.mrb[0].mxu0
      %v1199 = vpop.f32.mrb[0].mxu0
      %v1200 = vpop.f32.mrb[0].mxu0
      %1201 = vdwg.mxu0
      %1202 = vrot.lane.b32.xlu0 %v641, 120
      %v1203 = vpop.permute.xlu0 %1202
      %1204 = vrot.lane.b32.xlu0 %v641, 88
      %v1205 = vpop.permute.xlu0 %1204
      %v1207 = vsel %vm647, %v1203, 0
      %v1210 = vsel %vm647, %v1205, 0
      %1212 = vmatprep.subr.bf16.mxu0 0
      %1213 = vmatpush1.bf16.xpose.msra.mxu0 %v1210
      %1214 = vmatprep.subr.bf16.mxu0 0
      %1215 = vmatpush1.bf16.xpose.msra.mxu0 0
      %1216 = vmatprep.subr.bf16.mxu0 0
      %1217 = vmatpush1.bf16.xpose.msra.mxu0 0
      %1218 = vmatprep.subr.bf16.mxu0 0
      %1219 = vmatpush1.bf16.xpose.msra.mxu0 0
      %1220 = vmatprep.subr.bf16.mxu0 0
      %1221 = vmatpush1.bf16.xpose.msra.mxu0 0
      %1222 = vmatprep.subr.bf16.mxu0 0
      %1223 = vmatpush1.bf16.xpose.msra.mxu0 0
      %1224 = vmatprep.subr.bf16.mxu0 0
      %1225 = vmatpush1.bf16.xpose.msra.mxu0 0
      %1226 = vmatprep.subr.bf16.mxu0 0
      %1227 = vmatpush1.bf16.xpose.msra.mxu0 0
      %1228 = vmatprep.subr.bf16.mxu0 0
      %1229 = vmatpush1.bf16.xpose.msra.mxu0 0
      %1230 = vmatprep.subr.bf16.mxu0 0
      %1231 = vmatpush1.bf16.xpose.msra.mxu0 0
      %1232 = vmatprep.subr.bf16.mxu0 0
      %1233 = vmatpush1.bf16.xpose.msra.mxu0 0
      %1234 = vmatprep.subr.bf16.mxu0 0
      %1235 = vmatpush1.bf16.xpose.msra.mxu0 0
      %1236 = vmatprep.subr.bf16.mxu0 0
      %1237 = vmatpush1.bf16.xpose.msra.mxu0 0
      %1238 = vmatprep.subr.bf16.mxu0 0
      %1239 = vmatpush1.bf16.xpose.msra.mxu0 0
      %1240 = vmatprep.subr.bf16.mxu0 0
      %1241 = vmatpush1.bf16.xpose.msra.mxu0 0
      %1242 = vmatprep.subr.bf16.mxu0 0
      %1243 = vmatpush1.bf16.xpose.msra.mxu0 0
      %1244 = vmatprep.mubr.bf16.mxu0 0
      %1245 = vmatmul.mubr.bf16.gmra.mrb[0].mxu0 %v1207
      %v1246 = vpop.f32.mrb[0].mxu0
      %v1247 = vadd.f32 0.0, %v1246
      %v1248 = vpop.f32.mrb[0].mxu0
      %v1249 = vpop.f32.mrb[0].mxu0
      %v1250 = vpop.f32.mrb[0].mxu0
      %1251 = vdwg.mxu0
      %1252 = vrot.lane.b32.xlu0 %v642, 120
      %v1253 = vpop.permute.xlu0 %1252
      %1254 = vrot.lane.b32.xlu0 %v642, 88
      %v1255 = vpop.permute.xlu0 %1254
      %v1257 = vsel %vm647, %v1253, 0
      %v1260 = vsel %vm647, %v1255, 0
      %1262 = vmatprep.subr.bf16.mxu0 0
      %1263 = vmatpush1.bf16.xpose.msra.mxu0 %v1260
      %1264 = vmatprep.subr.bf16.mxu0 0
      %1265 = vmatpush1.bf16.xpose.msra.mxu0 0
      %1266 = vmatprep.subr.bf16.mxu0 0
      %1267 = vmatpush1.bf16.xpose.msra.mxu0 0
      %1268 = vmatprep.subr.bf16.mxu0 0
      %1269 = vmatpush1.bf16.xpose.msra.mxu0 0
      %1270 = vmatprep.subr.bf16.mxu0 0
      %1271 = vmatpush1.bf16.xpose.msra.mxu0 0
      %1272 = vmatprep.subr.bf16.mxu0 0
      %1273 = vmatpush1.bf16.xpose.msra.mxu0 0
      %1274 = vmatprep.subr.bf16.mxu0 0
      %1275 = vmatpush1.bf16.xpose.msra.mxu0 0
      %1276 = vmatprep.subr.bf16.mxu0 0
      %1277 = vmatpush1.bf16.xpose.msra.mxu0 0
      %1278 = vmatprep.subr.bf16.mxu0 0
      %1279 = vmatpush1.bf16.xpose.msra.mxu0 0
      %1280 = vmatprep.subr.bf16.mxu0 0
      %1281 = vmatpush1.bf16.xpose.msra.mxu0 0
      %1282 = vmatprep.subr.bf16.mxu0 0
      %1283 = vmatpush1.bf16.xpose.msra.mxu0 0
      %1284 = vmatprep.subr.bf16.mxu0 0
      %1285 = vmatpush1.bf16.xpose.msra.mxu0 0
      %1286 = vmatprep.subr.bf16.mxu0 0
      %1287 = vmatpush1.bf16.xpose.msra.mxu0 0
      %1288 = vmatprep.subr.bf16.mxu0 0
      %1289 = vmatpush1.bf16.xpose.msra.mxu0 0
      %1290 = vmatprep.subr.bf16.mxu0 0
      %1291 = vmatpush1.bf16.xpose.msra.mxu0 0
      %1292 = vmatprep.subr.bf16.mxu0 0
      %1293 = vmatpush1.bf16.xpose.msra.mxu0 0
      %1294 = vmatprep.mubr.bf16.mxu0 0
      %1295 = vmatmul.mubr.bf16.gmra.mrb[0].mxu0 %v1257
      %v1296 = vpop.f32.mrb[0].mxu0
      %v1297 = vadd.f32 0.0, %v1296
      %v1298 = vpop.f32.mrb[0].mxu0
      %v1299 = vpop.f32.mrb[0].mxu0
      %v1300 = vpop.f32.mrb[0].mxu0
      %1301 = vdwg.mxu0
      %1302 = vrot.lane.b32.xlu0 %v643, 120
      %v1303 = vpop.permute.xlu0 %1302
      %1304 = vrot.lane.b32.xlu0 %v643, 88
      %v1305 = vpop.permute.xlu0 %1304
      %v1307 = vsel %vm647, %v1303, 0
      %v1310 = vsel %vm647, %v1305, 0
      %1312 = vmatprep.subr.bf16.mxu0 0
      %1313 = vmatpush1.bf16.xpose.msra.mxu0 %v1310
      %1314 = vmatprep.subr.bf16.mxu0 0
      %1315 = vmatpush1.bf16.xpose.msra.mxu0 0
      %1316 = vmatprep.subr.bf16.mxu0 0
      %1317 = vmatpush1.bf16.xpose.msra.mxu0 0
      %1318 = vmatprep.subr.bf16.mxu0 0
      %1319 = vmatpush1.bf16.xpose.msra.mxu0 0
      %1320 = vmatprep.subr.bf16.mxu0 0
      %1321 = vmatpush1.bf16.xpose.msra.mxu0 0
      %1322 = vmatprep.subr.bf16.mxu0 0
      %1323 = vmatpush1.bf16.xpose.msra.mxu0 0
      %1324 = vmatprep.subr.bf16.mxu0 0
      %1325 = vmatpush1.bf16.xpose.msra.mxu0 0
      %1326 = vmatprep.subr.bf16.mxu0 0
      %1327 = vmatpush1.bf16.xpose.msra.mxu0 0
      %1328 = vmatprep.subr.bf16.mxu0 0
      %1329 = vmatpush1.bf16.xpose.msra.mxu0 0
      %1330 = vmatprep.subr.bf16.mxu0 0
      %1331 = vmatpush1.bf16.xpose.msra.mxu0 0
      %1332 = vmatprep.subr.bf16.mxu0 0
      %1333 = vmatpush1.bf16.xpose.msra.mxu0 0
      %1334 = vmatprep.subr.bf16.mxu0 0
      %1335 = vmatpush1.bf16.xpose.msra.mxu0 0
      %1336 = vmatprep.subr.bf16.mxu0 0
      %1337 = vmatpush1.bf16.xpose.msra.mxu0 0
      %1338 = vmatprep.subr.bf16.mxu0 0
      %1339 = vmatpush1.bf16.xpose.msra.mxu0 0
      %1340 = vmatprep.subr.bf16.mxu0 0
      %1341 = vmatpush1.bf16.xpose.msra.mxu0 0
      %1342 = vmatprep.subr.bf16.mxu0 0
      %1343 = vmatpush1.bf16.xpose.msra.mxu0 0
      %1344 = vmatprep.mubr.bf16.mxu0 0
      %1345 = vmatmul.mubr.bf16.gmra.mrb[0].mxu0 %v1307
      %v1346 = vpop.f32.mrb[0].mxu0
      %v1347 = vadd.f32 0.0, %v1346
      %v1348 = vpop.f32.mrb[0].mxu0
      %v1349 = vpop.f32.mrb[0].mxu0
      %v1350 = vpop.f32.mrb[0].mxu0
      %1351 = vdwg.mxu0
      %v1352 = vsel %vm647, %v1197, -inf
      %1353 = vmax.xlane.f32.xlu0 %v1352
      %v1354 = vpop.xlane.xlu0 %1353
      %v1355 = vsel %vm647, %v1247, -inf
      %1356 = vmax.xlane.f32.xlu0 %v1355
      %v1357 = vpop.xlane.xlu0 %1356
      %v1358 = vsel %vm647, %v1297, -inf
      %1359 = vmax.xlane.f32.xlu0 %v1358
      %v1360 = vpop.xlane.xlu0 %1359
      %v1361 = vsel %vm647, %v1347, -inf
      %1362 = vmax.xlane.f32.xlu0 %v1361
      %v1363 = vpop.xlane.xlu0 %1362
      %v1364 = vsub.f32 %v1197, %v1354
      %v1365 = vsub.f32 %v1247, %v1357
      %v1366 = vsub.f32 %v1297, %v1360
      %v1367 = vsub.f32 %v1347, %v1363
      %v1368 = vmul.f32 %v1364, 1.442695
      %v1369 = vpow.pop %v1368
      %v1370 = vmul.f32 %v1365, 1.442695
      %v1371 = vpow.pop %v1370
      %v1372 = vmul.f32 %v1366, 1.442695
      %v1373 = vpow.pop %v1372
      %v1374 = vmul.f32 %v1367, 1.442695
      %v1375 = vpow.pop %v1374
      %v1376 = vsel %vm647, %v1369, 0.0
      %1377 = vadd.xlane.f32.xlu0 %v1376
      %v1378 = vpop.xlane.xlu0 %1377
      %v1379 = vsel %vm647, %v1371, 0.0
      %1380 = vadd.xlane.f32.xlu0 %v1379
      %v1381 = vpop.xlane.xlu0 %1380
      %v1382 = vsel %vm647, %v1373, 0.0
      %1383 = vadd.xlane.f32.xlu0 %v1382
      %v1384 = vpop.xlane.xlu0 %1383
      %v1385 = vsel %vm647, %v1375, 0.0
      %1386 = vadd.xlane.f32.xlu0 %v1385
      %v1387 = vpop.xlane.xlu0 %1386
      %v1388 = vrcp.pop %v1378
      %v1389 = vrcp.pop %v1381
      %v1390 = vrcp.pop %v1384
      %v1391 = vrcp.pop %v1387
      %v1392 = vmul.f32 %v1369, %v1388
      %v1393 = vmul.f32 %v1371, %v1389
      %v1394 = vmul.f32 %v1373, %v1390
      %v1395 = vmul.f32 %v1375, %v1391
      %v1396 = vpack.c.bf16 %v1392, %v1392
      %v1397 = vpack.c.bf16 %v1393, %v1393
      %v1398 = vpack.c.bf16 %v1394, %v1394
      %v1399 = vpack.c.bf16 %v1395, %v1395
      %1400 = vrot.lane.b32.xlu0 %v640, 56
      %v1401 = vpop.permute.xlu0 %1400
      %v1403 = vsel %vm647, %v1396, 0
      %v1406 = vsel %vm894, %v1401, 0
      %1408 = vmatprep.subr.bf16.mxu0 0
      %1409 = vmatpush1.bf16.msra.mxu0 %v1406
      %1410 = vmatprep.subr.bf16.mxu0 0
      %1411 = vmatpush1.bf16.msra.mxu0 0
      %1412 = vmatprep.subr.bf16.mxu0 0
      %1413 = vmatpush1.bf16.msra.mxu0 0
      %1414 = vmatprep.subr.bf16.mxu0 0
      %1415 = vmatpush1.bf16.msra.mxu0 0
      %1416 = vmatprep.subr.bf16.mxu0 0
      %1417 = vmatpush1.bf16.msra.mxu0 0
      %1418 = vmatprep.subr.bf16.mxu0 0
      %1419 = vmatpush1.bf16.msra.mxu0 0
      %1420 = vmatprep.subr.bf16.mxu0 0
      %1421 = vmatpush1.bf16.msra.mxu0 0
      %1422 = vmatprep.subr.bf16.mxu0 0
      %1423 = vmatpush1.bf16.msra.mxu0 0
      %1424 = vmatprep.subr.bf16.mxu0 0
      %1425 = vmatpush1.bf16.msra.mxu0 0
      %1426 = vmatprep.subr.bf16.mxu0 0
      %1427 = vmatpush1.bf16.msra.mxu0 0
      %1428 = vmatprep.subr.bf16.mxu0 0
      %1429 = vmatpush1.bf16.msra.mxu0 0
      %1430 = vmatprep.subr.bf16.mxu0 0
      %1431 = vmatpush1.bf16.msra.mxu0 0
      %1432 = vmatprep.subr.bf16.mxu0 0
      %1433 = vmatpush1.bf16.msra.mxu0 0
      %1434 = vmatprep.subr.bf16.mxu0 0
      %1435 = vmatpush1.bf16.msra.mxu0 0
      %1436 = vmatprep.subr.bf16.mxu0 0
      %1437 = vmatpush1.bf16.msra.mxu0 0
      %1438 = vmatprep.subr.bf16.mxu0 0
      %1439 = vmatpush1.bf16.msra.mxu0 0
      %1440 = vmatprep.mubr.bf16.mxu0 0
      %1441 = vmatmul.mubr.bf16.gmra.mrb[0].mxu0 %v1403
      %v1442 = vpop.f32.mrb[0].mxu0
      %v1443 = vadd.f32 0.0, %v1442
      %v1444 = vpop.f32.mrb[0].mxu0
      %v1445 = vpop.f32.mrb[0].mxu0
      %v1446 = vpop.f32.mrb[0].mxu0
      %1447 = vdwg.mxu0
      %1448 = vrot.lane.b32.xlu0 %v641, 56
      %v1449 = vpop.permute.xlu0 %1448
      %v1451 = vsel %vm647, %v1397, 0
      %v1454 = vsel %vm894, %v1449, 0
      %1456 = vmatprep.subr.bf16.mxu0 0
      %1457 = vmatpush1.bf16.msra.mxu0 %v1454
      %1458 = vmatprep.subr.bf16.mxu0 0
      %1459 = vmatpush1.bf16.msra.mxu0 0
      %1460 = vmatprep.subr.bf16.mxu0 0
      %1461 = vmatpush1.bf16.msra.mxu0 0
      %1462 = vmatprep.subr.bf16.mxu0 0
      %1463 = vmatpush1.bf16.msra.mxu0 0
      %1464 = vmatprep.subr.bf16.mxu0 0
      %1465 = vmatpush1.bf16.msra.mxu0 0
      %1466 = vmatprep.subr.bf16.mxu0 0
      %1467 = vmatpush1.bf16.msra.mxu0 0
      %1468 = vmatprep.subr.bf16.mxu0 0
      %1469 = vmatpush1.bf16.msra.mxu0 0
      %1470 = vmatprep.subr.bf16.mxu0 0
      %1471 = vmatpush1.bf16.msra.mxu0 0
      %1472 = vmatprep.subr.bf16.mxu0 0
      %1473 = vmatpush1.bf16.msra.mxu0 0
      %1474 = vmatprep.subr.bf16.mxu0 0
      %1475 = vmatpush1.bf16.msra.mxu0 0
      %1476 = vmatprep.subr.bf16.mxu0 0
      %1477 = vmatpush1.bf16.msra.mxu0 0
      %1478 = vmatprep.subr.bf16.mxu0 0
      %1479 = vmatpush1.bf16.msra.mxu0 0
      %1480 = vmatprep.subr.bf16.mxu0 0
      %1481 = vmatpush1.bf16.msra.mxu0 0
      %1482 = vmatprep.subr.bf16.mxu0 0
      %1483 = vmatpush1.bf16.msra.mxu0 0
      %1484 = vmatprep.subr.bf16.mxu0 0
      %1485 = vmatpush1.bf16.msra.mxu0 0
      %1486 = vmatprep.subr.bf16.mxu0 0
      %1487 = vmatpush1.bf16.msra.mxu0 0
      %1488 = vmatprep.mubr.bf16.mxu0 0
      %1489 = vmatmul.mubr.bf16.gmra.mrb[0].mxu0 %v1451
      %v1490 = vpop.f32.mrb[0].mxu0
      %v1491 = vadd.f32 0.0, %v1490
      %v1492 = vpop.f32.mrb[0].mxu0
      %v1493 = vpop.f32.mrb[0].mxu0
      %v1494 = vpop.f32.mrb[0].mxu0
      %1495 = vdwg.mxu0
      %1496 = vrot.lane.b32.xlu0 %v642, 56
      %v1497 = vpop.permute.xlu0 %1496
      %v1499 = vsel %vm647, %v1398, 0
      %v1502 = vsel %vm894, %v1497, 0
      %1504 = vmatprep.subr.bf16.mxu0 0
      %1505 = vmatpush1.bf16.msra.mxu0 %v1502
      %1506 = vmatprep.subr.bf16.mxu0 0
      %1507 = vmatpush1.bf16.msra.mxu0 0
      %1508 = vmatprep.subr.bf16.mxu0 0
      %1509 = vmatpush1.bf16.msra.mxu0 0
      %1510 = vmatprep.subr.bf16.mxu0 0
      %1511 = vmatpush1.bf16.msra.mxu0 0
      %1512 = vmatprep.subr.bf16.mxu0 0
      %1513 = vmatpush1.bf16.msra.mxu0 0
      %1514 = vmatprep.subr.bf16.mxu0 0
      %1515 = vmatpush1.bf16.msra.mxu0 0
      %1516 = vmatprep.subr.bf16.mxu0 0
      %1517 = vmatpush1.bf16.msra.mxu0 0
      %1518 = vmatprep.subr.bf16.mxu0 0
      %1519 = vmatpush1.bf16.msra.mxu0 0
      %1520 = vmatprep.subr.bf16.mxu0 0
      %1521 = vmatpush1.bf16.msra.mxu0 0
      %1522 = vmatprep.subr.bf16.mxu0 0
      %1523 = vmatpush1.bf16.msra.mxu0 0
      %1524 = vmatprep.subr.bf16.mxu0 0
      %1525 = vmatpush1.bf16.msra.mxu0 0
      %1526 = vmatprep.subr.bf16.mxu0 0
      %1527 = vmatpush1.bf16.msra.mxu0 0
      %1528 = vmatprep.subr.bf16.mxu0 0
      %1529 = vmatpush1.bf16.msra.mxu0 0
      %1530 = vmatprep.subr.bf16.mxu0 0
      %1531 = vmatpush1.bf16.msra.mxu0 0
      %1532 = vmatprep.subr.bf16.mxu0 0
      %1533 = vmatpush1.bf16.msra.mxu0 0
      %1534 = vmatprep.subr.bf16.mxu0 0
      %1535 = vmatpush1.bf16.msra.mxu0 0
      %1536 = vmatprep.mubr.bf16.mxu0 0
      %1537 = vmatmul.mubr.bf16.gmra.mrb[0].mxu0 %v1499
      %v1538 = vpop.f32.mrb[0].mxu0
      %v1539 = vadd.f32 0.0, %v1538
      %v1540 = vpop.f32.mrb[0].mxu0
      %v1541 = vpop.f32.mrb[0].mxu0
      %v1542 = vpop.f32.mrb[0].mxu0
      %1543 = vdwg.mxu0
      %1544 = vrot.lane.b32.xlu0 %v643, 56
      %v1545 = vpop.permute.xlu0 %1544
      %v1547 = vsel %vm647, %v1399, 0
      %v1550 = vsel %vm894, %v1545, 0
      %1552 = vmatprep.subr.bf16.mxu0 0
      %1553 = vmatpush1.bf16.msra.mxu0 %v1550
      %1554 = vmatprep.subr.bf16.mxu0 0
      %1555 = vmatpush1.bf16.msra.mxu0 0
      %1556 = vmatprep.subr.bf16.mxu0 0
      %1557 = vmatpush1.bf16.msra.mxu0 0
      %1558 = vmatprep.subr.bf16.mxu0 0
      %1559 = vmatpush1.bf16.msra.mxu0 0
      %1560 = vmatprep.subr.bf16.mxu0 0
      %1561 = vmatpush1.bf16.msra.mxu0 0
      %1562 = vmatprep.subr.bf16.mxu0 0
      %1563 = vmatpush1.bf16.msra.mxu0 0
      %1564 = vmatprep.subr.bf16.mxu0 0
      %1565 = vmatpush1.bf16.msra.mxu0 0
      %1566 = vmatprep.subr.bf16.mxu0 0
      %1567 = vmatpush1.bf16.msra.mxu0 0
      %1568 = vmatprep.subr.bf16.mxu0 0
      %1569 = vmatpush1.bf16.msra.mxu0 0
      %1570 = vmatprep.subr.bf16.mxu0 0
      %1571 = vmatpush1.bf16.msra.mxu0 0
      %1572 = vmatprep.subr.bf16.mxu0 0
      %1573 = vmatpush1.bf16.msra.mxu0 0
      %1574 = vmatprep.subr.bf16.mxu0 0
      %1575 = vmatpush1.bf16.msra.mxu0 0
      %1576 = vmatprep.subr.bf16.mxu0 0
      %1577 = vmatpush1.bf16.msra.mxu0 0
      %1578 = vmatprep.subr.bf16.mxu0 0
      %1579 = vmatpush1.bf16.msra.mxu0 0
      %1580 = vmatprep.subr.bf16.mxu0 0
      %1581 = vmatpush1.bf16.msra.mxu0 0
      %1582 = vmatprep.subr.bf16.mxu0 0
      %1583 = vmatpush1.bf16.msra.mxu0 0
      %1584 = vmatprep.mubr.bf16.mxu0 0
      %1585 = vmatmul.mubr.bf16.gmra.mrb[0].mxu0 %v1547
      %v1586 = vpop.f32.mrb[0].mxu0
      %v1587 = vadd.f32 0.0, %v1586
      %v1588 = vpop.f32.mrb[0].mxu0
      %v1589 = vpop.f32.mrb[0].mxu0
      %v1590 = vpop.f32.mrb[0].mxu0
      %1591 = vdwg.mxu0
      %v1592 = vpack.c.bf16 %v1491, %v1443
      %v1593 = vpack.c.bf16 %v1587, %v1539
      %v1595 = vsel %vm647, %v1592, 0
      %v1598 = vsel %vm647, %v1593, 0
      %v1601 = vsel %vm894, %v636, 0
      %1603 = vmatprep.subr.bf16.mxu0 0
      %1604 = vmatpush1.bf16.msra.mxu0 %v1601
      %1605 = vmatprep.subr.bf16.mxu0 0
      %1606 = vmatpush1.bf16.msra.mxu0 0
      %1607 = vmatprep.subr.bf16.mxu0 0
      %1608 = vmatpush1.bf16.msra.mxu0 0
      %1609 = vmatprep.subr.bf16.mxu0 0
      %1610 = vmatpush1.bf16.msra.mxu0 0
      %1611 = vmatprep.subr.bf16.mxu0 0
      %1612 = vmatpush1.bf16.msra.mxu0 0
      %1613 = vmatprep.subr.bf16.mxu0 0
      %1614 = vmatpush1.bf16.msra.mxu0 0
      %1615 = vmatprep.subr.bf16.mxu0 0
      %1616 = vmatpush1.bf16.msra.mxu0 0
      %1617 = vmatprep.subr.bf16.mxu0 0
      %1618 = vmatpush1.bf16.msra.mxu0 0
      %1619 = vmatprep.subr.bf16.mxu0 0
      %1620 = vmatpush1.bf16.msra.mxu0 0
      %1621 = vmatprep.subr.bf16.mxu0 0
      %1622 = vmatpush1.bf16.msra.mxu0 0
      %1623 = vmatprep.subr.bf16.mxu0 0
      %1624 = vmatpush1.bf16.msra.mxu0 0
      %1625 = vmatprep.subr.bf16.mxu0 0
      %1626 = vmatpush1.bf16.msra.mxu0 0
      %1627 = vmatprep.subr.bf16.mxu0 0
      %1628 = vmatpush1.bf16.msra.mxu0 0
      %1629 = vmatprep.subr.bf16.mxu0 0
      %1630 = vmatpush1.bf16.msra.mxu0 0
      %1631 = vmatprep.subr.bf16.mxu0 0
      %1632 = vmatpush1.bf16.msra.mxu0 0
      %1633 = vmatprep.subr.bf16.mxu0 0
      %1634 = vmatpush1.bf16.msra.mxu0 0
      %1635 = vmatprep.mubr.bf16.mxu0 0
      %1636 = vmatmul.mubr.bf16.gmra.mrb[0].mxu0 %v1595
      %v1637 = vpop.f32.mrb[0].mxu0
      %v1638 = vadd.f32 0.0, %v1637
      %v1639 = vpop.f32.mrb[0].mxu0
      %v1640 = vpop.f32.mrb[0].mxu0
      %v1641 = vadd.f32 0.0, %v1640
      %v1642 = vpop.f32.mrb[0].mxu0
      %1643 = vmatprep.mubr.bf16.mxu0 0
      %1644 = vmatmul.mubr.bf16.gmra.mrb[0].mxu0 %v1598
      %v1645 = vpop.f32.mrb[0].mxu0
      %v1646 = vadd.f32 0.0, %v1645
      %v1647 = vpop.f32.mrb[0].mxu0
      %v1648 = vpop.f32.mrb[0].mxu0
      %v1649 = vadd.f32 0.0, %v1648
      %v1650 = vpop.f32.mrb[0].mxu0
      %1651 = vdwg.mxu0
      %v1652 = vadd.f32 %v1148, %v1638
      %v1653 = vadd.f32 %v1149, %v1641
      %v1654 = vadd.f32 %v1150, %v1646
      %v1655 = vadd.f32 %v1151, %v1649
      %1656 = vrot.lane.b32.xlu0 %v640, 112
      %v1657 = vpop.permute.xlu0 %1656
      %1658 = vrot.lane.b32.xlu0 %v640, 80
      %v1659 = vpop.permute.xlu0 %1658
      %v1661 = vsel %vm647, %v1657, 0
      %v1664 = vsel %vm647, %v1659, 0
      %1666 = vmatprep.subr.bf16.mxu0 0
      %1667 = vmatpush1.bf16.xpose.msra.mxu0 %v1664
      %1668 = vmatprep.subr.bf16.mxu0 0
      %1669 = vmatpush1.bf16.xpose.msra.mxu0 0
      %1670 = vmatprep.subr.bf16.mxu0 0
      %1671 = vmatpush1.bf16.xpose.msra.mxu0 0
      %1672 = vmatprep.subr.bf16.mxu0 0
      %1673 = vmatpush1.bf16.xpose.msra.mxu0 0
      %1674 = vmatprep.subr.bf16.mxu0 0
      %1675 = vmatpush1.bf16.xpose.msra.mxu0 0
      %1676 = vmatprep.subr.bf16.mxu0 0
      %1677 = vmatpush1.bf16.xpose.msra.mxu0 0
      %1678 = vmatprep.subr.bf16.mxu0 0
      %1679 = vmatpush1.bf16.xpose.msra.mxu0 0
      %1680 = vmatprep.subr.bf16.mxu0 0
      %1681 = vmatpush1.bf16.xpose.msra.mxu0 0
      %1682 = vmatprep.subr.bf16.mxu0 0
      %1683 = vmatpush1.bf16.xpose.msra.mxu0 0
      %1684 = vmatprep.subr.bf16.mxu0 0
      %1685 = vmatpush1.bf16.xpose.msra.mxu0 0
      %1686 = vmatprep.subr.bf16.mxu0 0
      %1687 = vmatpush1.bf16.xpose.msra.mxu0 0
      %1688 = vmatprep.subr.bf16.mxu0 0
      %1689 = vmatpush1.bf16.xpose.msra.mxu0 0
      %1690 = vmatprep.subr.bf16.mxu0 0
      %1691 = vmatpush1.bf16.xpose.msra.mxu0 0
      %1692 = vmatprep.subr.bf16.mxu0 0
      %1693 = vmatpush1.bf16.xpose.msra.mxu0 0
      %1694 = vmatprep.subr.bf16.mxu0 0
      %1695 = vmatpush1.bf16.xpose.msra.mxu0 0
      %1696 = vmatprep.subr.bf16.mxu0 0
      %1697 = vmatpush1.bf16.xpose.msra.mxu0 0
      %1698 = vmatprep.mubr.bf16.mxu0 0
      %1699 = vmatmul.mubr.bf16.gmra.mrb[0].mxu0 %v1661
      %v1700 = vpop.f32.mrb[0].mxu0
      %v1701 = vadd.f32 0.0, %v1700
      %v1702 = vpop.f32.mrb[0].mxu0
      %v1703 = vpop.f32.mrb[0].mxu0
      %v1704 = vpop.f32.mrb[0].mxu0
      %1705 = vdwg.mxu0
      %1706 = vrot.lane.b32.xlu0 %v641, 112
      %v1707 = vpop.permute.xlu0 %1706
      %1708 = vrot.lane.b32.xlu0 %v641, 80
      %v1709 = vpop.permute.xlu0 %1708
      %v1711 = vsel %vm647, %v1707, 0
      %v1714 = vsel %vm647, %v1709, 0
      %1716 = vmatprep.subr.bf16.mxu0 0
      %1717 = vmatpush1.bf16.xpose.msra.mxu0 %v1714
      %1718 = vmatprep.subr.bf16.mxu0 0
      %1719 = vmatpush1.bf16.xpose.msra.mxu0 0
      %1720 = vmatprep.subr.bf16.mxu0 0
      %1721 = vmatpush1.bf16.xpose.msra.mxu0 0
      %1722 = vmatprep.subr.bf16.mxu0 0
      %1723 = vmatpush1.bf16.xpose.msra.mxu0 0
      %1724 = vmatprep.subr.bf16.mxu0 0
      %1725 = vmatpush1.bf16.xpose.msra.mxu0 0
      %1726 = vmatprep.subr.bf16.mxu0 0
      %1727 = vmatpush1.bf16.xpose.msra.mxu0 0
      %1728 = vmatprep.subr.bf16.mxu0 0
      %1729 = vmatpush1.bf16.xpose.msra.mxu0 0
      %1730 = vmatprep.subr.bf16.mxu0 0
      %1731 = vmatpush1.bf16.xpose.msra.mxu0 0
      %1732 = vmatprep.subr.bf16.mxu0 0
      %1733 = vmatpush1.bf16.xpose.msra.mxu0 0
      %1734 = vmatprep.subr.bf16.mxu0 0
      %1735 = vmatpush1.bf16.xpose.msra.mxu0 0
      %1736 = vmatprep.subr.bf16.mxu0 0
      %1737 = vmatpush1.bf16.xpose.msra.mxu0 0
      %1738 = vmatprep.subr.bf16.mxu0 0
      %1739 = vmatpush1.bf16.xpose.msra.mxu0 0
      %1740 = vmatprep.subr.bf16.mxu0 0
      %1741 = vmatpush1.bf16.xpose.msra.mxu0 0
      %1742 = vmatprep.subr.bf16.mxu0 0
      %1743 = vmatpush1.bf16.xpose.msra.mxu0 0
      %1744 = vmatprep.subr.bf16.mxu0 0
      %1745 = vmatpush1.bf16.xpose.msra.mxu0 0
      %1746 = vmatprep.subr.bf16.mxu0 0
      %1747 = vmatpush1.bf16.xpose.msra.mxu0 0
      %1748 = vmatprep.mubr.bf16.mxu0 0
      %1749 = vmatmul.mubr.bf16.gmra.mrb[0].mxu0 %v1711
      %v1750 = vpop.f32.mrb[0].mxu0
      %v1751 = vadd.f32 0.0, %v1750
      %v1752 = vpop.f32.mrb[0].mxu0
      %v1753 = vpop.f32.mrb[0].mxu0
      %v1754 = vpop.f32.mrb[0].mxu0
      %1755 = vdwg.mxu0
      %1756 = vrot.lane.b32.xlu0 %v642, 112
      %v1757 = vpop.permute.xlu0 %1756
      %1758 = vrot.lane.b32.xlu0 %v642, 80
      %v1759 = vpop.permute.xlu0 %1758
      %v1761 = vsel %vm647, %v1757, 0
      %v1764 = vsel %vm647, %v1759, 0
      %1766 = vmatprep.subr.bf16.mxu0 0
      %1767 = vmatpush1.bf16.xpose.msra.mxu0 %v1764
      %1768 = vmatprep.subr.bf16.mxu0 0
      %1769 = vmatpush1.bf16.xpose.msra.mxu0 0
      %1770 = vmatprep.subr.bf16.mxu0 0
      %1771 = vmatpush1.bf16.xpose.msra.mxu0 0
      %1772 = vmatprep.subr.bf16.mxu0 0
      %1773 = vmatpush1.bf16.xpose.msra.mxu0 0
      %1774 = vmatprep.subr.bf16.mxu0 0
      %1775 = vmatpush1.bf16.xpose.msra.mxu0 0
      %1776 = vmatprep.subr.bf16.mxu0 0
      %1777 = vmatpush1.bf16.xpose.msra.mxu0 0
      %1778 = vmatprep.subr.bf16.mxu0 0
      %1779 = vmatpush1.bf16.xpose.msra.mxu0 0
      %1780 = vmatprep.subr.bf16.mxu0 0
      %1781 = vmatpush1.bf16.xpose.msra.mxu0 0
      %1782 = vmatprep.subr.bf16.mxu0 0
      %1783 = vmatpush1.bf16.xpose.msra.mxu0 0
      %1784 = vmatprep.subr.bf16.mxu0 0
      %1785 = vmatpush1.bf16.xpose.msra.mxu0 0
      %1786 = vmatprep.subr.bf16.mxu0 0
      %1787 = vmatpush1.bf16.xpose.msra.mxu0 0
      %1788 = vmatprep.subr.bf16.mxu0 0
      %1789 = vmatpush1.bf16.xpose.msra.mxu0 0
      %1790 = vmatprep.subr.bf16.mxu0 0
      %1791 = vmatpush1.bf16.xpose.msra.mxu0 0
      %1792 = vmatprep.subr.bf16.mxu0 0
      %1793 = vmatpush1.bf16.xpose.msra.mxu0 0
      %1794 = vmatprep.subr.bf16.mxu0 0
      %1795 = vmatpush1.bf16.xpose.msra.mxu0 0
      %1796 = vmatprep.subr.bf16.mxu0 0
      %1797 = vmatpush1.bf16.xpose.msra.mxu0 0
      %1798 = vmatprep.mubr.bf16.mxu0 0
      %1799 = vmatmul.mubr.bf16.gmra.mrb[0].mxu0 %v1761
      %v1800 = vpop.f32.mrb[0].mxu0
      %v1801 = vadd.f32 0.0, %v1800
      %v1802 = vpop.f32.mrb[0].mxu0
      %v1803 = vpop.f32.mrb[0].mxu0
      %v1804 = vpop.f32.mrb[0].mxu0
      %1805 = vdwg.mxu0
      %1806 = vrot.lane.b32.xlu0 %v643, 112
      %v1807 = vpop.permute.xlu0 %1806
      %1808 = vrot.lane.b32.xlu0 %v643, 80
      %v1809 = vpop.permute.xlu0 %1808
      %v1811 = vsel %vm647, %v1807, 0
      %v1814 = vsel %vm647, %v1809, 0
      %1816 = vmatprep.subr.bf16.mxu0 0
      %1817 = vmatpush1.bf16.xpose.msra.mxu0 %v1814
      %1818 = vmatprep.subr.bf16.mxu0 0
      %1819 = vmatpush1.bf16.xpose.msra.mxu0 0
      %1820 = vmatprep.subr.bf16.mxu0 0
      %1821 = vmatpush1.bf16.xpose.msra.mxu0 0
      %1822 = vmatprep.subr.bf16.mxu0 0
      %1823 = vmatpush1.bf16.xpose.msra.mxu0 0
      %1824 = vmatprep.subr.bf16.mxu0 0
      %1825 = vmatpush1.bf16.xpose.msra.mxu0 0
      %1826 = vmatprep.subr.bf16.mxu0 0
      %1827 = vmatpush1.bf16.xpose.msra.mxu0 0
      %1828 = vmatprep.subr.bf16.mxu0 0
      %1829 = vmatpush1.bf16.xpose.msra.mxu0 0
      %1830 = vmatprep.subr.bf16.mxu0 0
      %1831 = vmatpush1.bf16.xpose.msra.mxu0 0
      %1832 = vmatprep.subr.bf16.mxu0 0
      %1833 = vmatpush1.bf16.xpose.msra.mxu0 0
      %1834 = vmatprep.subr.bf16.mxu0 0
      %1835 = vmatpush1.bf16.xpose.msra.mxu0 0
      %1836 = vmatprep.subr.bf16.mxu0 0
      %1837 = vmatpush1.bf16.xpose.msra.mxu0 0
      %1838 = vmatprep.subr.bf16.mxu0 0
      %1839 = vmatpush1.bf16.xpose.msra.mxu0 0
      %1840 = vmatprep.subr.bf16.mxu0 0
      %1841 = vmatpush1.bf16.xpose.msra.mxu0 0
      %1842 = vmatprep.subr.bf16.mxu0 0
      %1843 = vmatpush1.bf16.xpose.msra.mxu0 0
      %1844 = vmatprep.subr.bf16.mxu0 0
      %1845 = vmatpush1.bf16.xpose.msra.mxu0 0
      %1846 = vmatprep.subr.bf16.mxu0 0
      %1847 = vmatpush1.bf16.xpose.msra.mxu0 0
      %1848 = vmatprep.mubr.bf16.mxu0 0
      %1849 = vmatmul.mubr.bf16.gmra.mrb[0].mxu0 %v1811
      %v1850 = vpop.f32.mrb[0].mxu0
      %v1851 = vadd.f32 0.0, %v1850
      %v1852 = vpop.f32.mrb[0].mxu0
      %v1853 = vpop.f32.mrb[0].mxu0
      %v1854 = vpop.f32.mrb[0].mxu0
      %1855 = vdwg.mxu0
      %v1856 = vsel %vm647, %v1701, -inf
      %1857 = vmax.xlane.f32.xlu0 %v1856
      %v1858 = vpop.xlane.xlu0 %1857
      %v1859 = vsel %vm647, %v1751, -inf
      %1860 = vmax.xlane.f32.xlu0 %v1859
      %v1861 = vpop.xlane.xlu0 %1860
      %v1862 = vsel %vm647, %v1801, -inf
      %1863 = vmax.xlane.f32.xlu0 %v1862
      %v1864 = vpop.xlane.xlu0 %1863
      %v1865 = vsel %vm647, %v1851, -inf
      %1866 = vmax.xlane.f32.xlu0 %v1865
      %v1867 = vpop.xlane.xlu0 %1866
      %v1868 = vsub.f32 %v1701, %v1858
      %v1869 = vsub.f32 %v1751, %v1861
      %v1870 = vsub.f32 %v1801, %v1864
      %v1871 = vsub.f32 %v1851, %v1867
      %v1872 = vmul.f32 %v1868, 1.442695
      %v1873 = vpow.pop %v1872
      %v1874 = vmul.f32 %v1869, 1.442695
      %v1875 = vpow.pop %v1874
      %v1876 = vmul.f32 %v1870, 1.442695
      %v1877 = vpow.pop %v1876
      %v1878 = vmul.f32 %v1871, 1.442695
      %v1879 = vpow.pop %v1878
      %v1880 = vsel %vm647, %v1873, 0.0
      %1881 = vadd.xlane.f32.xlu0 %v1880
      %v1882 = vpop.xlane.xlu0 %1881
      %v1883 = vsel %vm647, %v1875, 0.0
      %1884 = vadd.xlane.f32.xlu0 %v1883
      %v1885 = vpop.xlane.xlu0 %1884
      %v1886 = vsel %vm647, %v1877, 0.0
      %1887 = vadd.xlane.f32.xlu0 %v1886
      %v1888 = vpop.xlane.xlu0 %1887
      %v1889 = vsel %vm647, %v1879, 0.0
      %1890 = vadd.xlane.f32.xlu0 %v1889
      %v1891 = vpop.xlane.xlu0 %1890
      %v1892 = vrcp.pop %v1882
      %v1893 = vrcp.pop %v1885
      %v1894 = vrcp.pop %v1888
      %v1895 = vrcp.pop %v1891
      %v1896 = vmul.f32 %v1873, %v1892
      %v1897 = vmul.f32 %v1875, %v1893
      %v1898 = vmul.f32 %v1877, %v1894
      %v1899 = vmul.f32 %v1879, %v1895
      %v1900 = vpack.c.bf16 %v1896, %v1896
      %v1901 = vpack.c.bf16 %v1897, %v1897
      %v1902 = vpack.c.bf16 %v1898, %v1898
      %v1903 = vpack.c.bf16 %v1899, %v1899
      %1904 = vrot.lane.b32.xlu0 %v640, 48
      %v1905 = vpop.permute.xlu0 %1904
      %v1907 = vsel %vm647, %v1900, 0
      %v1910 = vsel %vm894, %v1905, 0
      %1912 = vmatprep.subr.bf16.mxu0 0
      %1913 = vmatpush1.bf16.msra.mxu0 %v1910
      %1914 = vmatprep.subr.bf16.mxu0 0
      %1915 = vmatpush1.bf16.msra.mxu0 0
      %1916 = vmatprep.subr.bf16.mxu0 0
      %1917 = vmatpush1.bf16.msra.mxu0 0
      %1918 = vmatprep.subr.bf16.mxu0 0
      %1919 = vmatpush1.bf16.msra.mxu0 0
      %1920 = vmatprep.subr.bf16.mxu0 0
      %1921 = vmatpush1.bf16.msra.mxu0 0
      %1922 = vmatprep.subr.bf16.mxu0 0
      %1923 = vmatpush1.bf16.msra.mxu0 0
      %1924 = vmatprep.subr.bf16.mxu0 0
      %1925 = vmatpush1.bf16.msra.mxu0 0
      %1926 = vmatprep.subr.bf16.mxu0 0
      %1927 = vmatpush1.bf16.msra.mxu0 0
      %1928 = vmatprep.subr.bf16.mxu0 0
      %1929 = vmatpush1.bf16.msra.mxu0 0
      %1930 = vmatprep.subr.bf16.mxu0 0
      %1931 = vmatpush1.bf16.msra.mxu0 0
      %1932 = vmatprep.subr.bf16.mxu0 0
      %1933 = vmatpush1.bf16.msra.mxu0 0
      %1934 = vmatprep.subr.bf16.mxu0 0
      %1935 = vmatpush1.bf16.msra.mxu0 0
      %1936 = vmatprep.subr.bf16.mxu0 0
      %1937 = vmatpush1.bf16.msra.mxu0 0
      %1938 = vmatprep.subr.bf16.mxu0 0
      %1939 = vmatpush1.bf16.msra.mxu0 0
      %1940 = vmatprep.subr.bf16.mxu0 0
      %1941 = vmatpush1.bf16.msra.mxu0 0
      %1942 = vmatprep.subr.bf16.mxu0 0
      %1943 = vmatpush1.bf16.msra.mxu0 0
      %1944 = vmatprep.mubr.bf16.mxu0 0
      %1945 = vmatmul.mubr.bf16.gmra.mrb[0].mxu0 %v1907
      %v1946 = vpop.f32.mrb[0].mxu0
      %v1947 = vadd.f32 0.0, %v1946
      %v1948 = vpop.f32.mrb[0].mxu0
      %v1949 = vpop.f32.mrb[0].mxu0
      %v1950 = vpop.f32.mrb[0].mxu0
      %1951 = vdwg.mxu0
      %1952 = vrot.lane.b32.xlu0 %v641, 48
      %v1953 = vpop.permute.xlu0 %1952
      %v1955 = vsel %vm647, %v1901, 0
      %v1958 = vsel %vm894, %v1953, 0
      %1960 = vmatprep.subr.bf16.mxu0 0
      %1961 = vmatpush1.bf16.msra.mxu0 %v1958
      %1962 = vmatprep.subr.bf16.mxu0 0
      %1963 = vmatpush1.bf16.msra.mxu0 0
      %1964 = vmatprep.subr.bf16.mxu0 0
      %1965 = vmatpush1.bf16.msra.mxu0 0
      %1966 = vmatprep.subr.bf16.mxu0 0
      %1967 = vmatpush1.bf16.msra.mxu0 0
      %1968 = vmatprep.subr.bf16.mxu0 0
      %1969 = vmatpush1.bf16.msra.mxu0 0
      %1970 = vmatprep.subr.bf16.mxu0 0
      %1971 = vmatpush1.bf16.msra.mxu0 0
      %1972 = vmatprep.subr.bf16.mxu0 0
      %1973 = vmatpush1.bf16.msra.mxu0 0
      %1974 = vmatprep.subr.bf16.mxu0 0
      %1975 = vmatpush1.bf16.msra.mxu0 0
      %1976 = vmatprep.subr.bf16.mxu0 0
      %1977 = vmatpush1.bf16.msra.mxu0 0
      %1978 = vmatprep.subr.bf16.mxu0 0
      %1979 = vmatpush1.bf16.msra.mxu0 0
      %1980 = vmatprep.subr.bf16.mxu0 0
      %1981 = vmatpush1.bf16.msra.mxu0 0
      %1982 = vmatprep.subr.bf16.mxu0 0
      %1983 = vmatpush1.bf16.msra.mxu0 0
      %1984 = vmatprep.subr.bf16.mxu0 0
      %1985 = vmatpush1.bf16.msra.mxu0 0
      %1986 = vmatprep.subr.bf16.mxu0 0
      %1987 = vmatpush1.bf16.msra.mxu0 0
      %1988 = vmatprep.subr.bf16.mxu0 0
      %1989 = vmatpush1.bf16.msra.mxu0 0
      %1990 = vmatprep.subr.bf16.mxu0 0
      %1991 = vmatpush1.bf16.msra.mxu0 0
      %1992 = vmatprep.mubr.bf16.mxu0 0
      %1993 = vmatmul.mubr.bf16.gmra.mrb[0].mxu0 %v1955
      %v1994 = vpop.f32.mrb[0].mxu0
      %v1995 = vadd.f32 0.0, %v1994
      %v1996 = vpop.f32.mrb[0].mxu0
      %v1997 = vpop.f32.mrb[0].mxu0
      %v1998 = vpop.f32.mrb[0].mxu0
      %1999 = vdwg.mxu0
      %2000 = vrot.lane.b32.xlu0 %v642, 48
      %v2001 = vpop.permute.xlu0 %2000
      %v2003 = vsel %vm647, %v1902, 0
      %v2006 = vsel %vm894, %v2001, 0
      %2008 = vmatprep.subr.bf16.mxu0 0
      %2009 = vmatpush1.bf16.msra.mxu0 %v2006
      %2010 = vmatprep.subr.bf16.mxu0 0
      %2011 = vmatpush1.bf16.msra.mxu0 0
      %2012 = vmatprep.subr.bf16.mxu0 0
      %2013 = vmatpush1.bf16.msra.mxu0 0
      %2014 = vmatprep.subr.bf16.mxu0 0
      %2015 = vmatpush1.bf16.msra.mxu0 0
      %2016 = vmatprep.subr.bf16.mxu0 0
      %2017 = vmatpush1.bf16.msra.mxu0 0
      %2018 = vmatprep.subr.bf16.mxu0 0
      %2019 = vmatpush1.bf16.msra.mxu0 0
      %2020 = vmatprep.subr.bf16.mxu0 0
      %2021 = vmatpush1.bf16.msra.mxu0 0
      %2022 = vmatprep.subr.bf16.mxu0 0
      %2023 = vmatpush1.bf16.msra.mxu0 0
      %2024 = vmatprep.subr.bf16.mxu0 0
      %2025 = vmatpush1.bf16.msra.mxu0 0
      %2026 = vmatprep.subr.bf16.mxu0 0
      %2027 = vmatpush1.bf16.msra.mxu0 0
      %2028 = vmatprep.subr.bf16.mxu0 0
      %2029 = vmatpush1.bf16.msra.mxu0 0
      %2030 = vmatprep.subr.bf16.mxu0 0
      %2031 = vmatpush1.bf16.msra.mxu0 0
      %2032 = vmatprep.subr.bf16.mxu0 0
      %2033 = vmatpush1.bf16.msra.mxu0 0
      %2034 = vmatprep.subr.bf16.mxu0 0
      %2035 = vmatpush1.bf16.msra.mxu0 0
      %2036 = vmatprep.subr.bf16.mxu0 0
      %2037 = vmatpush1.bf16.msra.mxu0 0
      %2038 = vmatprep.subr.bf16.mxu0 0
      %2039 = vmatpush1.bf16.msra.mxu0 0
      %2040 = vmatprep.mubr.bf16.mxu0 0
      %2041 = vmatmul.mubr.bf16.gmra.mrb[0].mxu0 %v2003
      %v2042 = vpop.f32.mrb[0].mxu0
      %v2043 = vadd.f32 0.0, %v2042
      %v2044 = vpop.f32.mrb[0].mxu0
      %v2045 = vpop.f32.mrb[0].mxu0
      %v2046 = vpop.f32.mrb[0].mxu0
      %2047 = vdwg.mxu0
      %2048 = vrot.lane.b32.xlu0 %v643, 48
      %v2049 = vpop.permute.xlu0 %2048
      %v2051 = vsel %vm647, %v1903, 0
      %v2054 = vsel %vm894, %v2049, 0
      %2056 = vmatprep.subr.bf16.mxu0 0
      %2057 = vmatpush1.bf16.msra.mxu0 %v2054
      %2058 = vmatprep.subr.bf16.mxu0 0
      %2059 = vmatpush1.bf16.msra.mxu0 0
      %2060 = vmatprep.subr.bf16.mxu0 0
      %2061 = vmatpush1.bf16.msra.mxu0 0
      %2062 = vmatprep.subr.bf16.mxu0 0
      %2063 = vmatpush1.bf16.msra.mxu0 0
      %2064 = vmatprep.subr.bf16.mxu0 0
      %2065 = vmatpush1.bf16.msra.mxu0 0
      %2066 = vmatprep.subr.bf16.mxu0 0
      %2067 = vmatpush1.bf16.msra.mxu0 0
      %2068 = vmatprep.subr.bf16.mxu0 0
      %2069 = vmatpush1.bf16.msra.mxu0 0
      %2070 = vmatprep.subr.bf16.mxu0 0
      %2071 = vmatpush1.bf16.msra.mxu0 0
      %2072 = vmatprep.subr.bf16.mxu0 0
      %2073 = vmatpush1.bf16.msra.mxu0 0
      %2074 = vmatprep.subr.bf16.mxu0 0
      %2075 = vmatpush1.bf16.msra.mxu0 0
      %2076 = vmatprep.subr.bf16.mxu0 0
      %2077 = vmatpush1.bf16.msra.mxu0 0
      %2078 = vmatprep.subr.bf16.mxu0 0
      %2079 = vmatpush1.bf16.msra.mxu0 0
      %2080 = vmatprep.subr.bf16.mxu0 0
      %2081 = vmatpush1.bf16.msra.mxu0 0
      %2082 = vmatprep.subr.bf16.mxu0 0
      %2083 = vmatpush1.bf16.msra.mxu0 0
      %2084 = vmatprep.subr.bf16.mxu0 0
      %2085 = vmatpush1.bf16.msra.mxu0 0
      %2086 = vmatprep.subr.bf16.mxu0 0
      %2087 = vmatpush1.bf16.msra.mxu0 0
      %2088 = vmatprep.mubr.bf16.mxu0 0
      %2089 = vmatmul.mubr.bf16.gmra.mrb[0].mxu0 %v2051
      %v2090 = vpop.f32.mrb[0].mxu0
      %v2091 = vadd.f32 0.0, %v2090
      %v2092 = vpop.f32.mrb[0].mxu0
      %v2093 = vpop.f32.mrb[0].mxu0
      %v2094 = vpop.f32.mrb[0].mxu0
      %2095 = vdwg.mxu0
      %v2096 = vpack.c.bf16 %v1995, %v1947
      %v2097 = vpack.c.bf16 %v2091, %v2043
      %v2099 = vsel %vm647, %v2096, 0
      %v2102 = vsel %vm647, %v2097, 0
      %v2105 = vsel %vm894, %v637, 0
      %2107 = vmatprep.subr.bf16.mxu0 0
      %2108 = vmatpush1.bf16.msra.mxu0 %v2105
      %2109 = vmatprep.subr.bf16.mxu0 0
      %2110 = vmatpush1.bf16.msra.mxu0 0
      %2111 = vmatprep.subr.bf16.mxu0 0
      %2112 = vmatpush1.bf16.msra.mxu0 0
      %2113 = vmatprep.subr.bf16.mxu0 0
      %2114 = vmatpush1.bf16.msra.mxu0 0
      %2115 = vmatprep.subr.bf16.mxu0 0
      %2116 = vmatpush1.bf16.msra.mxu0 0
      %2117 = vmatprep.subr.bf16.mxu0 0
      %2118 = vmatpush1.bf16.msra.mxu0 0
      %2119 = vmatprep.subr.bf16.mxu0 0
      %2120 = vmatpush1.bf16.msra.mxu0 0
      %2121 = vmatprep.subr.bf16.mxu0 0
      %2122 = vmatpush1.bf16.msra.mxu0 0
      %2123 = vmatprep.subr.bf16.mxu0 0
      %2124 = vmatpush1.bf16.msra.mxu0 0
      %2125 = vmatprep.subr.bf16.mxu0 0
      %2126 = vmatpush1.bf16.msra.mxu0 0
      %2127 = vmatprep.subr.bf16.mxu0 0
      %2128 = vmatpush1.bf16.msra.mxu0 0
      %2129 = vmatprep.subr.bf16.mxu0 0
      %2130 = vmatpush1.bf16.msra.mxu0 0
      %2131 = vmatprep.subr.bf16.mxu0 0
      %2132 = vmatpush1.bf16.msra.mxu0 0
      %2133 = vmatprep.subr.bf16.mxu0 0
      %2134 = vmatpush1.bf16.msra.mxu0 0
      %2135 = vmatprep.subr.bf16.mxu0 0
      %2136 = vmatpush1.bf16.msra.mxu0 0
      %2137 = vmatprep.subr.bf16.mxu0 0
      %2138 = vmatpush1.bf16.msra.mxu0 0
      %2139 = vmatprep.mubr.bf16.mxu0 0
      %2140 = vmatmul.mubr.bf16.gmra.mrb[0].mxu0 %v2099
      %v2141 = vpop.f32.mrb[0].mxu0
      %v2142 = vadd.f32 0.0, %v2141
      %v2143 = vpop.f32.mrb[0].mxu0
      %v2144 = vpop.f32.mrb[0].mxu0
      %v2145 = vadd.f32 0.0, %v2144
      %v2146 = vpop.f32.mrb[0].mxu0
      %2147 = vmatprep.mubr.bf16.mxu0 0
      %2148 = vmatmul.mubr.bf16.gmra.mrb[0].mxu0 %v2102
      %v2149 = vpop.f32.mrb[0].mxu0
      %v2150 = vadd.f32 0.0, %v2149
      %v2151 = vpop.f32.mrb[0].mxu0
      %v2152 = vpop.f32.mrb[0].mxu0
      %v2153 = vadd.f32 0.0, %v2152
      %v2154 = vpop.f32.mrb[0].mxu0
      %2155 = vdwg.mxu0
      %v2156 = vadd.f32 %v1652, %v2142
      %v2157 = vadd.f32 %v1653, %v2145
      %v2158 = vadd.f32 %v1654, %v2150
      %v2159 = vadd.f32 %v1655, %v2153
      %2160 = vrot.lane.b32.xlu0 %v640, 104
      %v2161 = vpop.permute.xlu0 %2160
      %2162 = vrot.lane.b32.xlu0 %v640, 72
      %v2163 = vpop.permute.xlu0 %2162
      %v2165 = vsel %vm647, %v2161, 0
      %v2168 = vsel %vm647, %v2163, 0
      %2170 = vmatprep.subr.bf16.mxu0 0
      %2171 = vmatpush1.bf16.xpose.msra.mxu0 %v2168
      %2172 = vmatprep.subr.bf16.mxu0 0
      %2173 = vmatpush1.bf16.xpose.msra.mxu0 0
      %2174 = vmatprep.subr.bf16.mxu0 0
      %2175 = vmatpush1.bf16.xpose.msra.mxu0 0
      %2176 = vmatprep.subr.bf16.mxu0 0
      %2177 = vmatpush1.bf16.xpose.msra.mxu0 0
      %2178 = vmatprep.subr.bf16.mxu0 0
      %2179 = vmatpush1.bf16.xpose.msra.mxu0 0
      %2180 = vmatprep.subr.bf16.mxu0 0
      %2181 = vmatpush1.bf16.xpose.msra.mxu0 0
      %2182 = vmatprep.subr.bf16.mxu0 0
      %2183 = vmatpush1.bf16.xpose.msra.mxu0 0
      %2184 = vmatprep.subr.bf16.mxu0 0
      %2185 = vmatpush1.bf16.xpose.msra.mxu0 0
      %2186 = vmatprep.subr.bf16.mxu0 0
      %2187 = vmatpush1.bf16.xpose.msra.mxu0 0
      %2188 = vmatprep.subr.bf16.mxu0 0
      %2189 = vmatpush1.bf16.xpose.msra.mxu0 0
      %2190 = vmatprep.subr.bf16.mxu0 0
      %2191 = vmatpush1.bf16.xpose.msra.mxu0 0
      %2192 = vmatprep.subr.bf16.mxu0 0
      %2193 = vmatpush1.bf16.xpose.msra.mxu0 0
      %2194 = vmatprep.subr.bf16.mxu0 0
      %2195 = vmatpush1.bf16.xpose.msra.mxu0 0
      %2196 = vmatprep.subr.bf16.mxu0 0
      %2197 = vmatpush1.bf16.xpose.msra.mxu0 0
      %2198 = vmatprep.subr.bf16.mxu0 0
      %2199 = vmatpush1.bf16.xpose.msra.mxu0 0
      %2200 = vmatprep.subr.bf16.mxu0 0
      %2201 = vmatpush1.bf16.xpose.msra.mxu0 0
      %2202 = vmatprep.mubr.bf16.mxu0 0
      %2203 = vmatmul.mubr.bf16.gmra.mrb[0].mxu0 %v2165
      %v2204 = vpop.f32.mrb[0].mxu0
      %v2205 = vadd.f32 0.0, %v2204
      %v2206 = vpop.f32.mrb[0].mxu0
      %v2207 = vpop.f32.mrb[0].mxu0
      %v2208 = vpop.f32.mrb[0].mxu0
      %2209 = vdwg.mxu0
      %2210 = vrot.lane.b32.xlu0 %v641, 104
      %v2211 = vpop.permute.xlu0 %2210
      %2212 = vrot.lane.b32.xlu0 %v641, 72
      %v2213 = vpop.permute.xlu0 %2212
      %v2215 = vsel %vm647, %v2211, 0
      %v2218 = vsel %vm647, %v2213, 0
      %2220 = vmatprep.subr.bf16.mxu0 0
      %2221 = vmatpush1.bf16.xpose.msra.mxu0 %v2218
      %2222 = vmatprep.subr.bf16.mxu0 0
      %2223 = vmatpush1.bf16.xpose.msra.mxu0 0
      %2224 = vmatprep.subr.bf16.mxu0 0
      %2225 = vmatpush1.bf16.xpose.msra.mxu0 0
      %2226 = vmatprep.subr.bf16.mxu0 0
      %2227 = vmatpush1.bf16.xpose.msra.mxu0 0
      %2228 = vmatprep.subr.bf16.mxu0 0
      %2229 = vmatpush1.bf16.xpose.msra.mxu0 0
      %2230 = vmatprep.subr.bf16.mxu0 0
      %2231 = vmatpush1.bf16.xpose.msra.mxu0 0
      %2232 = vmatprep.subr.bf16.mxu0 0
      %2233 = vmatpush1.bf16.xpose.msra.mxu0 0
      %2234 = vmatprep.subr.bf16.mxu0 0
      %2235 = vmatpush1.bf16.xpose.msra.mxu0 0
      %2236 = vmatprep.subr.bf16.mxu0 0
      %2237 = vmatpush1.bf16.xpose.msra.mxu0 0
      %2238 = vmatprep.subr.bf16.mxu0 0
      %2239 = vmatpush1.bf16.xpose.msra.mxu0 0
      %2240 = vmatprep.subr.bf16.mxu0 0
      %2241 = vmatpush1.bf16.xpose.msra.mxu0 0
      %2242 = vmatprep.subr.bf16.mxu0 0
      %2243 = vmatpush1.bf16.xpose.msra.mxu0 0
      %2244 = vmatprep.subr.bf16.mxu0 0
      %2245 = vmatpush1.bf16.xpose.msra.mxu0 0
      %2246 = vmatprep.subr.bf16.mxu0 0
      %2247 = vmatpush1.bf16.xpose.msra.mxu0 0
      %2248 = vmatprep.subr.bf16.mxu0 0
      %2249 = vmatpush1.bf16.xpose.msra.mxu0 0
      %2250 = vmatprep.subr.bf16.mxu0 0
      %2251 = vmatpush1.bf16.xpose.msra.mxu0 0
      %2252 = vmatprep.mubr.bf16.mxu0 0
      %2253 = vmatmul.mubr.bf16.gmra.mrb[0].mxu0 %v2215
      %v2254 = vpop.f32.mrb[0].mxu0
      %v2255 = vadd.f32 0.0, %v2254
      %v2256 = vpop.f32.mrb[0].mxu0
      %v2257 = vpop.f32.mrb[0].mxu0
      %v2258 = vpop.f32.mrb[0].mxu0
      %2259 = vdwg.mxu0
      %2260 = vrot.lane.b32.xlu0 %v642, 104
      %v2261 = vpop.permute.xlu0 %2260
      %2262 = vrot.lane.b32.xlu0 %v642, 72
      %v2263 = vpop.permute.xlu0 %2262
      %v2265 = vsel %vm647, %v2261, 0
      %v2268 = vsel %vm647, %v2263, 0
      %2270 = vmatprep.subr.bf16.mxu0 0
      %2271 = vmatpush1.bf16.xpose.msra.mxu0 %v2268
      %2272 = vmatprep.subr.bf16.mxu0 0
      %2273 = vmatpush1.bf16.xpose.msra.mxu0 0
      %2274 = vmatprep.subr.bf16.mxu0 0
      %2275 = vmatpush1.bf16.xpose.msra.mxu0 0
      %2276 = vmatprep.subr.bf16.mxu0 0
      %2277 = vmatpush1.bf16.xpose.msra.mxu0 0
      %2278 = vmatprep.subr.bf16.mxu0 0
      %2279 = vmatpush1.bf16.xpose.msra.mxu0 0
      %2280 = vmatprep.subr.bf16.mxu0 0
      %2281 = vmatpush1.bf16.xpose.msra.mxu0 0
      %2282 = vmatprep.subr.bf16.mxu0 0
      %2283 = vmatpush1.bf16.xpose.msra.mxu0 0
      %2284 = vmatprep.subr.bf16.mxu0 0
      %2285 = vmatpush1.bf16.xpose.msra.mxu0 0
      %2286 = vmatprep.subr.bf16.mxu0 0
      %2287 = vmatpush1.bf16.xpose.msra.mxu0 0
      %2288 = vmatprep.subr.bf16.mxu0 0
      %2289 = vmatpush1.bf16.xpose.msra.mxu0 0
      %2290 = vmatprep.subr.bf16.mxu0 0
      %2291 = vmatpush1.bf16.xpose.msra.mxu0 0
      %2292 = vmatprep.subr.bf16.mxu0 0
      %2293 = vmatpush1.bf16.xpose.msra.mxu0 0
      %2294 = vmatprep.subr.bf16.mxu0 0
      %2295 = vmatpush1.bf16.xpose.msra.mxu0 0
      %2296 = vmatprep.subr.bf16.mxu0 0
      %2297 = vmatpush1.bf16.xpose.msra.mxu0 0
      %2298 = vmatprep.subr.bf16.mxu0 0
      %2299 = vmatpush1.bf16.xpose.msra.mxu0 0
      %2300 = vmatprep.subr.bf16.mxu0 0
      %2301 = vmatpush1.bf16.xpose.msra.mxu0 0
      %2302 = vmatprep.mubr.bf16.mxu0 0
      %2303 = vmatmul.mubr.bf16.gmra.mrb[0].mxu0 %v2265
      %v2304 = vpop.f32.mrb[0].mxu0
      %v2305 = vadd.f32 0.0, %v2304
      %v2306 = vpop.f32.mrb[0].mxu0
      %v2307 = vpop.f32.mrb[0].mxu0
      %v2308 = vpop.f32.mrb[0].mxu0
      %2309 = vdwg.mxu0
      %2310 = vrot.lane.b32.xlu0 %v643, 104
      %v2311 = vpop.permute.xlu0 %2310
      %2312 = vrot.lane.b32.xlu0 %v643, 72
      %v2313 = vpop.permute.xlu0 %2312
      %v2315 = vsel %vm647, %v2311, 0
      %v2318 = vsel %vm647, %v2313, 0
      %2320 = vmatprep.subr.bf16.mxu0 0
      %2321 = vmatpush1.bf16.xpose.msra.mxu0 %v2318
      %2322 = vmatprep.subr.bf16.mxu0 0
      %2323 = vmatpush1.bf16.xpose.msra.mxu0 0
      %2324 = vmatprep.subr.bf16.mxu0 0
      %2325 = vmatpush1.bf16.xpose.msra.mxu0 0
      %2326 = vmatprep.subr.bf16.mxu0 0
      %2327 = vmatpush1.bf16.xpose.msra.mxu0 0
      %2328 = vmatprep.subr.bf16.mxu0 0
      %2329 = vmatpush1.bf16.xpose.msra.mxu0 0
      %2330 = vmatprep.subr.bf16.mxu0 0
      %2331 = vmatpush1.bf16.xpose.msra.mxu0 0
      %2332 = vmatprep.subr.bf16.mxu0 0
      %2333 = vmatpush1.bf16.xpose.msra.mxu0 0
      %2334 = vmatprep.subr.bf16.mxu0 0
      %2335 = vmatpush1.bf16.xpose.msra.mxu0 0
      %2336 = vmatprep.subr.bf16.mxu0 0
      %2337 = vmatpush1.bf16.xpose.msra.mxu0 0
      %2338 = vmatprep.subr.bf16.mxu0 0
      %2339 = vmatpush1.bf16.xpose.msra.mxu0 0
      %2340 = vmatprep.subr.bf16.mxu0 0
      %2341 = vmatpush1.bf16.xpose.msra.mxu0 0
      %2342 = vmatprep.subr.bf16.mxu0 0
      %2343 = vmatpush1.bf16.xpose.msra.mxu0 0
      %2344 = vmatprep.subr.bf16.mxu0 0
      %2345 = vmatpush1.bf16.xpose.msra.mxu0 0
      %2346 = vmatprep.subr.bf16.mxu0 0
      %2347 = vmatpush1.bf16.xpose.msra.mxu0 0
      %2348 = vmatprep.subr.bf16.mxu0 0
      %2349 = vmatpush1.bf16.xpose.msra.mxu0 0
      %2350 = vmatprep.subr.bf16.mxu0 0
      %2351 = vmatpush1.bf16.xpose.msra.mxu0 0
      %2352 = vmatprep.mubr.bf16.mxu0 0
      %2353 = vmatmul.mubr.bf16.gmra.mrb[0].mxu0 %v2315
      %v2354 = vpop.f32.mrb[0].mxu0
      %v2355 = vadd.f32 0.0, %v2354
      %v2356 = vpop.f32.mrb[0].mxu0
      %v2357 = vpop.f32.mrb[0].mxu0
      %v2358 = vpop.f32.mrb[0].mxu0
      %2359 = vdwg.mxu0
      %v2360 = vsel %vm647, %v2205, -inf
      %2361 = vmax.xlane.f32.xlu0 %v2360
      %v2362 = vpop.xlane.xlu0 %2361
      %v2363 = vsel %vm647, %v2255, -inf
      %2364 = vmax.xlane.f32.xlu0 %v2363
      %v2365 = vpop.xlane.xlu0 %2364
      %v2366 = vsel %vm647, %v2305, -inf
      %2367 = vmax.xlane.f32.xlu0 %v2366
      %v2368 = vpop.xlane.xlu0 %2367
      %v2369 = vsel %vm647, %v2355, -inf
      %2370 = vmax.xlane.f32.xlu0 %v2369
      %v2371 = vpop.xlane.xlu0 %2370
      %v2372 = vsub.f32 %v2205, %v2362
      %v2373 = vsub.f32 %v2255, %v2365
      %v2374 = vsub.f32 %v2305, %v2368
      %v2375 = vsub.f32 %v2355, %v2371
      %v2376 = vmul.f32 %v2372, 1.442695
      %v2377 = vpow.pop %v2376
      %v2378 = vmul.f32 %v2373, 1.442695
      %v2379 = vpow.pop %v2378
      %v2380 = vmul.f32 %v2374, 1.442695
      %v2381 = vpow.pop %v2380
      %v2382 = vmul.f32 %v2375, 1.442695
      %v2383 = vpow.pop %v2382
      %v2384 = vsel %vm647, %v2377, 0.0
      %2385 = vadd.xlane.f32.xlu0 %v2384
      %v2386 = vpop.xlane.xlu0 %2385
      %v2387 = vsel %vm647, %v2379, 0.0
      %2388 = vadd.xlane.f32.xlu0 %v2387
      %v2389 = vpop.xlane.xlu0 %2388
      %v2390 = vsel %vm647, %v2381, 0.0
      %2391 = vadd.xlane.f32.xlu0 %v2390
      %v2392 = vpop.xlane.xlu0 %2391
      %v2393 = vsel %vm647, %v2383, 0.0
      %2394 = vadd.xlane.f32.xlu0 %v2393
      %v2395 = vpop.xlane.xlu0 %2394
      %v2396 = vrcp.pop %v2386
      %v2397 = vrcp.pop %v2389
      %v2398 = vrcp.pop %v2392
      %v2399 = vrcp.pop %v2395
      %v2400 = vmul.f32 %v2377, %v2396
      %v2401 = vmul.f32 %v2379, %v2397
      %v2402 = vmul.f32 %v2381, %v2398
      %v2403 = vmul.f32 %v2383, %v2399
      %v2404 = vpack.c.bf16 %v2400, %v2400
      %v2405 = vpack.c.bf16 %v2401, %v2401
      %v2406 = vpack.c.bf16 %v2402, %v2402
      %v2407 = vpack.c.bf16 %v2403, %v2403
      %2408 = vrot.lane.b32.xlu0 %v640, 40
      %v2409 = vpop.permute.xlu0 %2408
      %v2411 = vsel %vm647, %v2404, 0
      %v2414 = vsel %vm894, %v2409, 0
      %2416 = vmatprep.subr.bf16.mxu0 0
      %2417 = vmatpush1.bf16.msra.mxu0 %v2414
      %2418 = vmatprep.subr.bf16.mxu0 0
      %2419 = vmatpush1.bf16.msra.mxu0 0
      %2420 = vmatprep.subr.bf16.mxu0 0
      %2421 = vmatpush1.bf16.msra.mxu0 0
      %2422 = vmatprep.subr.bf16.mxu0 0
      %2423 = vmatpush1.bf16.msra.mxu0 0
      %2424 = vmatprep.subr.bf16.mxu0 0
      %2425 = vmatpush1.bf16.msra.mxu0 0
      %2426 = vmatprep.subr.bf16.mxu0 0
      %2427 = vmatpush1.bf16.msra.mxu0 0
      %2428 = vmatprep.subr.bf16.mxu0 0
      %2429 = vmatpush1.bf16.msra.mxu0 0
      %2430 = vmatprep.subr.bf16.mxu0 0
      %2431 = vmatpush1.bf16.msra.mxu0 0
      %2432 = vmatprep.subr.bf16.mxu0 0
      %2433 = vmatpush1.bf16.msra.mxu0 0
      %2434 = vmatprep.subr.bf16.mxu0 0
      %2435 = vmatpush1.bf16.msra.mxu0 0
      %2436 = vmatprep.subr.bf16.mxu0 0
      %2437 = vmatpush1.bf16.msra.mxu0 0
      %2438 = vmatprep.subr.bf16.mxu0 0
      %2439 = vmatpush1.bf16.msra.mxu0 0
      %2440 = vmatprep.subr.bf16.mxu0 0
      %2441 = vmatpush1.bf16.msra.mxu0 0
      %2442 = vmatprep.subr.bf16.mxu0 0
      %2443 = vmatpush1.bf16.msra.mxu0 0
      %2444 = vmatprep.subr.bf16.mxu0 0
      %2445 = vmatpush1.bf16.msra.mxu0 0
      %2446 = vmatprep.subr.bf16.mxu0 0
      %2447 = vmatpush1.bf16.msra.mxu0 0
      %2448 = vmatprep.mubr.bf16.mxu0 0
      %2449 = vmatmul.mubr.bf16.gmra.mrb[0].mxu0 %v2411
      %v2450 = vpop.f32.mrb[0].mxu0
      %v2451 = vadd.f32 0.0, %v2450
      %v2452 = vpop.f32.mrb[0].mxu0
      %v2453 = vpop.f32.mrb[0].mxu0
      %v2454 = vpop.f32.mrb[0].mxu0
      %2455 = vdwg.mxu0
      %2456 = vrot.lane.b32.xlu0 %v641, 40
      %v2457 = vpop.permute.xlu0 %2456
      %v2459 = vsel %vm647, %v2405, 0
      %v2462 = vsel %vm894, %v2457, 0
      %2464 = vmatprep.subr.bf16.mxu0 0
      %2465 = vmatpush1.bf16.msra.mxu0 %v2462
      %2466 = vmatprep.subr.bf16.mxu0 0
      %2467 = vmatpush1.bf16.msra.mxu0 0
      %2468 = vmatprep.subr.bf16.mxu0 0
      %2469 = vmatpush1.bf16.msra.mxu0 0
      %2470 = vmatprep.subr.bf16.mxu0 0
      %2471 = vmatpush1.bf16.msra.mxu0 0
      %2472 = vmatprep.subr.bf16.mxu0 0
      %2473 = vmatpush1.bf16.msra.mxu0 0
      %2474 = vmatprep.subr.bf16.mxu0 0
      %2475 = vmatpush1.bf16.msra.mxu0 0
      %2476 = vmatprep.subr.bf16.mxu0 0
      %2477 = vmatpush1.bf16.msra.mxu0 0
      %2478 = vmatprep.subr.bf16.mxu0 0
      %2479 = vmatpush1.bf16.msra.mxu0 0
      %2480 = vmatprep.subr.bf16.mxu0 0
      %2481 = vmatpush1.bf16.msra.mxu0 0
      %2482 = vmatprep.subr.bf16.mxu0 0
      %2483 = vmatpush1.bf16.msra.mxu0 0
      %2484 = vmatprep.subr.bf16.mxu0 0
      %2485 = vmatpush1.bf16.msra.mxu0 0
      %2486 = vmatprep.subr.bf16.mxu0 0
      %2487 = vmatpush1.bf16.msra.mxu0 0
      %2488 = vmatprep.subr.bf16.mxu0 0
      %2489 = vmatpush1.bf16.msra.mxu0 0
      %2490 = vmatprep.subr.bf16.mxu0 0
      %2491 = vmatpush1.bf16.msra.mxu0 0
      %2492 = vmatprep.subr.bf16.mxu0 0
      %2493 = vmatpush1.bf16.msra.mxu0 0
      %2494 = vmatprep.subr.bf16.mxu0 0
      %2495 = vmatpush1.bf16.msra.mxu0 0
      %2496 = vmatprep.mubr.bf16.mxu0 0
      %2497 = vmatmul.mubr.bf16.gmra.mrb[0].mxu0 %v2459
      %v2498 = vpop.f32.mrb[0].mxu0
      %v2499 = vadd.f32 0.0, %v2498
      %v2500 = vpop.f32.mrb[0].mxu0
      %v2501 = vpop.f32.mrb[0].mxu0
      %v2502 = vpop.f32.mrb[0].mxu0
      %2503 = vdwg.mxu0
      %2504 = vrot.lane.b32.xlu0 %v642, 40
      %v2505 = vpop.permute.xlu0 %2504
      %v2507 = vsel %vm647, %v2406, 0
      %v2510 = vsel %vm894, %v2505, 0
      %2512 = vmatprep.subr.bf16.mxu0 0
      %2513 = vmatpush1.bf16.msra.mxu0 %v2510
      %2514 = vmatprep.subr.bf16.mxu0 0
      %2515 = vmatpush1.bf16.msra.mxu0 0
      %2516 = vmatprep.subr.bf16.mxu0 0
      %2517 = vmatpush1.bf16.msra.mxu0 0
      %2518 = vmatprep.subr.bf16.mxu0 0
      %2519 = vmatpush1.bf16.msra.mxu0 0
      %2520 = vmatprep.subr.bf16.mxu0 0
      %2521 = vmatpush1.bf16.msra.mxu0 0
      %2522 = vmatprep.subr.bf16.mxu0 0
      %2523 = vmatpush1.bf16.msra.mxu0 0
      %2524 = vmatprep.subr.bf16.mxu0 0
      %2525 = vmatpush1.bf16.msra.mxu0 0
      %2526 = vmatprep.subr.bf16.mxu0 0
      %2527 = vmatpush1.bf16.msra.mxu0 0
      %2528 = vmatprep.subr.bf16.mxu0 0
      %2529 = vmatpush1.bf16.msra.mxu0 0
      %2530 = vmatprep.subr.bf16.mxu0 0
      %2531 = vmatpush1.bf16.msra.mxu0 0
      %2532 = vmatprep.subr.bf16.mxu0 0
      %2533 = vmatpush1.bf16.msra.mxu0 0
      %2534 = vmatprep.subr.bf16.mxu0 0
      %2535 = vmatpush1.bf16.msra.mxu0 0
      %2536 = vmatprep.subr.bf16.mxu0 0
      %2537 = vmatpush1.bf16.msra.mxu0 0
      %2538 = vmatprep.subr.bf16.mxu0 0
      %2539 = vmatpush1.bf16.msra.mxu0 0
      %2540 = vmatprep.subr.bf16.mxu0 0
      %2541 = vmatpush1.bf16.msra.mxu0 0
      %2542 = vmatprep.subr.bf16.mxu0 0
      %2543 = vmatpush1.bf16.msra.mxu0 0
      %2544 = vmatprep.mubr.bf16.mxu0 0
      %2545 = vmatmul.mubr.bf16.gmra.mrb[0].mxu0 %v2507
      %v2546 = vpop.f32.mrb[0].mxu0
      %v2547 = vadd.f32 0.0, %v2546
      %v2548 = vpop.f32.mrb[0].mxu0
      %v2549 = vpop.f32.mrb[0].mxu0
      %v2550 = vpop.f32.mrb[0].mxu0
      %2551 = vdwg.mxu0
      %2552 = vrot.lane.b32.xlu0 %v643, 40
      %v2553 = vpop.permute.xlu0 %2552
      %v2555 = vsel %vm647, %v2407, 0
      %v2558 = vsel %vm894, %v2553, 0
      %2560 = vmatprep.subr.bf16.mxu0 0
      %2561 = vmatpush1.bf16.msra.mxu0 %v2558
      %2562 = vmatprep.subr.bf16.mxu0 0
      %2563 = vmatpush1.bf16.msra.mxu0 0
      %2564 = vmatprep.subr.bf16.mxu0 0
      %2565 = vmatpush1.bf16.msra.mxu0 0
      %2566 = vmatprep.subr.bf16.mxu0 0
      %2567 = vmatpush1.bf16.msra.mxu0 0
      %2568 = vmatprep.subr.bf16.mxu0 0
      %2569 = vmatpush1.bf16.msra.mxu0 0
      %2570 = vmatprep.subr.bf16.mxu0 0
      %2571 = vmatpush1.bf16.msra.mxu0 0
      %2572 = vmatprep.subr.bf16.mxu0 0
      %2573 = vmatpush1.bf16.msra.mxu0 0
      %2574 = vmatprep.subr.bf16.mxu0 0
      %2575 = vmatpush1.bf16.msra.mxu0 0
      %2576 = vmatprep.subr.bf16.mxu0 0
      %2577 = vmatpush1.bf16.msra.mxu0 0
      %2578 = vmatprep.subr.bf16.mxu0 0
      %2579 = vmatpush1.bf16.msra.mxu0 0
      %2580 = vmatprep.subr.bf16.mxu0 0
      %2581 = vmatpush1.bf16.msra.mxu0 0
      %2582 = vmatprep.subr.bf16.mxu0 0
      %2583 = vmatpush1.bf16.msra.mxu0 0
      %2584 = vmatprep.subr.bf16.mxu0 0
      %2585 = vmatpush1.bf16.msra.mxu0 0
      %2586 = vmatprep.subr.bf16.mxu0 0
      %2587 = vmatpush1.bf16.msra.mxu0 0
      %2588 = vmatprep.subr.bf16.mxu0 0
      %2589 = vmatpush1.bf16.msra.mxu0 0
      %2590 = vmatprep.subr.bf16.mxu0 0
      %2591 = vmatpush1.bf16.msra.mxu0 0
      %2592 = vmatprep.mubr.bf16.mxu0 0
      %2593 = vmatmul.mubr.bf16.gmra.mrb[0].mxu0 %v2555
      %v2594 = vpop.f32.mrb[0].mxu0
      %v2595 = vadd.f32 0.0, %v2594
      %v2596 = vpop.f32.mrb[0].mxu0
      %v2597 = vpop.f32.mrb[0].mxu0
      %v2598 = vpop.f32.mrb[0].mxu0
      %2599 = vdwg.mxu0
      %v2600 = vpack.c.bf16 %v2499, %v2451
      %v2601 = vpack.c.bf16 %v2595, %v2547
      %v2603 = vsel %vm647, %v2600, 0
      %v2606 = vsel %vm647, %v2601, 0
      %v2609 = vsel %vm894, %v638, 0
      %2611 = vmatprep.subr.bf16.mxu0 0
      %2612 = vmatpush1.bf16.msra.mxu0 %v2609
      %2613 = vmatprep.subr.bf16.mxu0 0
      %2614 = vmatpush1.bf16.msra.mxu0 0
      %2615 = vmatprep.subr.bf16.mxu0 0
      %2616 = vmatpush1.bf16.msra.mxu0 0
      %2617 = vmatprep.subr.bf16.mxu0 0
      %2618 = vmatpush1.bf16.msra.mxu0 0
      %2619 = vmatprep.subr.bf16.mxu0 0
      %2620 = vmatpush1.bf16.msra.mxu0 0
      %2621 = vmatprep.subr.bf16.mxu0 0
      %2622 = vmatpush1.bf16.msra.mxu0 0
      %2623 = vmatprep.subr.bf16.mxu0 0
      %2624 = vmatpush1.bf16.msra.mxu0 0
      %2625 = vmatprep.subr.bf16.mxu0 0
      %2626 = vmatpush1.bf16.msra.mxu0 0
      %2627 = vmatprep.subr.bf16.mxu0 0
      %2628 = vmatpush1.bf16.msra.mxu0 0
      %2629 = vmatprep.subr.bf16.mxu0 0
      %2630 = vmatpush1.bf16.msra.mxu0 0
      %2631 = vmatprep.subr.bf16.mxu0 0
      %2632 = vmatpush1.bf16.msra.mxu0 0
      %2633 = vmatprep.subr.bf16.mxu0 0
      %2634 = vmatpush1.bf16.msra.mxu0 0
      %2635 = vmatprep.subr.bf16.mxu0 0
      %2636 = vmatpush1.bf16.msra.mxu0 0
      %2637 = vmatprep.subr.bf16.mxu0 0
      %2638 = vmatpush1.bf16.msra.mxu0 0
      %2639 = vmatprep.subr.bf16.mxu0 0
      %2640 = vmatpush1.bf16.msra.mxu0 0
      %2641 = vmatprep.subr.bf16.mxu0 0
      %2642 = vmatpush1.bf16.msra.mxu0 0
      %2643 = vmatprep.mubr.bf16.mxu0 0
      %2644 = vmatmul.mubr.bf16.gmra.mrb[0].mxu0 %v2603
      %v2645 = vpop.f32.mrb[0].mxu0
      %v2646 = vadd.f32 0.0, %v2645
      %v2647 = vpop.f32.mrb[0].mxu0
      %v2648 = vpop.f32.mrb[0].mxu0
      %v2649 = vadd.f32 0.0, %v2648
      %v2650 = vpop.f32.mrb[0].mxu0
      %2651 = vmatprep.mubr.bf16.mxu0 0
      %2652 = vmatmul.mubr.bf16.gmra.mrb[0].mxu0 %v2606
      %v2653 = vpop.f32.mrb[0].mxu0
      %v2654 = vadd.f32 0.0, %v2653
      %v2655 = vpop.f32.mrb[0].mxu0
      %v2656 = vpop.f32.mrb[0].mxu0
      %v2657 = vadd.f32 0.0, %v2656
      %v2658 = vpop.f32.mrb[0].mxu0
      %2659 = vdwg.mxu0
      %v2660 = vadd.f32 %v2156, %v2646
      %v2661 = vadd.f32 %v2157, %v2649
      %v2662 = vadd.f32 %v2158, %v2654
      %v2663 = vadd.f32 %v2159, %v2657
      %v2664 = vadd.f32 %v550, %v2660
      %v2665 = vadd.f32 %v551, %v2661
      %v2666 = vadd.f32 %v552, %v2662
      %v2667 = vadd.f32 %v553, %v2663
      %v2668 = vld [vmem:[%s9] sm:$0x1]
      %v2669 = vld [vmem:[%s10] sm:$0x1]
      %v2670 = vsel %vm579, %v2664, 0.0
      %2671 = vadd.xlane.f32.xlu0 %v2670
      %v2672 = vpop.xlane.xlu0 %2671
      %v2673 = vsel %vm579, %v2665, 0.0
      %2674 = vadd.xlane.f32.xlu0 %v2673
      %v2675 = vpop.xlane.xlu0 %2674
      %v2676 = vsel %vm579, %v2666, 0.0
      %2677 = vadd.xlane.f32.xlu0 %v2676
      %v2678 = vpop.xlane.xlu0 %2677
      %v2679 = vsel %vm579, %v2667, 0.0
      %2680 = vadd.xlane.f32.xlu0 %v2679
      %v2681 = vpop.xlane.xlu0 %2680
      %v2682 = vrcp.pop 32.0
      %v2683 = vmul.f32 %v2672, %v2682
      %v2684 = vmul.f32 %v2675, %v2682
      %v2685 = vmul.f32 %v2678, %v2682
      %v2686 = vmul.f32 %v2681, %v2682
      %v2687 = vsub.f32 %v2664, %v2683
      %v2688 = vsub.f32 %v2665, %v2684
      %v2689 = vsub.f32 %v2666, %v2685
      %v2690 = vsub.f32 %v2667, %v2686
      %v2691 = vmul.f32 %v2687, %v2687
      %v2692 = vmul.f32 %v2688, %v2688
      %v2693 = vmul.f32 %v2689, %v2689
      %v2694 = vmul.f32 %v2690, %v2690
      %v2695 = vsel %vm579, %v2691, 0.0
      %2696 = vadd.xlane.f32.xlu0 %v2695
      %v2697 = vpop.xlane.xlu0 %2696
      %v2698 = vsel %vm579, %v2692, 0.0
      %2699 = vadd.xlane.f32.xlu0 %v2698
      %v2700 = vpop.xlane.xlu0 %2699
      %v2701 = vsel %vm579, %v2693, 0.0
      %2702 = vadd.xlane.f32.xlu0 %v2701
      %v2703 = vpop.xlane.xlu0 %2702
      %v2704 = vsel %vm579, %v2694, 0.0
      %2705 = vadd.xlane.f32.xlu0 %v2704
      %v2706 = vpop.xlane.xlu0 %2705
      %v2707 = vmul.f32 %v2697, %v2682
      %v2708 = vmul.f32 %v2700, %v2682
      %v2709 = vmul.f32 %v2703, %v2682
      %v2710 = vmul.f32 %v2706, %v2682
      %v2711 = vadd.f32 %v2707, 1e-05
      %v2712 = vadd.f32 %v2708, 1e-05
      %v2713 = vadd.f32 %v2709, 1e-05
      %v2714 = vadd.f32 %v2710, 1e-05
      %v2715 = vrsqrt.pop %v2711
      %v2716 = vrsqrt.pop %v2712
      %v2717 = vrsqrt.pop %v2713
      %v2718 = vrsqrt.pop %v2714
      %v2719 = vmul.f32 %v2687, %v2715
      %v2720 = vmul.f32 %v2688, %v2716
      %v2721 = vmul.f32 %v2689, %v2717
      %v2722 = vmul.f32 %v2690, %v2718
      %v2724 = vlaneseq
      %v2725 = vshrl.u32 %v2724, 7
      %v2726 = vsub.s32 0, %v2725
      %v2727 = vrot.slane %v2668, %v2726
      %v2729 = vmul.f32 %v2719, %v2727
      %v2730 = vmul.f32 %v2720, %v2727
      %v2731 = vmul.f32 %v2721, %v2727
      %v2732 = vmul.f32 %v2722, %v2727
      %v2734 = vlaneseq
      %v2735 = vshrl.u32 %v2734, 7
      %v2736 = vsub.s32 0, %v2735
      %v2737 = vrot.slane %v2669, %v2736
      %v2739 = vadd.f32 %v2729, %v2737
      %v2740 = vadd.f32 %v2730, %v2737
      %v2741 = vadd.f32 %v2731, %v2737
      %v2742 = vadd.f32 %v2732, %v2737
      %v2743 = vpack.c.bf16 %v2740, %v2739
      %v2744 = vpack.c.bf16 %v2742, %v2741
      %v2745 = vld [vmem:[%s5] sm:$0xf]
      %v2746 = vld [vmem:[%s5 + $0x4] sm:$0xf]
      %v2747 = vld [vmem:[%s5 + $0x8] sm:$0xf]
      %v2748 = vld [vmem:[%s5 + $0xc] sm:$0xf]
      %v2749 = vld [vmem:[%s6] sm:$0x1]
      %v2751 = vlaneseq
      %v2752 = vshrl.u32 %v2751, 7
      %v2753 = vsub.s32 0, %v2752
      %v2754 = vrot.slane %v2749, %v2753
      %v2760 = vunpack.c.l.b16 %v2745
      %v2761 = vunpack.c.l.b16 %v2746
      %v2762 = vunpack.c.l.b16 %v2747
      %v2763 = vunpack.c.l.b16 %v2748
      %v2764 = vpack.c.b16 %v2761, %v2760
      %v2765 = vpack.c.b16 %v2763, %v2762
      %v2769 = vsel %vm579, %v2743, 0
      %v2772 = vsel %vm579, %v2744, 0
      %2774 = vmatprep.subr.bf16.mxu0 0
      %2775 = vmatpush1.bf16.msra.mxu0 %v2764
      %2776 = vmatprep.subr.bf16.mxu0 0
      %2777 = vmatpush1.bf16.msra.mxu0 %v2765
      %2778 = vmatprep.subr.bf16.mxu0 0
      %2779 = vmatpush1.bf16.msra.mxu0 0
      %2780 = vmatprep.subr.bf16.mxu0 0
      %2781 = vmatpush1.bf16.msra.mxu0 0
      %2782 = vmatprep.subr.bf16.mxu0 0
      %2783 = vmatpush1.bf16.msra.mxu0 0
      %2784 = vmatprep.subr.bf16.mxu0 0
      %2785 = vmatpush1.bf16.msra.mxu0 0
      %2786 = vmatprep.subr.bf16.mxu0 0
      %2787 = vmatpush1.bf16.msra.mxu0 0
      %2788 = vmatprep.subr.bf16.mxu0 0
      %2789 = vmatpush1.bf16.msra.mxu0 0
      %2790 = vmatprep.subr.bf16.mxu0 0
      %2791 = vmatpush1.bf16.msra.mxu0 0
      %2792 = vmatprep.subr.bf16.mxu0 0
      %2793 = vmatpush1.bf16.msra.mxu0 0
      %2794 = vmatprep.subr.bf16.mxu0 0
      %2795 = vmatpush1.bf16.msra.mxu0 0
      %2796 = vmatprep.subr.bf16.mxu0 0
      %2797 = vmatpush1.bf16.msra.mxu0 0
      %2798 = vmatprep.subr.bf16.mxu0 0
      %2799 = vmatpush1.bf16.msra.mxu0 0
      %2800 = vmatprep.subr.bf16.mxu0 0
      %2801 = vmatpush1.bf16.msra.mxu0 0
      %2802 = vmatprep.subr.bf16.mxu0 0
      %2803 = vmatpush1.bf16.msra.mxu0 0
      %2804 = vmatprep.subr.bf16.mxu0 0
      %2805 = vmatpush1.bf16.msra.mxu0 0
      %2806 = vmatprep.mubr.bf16.mxu0 0
      %2807 = vmatmul.mubr.bf16.gmra.mrb[0].mxu0 %v2769
      %v2808 = vpop.f32.mrb[0].mxu0
      %v2809 = vadd.f32 %v2754, %v2808
      %v2810 = vpop.f32.mrb[0].mxu0
      %v2811 = vpop.f32.mrb[0].mxu0
      %v2812 = vadd.f32 %v2754, %v2811
      %v2813 = vpop.f32.mrb[0].mxu0
      %2814 = vmatprep.mubr.bf16.mxu0 0
      %2815 = vmatmul.mubr.bf16.gmra.mrb[0].mxu0 %v2772
      %v2816 = vpop.f32.mrb[0].mxu0
      %v2817 = vadd.f32 %v2754, %v2816
      %v2818 = vpop.f32.mrb[0].mxu0
      %v2819 = vpop.f32.mrb[0].mxu0
      %v2820 = vadd.f32 %v2754, %v2819
      %v2821 = vpop.f32.mrb[0].mxu0
      %2822 = vdwg.mxu0
      %v2823 = vmax.f32 %v2809, 0.0
      %v2824 = vmax.f32 %v2812, 0.0
      %v2825 = vmax.f32 %v2817, 0.0
      %v2826 = vmax.f32 %v2820, 0.0
      %v2827 = vpack.c.bf16 %v2824, %v2823
      %v2828 = vpack.c.bf16 %v2826, %v2825
      %v2829 = vld [vmem:[%s7] sm:$0xf]
      %v2830 = vld [vmem:[%s7 + $0x4] sm:$0xf]
      %v2831 = vld [vmem:[%s7 + $0x8] sm:$0xf]
      %v2832 = vld [vmem:[%s7 + $0xc] sm:$0xf]
      %v2833 = vld [vmem:[%s7 + $0x10] sm:$0xf]
      %v2834 = vld [vmem:[%s7 + $0x14] sm:$0xf]
      %v2835 = vld [vmem:[%s7 + $0x18] sm:$0xf]
      %v2836 = vld [vmem:[%s7 + $0x1c] sm:$0xf]
      %v2837 = vld [vmem:[%s8] sm:$0x1]
      %v2839 = vlaneseq
      %v2840 = vshrl.u32 %v2839, 7
      %v2841 = vsub.s32 0, %v2840
      %v2842 = vrot.slane %v2837, %v2841
      %v2852 = vunpack.c.l.b16 %v2829
      %v2853 = vunpack.c.l.b16 %v2830
      %v2854 = vunpack.c.l.b16 %v2831
      %v2855 = vunpack.c.l.b16 %v2832
      %v2856 = vunpack.c.l.b16 %v2833
      %v2857 = vunpack.c.l.b16 %v2834
      %v2858 = vunpack.c.l.b16 %v2835
      %v2859 = vunpack.c.l.b16 %v2836
      %v2860 = vpack.c.b16 %v2853, %v2852
      %v2861 = vpack.c.b16 %v2855, %v2854
      %v2862 = vpack.c.b16 %v2857, %v2856
      %v2863 = vpack.c.b16 %v2859, %v2858
      %vm2868 = vcmask 523264
      %v2870 = vsel %vm2868, %v2827, 0
      %v2873 = vsel %vm2868, %v2828, 0
      %2875 = vmatprep.subr.bf16.mxu0 0
      %2876 = vmatpush1.bf16.msra.mxu0 %v2860
      %2877 = vmatprep.subr.bf16.mxu0 0
      %2878 = vmatpush1.bf16.msra.mxu0 %v2861
      %2879 = vmatprep.subr.bf16.mxu0 0
      %2880 = vmatpush1.bf16.msra.mxu0 %v2862
      %2881 = vmatprep.subr.bf16.mxu0 0
      %2882 = vmatpush1.bf16.msra.mxu0 %v2863
      %2883 = vmatprep.subr.bf16.mxu0 0
      %2884 = vmatpush1.bf16.msra.mxu0 0
      %2885 = vmatprep.subr.bf16.mxu0 0
      %2886 = vmatpush1.bf16.msra.mxu0 0
      %2887 = vmatprep.subr.bf16.mxu0 0
      %2888 = vmatpush1.bf16.msra.mxu0 0
      %2889 = vmatprep.subr.bf16.mxu0 0
      %2890 = vmatpush1.bf16.msra.mxu0 0
      %2891 = vmatprep.subr.bf16.mxu0 0
      %2892 = vmatpush1.bf16.msra.mxu0 0
      %2893 = vmatprep.subr.bf16.mxu0 0
      %2894 = vmatpush1.bf16.msra.mxu0 0
      %2895 = vmatprep.subr.bf16.mxu0 0
      %2896 = vmatpush1.bf16.msra.mxu0 0
      %2897 = vmatprep.subr.bf16.mxu0 0
      %2898 = vmatpush1.bf16.msra.mxu0 0
      %2899 = vmatprep.subr.bf16.mxu0 0
      %2900 = vmatpush1.bf16.msra.mxu0 0
      %2901 = vmatprep.subr.bf16.mxu0 0
      %2902 = vmatpush1.bf16.msra.mxu0 0
      %2903 = vmatprep.subr.bf16.mxu0 0
      %2904 = vmatpush1.bf16.msra.mxu0 0
      %2905 = vmatprep.subr.bf16.mxu0 0
      %2906 = vmatpush1.bf16.msra.mxu0 0
      %2907 = vmatprep.mubr.bf16.mxu0 0
      %2908 = vmatmul.mubr.bf16.gmra.mrb[0].mxu0 %v2870
      %v2909 = vpop.f32.mrb[0].mxu0
      %v2910 = vadd.f32 %v2842, %v2909
      %v2911 = vpop.f32.mrb[0].mxu0
      %v2912 = vpop.f32.mrb[0].mxu0
      %v2913 = vadd.f32 %v2842, %v2912
      %v2914 = vpop.f32.mrb[0].mxu0
      %2915 = vmatprep.mubr.bf16.mxu0 0
      %2916 = vmatmul.mubr.bf16.gmra.mrb[0].mxu0 %v2873
      %v2917 = vpop.f32.mrb[0].mxu0
      %v2918 = vadd.f32 %v2842, %v2917
      %v2919 = vpop.f32.mrb[0].mxu0
      %v2920 = vpop.f32.mrb[0].mxu0
      %v2921 = vadd.f32 %v2842, %v2920
      %v2922 = vpop.f32.mrb[0].mxu0
      %2923 = vdwg.mxu0
      %v2924 = vadd.f32 %v2739, %v2910
      %v2925 = vadd.f32 %v2740, %v2913
      %v2926 = vadd.f32 %v2741, %v2918
      %v2927 = vadd.f32 %v2742, %v2921
      %v2928 = vld [vmem:[%s11] sm:$0x1]
      %v2929 = vld [vmem:[%s12] sm:$0x1]
      %v2930 = vsel %vm579, %v2924, 0.0
      %2931 = vadd.xlane.f32.xlu0 %v2930
      %v2932 = vpop.xlane.xlu0 %2931
      %v2933 = vsel %vm579, %v2925, 0.0
      %2934 = vadd.xlane.f32.xlu0 %v2933
      %v2935 = vpop.xlane.xlu0 %2934
      %v2936 = vsel %vm579, %v2926, 0.0
      %2937 = vadd.xlane.f32.xlu0 %v2936
      %v2938 = vpop.xlane.xlu0 %2937
      %v2939 = vsel %vm579, %v2927, 0.0
      %2940 = vadd.xlane.f32.xlu0 %v2939
      %v2941 = vpop.xlane.xlu0 %2940
      %v2942 = vmul.f32 %v2932, %v2682
      %v2943 = vmul.f32 %v2935, %v2682
      %v2944 = vmul.f32 %v2938, %v2682
      %v2945 = vmul.f32 %v2941, %v2682
      %v2946 = vsub.f32 %v2924, %v2942
      %v2947 = vsub.f32 %v2925, %v2943
      %v2948 = vsub.f32 %v2926, %v2944
      %v2949 = vsub.f32 %v2927, %v2945
      %v2950 = vmul.f32 %v2946, %v2946
      %v2951 = vmul.f32 %v2947, %v2947
      %v2952 = vmul.f32 %v2948, %v2948
      %v2953 = vmul.f32 %v2949, %v2949
      %v2954 = vsel %vm579, %v2950, 0.0
      %2955 = vadd.xlane.f32.xlu0 %v2954
      %v2956 = vpop.xlane.xlu0 %2955
      %v2957 = vsel %vm579, %v2951, 0.0
      %2958 = vadd.xlane.f32.xlu0 %v2957
      %v2959 = vpop.xlane.xlu0 %2958
      %v2960 = vsel %vm579, %v2952, 0.0
      %2961 = vadd.xlane.f32.xlu0 %v2960
      %v2962 = vpop.xlane.xlu0 %2961
      %v2963 = vsel %vm579, %v2953, 0.0
      %2964 = vadd.xlane.f32.xlu0 %v2963
      %v2965 = vpop.xlane.xlu0 %2964
      %v2966 = vmul.f32 %v2956, %v2682
      %v2967 = vmul.f32 %v2959, %v2682
      %v2968 = vmul.f32 %v2962, %v2682
      %v2969 = vmul.f32 %v2965, %v2682
      %v2970 = vadd.f32 %v2966, 1e-05
      %v2971 = vadd.f32 %v2967, 1e-05
      %v2972 = vadd.f32 %v2968, 1e-05
      %v2973 = vadd.f32 %v2969, 1e-05
      %v2974 = vrsqrt.pop %v2970
      %v2975 = vrsqrt.pop %v2971
      %v2976 = vrsqrt.pop %v2972
      %v2977 = vrsqrt.pop %v2973
      %v2978 = vmul.f32 %v2946, %v2974
      %v2979 = vmul.f32 %v2947, %v2975
      %v2980 = vmul.f32 %v2948, %v2976
      %v2981 = vmul.f32 %v2949, %v2977
      %v2983 = vlaneseq
      %v2984 = vshrl.u32 %v2983, 7
      %v2985 = vsub.s32 0, %v2984
      %v2986 = vrot.slane %v2928, %v2985
      %v2988 = vmul.f32 %v2978, %v2986
      %v2989 = vmul.f32 %v2979, %v2986
      %v2990 = vmul.f32 %v2980, %v2986
      %v2991 = vmul.f32 %v2981, %v2986
      %v2993 = vlaneseq
      %v2994 = vshrl.u32 %v2993, 7
      %v2995 = vsub.s32 0, %v2994
      %v2996 = vrot.slane %v2929, %v2995
      %v2998 = vadd.f32 %v2988, %v2996
      %v2999 = vadd.f32 %v2989, %v2996
      %v3000 = vadd.f32 %v2990, %v2996
      %v3001 = vadd.f32 %v2991, %v2996
      %v3002 = vpack.c.bf16 %v2999, %v2998
      %v3003 = vpack.c.bf16 %v3001, %v3000
      %s3004 = scalar_lea.vmem %s1, 16
      %v3005 = vld [vmem:[%s3004] sm:$0xf]
      %v3006 = vld [vmem:[%s3004 + $0x4] sm:$0xf]
      %v3007 = vld [vmem:[%s3004 + $0x8] sm:$0xf]
      %v3008 = vld [vmem:[%s3004 + $0xc] sm:$0xf]
      %s3009 = scalar_lea.vmem %s2, 1
      %v3010 = vld [vmem:[%s3009] sm:$0x1]
      %v3012 = vlaneseq
      %v3013 = vshrl.u32 %v3012, 7
      %v3014 = vsub.s32 0, %v3013
      %v3015 = vrot.slane %v3010, %v3014
      %v3021 = vunpack.c.l.b16 %v3005
      %v3022 = vunpack.c.l.b16 %v3006
      %v3023 = vunpack.c.l.b16 %v3007
      %v3024 = vunpack.c.l.b16 %v3008
      %v3025 = vpack.c.b16 %v3022, %v3021
      %v3026 = vpack.c.b16 %v3024, %v3023
      %v3030 = vsel %vm579, %v3002, 0
      %v3033 = vsel %vm579, %v3003, 0
      %3035 = vmatprep.subr.bf16.mxu0 0
      %3036 = vmatpush1.bf16.msra.mxu0 %v3025
      %3037 = vmatprep.subr.bf16.mxu0 0
      %3038 = vmatpush1.bf16.msra.mxu0 %v3026
      %3039 = vmatprep.subr.bf16.mxu0 0
      %3040 = vmatpush1.bf16.msra.mxu0 0
      %3041 = vmatprep.subr.bf16.mxu0 0
      %3042 = vmatpush1.bf16.msra.mxu0 0
      %3043 = vmatprep.subr.bf16.mxu0 0
      %3044 = vmatpush1.bf16.msra.mxu0 0
      %3045 = vmatprep.subr.bf16.mxu0 0
      %3046 = vmatpush1.bf16.msra.mxu0 0
      %3047 = vmatprep.subr.bf16.mxu0 0
      %3048 = vmatpush1.bf16.msra.mxu0 0
      %3049 = vmatprep.subr.bf16.mxu0 0
      %3050 = vmatpush1.bf16.msra.mxu0 0
      %3051 = vmatprep.subr.bf16.mxu0 0
      %3052 = vmatpush1.bf16.msra.mxu0 0
      %3053 = vmatprep.subr.bf16.mxu0 0
      %3054 = vmatpush1.bf16.msra.mxu0 0
      %3055 = vmatprep.subr.bf16.mxu0 0
      %3056 = vmatpush1.bf16.msra.mxu0 0
      %3057 = vmatprep.subr.bf16.mxu0 0
      %3058 = vmatpush1.bf16.msra.mxu0 0
      %3059 = vmatprep.subr.bf16.mxu0 0
      %3060 = vmatpush1.bf16.msra.mxu0 0
      %3061 = vmatprep.subr.bf16.mxu0 0
      %3062 = vmatpush1.bf16.msra.mxu0 0
      %3063 = vmatprep.subr.bf16.mxu0 0
      %3064 = vmatpush1.bf16.msra.mxu0 0
      %3065 = vmatprep.subr.bf16.mxu0 0
      %3066 = vmatpush1.bf16.msra.mxu0 0
      %3067 = vmatprep.mubr.bf16.mxu0 0
      %3068 = vmatmul.mubr.bf16.gmra.mrb[0].mxu0 %v3030
      %v3069 = vpop.f32.mrb[0].mxu0
      %v3070 = vadd.f32 %v3015, %v3069
      %v3071 = vpop.f32.mrb[0].mxu0
      %v3072 = vpop.f32.mrb[0].mxu0
      %v3073 = vadd.f32 %v3015, %v3072
      %v3074 = vpop.f32.mrb[0].mxu0
      %3075 = vmatprep.mubr.bf16.mxu0 0
      %3076 = vmatmul.mubr.bf16.gmra.mrb[0].mxu0 %v3033
      %v3077 = vpop.f32.mrb[0].mxu0
      %v3078 = vadd.f32 %v3015, %v3077
      %v3079 = vpop.f32.mrb[0].mxu0
      %v3080 = vpop.f32.mrb[0].mxu0
      %v3081 = vadd.f32 %v3015, %v3080
      %v3082 = vpop.f32.mrb[0].mxu0
      %3083 = vdwg.mxu0
      %s3084 = scalar_lea.vmem %s3, 16
      %v3085 = vld [vmem:[%s3084] sm:$0xf]
      %v3086 = vld [vmem:[%s3084 + $0x4] sm:$0xf]
      %v3087 = vld [vmem:[%s3084 + $0x8] sm:$0xf]
      %v3088 = vld [vmem:[%s3084 + $0xc] sm:$0xf]
      %s3089 = scalar_lea.vmem %s4, 1
      %v3090 = vld [vmem:[%s3089] sm:$0x1]
      %v3091 = vpack.c.bf16 %v3070, %v3070
      %v3092 = vpack.c.bf16 %v3073, %v3073
      %v3093 = vpack.c.bf16 %v3078, %v3078
      %v3094 = vpack.c.bf16 %v3081, %v3081
      %3096 = vrot.lane.b32.xlu0 %v3091, 96
      %v3097 = vpop.permute.xlu0 %3096
      %v3099 = vsel %vm647, %v3091, 0
      %v3102 = vsel %vm647, %v3097, 0
      %3104 = vmatprep.subr.bf16.mxu0 0
      %3105 = vmatpush1.bf16.xpose.msra.mxu0 %v3102
      %3106 = vmatprep.subr.bf16.mxu0 0
      %3107 = vmatpush1.bf16.xpose.msra.mxu0 0
      %3108 = vmatprep.subr.bf16.mxu0 0
      %3109 = vmatpush1.bf16.xpose.msra.mxu0 0
      %3110 = vmatprep.subr.bf16.mxu0 0
      %3111 = vmatpush1.bf16.xpose.msra.mxu0 0
      %3112 = vmatprep.subr.bf16.mxu0 0
      %3113 = vmatpush1.bf16.xpose.msra.mxu0 0
      %3114 = vmatprep.subr.bf16.mxu0 0
      %3115 = vmatpush1.bf16.xpose.msra.mxu0 0
      %3116 = vmatprep.subr.bf16.mxu0 0
      %3117 = vmatpush1.bf16.xpose.msra.mxu0 0
      %3118 = vmatprep.subr.bf16.mxu0 0
      %3119 = vmatpush1.bf16.xpose.msra.mxu0 0
      %3120 = vmatprep.subr.bf16.mxu0 0
      %3121 = vmatpush1.bf16.xpose.msra.mxu0 0
      %3122 = vmatprep.subr.bf16.mxu0 0
      %3123 = vmatpush1.bf16.xpose.msra.mxu0 0
      %3124 = vmatprep.subr.bf16.mxu0 0
      %3125 = vmatpush1.bf16.xpose.msra.mxu0 0
      %3126 = vmatprep.subr.bf16.mxu0 0
      %3127 = vmatpush1.bf16.xpose.msra.mxu0 0
      %3128 = vmatprep.subr.bf16.mxu0 0
      %3129 = vmatpush1.bf16.xpose.msra.mxu0 0
      %3130 = vmatprep.subr.bf16.mxu0 0
      %3131 = vmatpush1.bf16.xpose.msra.mxu0 0
      %3132 = vmatprep.subr.bf16.mxu0 0
      %3133 = vmatpush1.bf16.xpose.msra.mxu0 0
      %3134 = vmatprep.subr.bf16.mxu0 0
      %3135 = vmatpush1.bf16.xpose.msra.mxu0 0
      %3136 = vmatprep.mubr.bf16.mxu0 0
      %3137 = vmatmul.mubr.bf16.gmra.mrb[0].mxu0 %v3099
      %v3138 = vpop.f32.mrb[0].mxu0
      %v3139 = vadd.f32 0.0, %v3138
      %v3140 = vpop.f32.mrb[0].mxu0
      %v3141 = vpop.f32.mrb[0].mxu0
      %v3142 = vpop.f32.mrb[0].mxu0
      %3143 = vdwg.mxu0
      %3145 = vrot.lane.b32.xlu0 %v3092, 96
      %v3146 = vpop.permute.xlu0 %3145
      %v3148 = vsel %vm647, %v3092, 0
      %v3151 = vsel %vm647, %v3146, 0
      %3153 = vmatprep.subr.bf16.mxu0 0
      %3154 = vmatpush1.bf16.xpose.msra.mxu0 %v3151
      %3155 = vmatprep.subr.bf16.mxu0 0
      %3156 = vmatpush1.bf16.xpose.msra.mxu0 0
      %3157 = vmatprep.subr.bf16.mxu0 0
      %3158 = vmatpush1.bf16.xpose.msra.mxu0 0
      %3159 = vmatprep.subr.bf16.mxu0 0
      %3160 = vmatpush1.bf16.xpose.msra.mxu0 0
      %3161 = vmatprep.subr.bf16.mxu0 0
      %3162 = vmatpush1.bf16.xpose.msra.mxu0 0
      %3163 = vmatprep.subr.bf16.mxu0 0
      %3164 = vmatpush1.bf16.xpose.msra.mxu0 0
      %3165 = vmatprep.subr.bf16.mxu0 0
      %3166 = vmatpush1.bf16.xpose.msra.mxu0 0
      %3167 = vmatprep.subr.bf16.mxu0 0
      %3168 = vmatpush1.bf16.xpose.msra.mxu0 0
      %3169 = vmatprep.subr.bf16.mxu0 0
      %3170 = vmatpush1.bf16.xpose.msra.mxu0 0
      %3171 = vmatprep.subr.bf16.mxu0 0
      %3172 = vmatpush1.bf16.xpose.msra.mxu0 0
      %3173 = vmatprep.subr.bf16.mxu0 0
      %3174 = vmatpush1.bf16.xpose.msra.mxu0 0
      %3175 = vmatprep.subr.bf16.mxu0 0
      %3176 = vmatpush1.bf16.xpose.msra.mxu0 0
      %3177 = vmatprep.subr.bf16.mxu0 0
      %3178 = vmatpush1.bf16.xpose.msra.mxu0 0
      %3179 = vmatprep.subr.bf16.mxu0 0
      %3180 = vmatpush1.bf16.xpose.msra.mxu0 0
      %3181 = vmatprep.subr.bf16.mxu0 0
      %3182 = vmatpush1.bf16.xpose.msra.mxu0 0
      %3183 = vmatprep.subr.bf16.mxu0 0
      %3184 = vmatpush1.bf16.xpose.msra.mxu0 0
      %3185 = vmatprep.mubr.bf16.mxu0 0
      %3186 = vmatmul.mubr.bf16.gmra.mrb[0].mxu0 %v3148
      %v3187 = vpop.f32.mrb[0].mxu0
      %v3188 = vadd.f32 0.0, %v3187
      %v3189 = vpop.f32.mrb[0].mxu0
      %v3190 = vpop.f32.mrb[0].mxu0
      %v3191 = vpop.f32.mrb[0].mxu0
      %3192 = vdwg.mxu0
      %3194 = vrot.lane.b32.xlu0 %v3093, 96
      %v3195 = vpop.permute.xlu0 %3194
      %v3197 = vsel %vm647, %v3093, 0
      %v3200 = vsel %vm647, %v3195, 0
      %3202 = vmatprep.subr.bf16.mxu0 0
      %3203 = vmatpush1.bf16.xpose.msra.mxu0 %v3200
      %3204 = vmatprep.subr.bf16.mxu0 0
      %3205 = vmatpush1.bf16.xpose.msra.mxu0 0
      %3206 = vmatprep.subr.bf16.mxu0 0
      %3207 = vmatpush1.bf16.xpose.msra.mxu0 0
      %3208 = vmatprep.subr.bf16.mxu0 0
      %3209 = vmatpush1.bf16.xpose.msra.mxu0 0
      %3210 = vmatprep.subr.bf16.mxu0 0
      %3211 = vmatpush1.bf16.xpose.msra.mxu0 0
      %3212 = vmatprep.subr.bf16.mxu0 0
      %3213 = vmatpush1.bf16.xpose.msra.mxu0 0
      %3214 = vmatprep.subr.bf16.mxu0 0
      %3215 = vmatpush1.bf16.xpose.msra.mxu0 0
      %3216 = vmatprep.subr.bf16.mxu0 0
      %3217 = vmatpush1.bf16.xpose.msra.mxu0 0
      %3218 = vmatprep.subr.bf16.mxu0 0
      %3219 = vmatpush1.bf16.xpose.msra.mxu0 0
      %3220 = vmatprep.subr.bf16.mxu0 0
      %3221 = vmatpush1.bf16.xpose.msra.mxu0 0
      %3222 = vmatprep.subr.bf16.mxu0 0
      %3223 = vmatpush1.bf16.xpose.msra.mxu0 0
      %3224 = vmatprep.subr.bf16.mxu0 0
      %3225 = vmatpush1.bf16.xpose.msra.mxu0 0
      %3226 = vmatprep.subr.bf16.mxu0 0
      %3227 = vmatpush1.bf16.xpose.msra.mxu0 0
      %3228 = vmatprep.subr.bf16.mxu0 0
      %3229 = vmatpush1.bf16.xpose.msra.mxu0 0
      %3230 = vmatprep.subr.bf16.mxu0 0
      %3231 = vmatpush1.bf16.xpose.msra.mxu0 0
      %3232 = vmatprep.subr.bf16.mxu0 0
      %3233 = vmatpush1.bf16.xpose.msra.mxu0 0
      %3234 = vmatprep.mubr.bf16.mxu0 0
      %3235 = vmatmul.mubr.bf16.gmra.mrb[0].mxu0 %v3197
      %v3236 = vpop.f32.mrb[0].mxu0
      %v3237 = vadd.f32 0.0, %v3236
      %v3238 = vpop.f32.mrb[0].mxu0
      %v3239 = vpop.f32.mrb[0].mxu0
      %v3240 = vpop.f32.mrb[0].mxu0
      %3241 = vdwg.mxu0
      %3243 = vrot.lane.b32.xlu0 %v3094, 96
      %v3244 = vpop.permute.xlu0 %3243
      %v3246 = vsel %vm647, %v3094, 0
      %v3249 = vsel %vm647, %v3244, 0
      %3251 = vmatprep.subr.bf16.mxu0 0
      %3252 = vmatpush1.bf16.xpose.msra.mxu0 %v3249
      %3253 = vmatprep.subr.bf16.mxu0 0
      %3254 = vmatpush1.bf16.xpose.msra.mxu0 0
      %3255 = vmatprep.subr.bf16.mxu0 0
      %3256 = vmatpush1.bf16.xpose.msra.mxu0 0
      %3257 = vmatprep.subr.bf16.mxu0 0
      %3258 = vmatpush1.bf16.xpose.msra.mxu0 0
      %3259 = vmatprep.subr.bf16.mxu0 0
      %3260 = vmatpush1.bf16.xpose.msra.mxu0 0
      %3261 = vmatprep.subr.bf16.mxu0 0
      %3262 = vmatpush1.bf16.xpose.msra.mxu0 0
      %3263 = vmatprep.subr.bf16.mxu0 0
      %3264 = vmatpush1.bf16.xpose.msra.mxu0 0
      %3265 = vmatprep.subr.bf16.mxu0 0
      %3266 = vmatpush1.bf16.xpose.msra.mxu0 0
      %3267 = vmatprep.subr.bf16.mxu0 0
      %3268 = vmatpush1.bf16.xpose.msra.mxu0 0
      %3269 = vmatprep.subr.bf16.mxu0 0
      %3270 = vmatpush1.bf16.xpose.msra.mxu0 0
      %3271 = vmatprep.subr.bf16.mxu0 0
      %3272 = vmatpush1.bf16.xpose.msra.mxu0 0
      %3273 = vmatprep.subr.bf16.mxu0 0
      %3274 = vmatpush1.bf16.xpose.msra.mxu0 0
      %3275 = vmatprep.subr.bf16.mxu0 0
      %3276 = vmatpush1.bf16.xpose.msra.mxu0 0
      %3277 = vmatprep.subr.bf16.mxu0 0
      %3278 = vmatpush1.bf16.xpose.msra.mxu0 0
      %3279 = vmatprep.subr.bf16.mxu0 0
      %3280 = vmatpush1.bf16.xpose.msra.mxu0 0
      %3281 = vmatprep.subr.bf16.mxu0 0
      %3282 = vmatpush1.bf16.xpose.msra.mxu0 0
      %3283 = vmatprep.mubr.bf16.mxu0 0
      %3284 = vmatmul.mubr.bf16.gmra.mrb[0].mxu0 %v3246
      %v3285 = vpop.f32.mrb[0].mxu0
      %v3286 = vadd.f32 0.0, %v3285
      %v3287 = vpop.f32.mrb[0].mxu0
      %v3288 = vpop.f32.mrb[0].mxu0
      %v3289 = vpop.f32.mrb[0].mxu0
      %3290 = vdwg.mxu0
      %v3291 = vsel %vm647, %v3139, -inf
      %3292 = vmax.xlane.f32.xlu0 %v3291
      %v3293 = vpop.xlane.xlu0 %3292
      %v3294 = vsel %vm647, %v3188, -inf
      %3295 = vmax.xlane.f32.xlu0 %v3294
      %v3296 = vpop.xlane.xlu0 %3295
      %v3297 = vsel %vm647, %v3237, -inf
      %3298 = vmax.xlane.f32.xlu0 %v3297
      %v3299 = vpop.xlane.xlu0 %3298
      %v3300 = vsel %vm647, %v3286, -inf
      %3301 = vmax.xlane.f32.xlu0 %v3300
      %v3302 = vpop.xlane.xlu0 %3301
      %v3303 = vsub.f32 %v3139, %v3293
      %v3304 = vsub.f32 %v3188, %v3296
      %v3305 = vsub.f32 %v3237, %v3299
      %v3306 = vsub.f32 %v3286, %v3302
      %v3307 = vmul.f32 %v3303, 1.442695
      %v3308 = vpow.pop %v3307
      %v3309 = vmul.f32 %v3304, 1.442695
      %v3310 = vpow.pop %v3309
      %v3311 = vmul.f32 %v3305, 1.442695
      %v3312 = vpow.pop %v3311
      %v3313 = vmul.f32 %v3306, 1.442695
      %v3314 = vpow.pop %v3313
      %v3315 = vsel %vm647, %v3308, 0.0
      %3316 = vadd.xlane.f32.xlu0 %v3315
      %v3317 = vpop.xlane.xlu0 %3316
      %v3318 = vsel %vm647, %v3310, 0.0
      %3319 = vadd.xlane.f32.xlu0 %v3318
      %v3320 = vpop.xlane.xlu0 %3319
      %v3321 = vsel %vm647, %v3312, 0.0
      %3322 = vadd.xlane.f32.xlu0 %v3321
      %v3323 = vpop.xlane.xlu0 %3322
      %v3324 = vsel %vm647, %v3314, 0.0
      %3325 = vadd.xlane.f32.xlu0 %v3324
      %v3326 = vpop.xlane.xlu0 %3325
      %v3327 = vrcp.pop %v3317
      %v3328 = vrcp.pop %v3320
      %v3329 = vrcp.pop %v3323
      %v3330 = vrcp.pop %v3326
      %v3331 = vmul.f32 %v3308, %v3327
      %v3332 = vmul.f32 %v3310, %v3328
      %v3333 = vmul.f32 %v3312, %v3329
      %v3334 = vmul.f32 %v3314, %v3330
      %v3335 = vpack.c.bf16 %v3331, %v3331
      %v3336 = vpack.c.bf16 %v3332, %v3332
      %v3337 = vpack.c.bf16 %v3333, %v3333
      %v3338 = vpack.c.bf16 %v3334, %v3334
      %3339 = vrot.lane.b32.xlu0 %v3091, 64
      %v3340 = vpop.permute.xlu0 %3339
      %v3342 = vsel %vm647, %v3335, 0
      %v3345 = vsel %vm894, %v3340, 0
      %3347 = vmatprep.subr.bf16.mxu0 0
      %3348 = vmatpush1.bf16.msra.mxu0 %v3345
      %3349 = vmatprep.subr.bf16.mxu0 0
      %3350 = vmatpush1.bf16.msra.mxu0 0
      %3351 = vmatprep.subr.bf16.mxu0 0
      %3352 = vmatpush1.bf16.msra.mxu0 0
      %3353 = vmatprep.subr.bf16.mxu0 0
      %3354 = vmatpush1.bf16.msra.mxu0 0
      %3355 = vmatprep.subr.bf16.mxu0 0
      %3356 = vmatpush1.bf16.msra.mxu0 0
      %3357 = vmatprep.subr.bf16.mxu0 0
      %3358 = vmatpush1.bf16.msra.mxu0 0
      %3359 = vmatprep.subr.bf16.mxu0 0
      %3360 = vmatpush1.bf16.msra.mxu0 0
      %3361 = vmatprep.subr.bf16.mxu0 0
      %3362 = vmatpush1.bf16.msra.mxu0 0
      %3363 = vmatprep.subr.bf16.mxu0 0
      %3364 = vmatpush1.bf16.msra.mxu0 0
      %3365 = vmatprep.subr.bf16.mxu0 0
      %3366 = vmatpush1.bf16.msra.mxu0 0
      %3367 = vmatprep.subr.bf16.mxu0 0
      %3368 = vmatpush1.bf16.msra.mxu0 0
      %3369 = vmatprep.subr.bf16.mxu0 0
      %3370 = vmatpush1.bf16.msra.mxu0 0
      %3371 = vmatprep.subr.bf16.mxu0 0
      %3372 = vmatpush1.bf16.msra.mxu0 0
      %3373 = vmatprep.subr.bf16.mxu0 0
      %3374 = vmatpush1.bf16.msra.mxu0 0
      %3375 = vmatprep.subr.bf16.mxu0 0
      %3376 = vmatpush1.bf16.msra.mxu0 0
      %3377 = vmatprep.subr.bf16.mxu0 0
      %3378 = vmatpush1.bf16.msra.mxu0 0
      %3379 = vmatprep.mubr.bf16.mxu0 0
      %3380 = vmatmul.mubr.bf16.gmra.mrb[0].mxu0 %v3342
      %v3381 = vpop.f32.mrb[0].mxu0
      %v3382 = vadd.f32 0.0, %v3381
      %v3383 = vpop.f32.mrb[0].mxu0
      %v3384 = vpop.f32.mrb[0].mxu0
      %v3385 = vpop.f32.mrb[0].mxu0
      %3386 = vdwg.mxu0
      %3387 = vrot.lane.b32.xlu0 %v3092, 64
      %v3388 = vpop.permute.xlu0 %3387
      %v3390 = vsel %vm647, %v3336, 0
      %v3393 = vsel %vm894, %v3388, 0
      %3395 = vmatprep.subr.bf16.mxu0 0
      %3396 = vmatpush1.bf16.msra.mxu0 %v3393
      %3397 = vmatprep.subr.bf16.mxu0 0
      %3398 = vmatpush1.bf16.msra.mxu0 0
      %3399 = vmatprep.subr.bf16.mxu0 0
      %3400 = vmatpush1.bf16.msra.mxu0 0
      %3401 = vmatprep.subr.bf16.mxu0 0
      %3402 = vmatpush1.bf16.msra.mxu0 0
      %3403 = vmatprep.subr.bf16.mxu0 0
      %3404 = vmatpush1.bf16.msra.mxu0 0
      %3405 = vmatprep.subr.bf16.mxu0 0
      %3406 = vmatpush1.bf16.msra.mxu0 0
      %3407 = vmatprep.subr.bf16.mxu0 0
      %3408 = vmatpush1.bf16.msra.mxu0 0
      %3409 = vmatprep.subr.bf16.mxu0 0
      %3410 = vmatpush1.bf16.msra.mxu0 0
      %3411 = vmatprep.subr.bf16.mxu0 0
      %3412 = vmatpush1.bf16.msra.mxu0 0
      %3413 = vmatprep.subr.bf16.mxu0 0
      %3414 = vmatpush1.bf16.msra.mxu0 0
      %3415 = vmatprep.subr.bf16.mxu0 0
      %3416 = vmatpush1.bf16.msra.mxu0 0
      %3417 = vmatprep.subr.bf16.mxu0 0
      %3418 = vmatpush1.bf16.msra.mxu0 0
      %3419 = vmatprep.subr.bf16.mxu0 0
      %3420 = vmatpush1.bf16.msra.mxu0 0
      %3421 = vmatprep.subr.bf16.mxu0 0
      %3422 = vmatpush1.bf16.msra.mxu0 0
      %3423 = vmatprep.subr.bf16.mxu0 0
      %3424 = vmatpush1.bf16.msra.mxu0 0
      %3425 = vmatprep.subr.bf16.mxu0 0
      %3426 = vmatpush1.bf16.msra.mxu0 0
      %3427 = vmatprep.mubr.bf16.mxu0 0
      %3428 = vmatmul.mubr.bf16.gmra.mrb[0].mxu0 %v3390
      %v3429 = vpop.f32.mrb[0].mxu0
      %v3430 = vadd.f32 0.0, %v3429
      %v3431 = vpop.f32.mrb[0].mxu0
      %v3432 = vpop.f32.mrb[0].mxu0
      %v3433 = vpop.f32.mrb[0].mxu0
      %3434 = vdwg.mxu0
      %3435 = vrot.lane.b32.xlu0 %v3093, 64
      %v3436 = vpop.permute.xlu0 %3435
      %v3438 = vsel %vm647, %v3337, 0
      %v3441 = vsel %vm894, %v3436, 0
      %3443 = vmatprep.subr.bf16.mxu0 0
      %3444 = vmatpush1.bf16.msra.mxu0 %v3441
      %3445 = vmatprep.subr.bf16.mxu0 0
      %3446 = vmatpush1.bf16.msra.mxu0 0
      %3447 = vmatprep.subr.bf16.mxu0 0
      %3448 = vmatpush1.bf16.msra.mxu0 0
      %3449 = vmatprep.subr.bf16.mxu0 0
      %3450 = vmatpush1.bf16.msra.mxu0 0
      %3451 = vmatprep.subr.bf16.mxu0 0
      %3452 = vmatpush1.bf16.msra.mxu0 0
      %3453 = vmatprep.subr.bf16.mxu0 0
      %3454 = vmatpush1.bf16.msra.mxu0 0
      %3455 = vmatprep.subr.bf16.mxu0 0
      %3456 = vmatpush1.bf16.msra.mxu0 0
      %3457 = vmatprep.subr.bf16.mxu0 0
      %3458 = vmatpush1.bf16.msra.mxu0 0
      %3459 = vmatprep.subr.bf16.mxu0 0
      %3460 = vmatpush1.bf16.msra.mxu0 0
      %3461 = vmatprep.subr.bf16.mxu0 0
      %3462 = vmatpush1.bf16.msra.mxu0 0
      %3463 = vmatprep.subr.bf16.mxu0 0
      %3464 = vmatpush1.bf16.msra.mxu0 0
      %3465 = vmatprep.subr.bf16.mxu0 0
      %3466 = vmatpush1.bf16.msra.mxu0 0
      %3467 = vmatprep.subr.bf16.mxu0 0
      %3468 = vmatpush1.bf16.msra.mxu0 0
      %3469 = vmatprep.subr.bf16.mxu0 0
      %3470 = vmatpush1.bf16.msra.mxu0 0
      %3471 = vmatprep.subr.bf16.mxu0 0
      %3472 = vmatpush1.bf16.msra.mxu0 0
      %3473 = vmatprep.subr.bf16.mxu0 0
      %3474 = vmatpush1.bf16.msra.mxu0 0
      %3475 = vmatprep.mubr.bf16.mxu0 0
      %3476 = vmatmul.mubr.bf16.gmra.mrb[0].mxu0 %v3438
      %v3477 = vpop.f32.mrb[0].mxu0
      %v3478 = vadd.f32 0.0, %v3477
      %v3479 = vpop.f32.mrb[0].mxu0
      %v3480 = vpop.f32.mrb[0].mxu0
      %v3481 = vpop.f32.mrb[0].mxu0
      %3482 = vdwg.mxu0
      %3483 = vrot.lane.b32.xlu0 %v3094, 64
      %v3484 = vpop.permute.xlu0 %3483
      %v3486 = vsel %vm647, %v3338, 0
      %v3489 = vsel %vm894, %v3484, 0
      %3491 = vmatprep.subr.bf16.mxu0 0
      %3492 = vmatpush1.bf16.msra.mxu0 %v3489
      %3493 = vmatprep.subr.bf16.mxu0 0
      %3494 = vmatpush1.bf16.msra.mxu0 0
      %3495 = vmatprep.subr.bf16.mxu0 0
      %3496 = vmatpush1.bf16.msra.mxu0 0
      %3497 = vmatprep.subr.bf16.mxu0 0
      %3498 = vmatpush1.bf16.msra.mxu0 0
      %3499 = vmatprep.subr.bf16.mxu0 0
      %3500 = vmatpush1.bf16.msra.mxu0 0
      %3501 = vmatprep.subr.bf16.mxu0 0
      %3502 = vmatpush1.bf16.msra.mxu0 0
      %3503 = vmatprep.subr.bf16.mxu0 0
      %3504 = vmatpush1.bf16.msra.mxu0 0
      %3505 = vmatprep.subr.bf16.mxu0 0
      %3506 = vmatpush1.bf16.msra.mxu0 0
      %3507 = vmatprep.subr.bf16.mxu0 0
      %3508 = vmatpush1.bf16.msra.mxu0 0
      %3509 = vmatprep.subr.bf16.mxu0 0
      %3510 = vmatpush1.bf16.msra.mxu0 0
      %3511 = vmatprep.subr.bf16.mxu0 0
      %3512 = vmatpush1.bf16.msra.mxu0 0
      %3513 = vmatprep.subr.bf16.mxu0 0
      %3514 = vmatpush1.bf16.msra.mxu0 0
      %3515 = vmatprep.subr.bf16.mxu0 0
      %3516 = vmatpush1.bf16.msra.mxu0 0
      %3517 = vmatprep.subr.bf16.mxu0 0
      %3518 = vmatpush1.bf16.msra.mxu0 0
      %3519 = vmatprep.subr.bf16.mxu0 0
      %3520 = vmatpush1.bf16.msra.mxu0 0
      %3521 = vmatprep.subr.bf16.mxu0 0
      %3522 = vmatpush1.bf16.msra.mxu0 0
      %3523 = vmatprep.mubr.bf16.mxu0 0
      %3524 = vmatmul.mubr.bf16.gmra.mrb[0].mxu0 %v3486
      %v3525 = vpop.f32.mrb[0].mxu0
      %v3526 = vadd.f32 0.0, %v3525
      %v3527 = vpop.f32.mrb[0].mxu0
      %v3528 = vpop.f32.mrb[0].mxu0
      %v3529 = vpop.f32.mrb[0].mxu0
      %3530 = vdwg.mxu0
      %v3531 = vpack.c.bf16 %v3430, %v3382
      %v3532 = vpack.c.bf16 %v3526, %v3478
      %v3534 = vsel %vm647, %v3531, 0
      %v3537 = vsel %vm647, %v3532, 0
      %v3540 = vsel %vm894, %v3085, 0
      %3542 = vmatprep.subr.bf16.mxu0 0
      %3543 = vmatpush1.bf16.msra.mxu0 %v3540
      %3544 = vmatprep.subr.bf16.mxu0 0
      %3545 = vmatpush1.bf16.msra.mxu0 0
      %3546 = vmatprep.subr.bf16.mxu0 0
      %3547 = vmatpush1.bf16.msra.mxu0 0
      %3548 = vmatprep.subr.bf16.mxu0 0
      %3549 = vmatpush1.bf16.msra.mxu0 0
      %3550 = vmatprep.subr.bf16.mxu0 0
      %3551 = vmatpush1.bf16.msra.mxu0 0
      %3552 = vmatprep.subr.bf16.mxu0 0
      %3553 = vmatpush1.bf16.msra.mxu0 0
      %3554 = vmatprep.subr.bf16.mxu0 0
      %3555 = vmatpush1.bf16.msra.mxu0 0
      %3556 = vmatprep.subr.bf16.mxu0 0
      %3557 = vmatpush1.bf16.msra.mxu0 0
      %3558 = vmatprep.subr.bf16.mxu0 0
      %3559 = vmatpush1.bf16.msra.mxu0 0
      %3560 = vmatprep.subr.bf16.mxu0 0
      %3561 = vmatpush1.bf16.msra.mxu0 0
      %3562 = vmatprep.subr.bf16.mxu0 0
      %3563 = vmatpush1.bf16.msra.mxu0 0
      %3564 = vmatprep.subr.bf16.mxu0 0
      %3565 = vmatpush1.bf16.msra.mxu0 0
      %3566 = vmatprep.subr.bf16.mxu0 0
      %3567 = vmatpush1.bf16.msra.mxu0 0
      %3568 = vmatprep.subr.bf16.mxu0 0
      %3569 = vmatpush1.bf16.msra.mxu0 0
      %3570 = vmatprep.subr.bf16.mxu0 0
      %3571 = vmatpush1.bf16.msra.mxu0 0
      %3572 = vmatprep.subr.bf16.mxu0 0
      %3573 = vmatpush1.bf16.msra.mxu0 0
      %3574 = vmatprep.mubr.bf16.mxu0 0
      %3575 = vmatmul.mubr.bf16.gmra.mrb[0].mxu0 %v3534
      %v3576 = vpop.f32.mrb[0].mxu0
      %v3577 = vadd.f32 0.0, %v3576
      %v3578 = vpop.f32.mrb[0].mxu0
      %v3579 = vpop.f32.mrb[0].mxu0
      %v3580 = vadd.f32 0.0, %v3579
      %v3581 = vpop.f32.mrb[0].mxu0
      %3582 = vmatprep.mubr.bf16.mxu0 0
      %3583 = vmatmul.mubr.bf16.gmra.mrb[0].mxu0 %v3537
      %v3584 = vpop.f32.mrb[0].mxu0
      %v3585 = vadd.f32 0.0, %v3584
      %v3586 = vpop.f32.mrb[0].mxu0
      %v3587 = vpop.f32.mrb[0].mxu0
      %v3588 = vadd.f32 0.0, %v3587
      %v3589 = vpop.f32.mrb[0].mxu0
      %3590 = vdwg.mxu0
      %v3592 = vlaneseq
      %v3593 = vshrl.u32 %v3592, 7
      %v3594 = vsub.s32 0, %v3593
      %v3595 = vrot.slane %v3090, %v3594
      %v3597 = vadd.f32 %v3595, %v3577
      %v3598 = vadd.f32 %v3595, %v3580
      %v3599 = vadd.f32 %v3595, %v3585
      %v3600 = vadd.f32 %v3595, %v3588
      %3601 = vrot.lane.b32.xlu0 %v3091, 120
      %v3602 = vpop.permute.xlu0 %3601
      %3603 = vrot.lane.b32.xlu0 %v3091, 88
      %v3604 = vpop.permute.xlu0 %3603
      %v3606 = vsel %vm647, %v3602, 0
      %v3609 = vsel %vm647, %v3604, 0
      %3611 = vmatprep.subr.bf16.mxu0 0
      %3612 = vmatpush1.bf16.xpose.msra.mxu0 %v3609
      %3613 = vmatprep.subr.bf16.mxu0 0
      %3614 = vmatpush1.bf16.xpose.msra.mxu0 0
      %3615 = vmatprep.subr.bf16.mxu0 0
      %3616 = vmatpush1.bf16.xpose.msra.mxu0 0
      %3617 = vmatprep.subr.bf16.mxu0 0
      %3618 = vmatpush1.bf16.xpose.msra.mxu0 0
      %3619 = vmatprep.subr.bf16.mxu0 0
      %3620 = vmatpush1.bf16.xpose.msra.mxu0 0
      %3621 = vmatprep.subr.bf16.mxu0 0
      %3622 = vmatpush1.bf16.xpose.msra.mxu0 0
      %3623 = vmatprep.subr.bf16.mxu0 0
      %3624 = vmatpush1.bf16.xpose.msra.mxu0 0
      %3625 = vmatprep.subr.bf16.mxu0 0
      %3626 = vmatpush1.bf16.xpose.msra.mxu0 0
      %3627 = vmatprep.subr.bf16.mxu0 0
      %3628 = vmatpush1.bf16.xpose.msra.mxu0 0
      %3629 = vmatprep.subr.bf16.mxu0 0
      %3630 = vmatpush1.bf16.xpose.msra.mxu0 0
      %3631 = vmatprep.subr.bf16.mxu0 0
      %3632 = vmatpush1.bf16.xpose.msra.mxu0 0
      %3633 = vmatprep.subr.bf16.mxu0 0
      %3634 = vmatpush1.bf16.xpose.msra.mxu0 0
      %3635 = vmatprep.subr.bf16.mxu0 0
      %3636 = vmatpush1.bf16.xpose.msra.mxu0 0
      %3637 = vmatprep.subr.bf16.mxu0 0
      %3638 = vmatpush1.bf16.xpose.msra.mxu0 0
      %3639 = vmatprep.subr.bf16.mxu0 0
      %3640 = vmatpush1.bf16.xpose.msra.mxu0 0
      %3641 = vmatprep.subr.bf16.mxu0 0
      %3642 = vmatpush1.bf16.xpose.msra.mxu0 0
      %3643 = vmatprep.mubr.bf16.mxu0 0
      %3644 = vmatmul.mubr.bf16.gmra.mrb[0].mxu0 %v3606
      %v3645 = vpop.f32.mrb[0].mxu0
      %v3646 = vadd.f32 0.0, %v3645
      %v3647 = vpop.f32.mrb[0].mxu0
      %v3648 = vpop.f32.mrb[0].mxu0
      %v3649 = vpop.f32.mrb[0].mxu0
      %3650 = vdwg.mxu0
      %3651 = vrot.lane.b32.xlu0 %v3092, 120
      %v3652 = vpop.permute.xlu0 %3651
      %3653 = vrot.lane.b32.xlu0 %v3092, 88
      %v3654 = vpop.permute.xlu0 %3653
      %v3656 = vsel %vm647, %v3652, 0
      %v3659 = vsel %vm647, %v3654, 0
      %3661 = vmatprep.subr.bf16.mxu0 0
      %3662 = vmatpush1.bf16.xpose.msra.mxu0 %v3659
      %3663 = vmatprep.subr.bf16.mxu0 0
      %3664 = vmatpush1.bf16.xpose.msra.mxu0 0
      %3665 = vmatprep.subr.bf16.mxu0 0
      %3666 = vmatpush1.bf16.xpose.msra.mxu0 0
      %3667 = vmatprep.subr.bf16.mxu0 0
      %3668 = vmatpush1.bf16.xpose.msra.mxu0 0
      %3669 = vmatprep.subr.bf16.mxu0 0
      %3670 = vmatpush1.bf16.xpose.msra.mxu0 0
      %3671 = vmatprep.subr.bf16.mxu0 0
      %3672 = vmatpush1.bf16.xpose.msra.mxu0 0
      %3673 = vmatprep.subr.bf16.mxu0 0
      %3674 = vmatpush1.bf16.xpose.msra.mxu0 0
      %3675 = vmatprep.subr.bf16.mxu0 0
      %3676 = vmatpush1.bf16.xpose.msra.mxu0 0
      %3677 = vmatprep.subr.bf16.mxu0 0
      %3678 = vmatpush1.bf16.xpose.msra.mxu0 0
      %3679 = vmatprep.subr.bf16.mxu0 0
      %3680 = vmatpush1.bf16.xpose.msra.mxu0 0
      %3681 = vmatprep.subr.bf16.mxu0 0
      %3682 = vmatpush1.bf16.xpose.msra.mxu0 0
      %3683 = vmatprep.subr.bf16.mxu0 0
      %3684 = vmatpush1.bf16.xpose.msra.mxu0 0
      %3685 = vmatprep.subr.bf16.mxu0 0
      %3686 = vmatpush1.bf16.xpose.msra.mxu0 0
      %3687 = vmatprep.subr.bf16.mxu0 0
      %3688 = vmatpush1.bf16.xpose.msra.mxu0 0
      %3689 = vmatprep.subr.bf16.mxu0 0
      %3690 = vmatpush1.bf16.xpose.msra.mxu0 0
      %3691 = vmatprep.subr.bf16.mxu0 0
      %3692 = vmatpush1.bf16.xpose.msra.mxu0 0
      %3693 = vmatprep.mubr.bf16.mxu0 0
      %3694 = vmatmul.mubr.bf16.gmra.mrb[0].mxu0 %v3656
      %v3695 = vpop.f32.mrb[0].mxu0
      %v3696 = vadd.f32 0.0, %v3695
      %v3697 = vpop.f32.mrb[0].mxu0
      %v3698 = vpop.f32.mrb[0].mxu0
      %v3699 = vpop.f32.mrb[0].mxu0
      %3700 = vdwg.mxu0
      %3701 = vrot.lane.b32.xlu0 %v3093, 120
      %v3702 = vpop.permute.xlu0 %3701
      %3703 = vrot.lane.b32.xlu0 %v3093, 88
      %v3704 = vpop.permute.xlu0 %3703
      %v3706 = vsel %vm647, %v3702, 0
      %v3709 = vsel %vm647, %v3704, 0
      %3711 = vmatprep.subr.bf16.mxu0 0
      %3712 = vmatpush1.bf16.xpose.msra.mxu0 %v3709
      %3713 = vmatprep.subr.bf16.mxu0 0
      %3714 = vmatpush1.bf16.xpose.msra.mxu0 0
      %3715 = vmatprep.subr.bf16.mxu0 0
      %3716 = vmatpush1.bf16.xpose.msra.mxu0 0
      %3717 = vmatprep.subr.bf16.mxu0 0
      %3718 = vmatpush1.bf16.xpose.msra.mxu0 0
      %3719 = vmatprep.subr.bf16.mxu0 0
      %3720 = vmatpush1.bf16.xpose.msra.mxu0 0
      %3721 = vmatprep.subr.bf16.mxu0 0
      %3722 = vmatpush1.bf16.xpose.msra.mxu0 0
      %3723 = vmatprep.subr.bf16.mxu0 0
      %3724 = vmatpush1.bf16.xpose.msra.mxu0 0
      %3725 = vmatprep.subr.bf16.mxu0 0
      %3726 = vmatpush1.bf16.xpose.msra.mxu0 0
      %3727 = vmatprep.subr.bf16.mxu0 0
      %3728 = vmatpush1.bf16.xpose.msra.mxu0 0
      %3729 = vmatprep.subr.bf16.mxu0 0
      %3730 = vmatpush1.bf16.xpose.msra.mxu0 0
      %3731 = vmatprep.subr.bf16.mxu0 0
      %3732 = vmatpush1.bf16.xpose.msra.mxu0 0
      %3733 = vmatprep.subr.bf16.mxu0 0
      %3734 = vmatpush1.bf16.xpose.msra.mxu0 0
      %3735 = vmatprep.subr.bf16.mxu0 0
      %3736 = vmatpush1.bf16.xpose.msra.mxu0 0
      %3737 = vmatprep.subr.bf16.mxu0 0
      %3738 = vmatpush1.bf16.xpose.msra.mxu0 0
      %3739 = vmatprep.subr.bf16.mxu0 0
      %3740 = vmatpush1.bf16.xpose.msra.mxu0 0
      %3741 = vmatprep.subr.bf16.mxu0 0
      %3742 = vmatpush1.bf16.xpose.msra.mxu0 0
      %3743 = vmatprep.mubr.bf16.mxu0 0
      %3744 = vmatmul.mubr.bf16.gmra.mrb[0].mxu0 %v3706
      %v3745 = vpop.f32.mrb[0].mxu0
      %v3746 = vadd.f32 0.0, %v3745
      %v3747 = vpop.f32.mrb[0].mxu0
      %v3748 = vpop.f32.mrb[0].mxu0
      %v3749 = vpop.f32.mrb[0].mxu0
      %3750 = vdwg.mxu0
      %3751 = vrot.lane.b32.xlu0 %v3094, 120
      %v3752 = vpop.permute.xlu0 %3751
      %3753 = vrot.lane.b32.xlu0 %v3094, 88
      %v3754 = vpop.permute.xlu0 %3753
      %v3756 = vsel %vm647, %v3752, 0
      %v3759 = vsel %vm647, %v3754, 0
      %3761 = vmatprep.subr.bf16.mxu0 0
      %3762 = vmatpush1.bf16.xpose.msra.mxu0 %v3759
      %3763 = vmatprep.subr.bf16.mxu0 0
      %3764 = vmatpush1.bf16.xpose.msra.mxu0 0
      %3765 = vmatprep.subr.bf16.mxu0 0
      %3766 = vmatpush1.bf16.xpose.msra.mxu0 0
      %3767 = vmatprep.subr.bf16.mxu0 0
      %3768 = vmatpush1.bf16.xpose.msra.mxu0 0
      %3769 = vmatprep.subr.bf16.mxu0 0
      %3770 = vmatpush1.bf16.xpose.msra.mxu0 0
      %3771 = vmatprep.subr.bf16.mxu0 0
      %3772 = vmatpush1.bf16.xpose.msra.mxu0 0
      %3773 = vmatprep.subr.bf16.mxu0 0
      %3774 = vmatpush1.bf16.xpose.msra.mxu0 0
      %3775 = vmatprep.subr.bf16.mxu0 0
      %3776 = vmatpush1.bf16.xpose.msra.mxu0 0
      %3777 = vmatprep.subr.bf16.mxu0 0
      %3778 = vmatpush1.bf16.xpose.msra.mxu0 0
      %3779 = vmatprep.subr.bf16.mxu0 0
      %3780 = vmatpush1.bf16.xpose.msra.mxu0 0
      %3781 = vmatprep.subr.bf16.mxu0 0
      %3782 = vmatpush1.bf16.xpose.msra.mxu0 0
      %3783 = vmatprep.subr.bf16.mxu0 0
      %3784 = vmatpush1.bf16.xpose.msra.mxu0 0
      %3785 = vmatprep.subr.bf16.mxu0 0
      %3786 = vmatpush1.bf16.xpose.msra.mxu0 0
      %3787 = vmatprep.subr.bf16.mxu0 0
      %3788 = vmatpush1.bf16.xpose.msra.mxu0 0
      %3789 = vmatprep.subr.bf16.mxu0 0
      %3790 = vmatpush1.bf16.xpose.msra.mxu0 0
      %3791 = vmatprep.subr.bf16.mxu0 0
      %3792 = vmatpush1.bf16.xpose.msra.mxu0 0
      %3793 = vmatprep.mubr.bf16.mxu0 0
      %3794 = vmatmul.mubr.bf16.gmra.mrb[0].mxu0 %v3756
      %v3795 = vpop.f32.mrb[0].mxu0
      %v3796 = vadd.f32 0.0, %v3795
      %v3797 = vpop.f32.mrb[0].mxu0
      %v3798 = vpop.f32.mrb[0].mxu0
      %v3799 = vpop.f32.mrb[0].mxu0
      %3800 = vdwg.mxu0
      %v3801 = vsel %vm647, %v3646, -inf
      %3802 = vmax.xlane.f32.xlu0 %v3801
      %v3803 = vpop.xlane.xlu0 %3802
      %v3804 = vsel %vm647, %v3696, -inf
      %3805 = vmax.xlane.f32.xlu0 %v3804
      %v3806 = vpop.xlane.xlu0 %3805
      %v3807 = vsel %vm647, %v3746, -inf
      %3808 = vmax.xlane.f32.xlu0 %v3807
      %v3809 = vpop.xlane.xlu0 %3808
      %v3810 = vsel %vm647, %v3796, -inf
      %3811 = vmax.xlane.f32.xlu0 %v3810
      %v3812 = vpop.xlane.xlu0 %3811
      %v3813 = vsub.f32 %v3646, %v3803
      %v3814 = vsub.f32 %v3696, %v3806
      %v3815 = vsub.f32 %v3746, %v3809
      %v3816 = vsub.f32 %v3796, %v3812
      %v3817 = vmul.f32 %v3813, 1.442695
      %v3818 = vpow.pop %v3817
      %v3819 = vmul.f32 %v3814, 1.442695
      %v3820 = vpow.pop %v3819
      %v3821 = vmul.f32 %v3815, 1.442695
      %v3822 = vpow.pop %v3821
      %v3823 = vmul.f32 %v3816, 1.442695
      %v3824 = vpow.pop %v3823
      %v3825 = vsel %vm647, %v3818, 0.0
      %3826 = vadd.xlane.f32.xlu0 %v3825
      %v3827 = vpop.xlane.xlu0 %3826
      %v3828 = vsel %vm647, %v3820, 0.0
      %3829 = vadd.xlane.f32.xlu0 %v3828
      %v3830 = vpop.xlane.xlu0 %3829
      %v3831 = vsel %vm647, %v3822, 0.0
      %3832 = vadd.xlane.f32.xlu0 %v3831
      %v3833 = vpop.xlane.xlu0 %3832
      %v3834 = vsel %vm647, %v3824, 0.0
      %3835 = vadd.xlane.f32.xlu0 %v3834
      %v3836 = vpop.xlane.xlu0 %3835
      %v3837 = vrcp.pop %v3827
      %v3838 = vrcp.pop %v3830
      %v3839 = vrcp.pop %v3833
      %v3840 = vrcp.pop %v3836
      %v3841 = vmul.f32 %v3818, %v3837
      %v3842 = vmul.f32 %v3820, %v3838
      %v3843 = vmul.f32 %v3822, %v3839
      %v3844 = vmul.f32 %v3824, %v3840
      %v3845 = vpack.c.bf16 %v3841, %v3841
      %v3846 = vpack.c.bf16 %v3842, %v3842
      %v3847 = vpack.c.bf16 %v3843, %v3843
      %v3848 = vpack.c.bf16 %v3844, %v3844
      %3849 = vrot.lane.b32.xlu0 %v3091, 56
      %v3850 = vpop.permute.xlu0 %3849
      %v3852 = vsel %vm647, %v3845, 0
      %v3855 = vsel %vm894, %v3850, 0
      %3857 = vmatprep.subr.bf16.mxu0 0
      %3858 = vmatpush1.bf16.msra.mxu0 %v3855
      %3859 = vmatprep.subr.bf16.mxu0 0
      %3860 = vmatpush1.bf16.msra.mxu0 0
      %3861 = vmatprep.subr.bf16.mxu0 0
      %3862 = vmatpush1.bf16.msra.mxu0 0
      %3863 = vmatprep.subr.bf16.mxu0 0
      %3864 = vmatpush1.bf16.msra.mxu0 0
      %3865 = vmatprep.subr.bf16.mxu0 0
      %3866 = vmatpush1.bf16.msra.mxu0 0
      %3867 = vmatprep.subr.bf16.mxu0 0
      %3868 = vmatpush1.bf16.msra.mxu0 0
      %3869 = vmatprep.subr.bf16.mxu0 0
      %3870 = vmatpush1.bf16.msra.mxu0 0
      %3871 = vmatprep.subr.bf16.mxu0 0
      %3872 = vmatpush1.bf16.msra.mxu0 0
      %3873 = vmatprep.subr.bf16.mxu0 0
      %3874 = vmatpush1.bf16.msra.mxu0 0
      %3875 = vmatprep.subr.bf16.mxu0 0
      %3876 = vmatpush1.bf16.msra.mxu0 0
      %3877 = vmatprep.subr.bf16.mxu0 0
      %3878 = vmatpush1.bf16.msra.mxu0 0
      %3879 = vmatprep.subr.bf16.mxu0 0
      %3880 = vmatpush1.bf16.msra.mxu0 0
      %3881 = vmatprep.subr.bf16.mxu0 0
      %3882 = vmatpush1.bf16.msra.mxu0 0
      %3883 = vmatprep.subr.bf16.mxu0 0
      %3884 = vmatpush1.bf16.msra.mxu0 0
      %3885 = vmatprep.subr.bf16.mxu0 0
      %3886 = vmatpush1.bf16.msra.mxu0 0
      %3887 = vmatprep.subr.bf16.mxu0 0
      %3888 = vmatpush1.bf16.msra.mxu0 0
      %3889 = vmatprep.mubr.bf16.mxu0 0
      %3890 = vmatmul.mubr.bf16.gmra.mrb[0].mxu0 %v3852
      %v3891 = vpop.f32.mrb[0].mxu0
      %v3892 = vadd.f32 0.0, %v3891
      %v3893 = vpop.f32.mrb[0].mxu0
      %v3894 = vpop.f32.mrb[0].mxu0
      %v3895 = vpop.f32.mrb[0].mxu0
      %3896 = vdwg.mxu0
      %3897 = vrot.lane.b32.xlu0 %v3092, 56
      %v3898 = vpop.permute.xlu0 %3897
      %v3900 = vsel %vm647, %v3846, 0
      %v3903 = vsel %vm894, %v3898, 0
      %3905 = vmatprep.subr.bf16.mxu0 0
      %3906 = vmatpush1.bf16.msra.mxu0 %v3903
      %3907 = vmatprep.subr.bf16.mxu0 0
      %3908 = vmatpush1.bf16.msra.mxu0 0
      %3909 = vmatprep.subr.bf16.mxu0 0
      %3910 = vmatpush1.bf16.msra.mxu0 0
      %3911 = vmatprep.subr.bf16.mxu0 0
      %3912 = vmatpush1.bf16.msra.mxu0 0
      %3913 = vmatprep.subr.bf16.mxu0 0
      %3914 = vmatpush1.bf16.msra.mxu0 0
      %3915 = vmatprep.subr.bf16.mxu0 0
      %3916 = vmatpush1.bf16.msra.mxu0 0
      %3917 = vmatprep.subr.bf16.mxu0 0
      %3918 = vmatpush1.bf16.msra.mxu0 0
      %3919 = vmatprep.subr.bf16.mxu0 0
      %3920 = vmatpush1.bf16.msra.mxu0 0
      %3921 = vmatprep.subr.bf16.mxu0 0
      %3922 = vmatpush1.bf16.msra.mxu0 0
      %3923 = vmatprep.subr.bf16.mxu0 0
      %3924 = vmatpush1.bf16.msra.mxu0 0
      %3925 = vmatprep.subr.bf16.mxu0 0
      %3926 = vmatpush1.bf16.msra.mxu0 0
      %3927 = vmatprep.subr.bf16.mxu0 0
      %3928 = vmatpush1.bf16.msra.mxu0 0
      %3929 = vmatprep.subr.bf16.mxu0 0
      %3930 = vmatpush1.bf16.msra.mxu0 0
      %3931 = vmatprep.subr.bf16.mxu0 0
      %3932 = vmatpush1.bf16.msra.mxu0 0
      %3933 = vmatprep.subr.bf16.mxu0 0
      %3934 = vmatpush1.bf16.msra.mxu0 0
      %3935 = vmatprep.subr.bf16.mxu0 0
      %3936 = vmatpush1.bf16.msra.mxu0 0
      %3937 = vmatprep.mubr.bf16.mxu0 0
      %3938 = vmatmul.mubr.bf16.gmra.mrb[0].mxu0 %v3900
      %v3939 = vpop.f32.mrb[0].mxu0
      %v3940 = vadd.f32 0.0, %v3939
      %v3941 = vpop.f32.mrb[0].mxu0
      %v3942 = vpop.f32.mrb[0].mxu0
      %v3943 = vpop.f32.mrb[0].mxu0
      %3944 = vdwg.mxu0
      %3945 = vrot.lane.b32.xlu0 %v3093, 56
      %v3946 = vpop.permute.xlu0 %3945
      %v3948 = vsel %vm647, %v3847, 0
      %v3951 = vsel %vm894, %v3946, 0
      %3953 = vmatprep.subr.bf16.mxu0 0
      %3954 = vmatpush1.bf16.msra.mxu0 %v3951
      %3955 = vmatprep.subr.bf16.mxu0 0
      %3956 = vmatpush1.bf16.msra.mxu0 0
      %3957 = vmatprep.subr.bf16.mxu0 0
      %3958 = vmatpush1.bf16.msra.mxu0 0
      %3959 = vmatprep.subr.bf16.mxu0 0
      %3960 = vmatpush1.bf16.msra.mxu0 0
      %3961 = vmatprep.subr.bf16.mxu0 0
      %3962 = vmatpush1.bf16.msra.mxu0 0
      %3963 = vmatprep.subr.bf16.mxu0 0
      %3964 = vmatpush1.bf16.msra.mxu0 0
      %3965 = vmatprep.subr.bf16.mxu0 0
      %3966 = vmatpush1.bf16.msra.mxu0 0
      %3967 = vmatprep.subr.bf16.mxu0 0
      %3968 = vmatpush1.bf16.msra.mxu0 0
      %3969 = vmatprep.subr.bf16.mxu0 0
      %3970 = vmatpush1.bf16.msra.mxu0 0
      %3971 = vmatprep.subr.bf16.mxu0 0
      %3972 = vmatpush1.bf16.msra.mxu0 0
      %3973 = vmatprep.subr.bf16.mxu0 0
      %3974 = vmatpush1.bf16.msra.mxu0 0
      %3975 = vmatprep.subr.bf16.mxu0 0
      %3976 = vmatpush1.bf16.msra.mxu0 0
      %3977 = vmatprep.subr.bf16.mxu0 0
      %3978 = vmatpush1.bf16.msra.mxu0 0
      %3979 = vmatprep.subr.bf16.mxu0 0
      %3980 = vmatpush1.bf16.msra.mxu0 0
      %3981 = vmatprep.subr.bf16.mxu0 0
      %3982 = vmatpush1.bf16.msra.mxu0 0
      %3983 = vmatprep.subr.bf16.mxu0 0
      %3984 = vmatpush1.bf16.msra.mxu0 0
      %3985 = vmatprep.mubr.bf16.mxu0 0
      %3986 = vmatmul.mubr.bf16.gmra.mrb[0].mxu0 %v3948
      %v3987 = vpop.f32.mrb[0].mxu0
      %v3988 = vadd.f32 0.0, %v3987
      %v3989 = vpop.f32.mrb[0].mxu0
      %v3990 = vpop.f32.mrb[0].mxu0
      %v3991 = vpop.f32.mrb[0].mxu0
      %3992 = vdwg.mxu0
      %3993 = vrot.lane.b32.xlu0 %v3094, 56
      %v3994 = vpop.permute.xlu0 %3993
      %v3996 = vsel %vm647, %v3848, 0
      %v3999 = vsel %vm894, %v3994, 0
      %4001 = vmatprep.subr.bf16.mxu0 0
      %4002 = vmatpush1.bf16.msra.mxu0 %v3999
      %4003 = vmatprep.subr.bf16.mxu0 0
      %4004 = vmatpush1.bf16.msra.mxu0 0
      %4005 = vmatprep.subr.bf16.mxu0 0
      %4006 = vmatpush1.bf16.msra.mxu0 0
      %4007 = vmatprep.subr.bf16.mxu0 0
      %4008 = vmatpush1.bf16.msra.mxu0 0
      %4009 = vmatprep.subr.bf16.mxu0 0
      %4010 = vmatpush1.bf16.msra.mxu0 0
      %4011 = vmatprep.subr.bf16.mxu0 0
      %4012 = vmatpush1.bf16.msra.mxu0 0
      %4013 = vmatprep.subr.bf16.mxu0 0
      %4014 = vmatpush1.bf16.msra.mxu0 0
      %4015 = vmatprep.subr.bf16.mxu0 0
      %4016 = vmatpush1.bf16.msra.mxu0 0
      %4017 = vmatprep.subr.bf16.mxu0 0
      %4018 = vmatpush1.bf16.msra.mxu0 0
      %4019 = vmatprep.subr.bf16.mxu0 0
      %4020 = vmatpush1.bf16.msra.mxu0 0
      %4021 = vmatprep.subr.bf16.mxu0 0
      %4022 = vmatpush1.bf16.msra.mxu0 0
      %4023 = vmatprep.subr.bf16.mxu0 0
      %4024 = vmatpush1.bf16.msra.mxu0 0
      %4025 = vmatprep.subr.bf16.mxu0 0
      %4026 = vmatpush1.bf16.msra.mxu0 0
      %4027 = vmatprep.subr.bf16.mxu0 0
      %4028 = vmatpush1.bf16.msra.mxu0 0
      %4029 = vmatprep.subr.bf16.mxu0 0
      %4030 = vmatpush1.bf16.msra.mxu0 0
      %4031 = vmatprep.subr.bf16.mxu0 0
      %4032 = vmatpush1.bf16.msra.mxu0 0
      %4033 = vmatprep.mubr.bf16.mxu0 0
      %4034 = vmatmul.mubr.bf16.gmra.mrb[0].mxu0 %v3996
      %v4035 = vpop.f32.mrb[0].mxu0
      %v4036 = vadd.f32 0.0, %v4035
      %v4037 = vpop.f32.mrb[0].mxu0
      %v4038 = vpop.f32.mrb[0].mxu0
      %v4039 = vpop.f32.mrb[0].mxu0
      %4040 = vdwg.mxu0
      %v4041 = vpack.c.bf16 %v3940, %v3892
      %v4042 = vpack.c.bf16 %v4036, %v3988
      %v4044 = vsel %vm647, %v4041, 0
      %v4047 = vsel %vm647, %v4042, 0
      %v4050 = vsel %vm894, %v3086, 0
      %4052 = vmatprep.subr.bf16.mxu0 0
      %4053 = vmatpush1.bf16.msra.mxu0 %v4050
      %4054 = vmatprep.subr.bf16.mxu0 0
      %4055 = vmatpush1.bf16.msra.mxu0 0
      %4056 = vmatprep.subr.bf16.mxu0 0
      %4057 = vmatpush1.bf16.msra.mxu0 0
      %4058 = vmatprep.subr.bf16.mxu0 0
      %4059 = vmatpush1.bf16.msra.mxu0 0
      %4060 = vmatprep.subr.bf16.mxu0 0
      %4061 = vmatpush1.bf16.msra.mxu0 0
      %4062 = vmatprep.subr.bf16.mxu0 0
      %4063 = vmatpush1.bf16.msra.mxu0 0
      %4064 = vmatprep.subr.bf16.mxu0 0
      %4065 = vmatpush1.bf16.msra.mxu0 0
      %4066 = vmatprep.subr.bf16.mxu0 0
      %4067 = vmatpush1.bf16.msra.mxu0 0
      %4068 = vmatprep.subr.bf16.mxu0 0
      %4069 = vmatpush1.bf16.msra.mxu0 0
      %4070 = vmatprep.subr.bf16.mxu0 0
      %4071 = vmatpush1.bf16.msra.mxu0 0
      %4072 = vmatprep.subr.bf16.mxu0 0
      %4073 = vmatpush1.bf16.msra.mxu0 0
      %4074 = vmatprep.subr.bf16.mxu0 0
      %4075 = vmatpush1.bf16.msra.mxu0 0
      %4076 = vmatprep.subr.bf16.mxu0 0
      %4077 = vmatpush1.bf16.msra.mxu0 0
      %4078 = vmatprep.subr.bf16.mxu0 0
      %4079 = vmatpush1.bf16.msra.mxu0 0
      %4080 = vmatprep.subr.bf16.mxu0 0
      %4081 = vmatpush1.bf16.msra.mxu0 0
      %4082 = vmatprep.subr.bf16.mxu0 0
      %4083 = vmatpush1.bf16.msra.mxu0 0
      %4084 = vmatprep.mubr.bf16.mxu0 0
      %4085 = vmatmul.mubr.bf16.gmra.mrb[0].mxu0 %v4044
      %v4086 = vpop.f32.mrb[0].mxu0
      %v4087 = vadd.f32 0.0, %v4086
      %v4088 = vpop.f32.mrb[0].mxu0
      %v4089 = vpop.f32.mrb[0].mxu0
      %v4090 = vadd.f32 0.0, %v4089
      %v4091 = vpop.f32.mrb[0].mxu0
      %4092 = vmatprep.mubr.bf16.mxu0 0
      %4093 = vmatmul.mubr.bf16.gmra.mrb[0].mxu0 %v4047
      %v4094 = vpop.f32.mrb[0].mxu0
      %v4095 = vadd.f32 0.0, %v4094
      %v4096 = vpop.f32.mrb[0].mxu0
      %v4097 = vpop.f32.mrb[0].mxu0
      %v4098 = vadd.f32 0.0, %v4097
      %v4099 = vpop.f32.mrb[0].mxu0
      %4100 = vdwg.mxu0
      %v4101 = vadd.f32 %v3597, %v4087
      %v4102 = vadd.f32 %v3598, %v4090
      %v4103 = vadd.f32 %v3599, %v4095
      %v4104 = vadd.f32 %v3600, %v4098
      %4105 = vrot.lane.b32.xlu0 %v3091, 112
      %v4106 = vpop.permute.xlu0 %4105
      %4107 = vrot.lane.b32.xlu0 %v3091, 80
      %v4108 = vpop.permute.xlu0 %4107
      %v4110 = vsel %vm647, %v4106, 0
      %v4113 = vsel %vm647, %v4108, 0
      %4115 = vmatprep.subr.bf16.mxu0 0
      %4116 = vmatpush1.bf16.xpose.msra.mxu0 %v4113
      %4117 = vmatprep.subr.bf16.mxu0 0
      %4118 = vmatpush1.bf16.xpose.msra.mxu0 0
      %4119 = vmatprep.subr.bf16.mxu0 0
      %4120 = vmatpush1.bf16.xpose.msra.mxu0 0
      %4121 = vmatprep.subr.bf16.mxu0 0
      %4122 = vmatpush1.bf16.xpose.msra.mxu0 0
      %4123 = vmatprep.subr.bf16.mxu0 0
      %4124 = vmatpush1.bf16.xpose.msra.mxu0 0
      %4125 = vmatprep.subr.bf16.mxu0 0
      %4126 = vmatpush1.bf16.xpose.msra.mxu0 0
      %4127 = vmatprep.subr.bf16.mxu0 0
      %4128 = vmatpush1.bf16.xpose.msra.mxu0 0
      %4129 = vmatprep.subr.bf16.mxu0 0
      %4130 = vmatpush1.bf16.xpose.msra.mxu0 0
      %4131 = vmatprep.subr.bf16.mxu0 0
      %4132 = vmatpush1.bf16.xpose.msra.mxu0 0
      %4133 = vmatprep.subr.bf16.mxu0 0
      %4134 = vmatpush1.bf16.xpose.msra.mxu0 0
      %4135 = vmatprep.subr.bf16.mxu0 0
      %4136 = vmatpush1.bf16.xpose.msra.mxu0 0
      %4137 = vmatprep.subr.bf16.mxu0 0
      %4138 = vmatpush1.bf16.xpose.msra.mxu0 0
      %4139 = vmatprep.subr.bf16.mxu0 0
      %4140 = vmatpush1.bf16.xpose.msra.mxu0 0
      %4141 = vmatprep.subr.bf16.mxu0 0
      %4142 = vmatpush1.bf16.xpose.msra.mxu0 0
      %4143 = vmatprep.subr.bf16.mxu0 0
      %4144 = vmatpush1.bf16.xpose.msra.mxu0 0
      %4145 = vmatprep.subr.bf16.mxu0 0
      %4146 = vmatpush1.bf16.xpose.msra.mxu0 0
      %4147 = vmatprep.mubr.bf16.mxu0 0
      %4148 = vmatmul.mubr.bf16.gmra.mrb[0].mxu0 %v4110
      %v4149 = vpop.f32.mrb[0].mxu0
      %v4150 = vadd.f32 0.0, %v4149
      %v4151 = vpop.f32.mrb[0].mxu0
      %v4152 = vpop.f32.mrb[0].mxu0
      %v4153 = vpop.f32.mrb[0].mxu0
      %4154 = vdwg.mxu0
      %4155 = vrot.lane.b32.xlu0 %v3092, 112
      %v4156 = vpop.permute.xlu0 %4155
      %4157 = vrot.lane.b32.xlu0 %v3092, 80
      %v4158 = vpop.permute.xlu0 %4157
      %v4160 = vsel %vm647, %v4156, 0
      %v4163 = vsel %vm647, %v4158, 0
      %4165 = vmatprep.subr.bf16.mxu0 0
      %4166 = vmatpush1.bf16.xpose.msra.mxu0 %v4163
      %4167 = vmatprep.subr.bf16.mxu0 0
      %4168 = vmatpush1.bf16.xpose.msra.mxu0 0
      %4169 = vmatprep.subr.bf16.mxu0 0
      %4170 = vmatpush1.bf16.xpose.msra.mxu0 0
      %4171 = vmatprep.subr.bf16.mxu0 0
      %4172 = vmatpush1.bf16.xpose.msra.mxu0 0
      %4173 = vmatprep.subr.bf16.mxu0 0
      %4174 = vmatpush1.bf16.xpose.msra.mxu0 0
      %4175 = vmatprep.subr.bf16.mxu0 0
      %4176 = vmatpush1.bf16.xpose.msra.mxu0 0
      %4177 = vmatprep.subr.bf16.mxu0 0
      %4178 = vmatpush1.bf16.xpose.msra.mxu0 0
      %4179 = vmatprep.subr.bf16.mxu0 0
      %4180 = vmatpush1.bf16.xpose.msra.mxu0 0
      %4181 = vmatprep.subr.bf16.mxu0 0
      %4182 = vmatpush1.bf16.xpose.msra.mxu0 0
      %4183 = vmatprep.subr.bf16.mxu0 0
      %4184 = vmatpush1.bf16.xpose.msra.mxu0 0
      %4185 = vmatprep.subr.bf16.mxu0 0
      %4186 = vmatpush1.bf16.xpose.msra.mxu0 0
      %4187 = vmatprep.subr.bf16.mxu0 0
      %4188 = vmatpush1.bf16.xpose.msra.mxu0 0
      %4189 = vmatprep.subr.bf16.mxu0 0
      %4190 = vmatpush1.bf16.xpose.msra.mxu0 0
      %4191 = vmatprep.subr.bf16.mxu0 0
      %4192 = vmatpush1.bf16.xpose.msra.mxu0 0
      %4193 = vmatprep.subr.bf16.mxu0 0
      %4194 = vmatpush1.bf16.xpose.msra.mxu0 0
      %4195 = vmatprep.subr.bf16.mxu0 0
      %4196 = vmatpush1.bf16.xpose.msra.mxu0 0
      %4197 = vmatprep.mubr.bf16.mxu0 0
      %4198 = vmatmul.mubr.bf16.gmra.mrb[0].mxu0 %v4160
      %v4199 = vpop.f32.mrb[0].mxu0
      %v4200 = vadd.f32 0.0, %v4199
      %v4201 = vpop.f32.mrb[0].mxu0
      %v4202 = vpop.f32.mrb[0].mxu0
      %v4203 = vpop.f32.mrb[0].mxu0
      %4204 = vdwg.mxu0
      %4205 = vrot.lane.b32.xlu0 %v3093, 112
      %v4206 = vpop.permute.xlu0 %4205
      %4207 = vrot.lane.b32.xlu0 %v3093, 80
      %v4208 = vpop.permute.xlu0 %4207
      %v4210 = vsel %vm647, %v4206, 0
      %v4213 = vsel %vm647, %v4208, 0
      %4215 = vmatprep.subr.bf16.mxu0 0
      %4216 = vmatpush1.bf16.xpose.msra.mxu0 %v4213
      %4217 = vmatprep.subr.bf16.mxu0 0
      %4218 = vmatpush1.bf16.xpose.msra.mxu0 0
      %4219 = vmatprep.subr.bf16.mxu0 0
      %4220 = vmatpush1.bf16.xpose.msra.mxu0 0
      %4221 = vmatprep.subr.bf16.mxu0 0
      %4222 = vmatpush1.bf16.xpose.msra.mxu0 0
      %4223 = vmatprep.subr.bf16.mxu0 0
      %4224 = vmatpush1.bf16.xpose.msra.mxu0 0
      %4225 = vmatprep.subr.bf16.mxu0 0
      %4226 = vmatpush1.bf16.xpose.msra.mxu0 0
      %4227 = vmatprep.subr.bf16.mxu0 0
      %4228 = vmatpush1.bf16.xpose.msra.mxu0 0
      %4229 = vmatprep.subr.bf16.mxu0 0
      %4230 = vmatpush1.bf16.xpose.msra.mxu0 0
      %4231 = vmatprep.subr.bf16.mxu0 0
      %4232 = vmatpush1.bf16.xpose.msra.mxu0 0
      %4233 = vmatprep.subr.bf16.mxu0 0
      %4234 = vmatpush1.bf16.xpose.msra.mxu0 0
      %4235 = vmatprep.subr.bf16.mxu0 0
      %4236 = vmatpush1.bf16.xpose.msra.mxu0 0
      %4237 = vmatprep.subr.bf16.mxu0 0
      %4238 = vmatpush1.bf16.xpose.msra.mxu0 0
      %4239 = vmatprep.subr.bf16.mxu0 0
      %4240 = vmatpush1.bf16.xpose.msra.mxu0 0
      %4241 = vmatprep.subr.bf16.mxu0 0
      %4242 = vmatpush1.bf16.xpose.msra.mxu0 0
      %4243 = vmatprep.subr.bf16.mxu0 0
      %4244 = vmatpush1.bf16.xpose.msra.mxu0 0
      %4245 = vmatprep.subr.bf16.mxu0 0
      %4246 = vmatpush1.bf16.xpose.msra.mxu0 0
      %4247 = vmatprep.mubr.bf16.mxu0 0
      %4248 = vmatmul.mubr.bf16.gmra.mrb[0].mxu0 %v4210
      %v4249 = vpop.f32.mrb[0].mxu0
      %v4250 = vadd.f32 0.0, %v4249
      %v4251 = vpop.f32.mrb[0].mxu0
      %v4252 = vpop.f32.mrb[0].mxu0
      %v4253 = vpop.f32.mrb[0].mxu0
      %4254 = vdwg.mxu0
      %4255 = vrot.lane.b32.xlu0 %v3094, 112
      %v4256 = vpop.permute.xlu0 %4255
      %4257 = vrot.lane.b32.xlu0 %v3094, 80
      %v4258 = vpop.permute.xlu0 %4257
      %v4260 = vsel %vm647, %v4256, 0
      %v4263 = vsel %vm647, %v4258, 0
      %4265 = vmatprep.subr.bf16.mxu0 0
      %4266 = vmatpush1.bf16.xpose.msra.mxu0 %v4263
      %4267 = vmatprep.subr.bf16.mxu0 0
      %4268 = vmatpush1.bf16.xpose.msra.mxu0 0
      %4269 = vmatprep.subr.bf16.mxu0 0
      %4270 = vmatpush1.bf16.xpose.msra.mxu0 0
      %4271 = vmatprep.subr.bf16.mxu0 0
      %4272 = vmatpush1.bf16.xpose.msra.mxu0 0
      %4273 = vmatprep.subr.bf16.mxu0 0
      %4274 = vmatpush1.bf16.xpose.msra.mxu0 0
      %4275 = vmatprep.subr.bf16.mxu0 0
      %4276 = vmatpush1.bf16.xpose.msra.mxu0 0
      %4277 = vmatprep.subr.bf16.mxu0 0
      %4278 = vmatpush1.bf16.xpose.msra.mxu0 0
      %4279 = vmatprep.subr.bf16.mxu0 0
      %4280 = vmatpush1.bf16.xpose.msra.mxu0 0
      %4281 = vmatprep.subr.bf16.mxu0 0
      %4282 = vmatpush1.bf16.xpose.msra.mxu0 0
      %4283 = vmatprep.subr.bf16.mxu0 0
      %4284 = vmatpush1.bf16.xpose.msra.mxu0 0
      %4285 = vmatprep.subr.bf16.mxu0 0
      %4286 = vmatpush1.bf16.xpose.msra.mxu0 0
      %4287 = vmatprep.subr.bf16.mxu0 0
      %4288 = vmatpush1.bf16.xpose.msra.mxu0 0
      %4289 = vmatprep.subr.bf16.mxu0 0
      %4290 = vmatpush1.bf16.xpose.msra.mxu0 0
      %4291 = vmatprep.subr.bf16.mxu0 0
      %4292 = vmatpush1.bf16.xpose.msra.mxu0 0
      %4293 = vmatprep.subr.bf16.mxu0 0
      %4294 = vmatpush1.bf16.xpose.msra.mxu0 0
      %4295 = vmatprep.subr.bf16.mxu0 0
      %4296 = vmatpush1.bf16.xpose.msra.mxu0 0
      %4297 = vmatprep.mubr.bf16.mxu0 0
      %4298 = vmatmul.mubr.bf16.gmra.mrb[0].mxu0 %v4260
      %v4299 = vpop.f32.mrb[0].mxu0
      %v4300 = vadd.f32 0.0, %v4299
      %v4301 = vpop.f32.mrb[0].mxu0
      %v4302 = vpop.f32.mrb[0].mxu0
      %v4303 = vpop.f32.mrb[0].mxu0
      %4304 = vdwg.mxu0
      %v4305 = vsel %vm647, %v4150, -inf
      %4306 = vmax.xlane.f32.xlu0 %v4305
      %v4307 = vpop.xlane.xlu0 %4306
      %v4308 = vsel %vm647, %v4200, -inf
      %4309 = vmax.xlane.f32.xlu0 %v4308
      %v4310 = vpop.xlane.xlu0 %4309
      %v4311 = vsel %vm647, %v4250, -inf
      %4312 = vmax.xlane.f32.xlu0 %v4311
      %v4313 = vpop.xlane.xlu0 %4312
      %v4314 = vsel %vm647, %v4300, -inf
      %4315 = vmax.xlane.f32.xlu0 %v4314
      %v4316 = vpop.xlane.xlu0 %4315
      %v4317 = vsub.f32 %v4150, %v4307
      %v4318 = vsub.f32 %v4200, %v4310
      %v4319 = vsub.f32 %v4250, %v4313
      %v4320 = vsub.f32 %v4300, %v4316
      %v4321 = vmul.f32 %v4317, 1.442695
      %v4322 = vpow.pop %v4321
      %v4323 = vmul.f32 %v4318, 1.442695
      %v4324 = vpow.pop %v4323
      %v4325 = vmul.f32 %v4319, 1.442695
      %v4326 = vpow.pop %v4325
      %v4327 = vmul.f32 %v4320, 1.442695
      %v4328 = vpow.pop %v4327
      %v4329 = vsel %vm647, %v4322, 0.0
      %4330 = vadd.xlane.f32.xlu0 %v4329
      %v4331 = vpop.xlane.xlu0 %4330
      %v4332 = vsel %vm647, %v4324, 0.0
      %4333 = vadd.xlane.f32.xlu0 %v4332
      %v4334 = vpop.xlane.xlu0 %4333
      %v4335 = vsel %vm647, %v4326, 0.0
      %4336 = vadd.xlane.f32.xlu0 %v4335
      %v4337 = vpop.xlane.xlu0 %4336
      %v4338 = vsel %vm647, %v4328, 0.0
      %4339 = vadd.xlane.f32.xlu0 %v4338
      %v4340 = vpop.xlane.xlu0 %4339
      %v4341 = vrcp.pop %v4331
      %v4342 = vrcp.pop %v4334
      %v4343 = vrcp.pop %v4337
      %v4344 = vrcp.pop %v4340
      %v4345 = vmul.f32 %v4322, %v4341
      %v4346 = vmul.f32 %v4324, %v4342
      %v4347 = vmul.f32 %v4326, %v4343
      %v4348 = vmul.f32 %v4328, %v4344
      %v4349 = vpack.c.bf16 %v4345, %v4345
      %v4350 = vpack.c.bf16 %v4346, %v4346
      %v4351 = vpack.c.bf16 %v4347, %v4347
      %v4352 = vpack.c.bf16 %v4348, %v4348
      %4353 = vrot.lane.b32.xlu0 %v3091, 48
      %v4354 = vpop.permute.xlu0 %4353
      %v4356 = vsel %vm647, %v4349, 0
      %v4359 = vsel %vm894, %v4354, 0
      %4361 = vmatprep.subr.bf16.mxu0 0
      %4362 = vmatpush1.bf16.msra.mxu0 %v4359
      %4363 = vmatprep.subr.bf16.mxu0 0
      %4364 = vmatpush1.bf16.msra.mxu0 0
      %4365 = vmatprep.subr.bf16.mxu0 0
      %4366 = vmatpush1.bf16.msra.mxu0 0
      %4367 = vmatprep.subr.bf16.mxu0 0
      %4368 = vmatpush1.bf16.msra.mxu0 0
      %4369 = vmatprep.subr.bf16.mxu0 0
      %4370 = vmatpush1.bf16.msra.mxu0 0
      %4371 = vmatprep.subr.bf16.mxu0 0
      %4372 = vmatpush1.bf16.msra.mxu0 0
      %4373 = vmatprep.subr.bf16.mxu0 0
      %4374 = vmatpush1.bf16.msra.mxu0 0
      %4375 = vmatprep.subr.bf16.mxu0 0
      %4376 = vmatpush1.bf16.msra.mxu0 0
      %4377 = vmatprep.subr.bf16.mxu0 0
      %4378 = vmatpush1.bf16.msra.mxu0 0
      %4379 = vmatprep.subr.bf16.mxu0 0
      %4380 = vmatpush1.bf16.msra.mxu0 0
      %4381 = vmatprep.subr.bf16.mxu0 0
      %4382 = vmatpush1.bf16.msra.mxu0 0
      %4383 = vmatprep.subr.bf16.mxu0 0
      %4384 = vmatpush1.bf16.msra.mxu0 0
      %4385 = vmatprep.subr.bf16.mxu0 0
      %4386 = vmatpush1.bf16.msra.mxu0 0
      %4387 = vmatprep.subr.bf16.mxu0 0
      %4388 = vmatpush1.bf16.msra.mxu0 0
      %4389 = vmatprep.subr.bf16.mxu0 0
      %4390 = vmatpush1.bf16.msra.mxu0 0
      %4391 = vmatprep.subr.bf16.mxu0 0
      %4392 = vmatpush1.bf16.msra.mxu0 0
      %4393 = vmatprep.mubr.bf16.mxu0 0
      %4394 = vmatmul.mubr.bf16.gmra.mrb[0].mxu0 %v4356
      %v4395 = vpop.f32.mrb[0].mxu0
      %v4396 = vadd.f32 0.0, %v4395
      %v4397 = vpop.f32.mrb[0].mxu0
      %v4398 = vpop.f32.mrb[0].mxu0
      %v4399 = vpop.f32.mrb[0].mxu0
      %4400 = vdwg.mxu0
      %4401 = vrot.lane.b32.xlu0 %v3092, 48
      %v4402 = vpop.permute.xlu0 %4401
      %v4404 = vsel %vm647, %v4350, 0
      %v4407 = vsel %vm894, %v4402, 0
      %4409 = vmatprep.subr.bf16.mxu0 0
      %4410 = vmatpush1.bf16.msra.mxu0 %v4407
      %4411 = vmatprep.subr.bf16.mxu0 0
      %4412 = vmatpush1.bf16.msra.mxu0 0
      %4413 = vmatprep.subr.bf16.mxu0 0
      %4414 = vmatpush1.bf16.msra.mxu0 0
      %4415 = vmatprep.subr.bf16.mxu0 0
      %4416 = vmatpush1.bf16.msra.mxu0 0
      %4417 = vmatprep.subr.bf16.mxu0 0
      %4418 = vmatpush1.bf16.msra.mxu0 0
      %4419 = vmatprep.subr.bf16.mxu0 0
      %4420 = vmatpush1.bf16.msra.mxu0 0
      %4421 = vmatprep.subr.bf16.mxu0 0
      %4422 = vmatpush1.bf16.msra.mxu0 0
      %4423 = vmatprep.subr.bf16.mxu0 0
      %4424 = vmatpush1.bf16.msra.mxu0 0
      %4425 = vmatprep.subr.bf16.mxu0 0
      %4426 = vmatpush1.bf16.msra.mxu0 0
      %4427 = vmatprep.subr.bf16.mxu0 0
      %4428 = vmatpush1.bf16.msra.mxu0 0
      %4429 = vmatprep.subr.bf16.mxu0 0
      %4430 = vmatpush1.bf16.msra.mxu0 0
      %4431 = vmatprep.subr.bf16.mxu0 0
      %4432 = vmatpush1.bf16.msra.mxu0 0
      %4433 = vmatprep.subr.bf16.mxu0 0
      %4434 = vmatpush1.bf16.msra.mxu0 0
      %4435 = vmatprep.subr.bf16.mxu0 0
      %4436 = vmatpush1.bf16.msra.mxu0 0
      %4437 = vmatprep.subr.bf16.mxu0 0
      %4438 = vmatpush1.bf16.msra.mxu0 0
      %4439 = vmatprep.subr.bf16.mxu0 0
      %4440 = vmatpush1.bf16.msra.mxu0 0
      %4441 = vmatprep.mubr.bf16.mxu0 0
      %4442 = vmatmul.mubr.bf16.gmra.mrb[0].mxu0 %v4404
      %v4443 = vpop.f32.mrb[0].mxu0
      %v4444 = vadd.f32 0.0, %v4443
      %v4445 = vpop.f32.mrb[0].mxu0
      %v4446 = vpop.f32.mrb[0].mxu0
      %v4447 = vpop.f32.mrb[0].mxu0
      %4448 = vdwg.mxu0
      %4449 = vrot.lane.b32.xlu0 %v3093, 48
      %v4450 = vpop.permute.xlu0 %4449
      %v4452 = vsel %vm647, %v4351, 0
      %v4455 = vsel %vm894, %v4450, 0
      %4457 = vmatprep.subr.bf16.mxu0 0
      %4458 = vmatpush1.bf16.msra.mxu0 %v4455
      %4459 = vmatprep.subr.bf16.mxu0 0
      %4460 = vmatpush1.bf16.msra.mxu0 0
      %4461 = vmatprep.subr.bf16.mxu0 0
      %4462 = vmatpush1.bf16.msra.mxu0 0
      %4463 = vmatprep.subr.bf16.mxu0 0
      %4464 = vmatpush1.bf16.msra.mxu0 0
      %4465 = vmatprep.subr.bf16.mxu0 0
      %4466 = vmatpush1.bf16.msra.mxu0 0
      %4467 = vmatprep.subr.bf16.mxu0 0
      %4468 = vmatpush1.bf16.msra.mxu0 0
      %4469 = vmatprep.subr.bf16.mxu0 0
      %4470 = vmatpush1.bf16.msra.mxu0 0
      %4471 = vmatprep.subr.bf16.mxu0 0
      %4472 = vmatpush1.bf16.msra.mxu0 0
      %4473 = vmatprep.subr.bf16.mxu0 0
      %4474 = vmatpush1.bf16.msra.mxu0 0
      %4475 = vmatprep.subr.bf16.mxu0 0
      %4476 = vmatpush1.bf16.msra.mxu0 0
      %4477 = vmatprep.subr.bf16.mxu0 0
      %4478 = vmatpush1.bf16.msra.mxu0 0
      %4479 = vmatprep.subr.bf16.mxu0 0
      %4480 = vmatpush1.bf16.msra.mxu0 0
      %4481 = vmatprep.subr.bf16.mxu0 0
      %4482 = vmatpush1.bf16.msra.mxu0 0
      %4483 = vmatprep.subr.bf16.mxu0 0
      %4484 = vmatpush1.bf16.msra.mxu0 0
      %4485 = vmatprep.subr.bf16.mxu0 0
      %4486 = vmatpush1.bf16.msra.mxu0 0
      %4487 = vmatprep.subr.bf16.mxu0 0
      %4488 = vmatpush1.bf16.msra.mxu0 0
      %4489 = vmatprep.mubr.bf16.mxu0 0
      %4490 = vmatmul.mubr.bf16.gmra.mrb[0].mxu0 %v4452
      %v4491 = vpop.f32.mrb[0].mxu0
      %v4492 = vadd.f32 0.0, %v4491
      %v4493 = vpop.f32.mrb[0].mxu0
      %v4494 = vpop.f32.mrb[0].mxu0
      %v4495 = vpop.f32.mrb[0].mxu0
      %4496 = vdwg.mxu0
      %4497 = vrot.lane.b32.xlu0 %v3094, 48
      %v4498 = vpop.permute.xlu0 %4497
      %v4500 = vsel %vm647, %v4352, 0
      %v4503 = vsel %vm894, %v4498, 0
      %4505 = vmatprep.subr.bf16.mxu0 0
      %4506 = vmatpush1.bf16.msra.mxu0 %v4503
      %4507 = vmatprep.subr.bf16.mxu0 0
      %4508 = vmatpush1.bf16.msra.mxu0 0
      %4509 = vmatprep.subr.bf16.mxu0 0
      %4510 = vmatpush1.bf16.msra.mxu0 0
      %4511 = vmatprep.subr.bf16.mxu0 0
      %4512 = vmatpush1.bf16.msra.mxu0 0
      %4513 = vmatprep.subr.bf16.mxu0 0
      %4514 = vmatpush1.bf16.msra.mxu0 0
      %4515 = vmatprep.subr.bf16.mxu0 0
      %4516 = vmatpush1.bf16.msra.mxu0 0
      %4517 = vmatprep.subr.bf16.mxu0 0
      %4518 = vmatpush1.bf16.msra.mxu0 0
      %4519 = vmatprep.subr.bf16.mxu0 0
      %4520 = vmatpush1.bf16.msra.mxu0 0
      %4521 = vmatprep.subr.bf16.mxu0 0
      %4522 = vmatpush1.bf16.msra.mxu0 0
      %4523 = vmatprep.subr.bf16.mxu0 0
      %4524 = vmatpush1.bf16.msra.mxu0 0
      %4525 = vmatprep.subr.bf16.mxu0 0
      %4526 = vmatpush1.bf16.msra.mxu0 0
      %4527 = vmatprep.subr.bf16.mxu0 0
      %4528 = vmatpush1.bf16.msra.mxu0 0
      %4529 = vmatprep.subr.bf16.mxu0 0
      %4530 = vmatpush1.bf16.msra.mxu0 0
      %4531 = vmatprep.subr.bf16.mxu0 0
      %4532 = vmatpush1.bf16.msra.mxu0 0
      %4533 = vmatprep.subr.bf16.mxu0 0
      %4534 = vmatpush1.bf16.msra.mxu0 0
      %4535 = vmatprep.subr.bf16.mxu0 0
      %4536 = vmatpush1.bf16.msra.mxu0 0
      %4537 = vmatprep.mubr.bf16.mxu0 0
      %4538 = vmatmul.mubr.bf16.gmra.mrb[0].mxu0 %v4500
      %v4539 = vpop.f32.mrb[0].mxu0
      %v4540 = vadd.f32 0.0, %v4539
      %v4541 = vpop.f32.mrb[0].mxu0
      %v4542 = vpop.f32.mrb[0].mxu0
      %v4543 = vpop.f32.mrb[0].mxu0
      %4544 = vdwg.mxu0
      %v4545 = vpack.c.bf16 %v4444, %v4396
      %v4546 = vpack.c.bf16 %v4540, %v4492
      %v4548 = vsel %vm647, %v4545, 0
      %v4551 = vsel %vm647, %v4546, 0
      %v4554 = vsel %vm894, %v3087, 0
      %4556 = vmatprep.subr.bf16.mxu0 0
      %4557 = vmatpush1.bf16.msra.mxu0 %v4554
      %4558 = vmatprep.subr.bf16.mxu0 0
      %4559 = vmatpush1.bf16.msra.mxu0 0
      %4560 = vmatprep.subr.bf16.mxu0 0
      %4561 = vmatpush1.bf16.msra.mxu0 0
      %4562 = vmatprep.subr.bf16.mxu0 0
      %4563 = vmatpush1.bf16.msra.mxu0 0
      %4564 = vmatprep.subr.bf16.mxu0 0
      %4565 = vmatpush1.bf16.msra.mxu0 0
      %4566 = vmatprep.subr.bf16.mxu0 0
      %4567 = vmatpush1.bf16.msra.mxu0 0
      %4568 = vmatprep.subr.bf16.mxu0 0
      %4569 = vmatpush1.bf16.msra.mxu0 0
      %4570 = vmatprep.subr.bf16.mxu0 0
      %4571 = vmatpush1.bf16.msra.mxu0 0
      %4572 = vmatprep.subr.bf16.mxu0 0
      %4573 = vmatpush1.bf16.msra.mxu0 0
      %4574 = vmatprep.subr.bf16.mxu0 0
      %4575 = vmatpush1.bf16.msra.mxu0 0
      %4576 = vmatprep.subr.bf16.mxu0 0
      %4577 = vmatpush1.bf16.msra.mxu0 0
      %4578 = vmatprep.subr.bf16.mxu0 0
      %4579 = vmatpush1.bf16.msra.mxu0 0
      %4580 = vmatprep.subr.bf16.mxu0 0
      %4581 = vmatpush1.bf16.msra.mxu0 0
      %4582 = vmatprep.subr.bf16.mxu0 0
      %4583 = vmatpush1.bf16.msra.mxu0 0
      %4584 = vmatprep.subr.bf16.mxu0 0
      %4585 = vmatpush1.bf16.msra.mxu0 0
      %4586 = vmatprep.subr.bf16.mxu0 0
      %4587 = vmatpush1.bf16.msra.mxu0 0
      %4588 = vmatprep.mubr.bf16.mxu0 0
      %4589 = vmatmul.mubr.bf16.gmra.mrb[0].mxu0 %v4548
      %v4590 = vpop.f32.mrb[0].mxu0
      %v4591 = vadd.f32 0.0, %v4590
      %v4592 = vpop.f32.mrb[0].mxu0
      %v4593 = vpop.f32.mrb[0].mxu0
      %v4594 = vadd.f32 0.0, %v4593
      %v4595 = vpop.f32.mrb[0].mxu0
      %4596 = vmatprep.mubr.bf16.mxu0 0
      %4597 = vmatmul.mubr.bf16.gmra.mrb[0].mxu0 %v4551
      %v4598 = vpop.f32.mrb[0].mxu0
      %v4599 = vadd.f32 0.0, %v4598
      %v4600 = vpop.f32.mrb[0].mxu0
      %v4601 = vpop.f32.mrb[0].mxu0
      %v4602 = vadd.f32 0.0, %v4601
      %v4603 = vpop.f32.mrb[0].mxu0
      %4604 = vdwg.mxu0
      %v4605 = vadd.f32 %v4101, %v4591
      %v4606 = vadd.f32 %v4102, %v4594
      %v4607 = vadd.f32 %v4103, %v4599
      %v4608 = vadd.f32 %v4104, %v4602
      %4609 = vrot.lane.b32.xlu0 %v3091, 104
      %v4610 = vpop.permute.xlu0 %4609
      %4611 = vrot.lane.b32.xlu0 %v3091, 72
      %v4612 = vpop.permute.xlu0 %4611
      %v4614 = vsel %vm647, %v4610, 0
      %v4617 = vsel %vm647, %v4612, 0
      %4619 = vmatprep.subr.bf16.mxu0 0
      %4620 = vmatpush1.bf16.xpose.msra.mxu0 %v4617
      %4621 = vmatprep.subr.bf16.mxu0 0
      %4622 = vmatpush1.bf16.xpose.msra.mxu0 0
      %4623 = vmatprep.subr.bf16.mxu0 0
      %4624 = vmatpush1.bf16.xpose.msra.mxu0 0
      %4625 = vmatprep.subr.bf16.mxu0 0
      %4626 = vmatpush1.bf16.xpose.msra.mxu0 0
      %4627 = vmatprep.subr.bf16.mxu0 0
      %4628 = vmatpush1.bf16.xpose.msra.mxu0 0
      %4629 = vmatprep.subr.bf16.mxu0 0
      %4630 = vmatpush1.bf16.xpose.msra.mxu0 0
      %4631 = vmatprep.subr.bf16.mxu0 0
      %4632 = vmatpush1.bf16.xpose.msra.mxu0 0
      %4633 = vmatprep.subr.bf16.mxu0 0
      %4634 = vmatpush1.bf16.xpose.msra.mxu0 0
      %4635 = vmatprep.subr.bf16.mxu0 0
      %4636 = vmatpush1.bf16.xpose.msra.mxu0 0
      %4637 = vmatprep.subr.bf16.mxu0 0
      %4638 = vmatpush1.bf16.xpose.msra.mxu0 0
      %4639 = vmatprep.subr.bf16.mxu0 0
      %4640 = vmatpush1.bf16.xpose.msra.mxu0 0
      %4641 = vmatprep.subr.bf16.mxu0 0
      %4642 = vmatpush1.bf16.xpose.msra.mxu0 0
      %4643 = vmatprep.subr.bf16.mxu0 0
      %4644 = vmatpush1.bf16.xpose.msra.mxu0 0
      %4645 = vmatprep.subr.bf16.mxu0 0
      %4646 = vmatpush1.bf16.xpose.msra.mxu0 0
      %4647 = vmatprep.subr.bf16.mxu0 0
      %4648 = vmatpush1.bf16.xpose.msra.mxu0 0
      %4649 = vmatprep.subr.bf16.mxu0 0
      %4650 = vmatpush1.bf16.xpose.msra.mxu0 0
      %4651 = vmatprep.mubr.bf16.mxu0 0
      %4652 = vmatmul.mubr.bf16.gmra.mrb[0].mxu0 %v4614
      %v4653 = vpop.f32.mrb[0].mxu0
      %v4654 = vadd.f32 0.0, %v4653
      %v4655 = vpop.f32.mrb[0].mxu0
      %v4656 = vpop.f32.mrb[0].mxu0
      %v4657 = vpop.f32.mrb[0].mxu0
      %4658 = vdwg.mxu0
      %4659 = vrot.lane.b32.xlu0 %v3092, 104
      %v4660 = vpop.permute.xlu0 %4659
      %4661 = vrot.lane.b32.xlu0 %v3092, 72
      %v4662 = vpop.permute.xlu0 %4661
      %v4664 = vsel %vm647, %v4660, 0
      %v4667 = vsel %vm647, %v4662, 0
      %4669 = vmatprep.subr.bf16.mxu0 0
      %4670 = vmatpush1.bf16.xpose.msra.mxu0 %v4667
      %4671 = vmatprep.subr.bf16.mxu0 0
      %4672 = vmatpush1.bf16.xpose.msra.mxu0 0
      %4673 = vmatprep.subr.bf16.mxu0 0
      %4674 = vmatpush1.bf16.xpose.msra.mxu0 0
      %4675 = vmatprep.subr.bf16.mxu0 0
      %4676 = vmatpush1.bf16.xpose.msra.mxu0 0
      %4677 = vmatprep.subr.bf16.mxu0 0
      %4678 = vmatpush1.bf16.xpose.msra.mxu0 0
      %4679 = vmatprep.subr.bf16.mxu0 0
      %4680 = vmatpush1.bf16.xpose.msra.mxu0 0
      %4681 = vmatprep.subr.bf16.mxu0 0
      %4682 = vmatpush1.bf16.xpose.msra.mxu0 0
      %4683 = vmatprep.subr.bf16.mxu0 0
      %4684 = vmatpush1.bf16.xpose.msra.mxu0 0
      %4685 = vmatprep.subr.bf16.mxu0 0
      %4686 = vmatpush1.bf16.xpose.msra.mxu0 0
      %4687 = vmatprep.subr.bf16.mxu0 0
      %4688 = vmatpush1.bf16.xpose.msra.mxu0 0
      %4689 = vmatprep.subr.bf16.mxu0 0
      %4690 = vmatpush1.bf16.xpose.msra.mxu0 0
      %4691 = vmatprep.subr.bf16.mxu0 0
      %4692 = vmatpush1.bf16.xpose.msra.mxu0 0
      %4693 = vmatprep.subr.bf16.mxu0 0
      %4694 = vmatpush1.bf16.xpose.msra.mxu0 0
      %4695 = vmatprep.subr.bf16.mxu0 0
      %4696 = vmatpush1.bf16.xpose.msra.mxu0 0
      %4697 = vmatprep.subr.bf16.mxu0 0
      %4698 = vmatpush1.bf16.xpose.msra.mxu0 0
      %4699 = vmatprep.subr.bf16.mxu0 0
      %4700 = vmatpush1.bf16.xpose.msra.mxu0 0
      %4701 = vmatprep.mubr.bf16.mxu0 0
      %4702 = vmatmul.mubr.bf16.gmra.mrb[0].mxu0 %v4664
      %v4703 = vpop.f32.mrb[0].mxu0
      %v4704 = vadd.f32 0.0, %v4703
      %v4705 = vpop.f32.mrb[0].mxu0
      %v4706 = vpop.f32.mrb[0].mxu0
      %v4707 = vpop.f32.mrb[0].mxu0
      %4708 = vdwg.mxu0
      %4709 = vrot.lane.b32.xlu0 %v3093, 104
      %v4710 = vpop.permute.xlu0 %4709
      %4711 = vrot.lane.b32.xlu0 %v3093, 72
      %v4712 = vpop.permute.xlu0 %4711
      %v4714 = vsel %vm647, %v4710, 0
      %v4717 = vsel %vm647, %v4712, 0
      %4719 = vmatprep.subr.bf16.mxu0 0
      %4720 = vmatpush1.bf16.xpose.msra.mxu0 %v4717
      %4721 = vmatprep.subr.bf16.mxu0 0
      %4722 = vmatpush1.bf16.xpose.msra.mxu0 0
      %4723 = vmatprep.subr.bf16.mxu0 0
      %4724 = vmatpush1.bf16.xpose.msra.mxu0 0
      %4725 = vmatprep.subr.bf16.mxu0 0
      %4726 = vmatpush1.bf16.xpose.msra.mxu0 0
      %4727 = vmatprep.subr.bf16.mxu0 0
      %4728 = vmatpush1.bf16.xpose.msra.mxu0 0
      %4729 = vmatprep.subr.bf16.mxu0 0
      %4730 = vmatpush1.bf16.xpose.msra.mxu0 0
      %4731 = vmatprep.subr.bf16.mxu0 0
      %4732 = vmatpush1.bf16.xpose.msra.mxu0 0
      %4733 = vmatprep.subr.bf16.mxu0 0
      %4734 = vmatpush1.bf16.xpose.msra.mxu0 0
      %4735 = vmatprep.subr.bf16.mxu0 0
      %4736 = vmatpush1.bf16.xpose.msra.mxu0 0
      %4737 = vmatprep.subr.bf16.mxu0 0
      %4738 = vmatpush1.bf16.xpose.msra.mxu0 0
      %4739 = vmatprep.subr.bf16.mxu0 0
      %4740 = vmatpush1.bf16.xpose.msra.mxu0 0
      %4741 = vmatprep.subr.bf16.mxu0 0
      %4742 = vmatpush1.bf16.xpose.msra.mxu0 0
      %4743 = vmatprep.subr.bf16.mxu0 0
      %4744 = vmatpush1.bf16.xpose.msra.mxu0 0
      %4745 = vmatprep.subr.bf16.mxu0 0
      %4746 = vmatpush1.bf16.xpose.msra.mxu0 0
      %4747 = vmatprep.subr.bf16.mxu0 0
      %4748 = vmatpush1.bf16.xpose.msra.mxu0 0
      %4749 = vmatprep.subr.bf16.mxu0 0
      %4750 = vmatpush1.bf16.xpose.msra.mxu0 0
      %4751 = vmatprep.mubr.bf16.mxu0 0
      %4752 = vmatmul.mubr.bf16.gmra.mrb[0].mxu0 %v4714
      %v4753 = vpop.f32.mrb[0].mxu0
      %v4754 = vadd.f32 0.0, %v4753
      %v4755 = vpop.f32.mrb[0].mxu0
      %v4756 = vpop.f32.mrb[0].mxu0
      %v4757 = vpop.f32.mrb[0].mxu0
      %4758 = vdwg.mxu0
      %4759 = vrot.lane.b32.xlu0 %v3094, 104
      %v4760 = vpop.permute.xlu0 %4759
      %4761 = vrot.lane.b32.xlu0 %v3094, 72
      %v4762 = vpop.permute.xlu0 %4761
      %v4764 = vsel %vm647, %v4760, 0
      %v4767 = vsel %vm647, %v4762, 0
      %4769 = vmatprep.subr.bf16.mxu0 0
      %4770 = vmatpush1.bf16.xpose.msra.mxu0 %v4767
      %4771 = vmatprep.subr.bf16.mxu0 0
      %4772 = vmatpush1.bf16.xpose.msra.mxu0 0
      %4773 = vmatprep.subr.bf16.mxu0 0
      %4774 = vmatpush1.bf16.xpose.msra.mxu0 0
      %4775 = vmatprep.subr.bf16.mxu0 0
      %4776 = vmatpush1.bf16.xpose.msra.mxu0 0
      %4777 = vmatprep.subr.bf16.mxu0 0
      %4778 = vmatpush1.bf16.xpose.msra.mxu0 0
      %4779 = vmatprep.subr.bf16.mxu0 0
      %4780 = vmatpush1.bf16.xpose.msra.mxu0 0
      %4781 = vmatprep.subr.bf16.mxu0 0
      %4782 = vmatpush1.bf16.xpose.msra.mxu0 0
      %4783 = vmatprep.subr.bf16.mxu0 0
      %4784 = vmatpush1.bf16.xpose.msra.mxu0 0
      %4785 = vmatprep.subr.bf16.mxu0 0
      %4786 = vmatpush1.bf16.xpose.msra.mxu0 0
      %4787 = vmatprep.subr.bf16.mxu0 0
      %4788 = vmatpush1.bf16.xpose.msra.mxu0 0
      %4789 = vmatprep.subr.bf16.mxu0 0
      %4790 = vmatpush1.bf16.xpose.msra.mxu0 0
      %4791 = vmatprep.subr.bf16.mxu0 0
      %4792 = vmatpush1.bf16.xpose.msra.mxu0 0
      %4793 = vmatprep.subr.bf16.mxu0 0
      %4794 = vmatpush1.bf16.xpose.msra.mxu0 0
      %4795 = vmatprep.subr.bf16.mxu0 0
      %4796 = vmatpush1.bf16.xpose.msra.mxu0 0
      %4797 = vmatprep.subr.bf16.mxu0 0
      %4798 = vmatpush1.bf16.xpose.msra.mxu0 0
      %4799 = vmatprep.subr.bf16.mxu0 0
      %4800 = vmatpush1.bf16.xpose.msra.mxu0 0
      %4801 = vmatprep.mubr.bf16.mxu0 0
      %4802 = vmatmul.mubr.bf16.gmra.mrb[0].mxu0 %v4764
      %v4803 = vpop.f32.mrb[0].mxu0
      %v4804 = vadd.f32 0.0, %v4803
      %v4805 = vpop.f32.mrb[0].mxu0
      %v4806 = vpop.f32.mrb[0].mxu0
      %v4807 = vpop.f32.mrb[0].mxu0
      %4808 = vdwg.mxu0
      %v4809 = vsel %vm647, %v4654, -inf
      %4810 = vmax.xlane.f32.xlu0 %v4809
      %v4811 = vpop.xlane.xlu0 %4810
      %v4812 = vsel %vm647, %v4704, -inf
      %4813 = vmax.xlane.f32.xlu0 %v4812
      %v4814 = vpop.xlane.xlu0 %4813
      %v4815 = vsel %vm647, %v4754, -inf
      %4816 = vmax.xlane.f32.xlu0 %v4815
      %v4817 = vpop.xlane.xlu0 %4816
      %v4818 = vsel %vm647, %v4804, -inf
      %4819 = vmax.xlane.f32.xlu0 %v4818
      %v4820 = vpop.xlane.xlu0 %4819
      %v4821 = vsub.f32 %v4654, %v4811
      %v4822 = vsub.f32 %v4704, %v4814
      %v4823 = vsub.f32 %v4754, %v4817
      %v4824 = vsub.f32 %v4804, %v4820
      %v4825 = vmul.f32 %v4821, 1.442695
      %v4826 = vpow.pop %v4825
      %v4827 = vmul.f32 %v4822, 1.442695
      %v4828 = vpow.pop %v4827
      %v4829 = vmul.f32 %v4823, 1.442695
      %v4830 = vpow.pop %v4829
      %v4831 = vmul.f32 %v4824, 1.442695
      %v4832 = vpow.pop %v4831
      %v4833 = vsel %vm647, %v4826, 0.0
      %4834 = vadd.xlane.f32.xlu0 %v4833
      %v4835 = vpop.xlane.xlu0 %4834
      %v4836 = vsel %vm647, %v4828, 0.0
      %4837 = vadd.xlane.f32.xlu0 %v4836
      %v4838 = vpop.xlane.xlu0 %4837
      %v4839 = vsel %vm647, %v4830, 0.0
      %4840 = vadd.xlane.f32.xlu0 %v4839
      %v4841 = vpop.xlane.xlu0 %4840
      %v4842 = vsel %vm647, %v4832, 0.0
      %4843 = vadd.xlane.f32.xlu0 %v4842
      %v4844 = vpop.xlane.xlu0 %4843
      %v4845 = vrcp.pop %v4835
      %v4846 = vrcp.pop %v4838
      %v4847 = vrcp.pop %v4841
      %v4848 = vrcp.pop %v4844
      %v4849 = vmul.f32 %v4826, %v4845
      %v4850 = vmul.f32 %v4828, %v4846
      %v4851 = vmul.f32 %v4830, %v4847
      %v4852 = vmul.f32 %v4832, %v4848
      %v4853 = vpack.c.bf16 %v4849, %v4849
      %v4854 = vpack.c.bf16 %v4850, %v4850
      %v4855 = vpack.c.bf16 %v4851, %v4851
      %v4856 = vpack.c.bf16 %v4852, %v4852
      %4857 = vrot.lane.b32.xlu0 %v3091, 40
      %v4858 = vpop.permute.xlu0 %4857
      %v4860 = vsel %vm647, %v4853, 0
      %v4863 = vsel %vm894, %v4858, 0
      %4865 = vmatprep.subr.bf16.mxu0 0
      %4866 = vmatpush1.bf16.msra.mxu0 %v4863
      %4867 = vmatprep.subr.bf16.mxu0 0
      %4868 = vmatpush1.bf16.msra.mxu0 0
      %4869 = vmatprep.subr.bf16.mxu0 0
      %4870 = vmatpush1.bf16.msra.mxu0 0
      %4871 = vmatprep.subr.bf16.mxu0 0
      %4872 = vmatpush1.bf16.msra.mxu0 0
      %4873 = vmatprep.subr.bf16.mxu0 0
      %4874 = vmatpush1.bf16.msra.mxu0 0
      %4875 = vmatprep.subr.bf16.mxu0 0
      %4876 = vmatpush1.bf16.msra.mxu0 0
      %4877 = vmatprep.subr.bf16.mxu0 0
      %4878 = vmatpush1.bf16.msra.mxu0 0
      %4879 = vmatprep.subr.bf16.mxu0 0
      %4880 = vmatpush1.bf16.msra.mxu0 0
      %4881 = vmatprep.subr.bf16.mxu0 0
      %4882 = vmatpush1.bf16.msra.mxu0 0
      %4883 = vmatprep.subr.bf16.mxu0 0
      %4884 = vmatpush1.bf16.msra.mxu0 0
      %4885 = vmatprep.subr.bf16.mxu0 0
      %4886 = vmatpush1.bf16.msra.mxu0 0
      %4887 = vmatprep.subr.bf16.mxu0 0
      %4888 = vmatpush1.bf16.msra.mxu0 0
      %4889 = vmatprep.subr.bf16.mxu0 0
      %4890 = vmatpush1.bf16.msra.mxu0 0
      %4891 = vmatprep.subr.bf16.mxu0 0
      %4892 = vmatpush1.bf16.msra.mxu0 0
      %4893 = vmatprep.subr.bf16.mxu0 0
      %4894 = vmatpush1.bf16.msra.mxu0 0
      %4895 = vmatprep.subr.bf16.mxu0 0
      %4896 = vmatpush1.bf16.msra.mxu0 0
      %4897 = vmatprep.mubr.bf16.mxu0 0
      %4898 = vmatmul.mubr.bf16.gmra.mrb[0].mxu0 %v4860
      %v4899 = vpop.f32.mrb[0].mxu0
      %v4900 = vadd.f32 0.0, %v4899
      %v4901 = vpop.f32.mrb[0].mxu0
      %v4902 = vpop.f32.mrb[0].mxu0
      %v4903 = vpop.f32.mrb[0].mxu0
      %4904 = vdwg.mxu0
      %4905 = vrot.lane.b32.xlu0 %v3092, 40
      %v4906 = vpop.permute.xlu0 %4905
      %v4908 = vsel %vm647, %v4854, 0
      %v4911 = vsel %vm894, %v4906, 0
      %4913 = vmatprep.subr.bf16.mxu0 0
      %4914 = vmatpush1.bf16.msra.mxu0 %v4911
      %4915 = vmatprep.subr.bf16.mxu0 0
      %4916 = vmatpush1.bf16.msra.mxu0 0
      %4917 = vmatprep.subr.bf16.mxu0 0
      %4918 = vmatpush1.bf16.msra.mxu0 0
      %4919 = vmatprep.subr.bf16.mxu0 0
      %4920 = vmatpush1.bf16.msra.mxu0 0
      %4921 = vmatprep.subr.bf16.mxu0 0
      %4922 = vmatpush1.bf16.msra.mxu0 0
      %4923 = vmatprep.subr.bf16.mxu0 0
      %4924 = vmatpush1.bf16.msra.mxu0 0
      %4925 = vmatprep.subr.bf16.mxu0 0
      %4926 = vmatpush1.bf16.msra.mxu0 0
      %4927 = vmatprep.subr.bf16.mxu0 0
      %4928 = vmatpush1.bf16.msra.mxu0 0
      %4929 = vmatprep.subr.bf16.mxu0 0
      %4930 = vmatpush1.bf16.msra.mxu0 0
      %4931 = vmatprep.subr.bf16.mxu0 0
      %4932 = vmatpush1.bf16.msra.mxu0 0
      %4933 = vmatprep.subr.bf16.mxu0 0
      %4934 = vmatpush1.bf16.msra.mxu0 0
      %4935 = vmatprep.subr.bf16.mxu0 0
      %4936 = vmatpush1.bf16.msra.mxu0 0
      %4937 = vmatprep.subr.bf16.mxu0 0
      %4938 = vmatpush1.bf16.msra.mxu0 0
      %4939 = vmatprep.subr.bf16.mxu0 0
      %4940 = vmatpush1.bf16.msra.mxu0 0
      %4941 = vmatprep.subr.bf16.mxu0 0
      %4942 = vmatpush1.bf16.msra.mxu0 0
      %4943 = vmatprep.subr.bf16.mxu0 0
      %4944 = vmatpush1.bf16.msra.mxu0 0
      %4945 = vmatprep.mubr.bf16.mxu0 0
      %4946 = vmatmul.mubr.bf16.gmra.mrb[0].mxu0 %v4908
      %v4947 = vpop.f32.mrb[0].mxu0
      %v4948 = vadd.f32 0.0, %v4947
      %v4949 = vpop.f32.mrb[0].mxu0
      %v4950 = vpop.f32.mrb[0].mxu0
      %v4951 = vpop.f32.mrb[0].mxu0
      %4952 = vdwg.mxu0
      %4953 = vrot.lane.b32.xlu0 %v3093, 40
      %v4954 = vpop.permute.xlu0 %4953
      %v4956 = vsel %vm647, %v4855, 0
      %v4959 = vsel %vm894, %v4954, 0
      %4961 = vmatprep.subr.bf16.mxu0 0
      %4962 = vmatpush1.bf16.msra.mxu0 %v4959
      %4963 = vmatprep.subr.bf16.mxu0 0
      %4964 = vmatpush1.bf16.msra.mxu0 0
      %4965 = vmatprep.subr.bf16.mxu0 0
      %4966 = vmatpush1.bf16.msra.mxu0 0
      %4967 = vmatprep.subr.bf16.mxu0 0
      %4968 = vmatpush1.bf16.msra.mxu0 0
      %4969 = vmatprep.subr.bf16.mxu0 0
      %4970 = vmatpush1.bf16.msra.mxu0 0
      %4971 = vmatprep.subr.bf16.mxu0 0
      %4972 = vmatpush1.bf16.msra.mxu0 0
      %4973 = vmatprep.subr.bf16.mxu0 0
      %4974 = vmatpush1.bf16.msra.mxu0 0
      %4975 = vmatprep.subr.bf16.mxu0 0
      %4976 = vmatpush1.bf16.msra.mxu0 0
      %4977 = vmatprep.subr.bf16.mxu0 0
      %4978 = vmatpush1.bf16.msra.mxu0 0
      %4979 = vmatprep.subr.bf16.mxu0 0
      %4980 = vmatpush1.bf16.msra.mxu0 0
      %4981 = vmatprep.subr.bf16.mxu0 0
      %4982 = vmatpush1.bf16.msra.mxu0 0
      %4983 = vmatprep.subr.bf16.mxu0 0
      %4984 = vmatpush1.bf16.msra.mxu0 0
      %4985 = vmatprep.subr.bf16.mxu0 0
      %4986 = vmatpush1.bf16.msra.mxu0 0
      %4987 = vmatprep.subr.bf16.mxu0 0
      %4988 = vmatpush1.bf16.msra.mxu0 0
      %4989 = vmatprep.subr.bf16.mxu0 0
      %4990 = vmatpush1.bf16.msra.mxu0 0
      %4991 = vmatprep.subr.bf16.mxu0 0
      %4992 = vmatpush1.bf16.msra.mxu0 0
      %4993 = vmatprep.mubr.bf16.mxu0 0
      %4994 = vmatmul.mubr.bf16.gmra.mrb[0].mxu0 %v4956
      %v4995 = vpop.f32.mrb[0].mxu0
      %v4996 = vadd.f32 0.0, %v4995
      %v4997 = vpop.f32.mrb[0].mxu0
      %v4998 = vpop.f32.mrb[0].mxu0
      %v4999 = vpop.f32.mrb[0].mxu0
      %5000 = vdwg.mxu0
      %5001 = vrot.lane.b32.xlu0 %v3094, 40
      %v5002 = vpop.permute.xlu0 %5001
      %v5004 = vsel %vm647, %v4856, 0
      %v5007 = vsel %vm894, %v5002, 0
      %5009 = vmatprep.subr.bf16.mxu0 0
      %5010 = vmatpush1.bf16.msra.mxu0 %v5007
      %5011 = vmatprep.subr.bf16.mxu0 0
      %5012 = vmatpush1.bf16.msra.mxu0 0
      %5013 = vmatprep.subr.bf16.mxu0 0
      %5014 = vmatpush1.bf16.msra.mxu0 0
      %5015 = vmatprep.subr.bf16.mxu0 0
      %5016 = vmatpush1.bf16.msra.mxu0 0
      %5017 = vmatprep.subr.bf16.mxu0 0
      %5018 = vmatpush1.bf16.msra.mxu0 0
      %5019 = vmatprep.subr.bf16.mxu0 0
      %5020 = vmatpush1.bf16.msra.mxu0 0
      %5021 = vmatprep.subr.bf16.mxu0 0
      %5022 = vmatpush1.bf16.msra.mxu0 0
      %5023 = vmatprep.subr.bf16.mxu0 0
      %5024 = vmatpush1.bf16.msra.mxu0 0
      %5025 = vmatprep.subr.bf16.mxu0 0
      %5026 = vmatpush1.bf16.msra.mxu0 0
      %5027 = vmatprep.subr.bf16.mxu0 0
      %5028 = vmatpush1.bf16.msra.mxu0 0
      %5029 = vmatprep.subr.bf16.mxu0 0
      %5030 = vmatpush1.bf16.msra.mxu0 0
      %5031 = vmatprep.subr.bf16.mxu0 0
      %5032 = vmatpush1.bf16.msra.mxu0 0
      %5033 = vmatprep.subr.bf16.mxu0 0
      %5034 = vmatpush1.bf16.msra.mxu0 0
      %5035 = vmatprep.subr.bf16.mxu0 0
      %5036 = vmatpush1.bf16.msra.mxu0 0
      %5037 = vmatprep.subr.bf16.mxu0 0
      %5038 = vmatpush1.bf16.msra.mxu0 0
      %5039 = vmatprep.subr.bf16.mxu0 0
      %5040 = vmatpush1.bf16.msra.mxu0 0
      %5041 = vmatprep.mubr.bf16.mxu0 0
      %5042 = vmatmul.mubr.bf16.gmra.mrb[0].mxu0 %v5004
      %v5043 = vpop.f32.mrb[0].mxu0
      %v5044 = vadd.f32 0.0, %v5043
      %v5045 = vpop.f32.mrb[0].mxu0
      %v5046 = vpop.f32.mrb[0].mxu0
      %v5047 = vpop.f32.mrb[0].mxu0
      %5048 = vdwg.mxu0
      %v5049 = vpack.c.bf16 %v4948, %v4900
      %v5050 = vpack.c.bf16 %v5044, %v4996
      %v5052 = vsel %vm647, %v5049, 0
      %v5055 = vsel %vm647, %v5050, 0
      %v5058 = vsel %vm894, %v3088, 0
      %5060 = vmatprep.subr.bf16.mxu0 0
      %5061 = vmatpush1.bf16.msra.mxu0 %v5058
      %5062 = vmatprep.subr.bf16.mxu0 0
      %5063 = vmatpush1.bf16.msra.mxu0 0
      %5064 = vmatprep.subr.bf16.mxu0 0
      %5065 = vmatpush1.bf16.msra.mxu0 0
      %5066 = vmatprep.subr.bf16.mxu0 0
      %5067 = vmatpush1.bf16.msra.mxu0 0
      %5068 = vmatprep.subr.bf16.mxu0 0
      %5069 = vmatpush1.bf16.msra.mxu0 0
      %5070 = vmatprep.subr.bf16.mxu0 0
      %5071 = vmatpush1.bf16.msra.mxu0 0
      %5072 = vmatprep.subr.bf16.mxu0 0
      %5073 = vmatpush1.bf16.msra.mxu0 0
      %5074 = vmatprep.subr.bf16.mxu0 0
      %5075 = vmatpush1.bf16.msra.mxu0 0
      %5076 = vmatprep.subr.bf16.mxu0 0
      %5077 = vmatpush1.bf16.msra.mxu0 0
      %5078 = vmatprep.subr.bf16.mxu0 0
      %5079 = vmatpush1.bf16.msra.mxu0 0
      %5080 = vmatprep.subr.bf16.mxu0 0
      %5081 = vmatpush1.bf16.msra.mxu0 0
      %5082 = vmatprep.subr.bf16.mxu0 0
      %5083 = vmatpush1.bf16.msra.mxu0 0
      %5084 = vmatprep.subr.bf16.mxu0 0
      %5085 = vmatpush1.bf16.msra.mxu0 0
      %5086 = vmatprep.subr.bf16.mxu0 0
      %5087 = vmatpush1.bf16.msra.mxu0 0
      %5088 = vmatprep.subr.bf16.mxu0 0
      %5089 = vmatpush1.bf16.msra.mxu0 0
      %5090 = vmatprep.subr.bf16.mxu0 0
      %5091 = vmatpush1.bf16.msra.mxu0 0
      %5092 = vmatprep.mubr.bf16.mxu0 0
      %5093 = vmatmul.mubr.bf16.gmra.mrb[0].mxu0 %v5052
      %v5094 = vpop.f32.mrb[0].mxu0
      %v5095 = vadd.f32 0.0, %v5094
      %v5096 = vpop.f32.mrb[0].mxu0
      %v5097 = vpop.f32.mrb[0].mxu0
      %v5098 = vadd.f32 0.0, %v5097
      %v5099 = vpop.f32.mrb[0].mxu0
      %5100 = vmatprep.mubr.bf16.mxu0 0
      %5101 = vmatmul.mubr.bf16.gmra.mrb[0].mxu0 %v5055
      %v5102 = vpop.f32.mrb[0].mxu0
      %v5103 = vadd.f32 0.0, %v5102
      %v5104 = vpop.f32.mrb[0].mxu0
      %v5105 = vpop.f32.mrb[0].mxu0
      %v5106 = vadd.f32 0.0, %v5105
      %v5107 = vpop.f32.mrb[0].mxu0
      %5108 = vdwg.mxu0
      %v5109 = vadd.f32 %v4605, %v5095
      %v5110 = vadd.f32 %v4606, %v5098
      %v5111 = vadd.f32 %v4607, %v5103
      %v5112 = vadd.f32 %v4608, %v5106
      %v5113 = vadd.f32 %v2998, %v5109
      %v5114 = vadd.f32 %v2999, %v5110
      %v5115 = vadd.f32 %v3000, %v5111
      %v5116 = vadd.f32 %v3001, %v5112
      %s5117 = scalar_lea.vmem %s9, 1
      %v5118 = vld [vmem:[%s5117] sm:$0x1]
      %s5119 = scalar_lea.vmem %s10, 1
      %v5120 = vld [vmem:[%s5119] sm:$0x1]
      %v5121 = vsel %vm579, %v5113, 0.0
      %5122 = vadd.xlane.f32.xlu0 %v5121
      %v5123 = vpop.xlane.xlu0 %5122
      %v5124 = vsel %vm579, %v5114, 0.0
      %5125 = vadd.xlane.f32.xlu0 %v5124
      %v5126 = vpop.xlane.xlu0 %5125
      %v5127 = vsel %vm579, %v5115, 0.0
      %5128 = vadd.xlane.f32.xlu0 %v5127
      %v5129 = vpop.xlane.xlu0 %5128
      %v5130 = vsel %vm579, %v5116, 0.0
      %5131 = vadd.xlane.f32.xlu0 %v5130
      %v5132 = vpop.xlane.xlu0 %5131
      %v5133 = vmul.f32 %v5123, %v2682
      %v5134 = vmul.f32 %v5126, %v2682
      %v5135 = vmul.f32 %v5129, %v2682
      %v5136 = vmul.f32 %v5132, %v2682
      %v5137 = vsub.f32 %v5113, %v5133
      %v5138 = vsub.f32 %v5114, %v5134
      %v5139 = vsub.f32 %v5115, %v5135
      %v5140 = vsub.f32 %v5116, %v5136
      %v5141 = vmul.f32 %v5137, %v5137
      %v5142 = vmul.f32 %v5138, %v5138
      %v5143 = vmul.f32 %v5139, %v5139
      %v5144 = vmul.f32 %v5140, %v5140
      %v5145 = vsel %vm579, %v5141, 0.0
      %5146 = vadd.xlane.f32.xlu0 %v5145
      %v5147 = vpop.xlane.xlu0 %5146
      %v5148 = vsel %vm579, %v5142, 0.0
      %5149 = vadd.xlane.f32.xlu0 %v5148
      %v5150 = vpop.xlane.xlu0 %5149
      %v5151 = vsel %vm579, %v5143, 0.0
      %5152 = vadd.xlane.f32.xlu0 %v5151
      %v5153 = vpop.xlane.xlu0 %5152
      %v5154 = vsel %vm579, %v5144, 0.0
      %5155 = vadd.xlane.f32.xlu0 %v5154
      %v5156 = vpop.xlane.xlu0 %5155
      %v5157 = vmul.f32 %v5147, %v2682
      %v5158 = vmul.f32 %v5150, %v2682
      %v5159 = vmul.f32 %v5153, %v2682
      %v5160 = vmul.f32 %v5156, %v2682
      %v5161 = vadd.f32 %v5157, 1e-05
      %v5162 = vadd.f32 %v5158, 1e-05
      %v5163 = vadd.f32 %v5159, 1e-05
      %v5164 = vadd.f32 %v5160, 1e-05
      %v5165 = vrsqrt.pop %v5161
      %v5166 = vrsqrt.pop %v5162
      %v5167 = vrsqrt.pop %v5163
      %v5168 = vrsqrt.pop %v5164
      %v5169 = vmul.f32 %v5137, %v5165
      %v5170 = vmul.f32 %v5138, %v5166
      %v5171 = vmul.f32 %v5139, %v5167
      %v5172 = vmul.f32 %v5140, %v5168
      %v5174 = vlaneseq
      %v5175 = vshrl.u32 %v5174, 7
      %v5176 = vsub.s32 0, %v5175
      %v5177 = vrot.slane %v5118, %v5176
      %v5179 = vmul.f32 %v5169, %v5177
      %v5180 = vmul.f32 %v5170, %v5177
      %v5181 = vmul.f32 %v5171, %v5177
      %v5182 = vmul.f32 %v5172, %v5177
      %v5184 = vlaneseq
      %v5185 = vshrl.u32 %v5184, 7
      %v5186 = vsub.s32 0, %v5185
      %v5187 = vrot.slane %v5120, %v5186
      %v5189 = vadd.f32 %v5179, %v5187
      %v5190 = vadd.f32 %v5180, %v5187
      %v5191 = vadd.f32 %v5181, %v5187
      %v5192 = vadd.f32 %v5182, %v5187
      %v5193 = vpack.c.bf16 %v5190, %v5189
      %v5194 = vpack.c.bf16 %v5192, %v5191
      %s5195 = scalar_lea.vmem %s5, 16
      %v5196 = vld [vmem:[%s5195] sm:$0xf]
      %v5197 = vld [vmem:[%s5195 + $0x4] sm:$0xf]
      %v5198 = vld [vmem:[%s5195 + $0x8] sm:$0xf]
      %v5199 = vld [vmem:[%s5195 + $0xc] sm:$0xf]
      %s5200 = scalar_lea.vmem %s6, 1
      %v5201 = vld [vmem:[%s5200] sm:$0x1]
      %v5203 = vlaneseq
      %v5204 = vshrl.u32 %v5203, 7
      %v5205 = vsub.s32 0, %v5204
      %v5206 = vrot.slane %v5201, %v5205
      %v5212 = vunpack.c.l.b16 %v5196
      %v5213 = vunpack.c.l.b16 %v5197
      %v5214 = vunpack.c.l.b16 %v5198
      %v5215 = vunpack.c.l.b16 %v5199
      %v5216 = vpack.c.b16 %v5213, %v5212
      %v5217 = vpack.c.b16 %v5215, %v5214
      %v5221 = vsel %vm579, %v5193, 0
      %v5224 = vsel %vm579, %v5194, 0
      %5226 = vmatprep.subr.bf16.mxu0 0
      %5227 = vmatpush1.bf16.msra.mxu0 %v5216
      %5228 = vmatprep.subr.bf16.mxu0 0
      %5229 = vmatpush1.bf16.msra.mxu0 %v5217
      %5230 = vmatprep.subr.bf16.mxu0 0
      %5231 = vmatpush1.bf16.msra.mxu0 0
      %5232 = vmatprep.subr.bf16.mxu0 0
      %5233 = vmatpush1.bf16.msra.mxu0 0
      %5234 = vmatprep.subr.bf16.mxu0 0
      %5235 = vmatpush1.bf16.msra.mxu0 0
      %5236 = vmatprep.subr.bf16.mxu0 0
      %5237 = vmatpush1.bf16.msra.mxu0 0
      %5238 = vmatprep.subr.bf16.mxu0 0
      %5239 = vmatpush1.bf16.msra.mxu0 0
      %5240 = vmatprep.subr.bf16.mxu0 0
      %5241 = vmatpush1.bf16.msra.mxu0 0
      %5242 = vmatprep.subr.bf16.mxu0 0
      %5243 = vmatpush1.bf16.msra.mxu0 0
      %5244 = vmatprep.subr.bf16.mxu0 0
      %5245 = vmatpush1.bf16.msra.mxu0 0
      %5246 = vmatprep.subr.bf16.mxu0 0
      %5247 = vmatpush1.bf16.msra.mxu0 0
      %5248 = vmatprep.subr.bf16.mxu0 0
      %5249 = vmatpush1.bf16.msra.mxu0 0
      %5250 = vmatprep.subr.bf16.mxu0 0
      %5251 = vmatpush1.bf16.msra.mxu0 0
      %5252 = vmatprep.subr.bf16.mxu0 0
      %5253 = vmatpush1.bf16.msra.mxu0 0
      %5254 = vmatprep.subr.bf16.mxu0 0
      %5255 = vmatpush1.bf16.msra.mxu0 0
      %5256 = vmatprep.subr.bf16.mxu0 0
      %5257 = vmatpush1.bf16.msra.mxu0 0
      %5258 = vmatprep.mubr.bf16.mxu0 0
      %5259 = vmatmul.mubr.bf16.gmra.mrb[0].mxu0 %v5221
      %v5260 = vpop.f32.mrb[0].mxu0
      %v5261 = vadd.f32 %v5206, %v5260
      %v5262 = vpop.f32.mrb[0].mxu0
      %v5263 = vpop.f32.mrb[0].mxu0
      %v5264 = vadd.f32 %v5206, %v5263
      %v5265 = vpop.f32.mrb[0].mxu0
      %5266 = vmatprep.mubr.bf16.mxu0 0
      %5267 = vmatmul.mubr.bf16.gmra.mrb[0].mxu0 %v5224
      %v5268 = vpop.f32.mrb[0].mxu0
      %v5269 = vadd.f32 %v5206, %v5268
      %v5270 = vpop.f32.mrb[0].mxu0
      %v5271 = vpop.f32.mrb[0].mxu0
      %v5272 = vadd.f32 %v5206, %v5271
      %v5273 = vpop.f32.mrb[0].mxu0
      %5274 = vdwg.mxu0
      %v5275 = vmax.f32 %v5261, 0.0
      %v5276 = vmax.f32 %v5264, 0.0
      %v5277 = vmax.f32 %v5269, 0.0
      %v5278 = vmax.f32 %v5272, 0.0
      %v5279 = vpack.c.bf16 %v5276, %v5275
      %v5280 = vpack.c.bf16 %v5278, %v5277
      %s5281 = scalar_lea.vmem %s7, 32
      %v5282 = vld [vmem:[%s5281] sm:$0xf]
      %v5283 = vld [vmem:[%s5281 + $0x4] sm:$0xf]
      %v5284 = vld [vmem:[%s5281 + $0x8] sm:$0xf]
      %v5285 = vld [vmem:[%s5281 + $0xc] sm:$0xf]
      %v5286 = vld [vmem:[%s5281 + $0x10] sm:$0xf]
      %v5287 = vld [vmem:[%s5281 + $0x14] sm:$0xf]
      %v5288 = vld [vmem:[%s5281 + $0x18] sm:$0xf]
      %v5289 = vld [vmem:[%s5281 + $0x1c] sm:$0xf]
      %s5290 = scalar_lea.vmem %s8, 1
      %v5291 = vld [vmem:[%s5290] sm:$0x1]
      %v5293 = vlaneseq
      %v5294 = vshrl.u32 %v5293, 7
      %v5295 = vsub.s32 0, %v5294
      %v5296 = vrot.slane %v5291, %v5295
      %v5306 = vunpack.c.l.b16 %v5282
      %v5307 = vunpack.c.l.b16 %v5283
      %v5308 = vunpack.c.l.b16 %v5284
      %v5309 = vunpack.c.l.b16 %v5285
      %v5310 = vunpack.c.l.b16 %v5286
      %v5311 = vunpack.c.l.b16 %v5287
      %v5312 = vunpack.c.l.b16 %v5288
      %v5313 = vunpack.c.l.b16 %v5289
      %v5314 = vpack.c.b16 %v5307, %v5306
      %v5315 = vpack.c.b16 %v5309, %v5308
      %v5316 = vpack.c.b16 %v5311, %v5310
      %v5317 = vpack.c.b16 %v5313, %v5312
      %v5323 = vsel %vm2868, %v5279, 0
      %v5326 = vsel %vm2868, %v5280, 0
      %5328 = vmatprep.subr.bf16.mxu0 0
      %5329 = vmatpush1.bf16.msra.mxu0 %v5314
      %5330 = vmatprep.subr.bf16.mxu0 0
      %5331 = vmatpush1.bf16.msra.mxu0 %v5315
      %5332 = vmatprep.subr.bf16.mxu0 0
      %5333 = vmatpush1.bf16.msra.mxu0 %v5316
      %5334 = vmatprep.subr.bf16.mxu0 0
      %5335 = vmatpush1.bf16.msra.mxu0 %v5317
      %5336 = vmatprep.subr.bf16.mxu0 0
      %5337 = vmatpush1.bf16.msra.mxu0 0
      %5338 = vmatprep.subr.bf16.mxu0 0
      %5339 = vmatpush1.bf16.msra.mxu0 0
      %5340 = vmatprep.subr.bf16.mxu0 0
      %5341 = vmatpush1.bf16.msra.mxu0 0
      %5342 = vmatprep.subr.bf16.mxu0 0
      %5343 = vmatpush1.bf16.msra.mxu0 0
      %5344 = vmatprep.subr.bf16.mxu0 0
      %5345 = vmatpush1.bf16.msra.mxu0 0
      %5346 = vmatprep.subr.bf16.mxu0 0
      %5347 = vmatpush1.bf16.msra.mxu0 0
      %5348 = vmatprep.subr.bf16.mxu0 0
      %5349 = vmatpush1.bf16.msra.mxu0 0
      %5350 = vmatprep.subr.bf16.mxu0 0
      %5351 = vmatpush1.bf16.msra.mxu0 0
      %5352 = vmatprep.subr.bf16.mxu0 0
      %5353 = vmatpush1.bf16.msra.mxu0 0
      %5354 = vmatprep.subr.bf16.mxu0 0
      %5355 = vmatpush1.bf16.msra.mxu0 0
      %5356 = vmatprep.subr.bf16.mxu0 0
      %5357 = vmatpush1.bf16.msra.mxu0 0
      %5358 = vmatprep.subr.bf16.mxu0 0
      %5359 = vmatpush1.bf16.msra.mxu0 0
      %5360 = vmatprep.mubr.bf16.mxu0 0
      %5361 = vmatmul.mubr.bf16.gmra.mrb[0].mxu0 %v5323
      %v5362 = vpop.f32.mrb[0].mxu0
      %v5363 = vadd.f32 %v5296, %v5362
      %v5364 = vpop.f32.mrb[0].mxu0
      %v5365 = vpop.f32.mrb[0].mxu0
      %v5366 = vadd.f32 %v5296, %v5365
      %v5367 = vpop.f32.mrb[0].mxu0
      %5368 = vmatprep.mubr.bf16.mxu0 0
      %5369 = vmatmul.mubr.bf16.gmra.mrb[0].mxu0 %v5326
      %v5370 = vpop.f32.mrb[0].mxu0
      %v5371 = vadd.f32 %v5296, %v5370
      %v5372 = vpop.f32.mrb[0].mxu0
      %v5373 = vpop.f32.mrb[0].mxu0
      %v5374 = vadd.f32 %v5296, %v5373
      %v5375 = vpop.f32.mrb[0].mxu0
      %5376 = vdwg.mxu0
      %v5377 = vadd.f32 %v5189, %v5363
      %v5378 = vadd.f32 %v5190, %v5366
      %v5379 = vadd.f32 %v5191, %v5371
      %v5380 = vadd.f32 %v5192, %v5374
      %s5381 = scalar_lea.vmem %s11, 1
      %v5382 = vld [vmem:[%s5381] sm:$0x1]
      %s5383 = scalar_lea.vmem %s12, 1
      %v5384 = vld [vmem:[%s5383] sm:$0x1]
      %v5385 = vsel %vm579, %v5377, 0.0
      %5386 = vadd.xlane.f32.xlu0 %v5385
      %v5387 = vpop.xlane.xlu0 %5386
      %v5388 = vsel %vm579, %v5378, 0.0
      %5389 = vadd.xlane.f32.xlu0 %v5388
      %v5390 = vpop.xlane.xlu0 %5389
      %v5391 = vsel %vm579, %v5379, 0.0
      %5392 = vadd.xlane.f32.xlu0 %v5391
      %v5393 = vpop.xlane.xlu0 %5392
      %v5394 = vsel %vm579, %v5380, 0.0
      %5395 = vadd.xlane.f32.xlu0 %v5394
      %v5396 = vpop.xlane.xlu0 %5395
      %v5397 = vmul.f32 %v5387, %v2682
      %v5398 = vmul.f32 %v5390, %v2682
      %v5399 = vmul.f32 %v5393, %v2682
      %v5400 = vmul.f32 %v5396, %v2682
      %v5401 = vsub.f32 %v5377, %v5397
      %v5402 = vsub.f32 %v5378, %v5398
      %v5403 = vsub.f32 %v5379, %v5399
      %v5404 = vsub.f32 %v5380, %v5400
      %v5405 = vmul.f32 %v5401, %v5401
      %v5406 = vmul.f32 %v5402, %v5402
      %v5407 = vmul.f32 %v5403, %v5403
      %v5408 = vmul.f32 %v5404, %v5404
      %v5409 = vsel %vm579, %v5405, 0.0
      %5410 = vadd.xlane.f32.xlu0 %v5409
      %v5411 = vpop.xlane.xlu0 %5410
      %v5412 = vsel %vm579, %v5406, 0.0
      %5413 = vadd.xlane.f32.xlu0 %v5412
      %v5414 = vpop.xlane.xlu0 %5413
      %v5415 = vsel %vm579, %v5407, 0.0
      %5416 = vadd.xlane.f32.xlu0 %v5415
      %v5417 = vpop.xlane.xlu0 %5416
      %v5418 = vsel %vm579, %v5408, 0.0
      %5419 = vadd.xlane.f32.xlu0 %v5418
      %v5420 = vpop.xlane.xlu0 %5419
      %v5421 = vmul.f32 %v5411, %v2682
      %v5422 = vmul.f32 %v5414, %v2682
      %v5423 = vmul.f32 %v5417, %v2682
      %v5424 = vmul.f32 %v5420, %v2682
      %v5425 = vadd.f32 %v5421, 1e-05
      %v5426 = vadd.f32 %v5422, 1e-05
      %v5427 = vadd.f32 %v5423, 1e-05
      %v5428 = vadd.f32 %v5424, 1e-05
      %v5429 = vrsqrt.pop %v5425
      %v5430 = vrsqrt.pop %v5426
      %v5431 = vrsqrt.pop %v5427
      %v5432 = vrsqrt.pop %v5428
      %v5433 = vmul.f32 %v5401, %v5429
      %v5434 = vmul.f32 %v5402, %v5430
      %v5435 = vmul.f32 %v5403, %v5431
      %v5436 = vmul.f32 %v5404, %v5432
      %v5438 = vlaneseq
      %v5439 = vshrl.u32 %v5438, 7
      %v5440 = vsub.s32 0, %v5439
      %v5441 = vrot.slane %v5382, %v5440
      %v5443 = vmul.f32 %v5433, %v5441
      %v5444 = vmul.f32 %v5434, %v5441
      %v5445 = vmul.f32 %v5435, %v5441
      %v5446 = vmul.f32 %v5436, %v5441
      %v5448 = vlaneseq
      %v5449 = vshrl.u32 %v5448, 7
      %v5450 = vsub.s32 0, %v5449
      %v5451 = vrot.slane %v5384, %v5450
      %v5453 = vadd.f32 %v5443, %v5451
      %v5454 = vadd.f32 %v5444, %v5451
      %v5455 = vadd.f32 %v5445, %v5451
      %v5456 = vadd.f32 %v5446, %v5451
      %v5457 = vpack.c.bf16 %v5453, %v5453
      %v5458 = vpack.c.bf16 %v5454, %v5454
      %v5459 = vpack.c.bf16 %v5455, %v5455
      %v5460 = vpack.c.bf16 %v5456, %v5456
      %v5461 = vld [vmem:[%s13] sm:$0xf]
      %v5462 = vld [vmem:[%s13 + $0x4] sm:$0xf]
      %v5463 = vld [vmem:[%s13 + $0x8] sm:$0xf]
      %v5464 = vld [vmem:[%s13 + $0xc] sm:$0xf]
      %v5465 = vld [vmem:[%s14] sm:$0x1]
      %v5467 = vlaneseq
      %v5468 = vshrl.u32 %v5467, 7
      %v5469 = vsub.s32 0, %v5468
      %v5470 = vrot.slane %v5465, %v5469
      %v5476 = vunpack.c.l.b16 %v5457
      %v5477 = vunpack.c.l.b16 %v5458
      %v5478 = vunpack.c.l.b16 %v5459
      %v5479 = vunpack.c.l.b16 %v5460
      %v5480 = vrot.slane %v5476, 7
      %v5481 = vrot.slane %v5477, 6
      %vm5482 = vcmask 1041409
      %v5483 = vsel %vm5482, %v5481, %v5480
      %v5484 = vrot.slane %v5478, 5
      %vm5485 = vcmask 1042434
      %v5486 = vsel %vm5485, %v5484, %v5483
      %v5487 = vrot.slane %v5479, 4
      %vm5488 = vcmask 1043459
      %v5489 = vsel %vm5488, %v5487, %v5486
      %v5490 = vpack.c.b16 %v5489, %v5489
      %v5495 = vunpack.c.l.b16 %v5461
      %v5496 = vunpack.c.l.b16 %v5462
      %v5497 = vunpack.c.l.b16 %v5463
      %v5498 = vunpack.c.l.b16 %v5464
      %v5499 = vpack.c.b16 %v5496, %v5495
      %v5500 = vpack.c.b16 %v5498, %v5497
      %v5504 = vsel %vm579, %v5490, 0
      %5506 = vmatprep.subr.bf16.mxu0 0
      %5507 = vmatpush1.bf16.msra.mxu0 %v5499
      %5508 = vmatprep.subr.bf16.mxu0 0
      %5509 = vmatpush1.bf16.msra.mxu0 %v5500
      %5510 = vmatprep.subr.bf16.mxu0 0
      %5511 = vmatpush1.bf16.msra.mxu0 0
      %5512 = vmatprep.subr.bf16.mxu0 0
      %5513 = vmatpush1.bf16.msra.mxu0 0
      %5514 = vmatprep.subr.bf16.mxu0 0
      %5515 = vmatpush1.bf16.msra.mxu0 0
      %5516 = vmatprep.subr.bf16.mxu0 0
      %5517 = vmatpush1.bf16.msra.mxu0 0
      %5518 = vmatprep.subr.bf16.mxu0 0
      %5519 = vmatpush1.bf16.msra.mxu0 0
      %5520 = vmatprep.subr.bf16.mxu0 0
      %5521 = vmatpush1.bf16.msra.mxu0 0
      %5522 = vmatprep.subr.bf16.mxu0 0
      %5523 = vmatpush1.bf16.msra.mxu0 0
      %5524 = vmatprep.subr.bf16.mxu0 0
      %5525 = vmatpush1.bf16.msra.mxu0 0
      %5526 = vmatprep.subr.bf16.mxu0 0
      %5527 = vmatpush1.bf16.msra.mxu0 0
      %5528 = vmatprep.subr.bf16.mxu0 0
      %5529 = vmatpush1.bf16.msra.mxu0 0
      %5530 = vmatprep.subr.bf16.mxu0 0
      %5531 = vmatpush1.bf16.msra.mxu0 0
      %5532 = vmatprep.subr.bf16.mxu0 0
      %5533 = vmatpush1.bf16.msra.mxu0 0
      %5534 = vmatprep.subr.bf16.mxu0 0
      %5535 = vmatpush1.bf16.msra.mxu0 0
      %5536 = vmatprep.subr.bf16.mxu0 0
      %5537 = vmatpush1.bf16.msra.mxu0 0
      %5538 = vmatprep.mubr.bf16.mxu0 0
      %5539 = vmatmul.mubr.bf16.gmra.mrb[0].mxu0 %v5504
      %v5540 = vpop.f32.mrb[0].mxu0
      %v5541 = vadd.f32 %v5470, %v5540
      %v5542 = vpop.f32.mrb[0].mxu0
      %v5543 = vpop.f32.mrb[0].mxu0
      %v5544 = vpop.f32.mrb[0].mxu0
      %5545 = vdwg.mxu0
      %v5546 = vmax.f32 %v5541, 0.0
      %v5547 = vpack.c.bf16 %v5546, %v5546
      %v5548 = vld [vmem:[%s15] sm:$0xf]
      %v5549 = vld [vmem:[%s15 + $0x4] sm:$0xf]
      %v5550 = vld [vmem:[%s15 + $0x8] sm:$0xf]
      %v5551 = vld [vmem:[%s15 + $0xc] sm:$0xf]
      %v5552 = vld [vmem:[%s16] sm:$0x1]
      %v5554 = vlaneseq
      %v5555 = vshrl.u32 %v5554, 7
      %v5556 = vsub.s32 0, %v5555
      %v5557 = vrot.slane %v5552, %v5556
      %v5563 = vunpack.c.l.b16 %v5548
      %v5564 = vunpack.c.l.b16 %v5549
      %v5565 = vunpack.c.l.b16 %v5550
      %v5566 = vunpack.c.l.b16 %v5551
      %v5567 = vpack.c.b16 %v5564, %v5563
      %v5568 = vpack.c.b16 %v5566, %v5565
      %v5572 = vsel %vm579, %v5547, 0
      %5574 = vmatprep.subr.bf16.mxu0 0
      %5575 = vmatpush1.bf16.msra.mxu0 %v5567
      %5576 = vmatprep.subr.bf16.mxu0 0
      %5577 = vmatpush1.bf16.msra.mxu0 %v5568
      %5578 = vmatprep.subr.bf16.mxu0 0
      %5579 = vmatpush1.bf16.msra.mxu0 0
      %5580 = vmatprep.subr.bf16.mxu0 0
      %5581 = vmatpush1.bf16.msra.mxu0 0
      %5582 = vmatprep.subr.bf16.mxu0 0
      %5583 = vmatpush1.bf16.msra.mxu0 0
      %5584 = vmatprep.subr.bf16.mxu0 0
      %5585 = vmatpush1.bf16.msra.mxu0 0
      %5586 = vmatprep.subr.bf16.mxu0 0
      %5587 = vmatpush1.bf16.msra.mxu0 0
      %5588 = vmatprep.subr.bf16.mxu0 0
      %5589 = vmatpush1.bf16.msra.mxu0 0
      %5590 = vmatprep.subr.bf16.mxu0 0
      %5591 = vmatpush1.bf16.msra.mxu0 0
      %5592 = vmatprep.subr.bf16.mxu0 0
      %5593 = vmatpush1.bf16.msra.mxu0 0
      %5594 = vmatprep.subr.bf16.mxu0 0
      %5595 = vmatpush1.bf16.msra.mxu0 0
      %5596 = vmatprep.subr.bf16.mxu0 0
      %5597 = vmatpush1.bf16.msra.mxu0 0
      %5598 = vmatprep.subr.bf16.mxu0 0
      %5599 = vmatpush1.bf16.msra.mxu0 0
      %5600 = vmatprep.subr.bf16.mxu0 0
      %5601 = vmatpush1.bf16.msra.mxu0 0
      %5602 = vmatprep.subr.bf16.mxu0 0
      %5603 = vmatpush1.bf16.msra.mxu0 0
      %5604 = vmatprep.subr.bf16.mxu0 0
      %5605 = vmatpush1.bf16.msra.mxu0 0
      %5606 = vmatprep.mubr.bf16.mxu0 0
      %5607 = vmatmul.mubr.bf16.gmra.mrb[0].mxu0 %v5572
      %v5608 = vpop.f32.mrb[0].mxu0
      %v5609 = vadd.f32 %v5557, %v5608
      %v5610 = vpop.f32.mrb[0].mxu0
      %v5611 = vpop.f32.mrb[0].mxu0
      %v5612 = vpop.f32.mrb[0].mxu0
      %5613 = vdwg.mxu0
      %5614 = vst [vmem:[%s548] sm:$0xf] %v5609
      %p5615 = scmp.lt.s32.totalorder %s28, 1
      %s5616 = scalar_select %p5615, %s28, 1
      %s5617 = smul.addr %s5616, 4
      %s5618 = scalar_lea.vmem %s17, %s5617
      // Predicated region
      $region89: #{transformer_net.1} parent=87 // pred_check
        %p5619 = pneg %p408
      $region90: #{transformer_net.1} parent=87 // pred_check_branch
        %5621 = sbr.rel (%p5619) target = $region92
      $region91: #{transformer_net.1} parent=87 // pred_region
        _
      $region92: #{transformer_net.1} parent=87 // pred_fallthru
        _
    $region88: #{transformer_net.1} parent=5 // pred_fallthru
      _
    %p5622 = scmp.le.s32.totalorder 2, %s23
    // Predicated region
    $region93: #{transformer_net.1} parent=5 // pred_check
      %p5623 = pneg %p5622
    $region94: #{transformer_net.1} parent=5 // pred_check_branch
      %5625 = sbr.rel (%p5623) target = $region96
    $region95: #{transformer_net.1} parent=5 // pred_region
      %s5626 = ssub.s32 %s23, 2
      // Predicated region
      $region97: #{transformer_net.1} parent=95 // pred_check
        %p5627 = pneg %p414
      $region98: #{transformer_net.1} parent=95 // pred_check_branch
        %5629 = sbr.rel (%p5627) target = $region100
      $region99: #{transformer_net.1} parent=95 // pred_region
        %p5630 = scmp.lt.s32.totalorder %s29, 1
        %s5631 = scalar_select %p5630, %s29, 1
        %s5632 = smul.addr %s5631, 4
        %s5633 = scalar_lea.vmem %s17, %s5632
      $region100: #{transformer_net.1} parent=95 // pred_fallthru
        _
    $region96: #{transformer_net.1} parent=5 // pred_fallthru
      _
  $region6: #{transformer_net.1} parent=0 // loop_footer
    %s27 = sadd.s32 1, %s23
  $region7: #{transformer_net.1} parent=0 // loop_footer_branch
    %22 = sbr.rel target = $region3
  $region8: #{transformer_net.1} parent=0 // loop_exit
    _

</llo_original>
